<compile_context>
chip_gen: v7x
topology: tpu7x:2x2x1
jax: 0.10.0
libtpu: 0.0.40
codegen_flags: <defaults>
</compile_context>

<pallas_src>
import functools

import jax
import jax.numpy as jnp
import numpy as np
from jax import lax
from jax.experimental import pallas as pl
from jax.experimental.pallas import tpu as pltpu


def _lstm_anomaly_kernel(
    x_ref,                                        # (T, TB, D)  time-major batch block
    wih0_ref, whh0_ref, b0_ref,
    wih1_ref, whh1_ref, b1_ref,
    wa1_ref, ba1_ref, wa2_ref, ba2_ref,
    wf1_ref, bf1_ref, wf2_ref, bf2_ref,
    out_ref,                                      # (TB, 1)
    xg_ref,                                       # VMEM scratch (T, TB, 4H): gate inputs
    hseq_ref,                                     # VMEM scratch (T, TB, H): layer-1 hidden
    score_ref,                                    # VMEM scratch (T, TB, 1): attn scores
    *, seq_len, hidden_dim, batch_block, recurrence_unroll,
):
    T, TB, H = seq_len, batch_block, hidden_dim
    D = x_ref.shape[-1]
    f32 = jnp.float32

    def mm(act, w):
        # MXU matmul; cast LHS to the (possibly bf16) weight dtype, accumulate in f32.
        return jnp.dot(act.astype(w.dtype), w, preferred_element_type=f32)

    def gate_math(gates, c):
        i = jax.nn.sigmoid(gates[:, 0 * H:1 * H])
        f = jax.nn.sigmoid(gates[:, 1 * H:2 * H])
        g = jnp.tanh(gates[:, 2 * H:3 * H])
        o = jax.nn.sigmoid(gates[:, 3 * H:4 * H])
        c = f * c + i * g
        h = o * jnp.tanh(c)
        return h, c

    # ---- layer 0 input->gate matmul + bias, hoisted out of the recurrence ----
    x_flat = x_ref[...].reshape(T * TB, D)
    xg_ref[...] = (mm(x_flat, wih0_ref[...]) + b0_ref[...]).reshape(T, TB, 4 * H)

    # Keep weights resident as values (loaded once per grid step).
    whh0 = whh0_ref[...]
    wih1 = wih1_ref[...]
    b1 = b1_ref[...]
    whh1 = whh1_ref[...]
    wa1 = wa1_ref[...]
    ba1 = ba1_ref[...]
    wa2 = wa2_ref[...]
    ba2 = ba2_ref[...]

    zeros = jnp.zeros((TB, H), f32)

    # ---- layer 0 recurrence; layer-1's gate input for step t is produced as soon as
    #      h0[t] exists, filling the MXU while the carry waits on EUP/VPU gate math. ----
    def step0(t, carry):
        h, c = carry
        gates = xg_ref[t] + mm(h, whh0)
        h, c = gate_math(gates, c)
        # xg_ref[t] has been consumed for layer 0 -> overwrite in place with layer-1's
        # input->gate term (inter-layer dropout is identity at inference).
        xg_ref[t] = mm(h, wih1) + b1
        return (h, c)

    lax.fori_loop(0, T, step0, (zeros, zeros), unroll=recurrence_unroll)

    # ---- layer 1 recurrence; attention projection + Linear(H,1) score fused in ----
    def step1(t, carry):
        h, c = carry
        gates = xg_ref[t] + mm(h, whh1)
        h, c = gate_math(gates, c)
        hseq_ref[t] = h
        a = jnp.tanh(mm(h, wa1) + ba1)                                      # (TB, H)
        score_ref[t] = jnp.sum(a * wa2, axis=-1, keepdims=True) + ba2       # (TB, 1)
        return (h, c)

    lax.fori_loop(0, T, step1, (zeros, zeros), unroll=recurrence_unroll)

    # ---- softmax over the time axis (per sample) and context vector ----
    s = score_ref[...]                                                      # (T, TB, 1)
    s = s - jnp.max(s, axis=0, keepdims=True)
    e = jnp.exp(s)
    attn = e / jnp.sum(e, axis=0, keepdims=True)                            # (T, TB, 1)
    context = jnp.sum(attn * hseq_ref[...], axis=0)                         # (TB, H)

    # ---- fc1 -> relu -> (dropout = identity) -> fc2 -> sigmoid ----
    hfc = jnp.maximum(mm(context, wf1_ref[...]) + bf1_ref[...], 0.0)        # (TB, 64)
    logit = jnp.sum(hfc * wf2_ref[...], axis=-1, keepdims=True) + bf2_ref[...]
    out_ref[...] = jax.nn.sigmoid(logit)


def lstm_anomaly_forward(x, params, *, batch_block=None,
                         weight_dtype=jnp.float32,
                         recurrent_weight_dtype=jnp.float32):
    """x: (B, T, D) float32, batch_first like nn.LSTM(batch_first=True).

    batch_block=None keeps the whole batch in one grid point (best on v5e/v6e).
    Use batch_block=B//2 only to shard across v7x's two TensorCores, or smaller if
    VMEM forces tiling at large T/B.
    """
    B, T, D = x.shape
    H = params["whh0"].shape[0]
    TB = B if batch_block is None else min(batch_block, B)
    assert B % TB == 0, "batch must be divisible by the batch block"
    assert TB == B or TB % 8 == 0, "batch block must be the full batch or a multiple of 8"

    # Time-major layout so (batch, feature) land on (sublane, lane) for every step tile.
    # (One extra HBM pass over x; negligible at these sizes — fold into the BlockSpec if
    #  T*B*D ever gets large.)
    x_t = jnp.transpose(x, (1, 0, 2))            # (T, B, D)

    wd, rd, f32 = weight_dtype, recurrent_weight_dtype, jnp.float32
    args = (
        x_t,
        params["wih0"].astype(wd), params["whh0"].astype(rd), params["b0"].astype(f32),
        params["wih1"].astype(wd), params["whh1"].astype(rd), params["b1"].astype(f32),
        params["wa1"].astype(wd), params["ba1"].astype(f32),
        params["wa2"].astype(f32), params["ba2"].astype(f32),
        params["wf1"].astype(wd), params["bf1"].astype(f32),
        params["wf2"].astype(f32), params["bf2"].astype(f32),
    )

    def full(shape):
        # Whole-array block that stays resident across the batch grid (index_map -> 0).
        return pl.BlockSpec(shape, lambda i, _n=len(shape): (0,) * _n)

    in_specs = [
        pl.BlockSpec((T, TB, D), lambda i: (0, i, 0)),               # x (batch-tiled)
        full((D, 4 * H)), full((H, 4 * H)), full((1, 4 * H)),        # layer 0
        full((H, 4 * H)), full((H, 4 * H)), full((1, 4 * H)),        # layer 1
        full((H, H)), full((1, H)), full((1, H)), full((1, 1)),      # attention
        full((H, 64)), full((1, 64)), full((1, 64)), full((1, 1)),   # fc head
    ]
    out_specs = pl.BlockSpec((TB, 1), lambda i: (i, 0))

    # Explicit VMEM budget: scratch slabs + (double-buffered) inputs + headroom.
    lane = 128
    scratch_bytes = 4 * (T * TB * 4 * H            # xg
                         + T * TB * H              # hseq
                         + T * max(TB, 8) * lane)  # scores (lane-padded last dim of 1)
    weight_bytes = sum(int(a.size) * a.dtype.itemsize for a in args[1:])
    x_block_bytes = T * TB * D * 4
    vmem_limit = int(min(128 * 1024 * 1024,
                         scratch_bytes + 2 * (weight_bytes + x_block_bytes) + (8 << 20)))

    kernel = functools.partial(
        _lstm_anomaly_kernel,
        seq_len=T, hidden_dim=H, batch_block=TB,
        recurrence_unroll=max(1, min(T, 8)),
    )

    out = pl.pallas_call(
        kernel,
        out_shape=jax.ShapeDtypeStruct((B, 1), jnp.float32),
        grid_spec=pltpu.PrefetchScalarGridSpec(
            num_scalar_prefetch=0,
            grid=(B // TB,),
            in_specs=in_specs,
            out_specs=out_specs,
            scratch_shapes=[
                pltpu.VMEM((T, TB, 4 * H), jnp.float32),   # staged input->gate terms
                pltpu.VMEM((T, TB, H), jnp.float32),       # layer-1 hidden states
                pltpu.VMEM((T, TB, 1), jnp.float32),       # attention scores
            ],
        ),
        compiler_params=pltpu.CompilerParams(
            dimension_semantics=("parallel",),             # v7x: shard batch over 2 TCs
            vmem_limit_bytes=vmem_limit),
    )(*args)
    return out


def reference_forward(x, p):
    """Pure-JAX reference mirroring the PyTorch module in eval mode."""
    B, T, _ = x.shape
    H = p["whh0"].shape[0]

    def layer(seq, wih, whh, b):
        h = jnp.zeros((B, H), jnp.float32)
        c = jnp.zeros((B, H), jnp.float32)
        outs = []
        for t in range(T):
            gates = seq[:, t, :] @ wih + h @ whh + b
            i = jax.nn.sigmoid(gates[:, 0 * H:1 * H])
            f = jax.nn.sigmoid(gates[:, 1 * H:2 * H])
            g = jnp.tanh(gates[:, 2 * H:3 * H])
            o = jax.nn.sigmoid(gates[:, 3 * H:4 * H])
            c = f * c + i * g
            h = o * jnp.tanh(c)
            outs.append(h)
        return jnp.stack(outs, axis=1)                       # (B, T, H)

    h0 = layer(x, p["wih0"], p["whh0"], p["b0"])
    h1 = layer(h0, p["wih1"], p["whh1"], p["b1"])
    a = jnp.tanh(h1 @ p["wa1"] + p["ba1"])                   # (B, T, H)
    s = jnp.sum(a * p["wa2"], axis=-1) + p["ba2"][0, 0]      # (B, T)
    w = jax.nn.softmax(s, axis=1)
    ctx = jnp.sum(w[:, :, None] * h1, axis=1)                # (B, H)
    hfc = jnp.maximum(ctx @ p["wf1"] + p["bf1"], 0.0)
    return jax.nn.sigmoid(jnp.sum(hfc * p["wf2"], axis=-1, keepdims=True) + p["bf2"])


def init_params(key, input_dim, hidden_dim):
    """Deterministic synthetic parameters with PyTorch-equivalent layouts.
    Big matrices are stored pre-transposed (act @ W); Linear(*, 1) weights stay as rows."""
    H = hidden_dim
    k = 1.0 / np.sqrt(H)
    keys = jax.random.split(key, 16)

    def u(k_, shape, scale):
        return jax.random.uniform(k_, shape, jnp.float32, -scale, scale)

    wih0 = u(keys[0], (4 * H, input_dim), k).T               # (D, 4H)
    whh0 = u(keys[1], (4 * H, H), k).T                       # (H, 4H)
    b0 = (u(keys[2], (4 * H,), k) + u(keys[3], (4 * H,), k)).reshape(1, 4 * H)
    wih1 = u(keys[4], (4 * H, H), k).T
    whh1 = u(keys[5], (4 * H, H), k).T
    b1 = (u(keys[6], (4 * H,), k) + u(keys[7], (4 * H,), k)).reshape(1, 4 * H)
    wa1 = u(keys[8], (H, H), k).T                            # (H, H)
    ba1 = u(keys[9], (H,), k).reshape(1, H)
    wa2 = u(keys[10], (1, H), k)                             # row (PyTorch Linear(H,1))
    ba2 = u(keys[11], (1,), k).reshape(1, 1)
    wf1 = u(keys[12], (64, H), k).T                          # (H, 64)
    bf1 = u(keys[13], (64,), k).reshape(1, 64)
    wf2 = u(keys[14], (1, 64), 1.0 / np.sqrt(64))            # row (PyTorch Linear(64,1))
    bf2 = u(keys[15], (1,), 1.0 / np.sqrt(64)).reshape(1, 1)

    return dict(wih0=wih0, whh0=whh0, b0=b0,
                wih1=wih1, whh1=whh1, b1=b1,
                wa1=wa1, ba1=ba1, wa2=wa2, ba2=ba2,
                wf1=wf1, bf1=bf1, wf2=wf2, bf2=bf2)


if __name__ == "__main__":
    # batch, seq, input_dim, hidden_dim (module default hidden_dim=128)
    B, T, D, H = 16, 8, 16, 128

    key = jax.random.PRNGKey(0)
    kx, kp = jax.random.split(key)
    x = jax.random.normal(kx, (B, T, D), jnp.float32)
    params = init_params(kp, D, H)

    ref = reference_forward(x, params)

    # Default: full batch in one grid point (single-TC chips run the recurrence once).
    out = lstm_anomaly_forward(x, params)
    out = jax.block_until_ready(out)
    assert out.shape == (B, 1)
    np.testing.assert_allclose(np.asarray(out), np.asarray(ref), rtol=1e-3, atol=1e-4)

    # bf16 for the hoisted (non-recurrent) weights only; whh and the carried hidden state
    # stay f32 so rounding does not compound over T. Loose tolerance vs f32 reference.
    out_bf16 = lstm_anomaly_forward(x, params, weight_dtype=jnp.bfloat16)
    out_bf16 = jax.block_until_ready(out_bf16)
    np.testing.assert_allclose(np.asarray(out_bf16), np.asarray(ref), rtol=5e-2, atol=5e-2)

    print("KERNEL_OK")
</pallas_src>

<mosaic_0001>
module attributes {stable_mosaic.version = 11 : i64} {
  func.func @_lstm_anomaly_kernel(%arg0: i32, %arg1: memref<8x16x16xf32, #tpu.memory_space<vmem>>, %arg2: memref<16x512xf32, #tpu.memory_space<vmem>>, %arg3: memref<128x512xf32, #tpu.memory_space<vmem>>, %arg4: memref<1x512xf32, #tpu.memory_space<vmem>>, %arg5: memref<128x512xf32, #tpu.memory_space<vmem>>, %arg6: memref<128x512xf32, #tpu.memory_space<vmem>>, %arg7: memref<1x512xf32, #tpu.memory_space<vmem>>, %arg8: memref<128x128xf32, #tpu.memory_space<vmem>>, %arg9: memref<1x128xf32, #tpu.memory_space<vmem>>, %arg10: memref<1x128xf32, #tpu.memory_space<vmem>>, %arg11: memref<1x1xf32, #tpu.memory_space<vmem>>, %arg12: memref<128x64xf32, #tpu.memory_space<vmem>>, %arg13: memref<1x64xf32, #tpu.memory_space<vmem>>, %arg14: memref<1x64xf32, #tpu.memory_space<vmem>>, %arg15: memref<1x1xf32, #tpu.memory_space<vmem>>, %arg16: memref<16x1xf32, #tpu.memory_space<vmem>>, %arg17: memref<8x16x512xf32, #tpu.memory_space<vmem>>, %arg18: memref<8x16x128xf32, #tpu.memory_space<vmem>>, %arg19: memref<8x16x1xf32, #tpu.memory_space<vmem>>) attributes {dimension_semantics = [#tpu.dimension_semantics<parallel>], iteration_bounds = array<i64: 1>, scalar_prefetch = 0 : i64, scratch_operands = 3 : i64, tpu.core_type = #tpu.core_type<tc>, window_params = [{transform_indices = @transform_0, window_bounds = array<i64: 8, 16, 16>}, {pipeline_mode = #tpu.pipeline_mode<synchronous>, transform_indices = @transform_1, window_bounds = array<i64: 16, 512>}, {pipeline_mode = #tpu.pipeline_mode<synchronous>, transform_indices = @transform_2, window_bounds = array<i64: 128, 512>}, {pipeline_mode = #tpu.pipeline_mode<synchronous>, transform_indices = @transform_3, window_bounds = array<i64: 1, 512>}, {pipeline_mode = #tpu.pipeline_mode<synchronous>, transform_indices = @transform_4, window_bounds = array<i64: 128, 512>}, {pipeline_mode = #tpu.pipeline_mode<synchronous>, transform_indices = @transform_5, window_bounds = array<i64: 128, 512>}, {pipeline_mode = #tpu.pipeline_mode<synchronous>, transform_indices = @transform_6, window_bounds = array<i64: 1, 512>}, {pipeline_mode = #tpu.pipeline_mode<synchronous>, transform_indices = @transform_7, window_bounds = array<i64: 128, 128>}, {pipeline_mode = #tpu.pipeline_mode<synchronous>, transform_indices = @transform_8, window_bounds = array<i64: 1, 128>}, {pipeline_mode = #tpu.pipeline_mode<synchronous>, transform_indices = @transform_9, window_bounds = array<i64: 1, 128>}, {pipeline_mode = #tpu.pipeline_mode<synchronous>, transform_indices = @transform_10, window_bounds = array<i64: 1, 1>}, {pipeline_mode = #tpu.pipeline_mode<synchronous>, transform_indices = @transform_11, window_bounds = array<i64: 128, 64>}, {pipeline_mode = #tpu.pipeline_mode<synchronous>, transform_indices = @transform_12, window_bounds = array<i64: 1, 64>}, {pipeline_mode = #tpu.pipeline_mode<synchronous>, transform_indices = @transform_13, window_bounds = array<i64: 1, 64>}, {pipeline_mode = #tpu.pipeline_mode<synchronous>, transform_indices = @transform_14, window_bounds = array<i64: 1, 1>}, {transform_indices = @transform_15, window_bounds = array<i64: 16, 1>}]} {
    %c0 = arith.constant 0 : index
    %c0_0 = arith.constant 0 : index
    %c0_1 = arith.constant 0 : index
    %0 = vector.load %arg1[%c0, %c0_0, %c0_1] : memref<8x16x16xf32, #tpu.memory_space<vmem>>, vector<8x16x16xf32>
    %1 = vector.shape_cast %0 : vector<8x16x16xf32> to vector<128x16xf32>
    %c0_2 = arith.constant 0 : index
    %c0_3 = arith.constant 0 : index
    %2 = vector.load %arg2[%c0_2, %c0_3] : memref<16x512xf32, #tpu.memory_space<vmem>>, vector<16x512xf32>
    %cst = arith.constant dense<0.000000e+00> : vector<128x512xf32>
    %3 = tpu.matmul %1, %2, %cst {dimension_numbers = #tpu.dot_dimension_numbers<[1], [0], [0], [1], [0, 0, 1, 1], [], []>} : vector<128x16xf32>, vector<16x512xf32>, vector<128x512xf32> -> vector<128x512xf32>
    %c0_4 = arith.constant 0 : index
    %c0_5 = arith.constant 0 : index
    %4 = vector.load %arg4[%c0_4, %c0_5] : memref<1x512xf32, #tpu.memory_space<vmem>>, vector<1x512xf32>
    %5 = vector.broadcast %4 : vector<1x512xf32> to vector<128x512xf32>
    %6 = arith.addf %3, %5 : vector<128x512xf32>
    %7 = vector.shape_cast %6 : vector<128x512xf32> to vector<8x16x512xf32>
    %c0_6 = arith.constant 0 : index
    %c0_7 = arith.constant 0 : index
    %c0_8 = arith.constant 0 : index
    %8 = vector.load %arg17[%c0_6, %c0_7, %c0_8] : memref<8x16x512xf32, #tpu.memory_space<vmem>>, vector<8x16x512xf32>
    tpu.vector_store %arg17[%c0_6, %c0_7, %c0_8], %7 {strides = array<i32>} : memref<8x16x512xf32, #tpu.memory_space<vmem>>, vector<8x16x512xf32>,
    %c0_9 = arith.constant 0 : index
    %c0_10 = arith.constant 0 : index
    %9 = vector.load %arg3[%c0_9, %c0_10] : memref<128x512xf32, #tpu.memory_space<vmem>>, vector<128x512xf32>
    %c0_11 = arith.constant 0 : index
    %c0_12 = arith.constant 0 : index
    %10 = vector.load %arg5[%c0_11, %c0_12] : memref<128x512xf32, #tpu.memory_space<vmem>>, vector<128x512xf32>
    %c0_13 = arith.constant 0 : index
    %c0_14 = arith.constant 0 : index
    %11 = vector.load %arg7[%c0_13, %c0_14] : memref<1x512xf32, #tpu.memory_space<vmem>>, vector<1x512xf32>
    %c0_15 = arith.constant 0 : index
    %c0_16 = arith.constant 0 : index
    %12 = vector.load %arg6[%c0_15, %c0_16] : memref<128x512xf32, #tpu.memory_space<vmem>>, vector<128x512xf32>
    %c0_17 = arith.constant 0 : index
    %c0_18 = arith.constant 0 : index
    %13 = vector.load %arg8[%c0_17, %c0_18] : memref<128x128xf32, #tpu.memory_space<vmem>>, vector<128x128xf32>
    %c0_19 = arith.constant 0 : index
    %c0_20 = arith.constant 0 : index
    %14 = vector.load %arg9[%c0_19, %c0_20] : memref<1x128xf32, #tpu.memory_space<vmem>>, vector<1x128xf32>
    %c0_21 = arith.constant 0 : index
    %c0_22 = arith.constant 0 : index
    %15 = vector.load %arg10[%c0_21, %c0_22] : memref<1x128xf32, #tpu.memory_space<vmem>>, vector<1x128xf32>
    %c0_23 = arith.constant 0 : index
    %c0_24 = arith.constant 0 : index
    %16 = vector.load %arg11[%c0_23, %c0_24] : memref<1x1xf32, #tpu.memory_space<vmem>>, vector<1x1xf32>
    %cst_25 = arith.constant 0.000000e+00 : f32
    %17 = vector.broadcast %cst_25 : f32 to vector<16x128xf32>
    %c0_i32 = arith.constant 0 : i32
    %18 = arith.index_cast %c0_i32 : i32 to index
    %c0_26 = arith.constant 0 : index
    %c0_27 = arith.constant 0 : index
    %19 = vector.load %arg17[%18, %c0_26, %c0_27] : memref<8x16x512xf32, #tpu.memory_space<vmem>>, vector<1x16x512xf32>
    %20 = vector.shape_cast %19 : vector<1x16x512xf32> to vector<16x512xf32>
    %cst_28 = arith.constant dense<0.000000e+00> : vector<16x512xf32>
    %21 = tpu.matmul %17, %9, %cst_28 {dimension_numbers = #tpu.dot_dimension_numbers<[1], [0], [0], [1], [0, 0, 1, 1], [], []>} : vector<16x128xf32>, vector<128x512xf32>, vector<16x512xf32> -> vector<16x512xf32>
    %22 = arith.addf %20, %21 : vector<16x512xf32>
    %23 = vector.extract_strided_slice %22 {offsets = [0, 0], sizes = [16, 128], strides = [1, 1]} : vector<16x512xf32> to vector<16x128xf32>
    %24 = arith.negf %23 : vector<16x128xf32>
    %25 = math.exp %24 : vector<16x128xf32>
    %cst_29 = arith.constant 1.000000e+00 : f32
    %26 = vector.broadcast %cst_29 : f32 to vector<16x128xf32>
    %27 = arith.addf %26, %25 : vector<16x128xf32>
    %28 = arith.divf %26, %27 : vector<16x128xf32>
    %29 = vector.extract_strided_slice %22 {offsets = [0, 128], sizes = [16, 128], strides = [1, 1]} : vector<16x512xf32> to vector<16x128xf32>
    %30 = arith.negf %29 : vector<16x128xf32>
    %31 = math.exp %30 : vector<16x128xf32>
    %cst_30 = arith.constant 1.000000e+00 : f32
    %32 = vector.broadcast %cst_30 : f32 to vector<16x128xf32>
    %33 = arith.addf %32, %31 : vector<16x128xf32>
    %34 = arith.divf %32, %33 : vector<16x128xf32>
    %35 = vector.extract_strided_slice %22 {offsets = [0, 256], sizes = [16, 128], strides = [1, 1]} : vector<16x512xf32> to vector<16x128xf32>
    %36 = math.tanh %35 : vector<16x128xf32>
    %37 = vector.extract_strided_slice %22 {offsets = [0, 384], sizes = [16, 128], strides = [1, 1]} : vector<16x512xf32> to vector<16x128xf32>
    %38 = arith.negf %37 : vector<16x128xf32>
    %39 = math.exp %38 : vector<16x128xf32>
    %cst_31 = arith.constant 1.000000e+00 : f32
    %40 = vector.broadcast %cst_31 : f32 to vector<16x128xf32>
    %41 = arith.addf %40, %39 : vector<16x128xf32>
    %42 = arith.divf %40, %41 : vector<16x128xf32>
    %43 = arith.mulf %34, %17 : vector<16x128xf32>
    %44 = arith.mulf %28, %36 : vector<16x128xf32>
    %45 = arith.addf %43, %44 : vector<16x128xf32>
    %46 = math.tanh %45 : vector<16x128xf32>
    %47 = arith.mulf %42, %46 : vector<16x128xf32>
    %cst_32 = arith.constant dense<0.000000e+00> : vector<16x512xf32>
    %48 = tpu.matmul %47, %10, %cst_32 {dimension_numbers = #tpu.dot_dimension_numbers<[1], [0], [0], [1], [0, 0, 1, 1], [], []>} : vector<16x128xf32>, vector<128x512xf32>, vector<16x512xf32> -> vector<16x512xf32>
    %49 = vector.broadcast %11 : vector<1x512xf32> to vector<16x512xf32>
    %50 = arith.addf %48, %49 : vector<16x512xf32>
    %51 = arith.index_cast %c0_i32 : i32 to index
    %c0_33 = arith.constant 0 : index
    %c0_34 = arith.constant 0 : index
    %52 = vector.load %arg17[%51, %c0_33, %c0_34] : memref<8x16x512xf32, #tpu.memory_space<vmem>>, vector<1x16x512xf32>
    %53 = vector.shape_cast %52 : vector<1x16x512xf32> to vector<16x512xf32>
    %54 = vector.shape_cast %50 : vector<16x512xf32> to vector<1x16x512xf32>
    tpu.vector_store %arg17[%51, %c0_33, %c0_34], %54 {strides = array<i32>} : memref<8x16x512xf32, #tpu.memory_space<vmem>>, vector<1x16x512xf32>,
    %c1_i32 = arith.constant 1 : i32
    %55 = arith.index_cast %c1_i32 : i32 to index
    %c0_35 = arith.constant 0 : index
    %c0_36 = arith.constant 0 : index
    %56 = vector.load %arg17[%55, %c0_35, %c0_36] : memref<8x16x512xf32, #tpu.memory_space<vmem>>, vector<1x16x512xf32>
    %57 = vector.shape_cast %56 : vector<1x16x512xf32> to vector<16x512xf32>
    %cst_37 = arith.constant dense<0.000000e+00> : vector<16x512xf32>
    %58 = tpu.matmul %47, %9, %cst_37 {dimension_numbers = #tpu.dot_dimension_numbers<[1], [0], [0], [1], [0, 0, 1, 1], [], []>} : vector<16x128xf32>, vector<128x512xf32>, vector<16x512xf32> -> vector<16x512xf32>
    %59 = arith.addf %57, %58 : vector<16x512xf32>
    %60 = vector.extract_strided_slice %59 {offsets = [0, 0], sizes = [16, 128], strides = [1, 1]} : vector<16x512xf32> to vector<16x128xf32>
    %61 = arith.negf %60 : vector<16x128xf32>
    %62 = math.exp %61 : vector<16x128xf32>
    %cst_38 = arith.constant 1.000000e+00 : f32
    %63 = vector.broadcast %cst_38 : f32 to vector<16x128xf32>
    %64 = arith.addf %63, %62 : vector<16x128xf32>
    %65 = arith.divf %63, %64 : vector<16x128xf32>
    %66 = vector.extract_strided_slice %59 {offsets = [0, 128], sizes = [16, 128], strides = [1, 1]} : vector<16x512xf32> to vector<16x128xf32>
    %67 = arith.negf %66 : vector<16x128xf32>
    %68 = math.exp %67 : vector<16x128xf32>
    %cst_39 = arith.constant 1.000000e+00 : f32
    %69 = vector.broadcast %cst_39 : f32 to vector<16x128xf32>
    %70 = arith.addf %69, %68 : vector<16x128xf32>
    %71 = arith.divf %69, %70 : vector<16x128xf32>
    %72 = vector.extract_strided_slice %59 {offsets = [0, 256], sizes = [16, 128], strides = [1, 1]} : vector<16x512xf32> to vector<16x128xf32>
    %73 = math.tanh %72 : vector<16x128xf32>
    %74 = vector.extract_strided_slice %59 {offsets = [0, 384], sizes = [16, 128], strides = [1, 1]} : vector<16x512xf32> to vector<16x128xf32>
    %75 = arith.negf %74 : vector<16x128xf32>
    %76 = math.exp %75 : vector<16x128xf32>
    %cst_40 = arith.constant 1.000000e+00 : f32
    %77 = vector.broadcast %cst_40 : f32 to vector<16x128xf32>
    %78 = arith.addf %77, %76 : vector<16x128xf32>
    %79 = arith.divf %77, %78 : vector<16x128xf32>
    %80 = arith.mulf %71, %45 : vector<16x128xf32>
    %81 = arith.mulf %65, %73 : vector<16x128xf32>
    %82 = arith.addf %80, %81 : vector<16x128xf32>
    %83 = math.tanh %82 : vector<16x128xf32>
    %84 = arith.mulf %79, %83 : vector<16x128xf32>
    %cst_41 = arith.constant dense<0.000000e+00> : vector<16x512xf32>
    %85 = tpu.matmul %84, %10, %cst_41 {dimension_numbers = #tpu.dot_dimension_numbers<[1], [0], [0], [1], [0, 0, 1, 1], [], []>} : vector<16x128xf32>, vector<128x512xf32>, vector<16x512xf32> -> vector<16x512xf32>
    %86 = vector.broadcast %11 : vector<1x512xf32> to vector<16x512xf32>
    %87 = arith.addf %85, %86 : vector<16x512xf32>
    %88 = arith.index_cast %c1_i32 : i32 to index
    %c0_42 = arith.constant 0 : index
    %c0_43 = arith.constant 0 : index
    %89 = vector.load %arg17[%88, %c0_42, %c0_43] : memref<8x16x512xf32, #tpu.memory_space<vmem>>, vector<1x16x512xf32>
    %90 = vector.shape_cast %89 : vector<1x16x512xf32> to vector<16x512xf32>
    %91 = vector.shape_cast %87 : vector<16x512xf32> to vector<1x16x512xf32>
    tpu.vector_store %arg17[%88, %c0_42, %c0_43], %91 {strides = array<i32>} : memref<8x16x512xf32, #tpu.memory_space<vmem>>, vector<1x16x512xf32>,
    %c2_i32 = arith.constant 2 : i32
    %92 = arith.index_cast %c2_i32 : i32 to index
    %c0_44 = arith.constant 0 : index
    %c0_45 = arith.constant 0 : index
    %93 = vector.load %arg17[%92, %c0_44, %c0_45] : memref<8x16x512xf32, #tpu.memory_space<vmem>>, vector<1x16x512xf32>
    %94 = vector.shape_cast %93 : vector<1x16x512xf32> to vector<16x512xf32>
    %cst_46 = arith.constant dense<0.000000e+00> : vector<16x512xf32>
    %95 = tpu.matmul %84, %9, %cst_46 {dimension_numbers = #tpu.dot_dimension_numbers<[1], [0], [0], [1], [0, 0, 1, 1], [], []>} : vector<16x128xf32>, vector<128x512xf32>, vector<16x512xf32> -> vector<16x512xf32>
    %96 = arith.addf %94, %95 : vector<16x512xf32>
    %97 = vector.extract_strided_slice %96 {offsets = [0, 0], sizes = [16, 128], strides = [1, 1]} : vector<16x512xf32> to vector<16x128xf32>
    %98 = arith.negf %97 : vector<16x128xf32>
    %99 = math.exp %98 : vector<16x128xf32>
    %cst_47 = arith.constant 1.000000e+00 : f32
    %100 = vector.broadcast %cst_47 : f32 to vector<16x128xf32>
    %101 = arith.addf %100, %99 : vector<16x128xf32>
    %102 = arith.divf %100, %101 : vector<16x128xf32>
    %103 = vector.extract_strided_slice %96 {offsets = [0, 128], sizes = [16, 128], strides = [1, 1]} : vector<16x512xf32> to vector<16x128xf32>
    %104 = arith.negf %103 : vector<16x128xf32>
    %105 = math.exp %104 : vector<16x128xf32>
    %cst_48 = arith.constant 1.000000e+00 : f32
    %106 = vector.broadcast %cst_48 : f32 to vector<16x128xf32>
    %107 = arith.addf %106, %105 : vector<16x128xf32>
    %108 = arith.divf %106, %107 : vector<16x128xf32>
    %109 = vector.extract_strided_slice %96 {offsets = [0, 256], sizes = [16, 128], strides = [1, 1]} : vector<16x512xf32> to vector<16x128xf32>
    %110 = math.tanh %109 : vector<16x128xf32>
    %111 = vector.extract_strided_slice %96 {offsets = [0, 384], sizes = [16, 128], strides = [1, 1]} : vector<16x512xf32> to vector<16x128xf32>
    %112 = arith.negf %111 : vector<16x128xf32>
    %113 = math.exp %112 : vector<16x128xf32>
    %cst_49 = arith.constant 1.000000e+00 : f32
    %114 = vector.broadcast %cst_49 : f32 to vector<16x128xf32>
    %115 = arith.addf %114, %113 : vector<16x128xf32>
    %116 = arith.divf %114, %115 : vector<16x128xf32>
    %117 = arith.mulf %108, %82 : vector<16x128xf32>
    %118 = arith.mulf %102, %110 : vector<16x128xf32>
    %119 = arith.addf %117, %118 : vector<16x128xf32>
    %120 = math.tanh %119 : vector<16x128xf32>
    %121 = arith.mulf %116, %120 : vector<16x128xf32>
    %cst_50 = arith.constant dense<0.000000e+00> : vector<16x512xf32>
    %122 = tpu.matmul %121, %10, %cst_50 {dimension_numbers = #tpu.dot_dimension_numbers<[1], [0], [0], [1], [0, 0, 1, 1], [], []>} : vector<16x128xf32>, vector<128x512xf32>, vector<16x512xf32> -> vector<16x512xf32>
    %123 = vector.broadcast %11 : vector<1x512xf32> to vector<16x512xf32>
    %124 = arith.addf %122, %123 : vector<16x512xf32>
    %125 = arith.index_cast %c2_i32 : i32 to index
    %c0_51 = arith.constant 0 : index
    %c0_52 = arith.constant 0 : index
    %126 = vector.load %arg17[%125, %c0_51, %c0_52] : memref<8x16x512xf32, #tpu.memory_space<vmem>>, vector<1x16x512xf32>
    %127 = vector.shape_cast %126 : vector<1x16x512xf32> to vector<16x512xf32>
    %128 = vector.shape_cast %124 : vector<16x512xf32> to vector<1x16x512xf32>
    tpu.vector_store %arg17[%125, %c0_51, %c0_52], %128 {strides = array<i32>} : memref<8x16x512xf32, #tpu.memory_space<vmem>>, vector<1x16x512xf32>,
    %c3_i32 = arith.constant 3 : i32
    %129 = arith.index_cast %c3_i32 : i32 to index
    %c0_53 = arith.constant 0 : index
    %c0_54 = arith.constant 0 : index
    %130 = vector.load %arg17[%129, %c0_53, %c0_54] : memref<8x16x512xf32, #tpu.memory_space<vmem>>, vector<1x16x512xf32>
    %131 = vector.shape_cast %130 : vector<1x16x512xf32> to vector<16x512xf32>
    %cst_55 = arith.constant dense<0.000000e+00> : vector<16x512xf32>
    %132 = tpu.matmul %121, %9, %cst_55 {dimension_numbers = #tpu.dot_dimension_numbers<[1], [0], [0], [1], [0, 0, 1, 1], [], []>} : vector<16x128xf32>, vector<128x512xf32>, vector<16x512xf32> -> vector<16x512xf32>
    %133 = arith.addf %131, %132 : vector<16x512xf32>
    %134 = vector.extract_strided_slice %133 {offsets = [0, 0], sizes = [16, 128], strides = [1, 1]} : vector<16x512xf32> to vector<16x128xf32>
    %135 = arith.negf %134 : vector<16x128xf32>
    %136 = math.exp %135 : vector<16x128xf32>
    %cst_56 = arith.constant 1.000000e+00 : f32
    %137 = vector.broadcast %cst_56 : f32 to vector<16x128xf32>
    %138 = arith.addf %137, %136 : vector<16x128xf32>
    %139 = arith.divf %137, %138 : vector<16x128xf32>
    %140 = vector.extract_strided_slice %133 {offsets = [0, 128], sizes = [16, 128], strides = [1, 1]} : vector<16x512xf32> to vector<16x128xf32>
    %141 = arith.negf %140 : vector<16x128xf32>
    %142 = math.exp %141 : vector<16x128xf32>
    %cst_57 = arith.constant 1.000000e+00 : f32
    %143 = vector.broadcast %cst_57 : f32 to vector<16x128xf32>
    %144 = arith.addf %143, %142 : vector<16x128xf32>
    %145 = arith.divf %143, %144 : vector<16x128xf32>
    %146 = vector.extract_strided_slice %133 {offsets = [0, 256], sizes = [16, 128], strides = [1, 1]} : vector<16x512xf32> to vector<16x128xf32>
    %147 = math.tanh %146 : vector<16x128xf32>
    %148 = vector.extract_strided_slice %133 {offsets = [0, 384], sizes = [16, 128], strides = [1, 1]} : vector<16x512xf32> to vector<16x128xf32>
    %149 = arith.negf %148 : vector<16x128xf32>
    %150 = math.exp %149 : vector<16x128xf32>
    %cst_58 = arith.constant 1.000000e+00 : f32
    %151 = vector.broadcast %cst_58 : f32 to vector<16x128xf32>
    %152 = arith.addf %151, %150 : vector<16x128xf32>
    %153 = arith.divf %151, %152 : vector<16x128xf32>
    %154 = arith.mulf %145, %119 : vector<16x128xf32>
    %155 = arith.mulf %139, %147 : vector<16x128xf32>
    %156 = arith.addf %154, %155 : vector<16x128xf32>
    %157 = math.tanh %156 : vector<16x128xf32>
    %158 = arith.mulf %153, %157 : vector<16x128xf32>
    %cst_59 = arith.constant dense<0.000000e+00> : vector<16x512xf32>
    %159 = tpu.matmul %158, %10, %cst_59 {dimension_numbers = #tpu.dot_dimension_numbers<[1], [0], [0], [1], [0, 0, 1, 1], [], []>} : vector<16x128xf32>, vector<128x512xf32>, vector<16x512xf32> -> vector<16x512xf32>
    %160 = vector.broadcast %11 : vector<1x512xf32> to vector<16x512xf32>
    %161 = arith.addf %159, %160 : vector<16x512xf32>
    %162 = arith.index_cast %c3_i32 : i32 to index
    %c0_60 = arith.constant 0 : index
    %c0_61 = arith.constant 0 : index
    %163 = vector.load %arg17[%162, %c0_60, %c0_61] : memref<8x16x512xf32, #tpu.memory_space<vmem>>, vector<1x16x512xf32>
    %164 = vector.shape_cast %163 : vector<1x16x512xf32> to vector<16x512xf32>
    %165 = vector.shape_cast %161 : vector<16x512xf32> to vector<1x16x512xf32>
    tpu.vector_store %arg17[%162, %c0_60, %c0_61], %165 {strides = array<i32>} : memref<8x16x512xf32, #tpu.memory_space<vmem>>, vector<1x16x512xf32>,
    %c4_i32 = arith.constant 4 : i32
    %166 = arith.index_cast %c4_i32 : i32 to index
    %c0_62 = arith.constant 0 : index
    %c0_63 = arith.constant 0 : index
    %167 = vector.load %arg17[%166, %c0_62, %c0_63] : memref<8x16x512xf32, #tpu.memory_space<vmem>>, vector<1x16x512xf32>
    %168 = vector.shape_cast %167 : vector<1x16x512xf32> to vector<16x512xf32>
    %cst_64 = arith.constant dense<0.000000e+00> : vector<16x512xf32>
    %169 = tpu.matmul %158, %9, %cst_64 {dimension_numbers = #tpu.dot_dimension_numbers<[1], [0], [0], [1], [0, 0, 1, 1], [], []>} : vector<16x128xf32>, vector<128x512xf32>, vector<16x512xf32> -> vector<16x512xf32>
    %170 = arith.addf %168, %169 : vector<16x512xf32>
    %171 = vector.extract_strided_slice %170 {offsets = [0, 0], sizes = [16, 128], strides = [1, 1]} : vector<16x512xf32> to vector<16x128xf32>
    %172 = arith.negf %171 : vector<16x128xf32>
    %173 = math.exp %172 : vector<16x128xf32>
    %cst_65 = arith.constant 1.000000e+00 : f32
    %174 = vector.broadcast %cst_65 : f32 to vector<16x128xf32>
    %175 = arith.addf %174, %173 : vector<16x128xf32>
    %176 = arith.divf %174, %175 : vector<16x128xf32>
    %177 = vector.extract_strided_slice %170 {offsets = [0, 128], sizes = [16, 128], strides = [1, 1]} : vector<16x512xf32> to vector<16x128xf32>
    %178 = arith.negf %177 : vector<16x128xf32>
    %179 = math.exp %178 : vector<16x128xf32>
    %cst_66 = arith.constant 1.000000e+00 : f32
    %180 = vector.broadcast %cst_66 : f32 to vector<16x128xf32>
    %181 = arith.addf %180, %179 : vector<16x128xf32>
    %182 = arith.divf %180, %181 : vector<16x128xf32>
    %183 = vector.extract_strided_slice %170 {offsets = [0, 256], sizes = [16, 128], strides = [1, 1]} : vector<16x512xf32> to vector<16x128xf32>
    %184 = math.tanh %183 : vector<16x128xf32>
    %185 = vector.extract_strided_slice %170 {offsets = [0, 384], sizes = [16, 128], strides = [1, 1]} : vector<16x512xf32> to vector<16x128xf32>
    %186 = arith.negf %185 : vector<16x128xf32>
    %187 = math.exp %186 : vector<16x128xf32>
    %cst_67 = arith.constant 1.000000e+00 : f32
    %188 = vector.broadcast %cst_67 : f32 to vector<16x128xf32>
    %189 = arith.addf %188, %187 : vector<16x128xf32>
    %190 = arith.divf %188, %189 : vector<16x128xf32>
    %191 = arith.mulf %182, %156 : vector<16x128xf32>
    %192 = arith.mulf %176, %184 : vector<16x128xf32>
    %193 = arith.addf %191, %192 : vector<16x128xf32>
    %194 = math.tanh %193 : vector<16x128xf32>
    %195 = arith.mulf %190, %194 : vector<16x128xf32>
    %cst_68 = arith.constant dense<0.000000e+00> : vector<16x512xf32>
    %196 = tpu.matmul %195, %10, %cst_68 {dimension_numbers = #tpu.dot_dimension_numbers<[1], [0], [0], [1], [0, 0, 1, 1], [], []>} : vector<16x128xf32>, vector<128x512xf32>, vector<16x512xf32> -> vector<16x512xf32>
    %197 = vector.broadcast %11 : vector<1x512xf32> to vector<16x512xf32>
    %198 = arith.addf %196, %197 : vector<16x512xf32>
    %199 = arith.index_cast %c4_i32 : i32 to index
    %c0_69 = arith.constant 0 : index
    %c0_70 = arith.constant 0 : index
    %200 = vector.load %arg17[%199, %c0_69, %c0_70] : memref<8x16x512xf32, #tpu.memory_space<vmem>>, vector<1x16x512xf32>
    %201 = vector.shape_cast %200 : vector<1x16x512xf32> to vector<16x512xf32>
    %202 = vector.shape_cast %198 : vector<16x512xf32> to vector<1x16x512xf32>
    tpu.vector_store %arg17[%199, %c0_69, %c0_70], %202 {strides = array<i32>} : memref<8x16x512xf32, #tpu.memory_space<vmem>>, vector<1x16x512xf32>,
    %c5_i32 = arith.constant 5 : i32
    %203 = arith.index_cast %c5_i32 : i32 to index
    %c0_71 = arith.constant 0 : index
    %c0_72 = arith.constant 0 : index
    %204 = vector.load %arg17[%203, %c0_71, %c0_72] : memref<8x16x512xf32, #tpu.memory_space<vmem>>, vector<1x16x512xf32>
    %205 = vector.shape_cast %204 : vector<1x16x512xf32> to vector<16x512xf32>
    %cst_73 = arith.constant dense<0.000000e+00> : vector<16x512xf32>
    %206 = tpu.matmul %195, %9, %cst_73 {dimension_numbers = #tpu.dot_dimension_numbers<[1], [0], [0], [1], [0, 0, 1, 1], [], []>} : vector<16x128xf32>, vector<128x512xf32>, vector<16x512xf32> -> vector<16x512xf32>
    %207 = arith.addf %205, %206 : vector<16x512xf32>
    %208 = vector.extract_strided_slice %207 {offsets = [0, 0], sizes = [16, 128], strides = [1, 1]} : vector<16x512xf32> to vector<16x128xf32>
    %209 = arith.negf %208 : vector<16x128xf32>
    %210 = math.exp %209 : vector<16x128xf32>
    %cst_74 = arith.constant 1.000000e+00 : f32
    %211 = vector.broadcast %cst_74 : f32 to vector<16x128xf32>
    %212 = arith.addf %211, %210 : vector<16x128xf32>
    %213 = arith.divf %211, %212 : vector<16x128xf32>
    %214 = vector.extract_strided_slice %207 {offsets = [0, 128], sizes = [16, 128], strides = [1, 1]} : vector<16x512xf32> to vector<16x128xf32>
    %215 = arith.negf %214 : vector<16x128xf32>
    %216 = math.exp %215 : vector<16x128xf32>
    %cst_75 = arith.constant 1.000000e+00 : f32
    %217 = vector.broadcast %cst_75 : f32 to vector<16x128xf32>
    %218 = arith.addf %217, %216 : vector<16x128xf32>
    %219 = arith.divf %217, %218 : vector<16x128xf32>
    %220 = vector.extract_strided_slice %207 {offsets = [0, 256], sizes = [16, 128], strides = [1, 1]} : vector<16x512xf32> to vector<16x128xf32>
    %221 = math.tanh %220 : vector<16x128xf32>
    %222 = vector.extract_strided_slice %207 {offsets = [0, 384], sizes = [16, 128], strides = [1, 1]} : vector<16x512xf32> to vector<16x128xf32>
    %223 = arith.negf %222 : vector<16x128xf32>
    %224 = math.exp %223 : vector<16x128xf32>
    %cst_76 = arith.constant 1.000000e+00 : f32
    %225 = vector.broadcast %cst_76 : f32 to vector<16x128xf32>
    %226 = arith.addf %225, %224 : vector<16x128xf32>
    %227 = arith.divf %225, %226 : vector<16x128xf32>
    %228 = arith.mulf %219, %193 : vector<16x128xf32>
    %229 = arith.mulf %213, %221 : vector<16x128xf32>
    %230 = arith.addf %228, %229 : vector<16x128xf32>
    %231 = math.tanh %230 : vector<16x128xf32>
    %232 = arith.mulf %227, %231 : vector<16x128xf32>
    %cst_77 = arith.constant dense<0.000000e+00> : vector<16x512xf32>
    %233 = tpu.matmul %232, %10, %cst_77 {dimension_numbers = #tpu.dot_dimension_numbers<[1], [0], [0], [1], [0, 0, 1, 1], [], []>} : vector<16x128xf32>, vector<128x512xf32>, vector<16x512xf32> -> vector<16x512xf32>
    %234 = vector.broadcast %11 : vector<1x512xf32> to vector<16x512xf32>
    %235 = arith.addf %233, %234 : vector<16x512xf32>
    %236 = arith.index_cast %c5_i32 : i32 to index
    %c0_78 = arith.constant 0 : index
    %c0_79 = arith.constant 0 : index
    %237 = vector.load %arg17[%236, %c0_78, %c0_79] : memref<8x16x512xf32, #tpu.memory_space<vmem>>, vector<1x16x512xf32>
    %238 = vector.shape_cast %237 : vector<1x16x512xf32> to vector<16x512xf32>
    %239 = vector.shape_cast %235 : vector<16x512xf32> to vector<1x16x512xf32>
    tpu.vector_store %arg17[%236, %c0_78, %c0_79], %239 {strides = array<i32>} : memref<8x16x512xf32, #tpu.memory_space<vmem>>, vector<1x16x512xf32>,
    %c6_i32 = arith.constant 6 : i32
    %240 = arith.index_cast %c6_i32 : i32 to index
    %c0_80 = arith.constant 0 : index
    %c0_81 = arith.constant 0 : index
    %241 = vector.load %arg17[%240, %c0_80, %c0_81] : memref<8x16x512xf32, #tpu.memory_space<vmem>>, vector<1x16x512xf32>
    %242 = vector.shape_cast %241 : vector<1x16x512xf32> to vector<16x512xf32>
    %cst_82 = arith.constant dense<0.000000e+00> : vector<16x512xf32>
    %243 = tpu.matmul %232, %9, %cst_82 {dimension_numbers = #tpu.dot_dimension_numbers<[1], [0], [0], [1], [0, 0, 1, 1], [], []>} : vector<16x128xf32>, vector<128x512xf32>, vector<16x512xf32> -> vector<16x512xf32>
    %244 = arith.addf %242, %243 : vector<16x512xf32>
    %245 = vector.extract_strided_slice %244 {offsets = [0, 0], sizes = [16, 128], strides = [1, 1]} : vector<16x512xf32> to vector<16x128xf32>
    %246 = arith.negf %245 : vector<16x128xf32>
    %247 = math.exp %246 : vector<16x128xf32>
    %cst_83 = arith.constant 1.000000e+00 : f32
    %248 = vector.broadcast %cst_83 : f32 to vector<16x128xf32>
    %249 = arith.addf %248, %247 : vector<16x128xf32>
    %250 = arith.divf %248, %249 : vector<16x128xf32>
    %251 = vector.extract_strided_slice %244 {offsets = [0, 128], sizes = [16, 128], strides = [1, 1]} : vector<16x512xf32> to vector<16x128xf32>
    %252 = arith.negf %251 : vector<16x128xf32>
    %253 = math.exp %252 : vector<16x128xf32>
    %cst_84 = arith.constant 1.000000e+00 : f32
    %254 = vector.broadcast %cst_84 : f32 to vector<16x128xf32>
    %255 = arith.addf %254, %253 : vector<16x128xf32>
    %256 = arith.divf %254, %255 : vector<16x128xf32>
    %257 = vector.extract_strided_slice %244 {offsets = [0, 256], sizes = [16, 128], strides = [1, 1]} : vector<16x512xf32> to vector<16x128xf32>
    %258 = math.tanh %257 : vector<16x128xf32>
    %259 = vector.extract_strided_slice %244 {offsets = [0, 384], sizes = [16, 128], strides = [1, 1]} : vector<16x512xf32> to vector<16x128xf32>
    %260 = arith.negf %259 : vector<16x128xf32>
    %261 = math.exp %260 : vector<16x128xf32>
    %cst_85 = arith.constant 1.000000e+00 : f32
    %262 = vector.broadcast %cst_85 : f32 to vector<16x128xf32>
    %263 = arith.addf %262, %261 : vector<16x128xf32>
    %264 = arith.divf %262, %263 : vector<16x128xf32>
    %265 = arith.mulf %256, %230 : vector<16x128xf32>
    %266 = arith.mulf %250, %258 : vector<16x128xf32>
    %267 = arith.addf %265, %266 : vector<16x128xf32>
    %268 = math.tanh %267 : vector<16x128xf32>
    %269 = arith.mulf %264, %268 : vector<16x128xf32>
    %cst_86 = arith.constant dense<0.000000e+00> : vector<16x512xf32>
    %270 = tpu.matmul %269, %10, %cst_86 {dimension_numbers = #tpu.dot_dimension_numbers<[1], [0], [0], [1], [0, 0, 1, 1], [], []>} : vector<16x128xf32>, vector<128x512xf32>, vector<16x512xf32> -> vector<16x512xf32>
    %271 = vector.broadcast %11 : vector<1x512xf32> to vector<16x512xf32>
    %272 = arith.addf %270, %271 : vector<16x512xf32>
    %273 = arith.index_cast %c6_i32 : i32 to index
    %c0_87 = arith.constant 0 : index
    %c0_88 = arith.constant 0 : index
    %274 = vector.load %arg17[%273, %c0_87, %c0_88] : memref<8x16x512xf32, #tpu.memory_space<vmem>>, vector<1x16x512xf32>
    %275 = vector.shape_cast %274 : vector<1x16x512xf32> to vector<16x512xf32>
    %276 = vector.shape_cast %272 : vector<16x512xf32> to vector<1x16x512xf32>
    tpu.vector_store %arg17[%273, %c0_87, %c0_88], %276 {strides = array<i32>} : memref<8x16x512xf32, #tpu.memory_space<vmem>>, vector<1x16x512xf32>,
    %c7_i32 = arith.constant 7 : i32
    %277 = arith.index_cast %c7_i32 : i32 to index
    %c0_89 = arith.constant 0 : index
    %c0_90 = arith.constant 0 : index
    %278 = vector.load %arg17[%277, %c0_89, %c0_90] : memref<8x16x512xf32, #tpu.memory_space<vmem>>, vector<1x16x512xf32>
    %279 = vector.shape_cast %278 : vector<1x16x512xf32> to vector<16x512xf32>
    %cst_91 = arith.constant dense<0.000000e+00> : vector<16x512xf32>
    %280 = tpu.matmul %269, %9, %cst_91 {dimension_numbers = #tpu.dot_dimension_numbers<[1], [0], [0], [1], [0, 0, 1, 1], [], []>} : vector<16x128xf32>, vector<128x512xf32>, vector<16x512xf32> -> vector<16x512xf32>
    %281 = arith.addf %279, %280 : vector<16x512xf32>
    %282 = vector.extract_strided_slice %281 {offsets = [0, 0], sizes = [16, 128], strides = [1, 1]} : vector<16x512xf32> to vector<16x128xf32>
    %283 = arith.negf %282 : vector<16x128xf32>
    %284 = math.exp %283 : vector<16x128xf32>
    %cst_92 = arith.constant 1.000000e+00 : f32
    %285 = vector.broadcast %cst_92 : f32 to vector<16x128xf32>
    %286 = arith.addf %285, %284 : vector<16x128xf32>
    %287 = arith.divf %285, %286 : vector<16x128xf32>
    %288 = vector.extract_strided_slice %281 {offsets = [0, 128], sizes = [16, 128], strides = [1, 1]} : vector<16x512xf32> to vector<16x128xf32>
    %289 = arith.negf %288 : vector<16x128xf32>
    %290 = math.exp %289 : vector<16x128xf32>
    %cst_93 = arith.constant 1.000000e+00 : f32
    %291 = vector.broadcast %cst_93 : f32 to vector<16x128xf32>
    %292 = arith.addf %291, %290 : vector<16x128xf32>
    %293 = arith.divf %291, %292 : vector<16x128xf32>
    %294 = vector.extract_strided_slice %281 {offsets = [0, 256], sizes = [16, 128], strides = [1, 1]} : vector<16x512xf32> to vector<16x128xf32>
    %295 = math.tanh %294 : vector<16x128xf32>
    %296 = vector.extract_strided_slice %281 {offsets = [0, 384], sizes = [16, 128], strides = [1, 1]} : vector<16x512xf32> to vector<16x128xf32>
    %297 = arith.negf %296 : vector<16x128xf32>
    %298 = math.exp %297 : vector<16x128xf32>
    %cst_94 = arith.constant 1.000000e+00 : f32
    %299 = vector.broadcast %cst_94 : f32 to vector<16x128xf32>
    %300 = arith.addf %299, %298 : vector<16x128xf32>
    %301 = arith.divf %299, %300 : vector<16x128xf32>
    %302 = arith.mulf %293, %267 : vector<16x128xf32>
    %303 = arith.mulf %287, %295 : vector<16x128xf32>
    %304 = arith.addf %302, %303 : vector<16x128xf32>
    %305 = math.tanh %304 : vector<16x128xf32>
    %306 = arith.mulf %301, %305 : vector<16x128xf32>
    %cst_95 = arith.constant dense<0.000000e+00> : vector<16x512xf32>
    %307 = tpu.matmul %306, %10, %cst_95 {dimension_numbers = #tpu.dot_dimension_numbers<[1], [0], [0], [1], [0, 0, 1, 1], [], []>} : vector<16x128xf32>, vector<128x512xf32>, vector<16x512xf32> -> vector<16x512xf32>
    %308 = vector.broadcast %11 : vector<1x512xf32> to vector<16x512xf32>
    %309 = arith.addf %307, %308 : vector<16x512xf32>
    %310 = arith.index_cast %c7_i32 : i32 to index
    %c0_96 = arith.constant 0 : index
    %c0_97 = arith.constant 0 : index
    %311 = vector.load %arg17[%310, %c0_96, %c0_97] : memref<8x16x512xf32, #tpu.memory_space<vmem>>, vector<1x16x512xf32>
    %312 = vector.shape_cast %311 : vector<1x16x512xf32> to vector<16x512xf32>
    %313 = vector.shape_cast %309 : vector<16x512xf32> to vector<1x16x512xf32>
    tpu.vector_store %arg17[%310, %c0_96, %c0_97], %313 {strides = array<i32>} : memref<8x16x512xf32, #tpu.memory_space<vmem>>, vector<1x16x512xf32>,
    %c8_i32 = arith.constant 8 : i32
    %c0_i32_98 = arith.constant 0 : i32
    %314 = arith.index_cast %c0_i32_98 : i32 to index
    %c0_99 = arith.constant 0 : index
    %c0_100 = arith.constant 0 : index
    %315 = vector.load %arg17[%314, %c0_99, %c0_100] : memref<8x16x512xf32, #tpu.memory_space<vmem>>, vector<1x16x512xf32>
    %316 = vector.shape_cast %315 : vector<1x16x512xf32> to vector<16x512xf32>
    %cst_101 = arith.constant dense<0.000000e+00> : vector<16x512xf32>
    %317 = tpu.matmul %17, %12, %cst_101 {dimension_numbers = #tpu.dot_dimension_numbers<[1], [0], [0], [1], [0, 0, 1, 1], [], []>} : vector<16x128xf32>, vector<128x512xf32>, vector<16x512xf32> -> vector<16x512xf32>
    %318 = arith.addf %316, %317 : vector<16x512xf32>
    %319 = vector.extract_strided_slice %318 {offsets = [0, 0], sizes = [16, 128], strides = [1, 1]} : vector<16x512xf32> to vector<16x128xf32>
    %320 = arith.negf %319 : vector<16x128xf32>
    %321 = math.exp %320 : vector<16x128xf32>
    %cst_102 = arith.constant 1.000000e+00 : f32
    %322 = vector.broadcast %cst_102 : f32 to vector<16x128xf32>
    %323 = arith.addf %322, %321 : vector<16x128xf32>
    %324 = arith.divf %322, %323 : vector<16x128xf32>
    %325 = vector.extract_strided_slice %318 {offsets = [0, 128], sizes = [16, 128], strides = [1, 1]} : vector<16x512xf32> to vector<16x128xf32>
    %326 = arith.negf %325 : vector<16x128xf32>
    %327 = math.exp %326 : vector<16x128xf32>
    %cst_103 = arith.constant 1.000000e+00 : f32
    %328 = vector.broadcast %cst_103 : f32 to vector<16x128xf32>
    %329 = arith.addf %328, %327 : vector<16x128xf32>
    %330 = arith.divf %328, %329 : vector<16x128xf32>
    %331 = vector.extract_strided_slice %318 {offsets = [0, 256], sizes = [16, 128], strides = [1, 1]} : vector<16x512xf32> to vector<16x128xf32>
    %332 = math.tanh %331 : vector<16x128xf32>
    %333 = vector.extract_strided_slice %318 {offsets = [0, 384], sizes = [16, 128], strides = [1, 1]} : vector<16x512xf32> to vector<16x128xf32>
    %334 = arith.negf %333 : vector<16x128xf32>
    %335 = math.exp %334 : vector<16x128xf32>
    %cst_104 = arith.constant 1.000000e+00 : f32
    %336 = vector.broadcast %cst_104 : f32 to vector<16x128xf32>
    %337 = arith.addf %336, %335 : vector<16x128xf32>
    %338 = arith.divf %336, %337 : vector<16x128xf32>
    %339 = arith.mulf %330, %17 : vector<16x128xf32>
    %340 = arith.mulf %324, %332 : vector<16x128xf32>
    %341 = arith.addf %339, %340 : vector<16x128xf32>
    %342 = math.tanh %341 : vector<16x128xf32>
    %343 = arith.mulf %338, %342 : vector<16x128xf32>
    %344 = arith.index_cast %c0_i32_98 : i32 to index
    %c0_105 = arith.constant 0 : index
    %c0_106 = arith.constant 0 : index
    %345 = vector.load %arg18[%344, %c0_105, %c0_106] : memref<8x16x128xf32, #tpu.memory_space<vmem>>, vector<1x16x128xf32>
    %346 = vector.shape_cast %345 : vector<1x16x128xf32> to vector<16x128xf32>
    %347 = vector.shape_cast %343 : vector<16x128xf32> to vector<1x16x128xf32>
    tpu.vector_store %arg18[%344, %c0_105, %c0_106], %347 {strides = array<i32>} : memref<8x16x128xf32, #tpu.memory_space<vmem>>, vector<1x16x128xf32>,
    %cst_107 = arith.constant dense<0.000000e+00> : vector<16x128xf32>
    %348 = tpu.matmul %343, %13, %cst_107 {dimension_numbers = #tpu.dot_dimension_numbers<[1], [0], [0], [1], [0, 0, 1, 1], [], []>} : vector<16x128xf32>, vector<128x128xf32>, vector<16x128xf32> -> vector<16x128xf32>
    %349 = vector.broadcast %14 : vector<1x128xf32> to vector<16x128xf32>
    %350 = arith.addf %348, %349 : vector<16x128xf32>
    %351 = math.tanh %350 : vector<16x128xf32>
    %352 = vector.broadcast %15 : vector<1x128xf32> to vector<16x128xf32>
    %353 = arith.mulf %351, %352 : vector<16x128xf32>
    %cst_108 = arith.constant dense<0.000000e+00> : vector<16xf32>
    %354 = vector.multi_reduction <add>, %353, %cst_108 [1] : vector<16x128xf32> to vector<16xf32>
    %355 = vector.shape_cast %354 : vector<16xf32> to vector<16x1xf32>
    %356 = vector.broadcast %16 : vector<1x1xf32> to vector<16x1xf32>
    %357 = arith.addf %355, %356 : vector<16x1xf32>
    %358 = arith.index_cast %c0_i32_98 : i32 to index
    %c0_109 = arith.constant 0 : index
    %c0_110 = arith.constant 0 : index
    %359 = vector.load %arg19[%358, %c0_109, %c0_110] : memref<8x16x1xf32, #tpu.memory_space<vmem>>, vector<1x16x1xf32>
    %360 = vector.shape_cast %359 : vector<1x16x1xf32> to vector<16x1xf32>
    %361 = vector.shape_cast %357 : vector<16x1xf32> to vector<1x16x1xf32>
    tpu.vector_store %arg19[%358, %c0_109, %c0_110], %361 {strides = array<i32>} : memref<8x16x1xf32, #tpu.memory_space<vmem>>, vector<1x16x1xf32>,
    %c1_i32_111 = arith.constant 1 : i32
    %362 = arith.index_cast %c1_i32_111 : i32 to index
    %c0_112 = arith.constant 0 : index
    %c0_113 = arith.constant 0 : index
    %363 = vector.load %arg17[%362, %c0_112, %c0_113] : memref<8x16x512xf32, #tpu.memory_space<vmem>>, vector<1x16x512xf32>
    %364 = vector.shape_cast %363 : vector<1x16x512xf32> to vector<16x512xf32>
    %cst_114 = arith.constant dense<0.000000e+00> : vector<16x512xf32>
    %365 = tpu.matmul %343, %12, %cst_114 {dimension_numbers = #tpu.dot_dimension_numbers<[1], [0], [0], [1], [0, 0, 1, 1], [], []>} : vector<16x128xf32>, vector<128x512xf32>, vector<16x512xf32> -> vector<16x512xf32>
    %366 = arith.addf %364, %365 : vector<16x512xf32>
    %367 = vector.extract_strided_slice %366 {offsets = [0, 0], sizes = [16, 128], strides = [1, 1]} : vector<16x512xf32> to vector<16x128xf32>
    %368 = arith.negf %367 : vector<16x128xf32>
    %369 = math.exp %368 : vector<16x128xf32>
    %cst_115 = arith.constant 1.000000e+00 : f32
    %370 = vector.broadcast %cst_115 : f32 to vector<16x128xf32>
    %371 = arith.addf %370, %369 : vector<16x128xf32>
    %372 = arith.divf %370, %371 : vector<16x128xf32>
    %373 = vector.extract_strided_slice %366 {offsets = [0, 128], sizes = [16, 128], strides = [1, 1]} : vector<16x512xf32> to vector<16x128xf32>
    %374 = arith.negf %373 : vector<16x128xf32>
    %375 = math.exp %374 : vector<16x128xf32>
    %cst_116 = arith.constant 1.000000e+00 : f32
    %376 = vector.broadcast %cst_116 : f32 to vector<16x128xf32>
    %377 = arith.addf %376, %375 : vector<16x128xf32>
    %378 = arith.divf %376, %377 : vector<16x128xf32>
    %379 = vector.extract_strided_slice %366 {offsets = [0, 256], sizes = [16, 128], strides = [1, 1]} : vector<16x512xf32> to vector<16x128xf32>
    %380 = math.tanh %379 : vector<16x128xf32>
    %381 = vector.extract_strided_slice %366 {offsets = [0, 384], sizes = [16, 128], strides = [1, 1]} : vector<16x512xf32> to vector<16x128xf32>
    %382 = arith.negf %381 : vector<16x128xf32>
    %383 = math.exp %382 : vector<16x128xf32>
    %cst_117 = arith.constant 1.000000e+00 : f32
    %384 = vector.broadcast %cst_117 : f32 to vector<16x128xf32>
    %385 = arith.addf %384, %383 : vector<16x128xf32>
    %386 = arith.divf %384, %385 : vector<16x128xf32>
    %387 = arith.mulf %378, %341 : vector<16x128xf32>
    %388 = arith.mulf %372, %380 : vector<16x128xf32>
    %389 = arith.addf %387, %388 : vector<16x128xf32>
    %390 = math.tanh %389 : vector<16x128xf32>
    %391 = arith.mulf %386, %390 : vector<16x128xf32>
    %392 = arith.index_cast %c1_i32_111 : i32 to index
    %c0_118 = arith.constant 0 : index
    %c0_119 = arith.constant 0 : index
    %393 = vector.load %arg18[%392, %c0_118, %c0_119] : memref<8x16x128xf32, #tpu.memory_space<vmem>>, vector<1x16x128xf32>
    %394 = vector.shape_cast %393 : vector<1x16x128xf32> to vector<16x128xf32>
    %395 = vector.shape_cast %391 : vector<16x128xf32> to vector<1x16x128xf32>
    tpu.vector_store %arg18[%392, %c0_118, %c0_119], %395 {strides = array<i32>} : memref<8x16x128xf32, #tpu.memory_space<vmem>>, vector<1x16x128xf32>,
    %cst_120 = arith.constant dense<0.000000e+00> : vector<16x128xf32>
    %396 = tpu.matmul %391, %13, %cst_120 {dimension_numbers = #tpu.dot_dimension_numbers<[1], [0], [0], [1], [0, 0, 1, 1], [], []>} : vector<16x128xf32>, vector<128x128xf32>, vector<16x128xf32> -> vector<16x128xf32>
    %397 = vector.broadcast %14 : vector<1x128xf32> to vector<16x128xf32>
    %398 = arith.addf %396, %397 : vector<16x128xf32>
    %399 = math.tanh %398 : vector<16x128xf32>
    %400 = vector.broadcast %15 : vector<1x128xf32> to vector<16x128xf32>
    %401 = arith.mulf %399, %400 : vector<16x128xf32>
    %cst_121 = arith.constant dense<0.000000e+00> : vector<16xf32>
    %402 = vector.multi_reduction <add>, %401, %cst_121 [1] : vector<16x128xf32> to vector<16xf32>
    %403 = vector.shape_cast %402 : vector<16xf32> to vector<16x1xf32>
    %404 = vector.broadcast %16 : vector<1x1xf32> to vector<16x1xf32>
    %405 = arith.addf %403, %404 : vector<16x1xf32>
    %406 = arith.index_cast %c1_i32_111 : i32 to index
    %c0_122 = arith.constant 0 : index
    %c0_123 = arith.constant 0 : index
    %407 = vector.load %arg19[%406, %c0_122, %c0_123] : memref<8x16x1xf32, #tpu.memory_space<vmem>>, vector<1x16x1xf32>
    %408 = vector.shape_cast %407 : vector<1x16x1xf32> to vector<16x1xf32>
    %409 = vector.shape_cast %405 : vector<16x1xf32> to vector<1x16x1xf32>
    tpu.vector_store %arg19[%406, %c0_122, %c0_123], %409 {strides = array<i32>} : memref<8x16x1xf32, #tpu.memory_space<vmem>>, vector<1x16x1xf32>,
    %c2_i32_124 = arith.constant 2 : i32
    %410 = arith.index_cast %c2_i32_124 : i32 to index
    %c0_125 = arith.constant 0 : index
    %c0_126 = arith.constant 0 : index
    %411 = vector.load %arg17[%410, %c0_125, %c0_126] : memref<8x16x512xf32, #tpu.memory_space<vmem>>, vector<1x16x512xf32>
    %412 = vector.shape_cast %411 : vector<1x16x512xf32> to vector<16x512xf32>
    %cst_127 = arith.constant dense<0.000000e+00> : vector<16x512xf32>
    %413 = tpu.matmul %391, %12, %cst_127 {dimension_numbers = #tpu.dot_dimension_numbers<[1], [0], [0], [1], [0, 0, 1, 1], [], []>} : vector<16x128xf32>, vector<128x512xf32>, vector<16x512xf32> -> vector<16x512xf32>
    %414 = arith.addf %412, %413 : vector<16x512xf32>
    %415 = vector.extract_strided_slice %414 {offsets = [0, 0], sizes = [16, 128], strides = [1, 1]} : vector<16x512xf32> to vector<16x128xf32>
    %416 = arith.negf %415 : vector<16x128xf32>
    %417 = math.exp %416 : vector<16x128xf32>
    %cst_128 = arith.constant 1.000000e+00 : f32
    %418 = vector.broadcast %cst_128 : f32 to vector<16x128xf32>
    %419 = arith.addf %418, %417 : vector<16x128xf32>
    %420 = arith.divf %418, %419 : vector<16x128xf32>
    %421 = vector.extract_strided_slice %414 {offsets = [0, 128], sizes = [16, 128], strides = [1, 1]} : vector<16x512xf32> to vector<16x128xf32>
    %422 = arith.negf %421 : vector<16x128xf32>
    %423 = math.exp %422 : vector<16x128xf32>
    %cst_129 = arith.constant 1.000000e+00 : f32
    %424 = vector.broadcast %cst_129 : f32 to vector<16x128xf32>
    %425 = arith.addf %424, %423 : vector<16x128xf32>
    %426 = arith.divf %424, %425 : vector<16x128xf32>
    %427 = vector.extract_strided_slice %414 {offsets = [0, 256], sizes = [16, 128], strides = [1, 1]} : vector<16x512xf32> to vector<16x128xf32>
    %428 = math.tanh %427 : vector<16x128xf32>
    %429 = vector.extract_strided_slice %414 {offsets = [0, 384], sizes = [16, 128], strides = [1, 1]} : vector<16x512xf32> to vector<16x128xf32>
    %430 = arith.negf %429 : vector<16x128xf32>
    %431 = math.exp %430 : vector<16x128xf32>
    %cst_130 = arith.constant 1.000000e+00 : f32
    %432 = vector.broadcast %cst_130 : f32 to vector<16x128xf32>
    %433 = arith.addf %432, %431 : vector<16x128xf32>
    %434 = arith.divf %432, %433 : vector<16x128xf32>
    %435 = arith.mulf %426, %389 : vector<16x128xf32>
    %436 = arith.mulf %420, %428 : vector<16x128xf32>
    %437 = arith.addf %435, %436 : vector<16x128xf32>
    %438 = math.tanh %437 : vector<16x128xf32>
    %439 = arith.mulf %434, %438 : vector<16x128xf32>
    %440 = arith.index_cast %c2_i32_124 : i32 to index
    %c0_131 = arith.constant 0 : index
    %c0_132 = arith.constant 0 : index
    %441 = vector.load %arg18[%440, %c0_131, %c0_132] : memref<8x16x128xf32, #tpu.memory_space<vmem>>, vector<1x16x128xf32>
    %442 = vector.shape_cast %441 : vector<1x16x128xf32> to vector<16x128xf32>
    %443 = vector.shape_cast %439 : vector<16x128xf32> to vector<1x16x128xf32>
    tpu.vector_store %arg18[%440, %c0_131, %c0_132], %443 {strides = array<i32>} : memref<8x16x128xf32, #tpu.memory_space<vmem>>, vector<1x16x128xf32>,
    %cst_133 = arith.constant dense<0.000000e+00> : vector<16x128xf32>
    %444 = tpu.matmul %439, %13, %cst_133 {dimension_numbers = #tpu.dot_dimension_numbers<[1], [0], [0], [1], [0, 0, 1, 1], [], []>} : vector<16x128xf32>, vector<128x128xf32>, vector<16x128xf32> -> vector<16x128xf32>
    %445 = vector.broadcast %14 : vector<1x128xf32> to vector<16x128xf32>
    %446 = arith.addf %444, %445 : vector<16x128xf32>
    %447 = math.tanh %446 : vector<16x128xf32>
    %448 = vector.broadcast %15 : vector<1x128xf32> to vector<16x128xf32>
    %449 = arith.mulf %447, %448 : vector<16x128xf32>
    %cst_134 = arith.constant dense<0.000000e+00> : vector<16xf32>
    %450 = vector.multi_reduction <add>, %449, %cst_134 [1] : vector<16x128xf32> to vector<16xf32>
    %451 = vector.shape_cast %450 : vector<16xf32> to vector<16x1xf32>
    %452 = vector.broadcast %16 : vector<1x1xf32> to vector<16x1xf32>
    %453 = arith.addf %451, %452 : vector<16x1xf32>
    %454 = arith.index_cast %c2_i32_124 : i32 to index
    %c0_135 = arith.constant 0 : index
    %c0_136 = arith.constant 0 : index
    %455 = vector.load %arg19[%454, %c0_135, %c0_136] : memref<8x16x1xf32, #tpu.memory_space<vmem>>, vector<1x16x1xf32>
    %456 = vector.shape_cast %455 : vector<1x16x1xf32> to vector<16x1xf32>
    %457 = vector.shape_cast %453 : vector<16x1xf32> to vector<1x16x1xf32>
    tpu.vector_store %arg19[%454, %c0_135, %c0_136], %457 {strides = array<i32>} : memref<8x16x1xf32, #tpu.memory_space<vmem>>, vector<1x16x1xf32>,
    %c3_i32_137 = arith.constant 3 : i32
    %458 = arith.index_cast %c3_i32_137 : i32 to index
    %c0_138 = arith.constant 0 : index
    %c0_139 = arith.constant 0 : index
    %459 = vector.load %arg17[%458, %c0_138, %c0_139] : memref<8x16x512xf32, #tpu.memory_space<vmem>>, vector<1x16x512xf32>
    %460 = vector.shape_cast %459 : vector<1x16x512xf32> to vector<16x512xf32>
    %cst_140 = arith.constant dense<0.000000e+00> : vector<16x512xf32>
    %461 = tpu.matmul %439, %12, %cst_140 {dimension_numbers = #tpu.dot_dimension_numbers<[1], [0], [0], [1], [0, 0, 1, 1], [], []>} : vector<16x128xf32>, vector<128x512xf32>, vector<16x512xf32> -> vector<16x512xf32>
    %462 = arith.addf %460, %461 : vector<16x512xf32>
    %463 = vector.extract_strided_slice %462 {offsets = [0, 0], sizes = [16, 128], strides = [1, 1]} : vector<16x512xf32> to vector<16x128xf32>
    %464 = arith.negf %463 : vector<16x128xf32>
    %465 = math.exp %464 : vector<16x128xf32>
    %cst_141 = arith.constant 1.000000e+00 : f32
    %466 = vector.broadcast %cst_141 : f32 to vector<16x128xf32>
    %467 = arith.addf %466, %465 : vector<16x128xf32>
    %468 = arith.divf %466, %467 : vector<16x128xf32>
    %469 = vector.extract_strided_slice %462 {offsets = [0, 128], sizes = [16, 128], strides = [1, 1]} : vector<16x512xf32> to vector<16x128xf32>
    %470 = arith.negf %469 : vector<16x128xf32>
    %471 = math.exp %470 : vector<16x128xf32>
    %cst_142 = arith.constant 1.000000e+00 : f32
    %472 = vector.broadcast %cst_142 : f32 to vector<16x128xf32>
    %473 = arith.addf %472, %471 : vector<16x128xf32>
    %474 = arith.divf %472, %473 : vector<16x128xf32>
    %475 = vector.extract_strided_slice %462 {offsets = [0, 256], sizes = [16, 128], strides = [1, 1]} : vector<16x512xf32> to vector<16x128xf32>
    %476 = math.tanh %475 : vector<16x128xf32>
    %477 = vector.extract_strided_slice %462 {offsets = [0, 384], sizes = [16, 128], strides = [1, 1]} : vector<16x512xf32> to vector<16x128xf32>
    %478 = arith.negf %477 : vector<16x128xf32>
    %479 = math.exp %478 : vector<16x128xf32>
    %cst_143 = arith.constant 1.000000e+00 : f32
    %480 = vector.broadcast %cst_143 : f32 to vector<16x128xf32>
    %481 = arith.addf %480, %479 : vector<16x128xf32>
    %482 = arith.divf %480, %481 : vector<16x128xf32>
    %483 = arith.mulf %474, %437 : vector<16x128xf32>
    %484 = arith.mulf %468, %476 : vector<16x128xf32>
    %485 = arith.addf %483, %484 : vector<16x128xf32>
    %486 = math.tanh %485 : vector<16x128xf32>
    %487 = arith.mulf %482, %486 : vector<16x128xf32>
    %488 = arith.index_cast %c3_i32_137 : i32 to index
    %c0_144 = arith.constant 0 : index
    %c0_145 = arith.constant 0 : index
    %489 = vector.load %arg18[%488, %c0_144, %c0_145] : memref<8x16x128xf32, #tpu.memory_space<vmem>>, vector<1x16x128xf32>
    %490 = vector.shape_cast %489 : vector<1x16x128xf32> to vector<16x128xf32>
    %491 = vector.shape_cast %487 : vector<16x128xf32> to vector<1x16x128xf32>
    tpu.vector_store %arg18[%488, %c0_144, %c0_145], %491 {strides = array<i32>} : memref<8x16x128xf32, #tpu.memory_space<vmem>>, vector<1x16x128xf32>,
    %cst_146 = arith.constant dense<0.000000e+00> : vector<16x128xf32>
    %492 = tpu.matmul %487, %13, %cst_146 {dimension_numbers = #tpu.dot_dimension_numbers<[1], [0], [0], [1], [0, 0, 1, 1], [], []>} : vector<16x128xf32>, vector<128x128xf32>, vector<16x128xf32> -> vector<16x128xf32>
    %493 = vector.broadcast %14 : vector<1x128xf32> to vector<16x128xf32>
    %494 = arith.addf %492, %493 : vector<16x128xf32>
    %495 = math.tanh %494 : vector<16x128xf32>
    %496 = vector.broadcast %15 : vector<1x128xf32> to vector<16x128xf32>
    %497 = arith.mulf %495, %496 : vector<16x128xf32>
    %cst_147 = arith.constant dense<0.000000e+00> : vector<16xf32>
    %498 = vector.multi_reduction <add>, %497, %cst_147 [1] : vector<16x128xf32> to vector<16xf32>
    %499 = vector.shape_cast %498 : vector<16xf32> to vector<16x1xf32>
    %500 = vector.broadcast %16 : vector<1x1xf32> to vector<16x1xf32>
    %501 = arith.addf %499, %500 : vector<16x1xf32>
    %502 = arith.index_cast %c3_i32_137 : i32 to index
    %c0_148 = arith.constant 0 : index
    %c0_149 = arith.constant 0 : index
    %503 = vector.load %arg19[%502, %c0_148, %c0_149] : memref<8x16x1xf32, #tpu.memory_space<vmem>>, vector<1x16x1xf32>
    %504 = vector.shape_cast %503 : vector<1x16x1xf32> to vector<16x1xf32>
    %505 = vector.shape_cast %501 : vector<16x1xf32> to vector<1x16x1xf32>
    tpu.vector_store %arg19[%502, %c0_148, %c0_149], %505 {strides = array<i32>} : memref<8x16x1xf32, #tpu.memory_space<vmem>>, vector<1x16x1xf32>,
    %c4_i32_150 = arith.constant 4 : i32
    %506 = arith.index_cast %c4_i32_150 : i32 to index
    %c0_151 = arith.constant 0 : index
    %c0_152 = arith.constant 0 : index
    %507 = vector.load %arg17[%506, %c0_151, %c0_152] : memref<8x16x512xf32, #tpu.memory_space<vmem>>, vector<1x16x512xf32>
    %508 = vector.shape_cast %507 : vector<1x16x512xf32> to vector<16x512xf32>
    %cst_153 = arith.constant dense<0.000000e+00> : vector<16x512xf32>
    %509 = tpu.matmul %487, %12, %cst_153 {dimension_numbers = #tpu.dot_dimension_numbers<[1], [0], [0], [1], [0, 0, 1, 1], [], []>} : vector<16x128xf32>, vector<128x512xf32>, vector<16x512xf32> -> vector<16x512xf32>
    %510 = arith.addf %508, %509 : vector<16x512xf32>
    %511 = vector.extract_strided_slice %510 {offsets = [0, 0], sizes = [16, 128], strides = [1, 1]} : vector<16x512xf32> to vector<16x128xf32>
    %512 = arith.negf %511 : vector<16x128xf32>
    %513 = math.exp %512 : vector<16x128xf32>
    %cst_154 = arith.constant 1.000000e+00 : f32
    %514 = vector.broadcast %cst_154 : f32 to vector<16x128xf32>
    %515 = arith.addf %514, %513 : vector<16x128xf32>
    %516 = arith.divf %514, %515 : vector<16x128xf32>
    %517 = vector.extract_strided_slice %510 {offsets = [0, 128], sizes = [16, 128], strides = [1, 1]} : vector<16x512xf32> to vector<16x128xf32>
    %518 = arith.negf %517 : vector<16x128xf32>
    %519 = math.exp %518 : vector<16x128xf32>
    %cst_155 = arith.constant 1.000000e+00 : f32
    %520 = vector.broadcast %cst_155 : f32 to vector<16x128xf32>
    %521 = arith.addf %520, %519 : vector<16x128xf32>
    %522 = arith.divf %520, %521 : vector<16x128xf32>
    %523 = vector.extract_strided_slice %510 {offsets = [0, 256], sizes = [16, 128], strides = [1, 1]} : vector<16x512xf32> to vector<16x128xf32>
    %524 = math.tanh %523 : vector<16x128xf32>
    %525 = vector.extract_strided_slice %510 {offsets = [0, 384], sizes = [16, 128], strides = [1, 1]} : vector<16x512xf32> to vector<16x128xf32>
    %526 = arith.negf %525 : vector<16x128xf32>
    %527 = math.exp %526 : vector<16x128xf32>
    %cst_156 = arith.constant 1.000000e+00 : f32
    %528 = vector.broadcast %cst_156 : f32 to vector<16x128xf32>
    %529 = arith.addf %528, %527 : vector<16x128xf32>
    %530 = arith.divf %528, %529 : vector<16x128xf32>
    %531 = arith.mulf %522, %485 : vector<16x128xf32>
    %532 = arith.mulf %516, %524 : vector<16x128xf32>
    %533 = arith.addf %531, %532 : vector<16x128xf32>
    %534 = math.tanh %533 : vector<16x128xf32>
    %535 = arith.mulf %530, %534 : vector<16x128xf32>
    %536 = arith.index_cast %c4_i32_150 : i32 to index
    %c0_157 = arith.constant 0 : index
    %c0_158 = arith.constant 0 : index
    %537 = vector.load %arg18[%536, %c0_157, %c0_158] : memref<8x16x128xf32, #tpu.memory_space<vmem>>, vector<1x16x128xf32>
    %538 = vector.shape_cast %537 : vector<1x16x128xf32> to vector<16x128xf32>
    %539 = vector.shape_cast %535 : vector<16x128xf32> to vector<1x16x128xf32>
    tpu.vector_store %arg18[%536, %c0_157, %c0_158], %539 {strides = array<i32>} : memref<8x16x128xf32, #tpu.memory_space<vmem>>, vector<1x16x128xf32>,
    %cst_159 = arith.constant dense<0.000000e+00> : vector<16x128xf32>
    %540 = tpu.matmul %535, %13, %cst_159 {dimension_numbers = #tpu.dot_dimension_numbers<[1], [0], [0], [1], [0, 0, 1, 1], [], []>} : vector<16x128xf32>, vector<128x128xf32>, vector<16x128xf32> -> vector<16x128xf32>
    %541 = vector.broadcast %14 : vector<1x128xf32> to vector<16x128xf32>
    %542 = arith.addf %540, %541 : vector<16x128xf32>
    %543 = math.tanh %542 : vector<16x128xf32>
    %544 = vector.broadcast %15 : vector<1x128xf32> to vector<16x128xf32>
    %545 = arith.mulf %543, %544 : vector<16x128xf32>
    %cst_160 = arith.constant dense<0.000000e+00> : vector<16xf32>
    %546 = vector.multi_reduction <add>, %545, %cst_160 [1] : vector<16x128xf32> to vector<16xf32>
    %547 = vector.shape_cast %546 : vector<16xf32> to vector<16x1xf32>
    %548 = vector.broadcast %16 : vector<1x1xf32> to vector<16x1xf32>
    %549 = arith.addf %547, %548 : vector<16x1xf32>
    %550 = arith.index_cast %c4_i32_150 : i32 to index
    %c0_161 = arith.constant 0 : index
    %c0_162 = arith.constant 0 : index
    %551 = vector.load %arg19[%550, %c0_161, %c0_162] : memref<8x16x1xf32, #tpu.memory_space<vmem>>, vector<1x16x1xf32>
    %552 = vector.shape_cast %551 : vector<1x16x1xf32> to vector<16x1xf32>
    %553 = vector.shape_cast %549 : vector<16x1xf32> to vector<1x16x1xf32>
    tpu.vector_store %arg19[%550, %c0_161, %c0_162], %553 {strides = array<i32>} : memref<8x16x1xf32, #tpu.memory_space<vmem>>, vector<1x16x1xf32>,
    %c5_i32_163 = arith.constant 5 : i32
    %554 = arith.index_cast %c5_i32_163 : i32 to index
    %c0_164 = arith.constant 0 : index
    %c0_165 = arith.constant 0 : index
    %555 = vector.load %arg17[%554, %c0_164, %c0_165] : memref<8x16x512xf32, #tpu.memory_space<vmem>>, vector<1x16x512xf32>
    %556 = vector.shape_cast %555 : vector<1x16x512xf32> to vector<16x512xf32>
    %cst_166 = arith.constant dense<0.000000e+00> : vector<16x512xf32>
    %557 = tpu.matmul %535, %12, %cst_166 {dimension_numbers = #tpu.dot_dimension_numbers<[1], [0], [0], [1], [0, 0, 1, 1], [], []>} : vector<16x128xf32>, vector<128x512xf32>, vector<16x512xf32> -> vector<16x512xf32>
    %558 = arith.addf %556, %557 : vector<16x512xf32>
    %559 = vector.extract_strided_slice %558 {offsets = [0, 0], sizes = [16, 128], strides = [1, 1]} : vector<16x512xf32> to vector<16x128xf32>
    %560 = arith.negf %559 : vector<16x128xf32>
    %561 = math.exp %560 : vector<16x128xf32>
    %cst_167 = arith.constant 1.000000e+00 : f32
    %562 = vector.broadcast %cst_167 : f32 to vector<16x128xf32>
    %563 = arith.addf %562, %561 : vector<16x128xf32>
    %564 = arith.divf %562, %563 : vector<16x128xf32>
    %565 = vector.extract_strided_slice %558 {offsets = [0, 128], sizes = [16, 128], strides = [1, 1]} : vector<16x512xf32> to vector<16x128xf32>
    %566 = arith.negf %565 : vector<16x128xf32>
    %567 = math.exp %566 : vector<16x128xf32>
    %cst_168 = arith.constant 1.000000e+00 : f32
    %568 = vector.broadcast %cst_168 : f32 to vector<16x128xf32>
    %569 = arith.addf %568, %567 : vector<16x128xf32>
    %570 = arith.divf %568, %569 : vector<16x128xf32>
    %571 = vector.extract_strided_slice %558 {offsets = [0, 256], sizes = [16, 128], strides = [1, 1]} : vector<16x512xf32> to vector<16x128xf32>
    %572 = math.tanh %571 : vector<16x128xf32>
    %573 = vector.extract_strided_slice %558 {offsets = [0, 384], sizes = [16, 128], strides = [1, 1]} : vector<16x512xf32> to vector<16x128xf32>
    %574 = arith.negf %573 : vector<16x128xf32>
    %575 = math.exp %574 : vector<16x128xf32>
    %cst_169 = arith.constant 1.000000e+00 : f32
    %576 = vector.broadcast %cst_169 : f32 to vector<16x128xf32>
    %577 = arith.addf %576, %575 : vector<16x128xf32>
    %578 = arith.divf %576, %577 : vector<16x128xf32>
    %579 = arith.mulf %570, %533 : vector<16x128xf32>
    %580 = arith.mulf %564, %572 : vector<16x128xf32>
    %581 = arith.addf %579, %580 : vector<16x128xf32>
    %582 = math.tanh %581 : vector<16x128xf32>
    %583 = arith.mulf %578, %582 : vector<16x128xf32>
    %584 = arith.index_cast %c5_i32_163 : i32 to index
    %c0_170 = arith.constant 0 : index
    %c0_171 = arith.constant 0 : index
    %585 = vector.load %arg18[%584, %c0_170, %c0_171] : memref<8x16x128xf32, #tpu.memory_space<vmem>>, vector<1x16x128xf32>
    %586 = vector.shape_cast %585 : vector<1x16x128xf32> to vector<16x128xf32>
    %587 = vector.shape_cast %583 : vector<16x128xf32> to vector<1x16x128xf32>
    tpu.vector_store %arg18[%584, %c0_170, %c0_171], %587 {strides = array<i32>} : memref<8x16x128xf32, #tpu.memory_space<vmem>>, vector<1x16x128xf32>,
    %cst_172 = arith.constant dense<0.000000e+00> : vector<16x128xf32>
    %588 = tpu.matmul %583, %13, %cst_172 {dimension_numbers = #tpu.dot_dimension_numbers<[1], [0], [0], [1], [0, 0, 1, 1], [], []>} : vector<16x128xf32>, vector<128x128xf32>, vector<16x128xf32> -> vector<16x128xf32>
    %589 = vector.broadcast %14 : vector<1x128xf32> to vector<16x128xf32>
    %590 = arith.addf %588, %589 : vector<16x128xf32>
    %591 = math.tanh %590 : vector<16x128xf32>
    %592 = vector.broadcast %15 : vector<1x128xf32> to vector<16x128xf32>
    %593 = arith.mulf %591, %592 : vector<16x128xf32>
    %cst_173 = arith.constant dense<0.000000e+00> : vector<16xf32>
    %594 = vector.multi_reduction <add>, %593, %cst_173 [1] : vector<16x128xf32> to vector<16xf32>
    %595 = vector.shape_cast %594 : vector<16xf32> to vector<16x1xf32>
    %596 = vector.broadcast %16 : vector<1x1xf32> to vector<16x1xf32>
    %597 = arith.addf %595, %596 : vector<16x1xf32>
    %598 = arith.index_cast %c5_i32_163 : i32 to index
    %c0_174 = arith.constant 0 : index
    %c0_175 = arith.constant 0 : index
    %599 = vector.load %arg19[%598, %c0_174, %c0_175] : memref<8x16x1xf32, #tpu.memory_space<vmem>>, vector<1x16x1xf32>
    %600 = vector.shape_cast %599 : vector<1x16x1xf32> to vector<16x1xf32>
    %601 = vector.shape_cast %597 : vector<16x1xf32> to vector<1x16x1xf32>
    tpu.vector_store %arg19[%598, %c0_174, %c0_175], %601 {strides = array<i32>} : memref<8x16x1xf32, #tpu.memory_space<vmem>>, vector<1x16x1xf32>,
    %c6_i32_176 = arith.constant 6 : i32
    %602 = arith.index_cast %c6_i32_176 : i32 to index
    %c0_177 = arith.constant 0 : index
    %c0_178 = arith.constant 0 : index
    %603 = vector.load %arg17[%602, %c0_177, %c0_178] : memref<8x16x512xf32, #tpu.memory_space<vmem>>, vector<1x16x512xf32>
    %604 = vector.shape_cast %603 : vector<1x16x512xf32> to vector<16x512xf32>
    %cst_179 = arith.constant dense<0.000000e+00> : vector<16x512xf32>
    %605 = tpu.matmul %583, %12, %cst_179 {dimension_numbers = #tpu.dot_dimension_numbers<[1], [0], [0], [1], [0, 0, 1, 1], [], []>} : vector<16x128xf32>, vector<128x512xf32>, vector<16x512xf32> -> vector<16x512xf32>
    %606 = arith.addf %604, %605 : vector<16x512xf32>
    %607 = vector.extract_strided_slice %606 {offsets = [0, 0], sizes = [16, 128], strides = [1, 1]} : vector<16x512xf32> to vector<16x128xf32>
    %608 = arith.negf %607 : vector<16x128xf32>
    %609 = math.exp %608 : vector<16x128xf32>
    %cst_180 = arith.constant 1.000000e+00 : f32
    %610 = vector.broadcast %cst_180 : f32 to vector<16x128xf32>
    %611 = arith.addf %610, %609 : vector<16x128xf32>
    %612 = arith.divf %610, %611 : vector<16x128xf32>
    %613 = vector.extract_strided_slice %606 {offsets = [0, 128], sizes = [16, 128], strides = [1, 1]} : vector<16x512xf32> to vector<16x128xf32>
    %614 = arith.negf %613 : vector<16x128xf32>
    %615 = math.exp %614 : vector<16x128xf32>
    %cst_181 = arith.constant 1.000000e+00 : f32
    %616 = vector.broadcast %cst_181 : f32 to vector<16x128xf32>
    %617 = arith.addf %616, %615 : vector<16x128xf32>
    %618 = arith.divf %616, %617 : vector<16x128xf32>
    %619 = vector.extract_strided_slice %606 {offsets = [0, 256], sizes = [16, 128], strides = [1, 1]} : vector<16x512xf32> to vector<16x128xf32>
    %620 = math.tanh %619 : vector<16x128xf32>
    %621 = vector.extract_strided_slice %606 {offsets = [0, 384], sizes = [16, 128], strides = [1, 1]} : vector<16x512xf32> to vector<16x128xf32>
    %622 = arith.negf %621 : vector<16x128xf32>
    %623 = math.exp %622 : vector<16x128xf32>
    %cst_182 = arith.constant 1.000000e+00 : f32
    %624 = vector.broadcast %cst_182 : f32 to vector<16x128xf32>
    %625 = arith.addf %624, %623 : vector<16x128xf32>
    %626 = arith.divf %624, %625 : vector<16x128xf32>
    %627 = arith.mulf %618, %581 : vector<16x128xf32>
    %628 = arith.mulf %612, %620 : vector<16x128xf32>
    %629 = arith.addf %627, %628 : vector<16x128xf32>
    %630 = math.tanh %629 : vector<16x128xf32>
    %631 = arith.mulf %626, %630 : vector<16x128xf32>
    %632 = arith.index_cast %c6_i32_176 : i32 to index
    %c0_183 = arith.constant 0 : index
    %c0_184 = arith.constant 0 : index
    %633 = vector.load %arg18[%632, %c0_183, %c0_184] : memref<8x16x128xf32, #tpu.memory_space<vmem>>, vector<1x16x128xf32>
    %634 = vector.shape_cast %633 : vector<1x16x128xf32> to vector<16x128xf32>
    %635 = vector.shape_cast %631 : vector<16x128xf32> to vector<1x16x128xf32>
    tpu.vector_store %arg18[%632, %c0_183, %c0_184], %635 {strides = array<i32>} : memref<8x16x128xf32, #tpu.memory_space<vmem>>, vector<1x16x128xf32>,
    %cst_185 = arith.constant dense<0.000000e+00> : vector<16x128xf32>
    %636 = tpu.matmul %631, %13, %cst_185 {dimension_numbers = #tpu.dot_dimension_numbers<[1], [0], [0], [1], [0, 0, 1, 1], [], []>} : vector<16x128xf32>, vector<128x128xf32>, vector<16x128xf32> -> vector<16x128xf32>
    %637 = vector.broadcast %14 : vector<1x128xf32> to vector<16x128xf32>
    %638 = arith.addf %636, %637 : vector<16x128xf32>
    %639 = math.tanh %638 : vector<16x128xf32>
    %640 = vector.broadcast %15 : vector<1x128xf32> to vector<16x128xf32>
    %641 = arith.mulf %639, %640 : vector<16x128xf32>
    %cst_186 = arith.constant dense<0.000000e+00> : vector<16xf32>
    %642 = vector.multi_reduction <add>, %641, %cst_186 [1] : vector<16x128xf32> to vector<16xf32>
    %643 = vector.shape_cast %642 : vector<16xf32> to vector<16x1xf32>
    %644 = vector.broadcast %16 : vector<1x1xf32> to vector<16x1xf32>
    %645 = arith.addf %643, %644 : vector<16x1xf32>
    %646 = arith.index_cast %c6_i32_176 : i32 to index
    %c0_187 = arith.constant 0 : index
    %c0_188 = arith.constant 0 : index
    %647 = vector.load %arg19[%646, %c0_187, %c0_188] : memref<8x16x1xf32, #tpu.memory_space<vmem>>, vector<1x16x1xf32>
    %648 = vector.shape_cast %647 : vector<1x16x1xf32> to vector<16x1xf32>
    %649 = vector.shape_cast %645 : vector<16x1xf32> to vector<1x16x1xf32>
    tpu.vector_store %arg19[%646, %c0_187, %c0_188], %649 {strides = array<i32>} : memref<8x16x1xf32, #tpu.memory_space<vmem>>, vector<1x16x1xf32>,
    %c7_i32_189 = arith.constant 7 : i32
    %650 = arith.index_cast %c7_i32_189 : i32 to index
    %c0_190 = arith.constant 0 : index
    %c0_191 = arith.constant 0 : index
    %651 = vector.load %arg17[%650, %c0_190, %c0_191] : memref<8x16x512xf32, #tpu.memory_space<vmem>>, vector<1x16x512xf32>
    %652 = vector.shape_cast %651 : vector<1x16x512xf32> to vector<16x512xf32>
    %cst_192 = arith.constant dense<0.000000e+00> : vector<16x512xf32>
    %653 = tpu.matmul %631, %12, %cst_192 {dimension_numbers = #tpu.dot_dimension_numbers<[1], [0], [0], [1], [0, 0, 1, 1], [], []>} : vector<16x128xf32>, vector<128x512xf32>, vector<16x512xf32> -> vector<16x512xf32>
    %654 = arith.addf %652, %653 : vector<16x512xf32>
    %655 = vector.extract_strided_slice %654 {offsets = [0, 0], sizes = [16, 128], strides = [1, 1]} : vector<16x512xf32> to vector<16x128xf32>
    %656 = arith.negf %655 : vector<16x128xf32>
    %657 = math.exp %656 : vector<16x128xf32>
    %cst_193 = arith.constant 1.000000e+00 : f32
    %658 = vector.broadcast %cst_193 : f32 to vector<16x128xf32>
    %659 = arith.addf %658, %657 : vector<16x128xf32>
    %660 = arith.divf %658, %659 : vector<16x128xf32>
    %661 = vector.extract_strided_slice %654 {offsets = [0, 128], sizes = [16, 128], strides = [1, 1]} : vector<16x512xf32> to vector<16x128xf32>
    %662 = arith.negf %661 : vector<16x128xf32>
    %663 = math.exp %662 : vector<16x128xf32>
    %cst_194 = arith.constant 1.000000e+00 : f32
    %664 = vector.broadcast %cst_194 : f32 to vector<16x128xf32>
    %665 = arith.addf %664, %663 : vector<16x128xf32>
    %666 = arith.divf %664, %665 : vector<16x128xf32>
    %667 = vector.extract_strided_slice %654 {offsets = [0, 256], sizes = [16, 128], strides = [1, 1]} : vector<16x512xf32> to vector<16x128xf32>
    %668 = math.tanh %667 : vector<16x128xf32>
    %669 = vector.extract_strided_slice %654 {offsets = [0, 384], sizes = [16, 128], strides = [1, 1]} : vector<16x512xf32> to vector<16x128xf32>
    %670 = arith.negf %669 : vector<16x128xf32>
    %671 = math.exp %670 : vector<16x128xf32>
    %cst_195 = arith.constant 1.000000e+00 : f32
    %672 = vector.broadcast %cst_195 : f32 to vector<16x128xf32>
    %673 = arith.addf %672, %671 : vector<16x128xf32>
    %674 = arith.divf %672, %673 : vector<16x128xf32>
    %675 = arith.mulf %666, %629 : vector<16x128xf32>
    %676 = arith.mulf %660, %668 : vector<16x128xf32>
    %677 = arith.addf %675, %676 : vector<16x128xf32>
    %678 = math.tanh %677 : vector<16x128xf32>
    %679 = arith.mulf %674, %678 : vector<16x128xf32>
    %680 = arith.index_cast %c7_i32_189 : i32 to index
    %c0_196 = arith.constant 0 : index
    %c0_197 = arith.constant 0 : index
    %681 = vector.load %arg18[%680, %c0_196, %c0_197] : memref<8x16x128xf32, #tpu.memory_space<vmem>>, vector<1x16x128xf32>
    %682 = vector.shape_cast %681 : vector<1x16x128xf32> to vector<16x128xf32>
    %683 = vector.shape_cast %679 : vector<16x128xf32> to vector<1x16x128xf32>
    tpu.vector_store %arg18[%680, %c0_196, %c0_197], %683 {strides = array<i32>} : memref<8x16x128xf32, #tpu.memory_space<vmem>>, vector<1x16x128xf32>,
    %cst_198 = arith.constant dense<0.000000e+00> : vector<16x128xf32>
    %684 = tpu.matmul %679, %13, %cst_198 {dimension_numbers = #tpu.dot_dimension_numbers<[1], [0], [0], [1], [0, 0, 1, 1], [], []>} : vector<16x128xf32>, vector<128x128xf32>, vector<16x128xf32> -> vector<16x128xf32>
    %685 = vector.broadcast %14 : vector<1x128xf32> to vector<16x128xf32>
    %686 = arith.addf %684, %685 : vector<16x128xf32>
    %687 = math.tanh %686 : vector<16x128xf32>
    %688 = vector.broadcast %15 : vector<1x128xf32> to vector<16x128xf32>
    %689 = arith.mulf %687, %688 : vector<16x128xf32>
    %cst_199 = arith.constant dense<0.000000e+00> : vector<16xf32>
    %690 = vector.multi_reduction <add>, %689, %cst_199 [1] : vector<16x128xf32> to vector<16xf32>
    %691 = vector.shape_cast %690 : vector<16xf32> to vector<16x1xf32>
    %692 = vector.broadcast %16 : vector<1x1xf32> to vector<16x1xf32>
    %693 = arith.addf %691, %692 : vector<16x1xf32>
    %694 = arith.index_cast %c7_i32_189 : i32 to index
    %c0_200 = arith.constant 0 : index
    %c0_201 = arith.constant 0 : index
    %695 = vector.load %arg19[%694, %c0_200, %c0_201] : memref<8x16x1xf32, #tpu.memory_space<vmem>>, vector<1x16x1xf32>
    %696 = vector.shape_cast %695 : vector<1x16x1xf32> to vector<16x1xf32>
    %697 = vector.shape_cast %693 : vector<16x1xf32> to vector<1x16x1xf32>
    tpu.vector_store %arg19[%694, %c0_200, %c0_201], %697 {strides = array<i32>} : memref<8x16x1xf32, #tpu.memory_space<vmem>>, vector<1x16x1xf32>,
    %c8_i32_202 = arith.constant 8 : i32
    %c0_203 = arith.constant 0 : index
    %c0_204 = arith.constant 0 : index
    %c0_205 = arith.constant 0 : index
    %698 = vector.load %arg19[%c0_203, %c0_204, %c0_205] : memref<8x16x1xf32, #tpu.memory_space<vmem>>, vector<8x16x1xf32>
    %cst_206 = arith.constant dense<0xFF800000> : vector<16x1xf32>
    %699 = vector.multi_reduction <maximumf>, %698, %cst_206 [0] : vector<8x16x1xf32> to vector<16x1xf32>
    %700 = vector.shape_cast %699 : vector<16x1xf32> to vector<1x16x1xf32>
    %701 = vector.broadcast %700 : vector<1x16x1xf32> to vector<8x16x1xf32>
    %702 = arith.subf %698, %701 : vector<8x16x1xf32>
    %703 = math.exp %702 : vector<8x16x1xf32>
    %cst_207 = arith.constant dense<0.000000e+00> : vector<16x1xf32>
    %704 = vector.multi_reduction <add>, %703, %cst_207 [0] : vector<8x16x1xf32> to vector<16x1xf32>
    %705 = vector.shape_cast %704 : vector<16x1xf32> to vector<1x16x1xf32>
    %706 = vector.broadcast %705 : vector<1x16x1xf32> to vector<8x16x1xf32>
    %707 = arith.divf %703, %706 : vector<8x16x1xf32>
    %c0_208 = arith.constant 0 : index
    %c0_209 = arith.constant 0 : index
    %c0_210 = arith.constant 0 : index
    %708 = vector.load %arg18[%c0_208, %c0_209, %c0_210] : memref<8x16x128xf32, #tpu.memory_space<vmem>>, vector<8x16x128xf32>
    %709 = vector.broadcast %707 : vector<8x16x1xf32> to vector<8x16x128xf32>
    %710 = arith.mulf %709, %708 : vector<8x16x128xf32>
    %cst_211 = arith.constant dense<0.000000e+00> : vector<16x128xf32>
    %711 = vector.multi_reduction <add>, %710, %cst_211 [0] : vector<8x16x128xf32> to vector<16x128xf32>
    %c0_212 = arith.constant 0 : index
    %c0_213 = arith.constant 0 : index
    %712 = vector.load %arg12[%c0_212, %c0_213] : memref<128x64xf32, #tpu.memory_space<vmem>>, vector<128x64xf32>
    %cst_214 = arith.constant dense<0.000000e+00> : vector<16x64xf32>
    %713 = tpu.matmul %711, %712, %cst_214 {dimension_numbers = #tpu.dot_dimension_numbers<[1], [0], [0], [1], [0, 0, 1, 1], [], []>} : vector<16x128xf32>, vector<128x64xf32>, vector<16x64xf32> -> vector<16x64xf32>
    %c0_215 = arith.constant 0 : index
    %c0_216 = arith.constant 0 : index
    %714 = vector.load %arg13[%c0_215, %c0_216] : memref<1x64xf32, #tpu.memory_space<vmem>>, vector<1x64xf32>
    %715 = vector.broadcast %714 : vector<1x64xf32> to vector<16x64xf32>
    %716 = arith.addf %713, %715 : vector<16x64xf32>
    %cst_217 = arith.constant 0.000000e+00 : f32
    %717 = vector.broadcast %cst_217 : f32 to vector<16x64xf32>
    %718 = arith.maximumf %716, %717 : vector<16x64xf32>
    %c0_218 = arith.constant 0 : index
    %c0_219 = arith.constant 0 : index
    %719 = vector.load %arg14[%c0_218, %c0_219] : memref<1x64xf32, #tpu.memory_space<vmem>>, vector<1x64xf32>
    %720 = vector.broadcast %719 : vector<1x64xf32> to vector<16x64xf32>
    %721 = arith.mulf %718, %720 : vector<16x64xf32>
    %cst_220 = arith.constant dense<0.000000e+00> : vector<16xf32>
    %722 = vector.multi_reduction <add>, %721, %cst_220 [1] : vector<16x64xf32> to vector<16xf32>
    %723 = vector.shape_cast %722 : vector<16xf32> to vector<16x1xf32>
    %c0_221 = arith.constant 0 : index
    %c0_222 = arith.constant 0 : index
    %724 = vector.load %arg15[%c0_221, %c0_222] : memref<1x1xf32, #tpu.memory_space<vmem>>, vector<1x1xf32>
    %725 = vector.broadcast %724 : vector<1x1xf32> to vector<16x1xf32>
    %726 = arith.addf %723, %725 : vector<16x1xf32>
    %727 = arith.negf %726 : vector<16x1xf32>
    %728 = math.exp %727 : vector<16x1xf32>
    %cst_223 = arith.constant 1.000000e+00 : f32
    %729 = vector.broadcast %cst_223 : f32 to vector<16x1xf32>
    %730 = arith.addf %729, %728 : vector<16x1xf32>
    %731 = arith.divf %729, %730 : vector<16x1xf32>
    %c0_224 = arith.constant 0 : index
    %c0_225 = arith.constant 0 : index
    %732 = vector.load %arg16[%c0_224, %c0_225] : memref<16x1xf32, #tpu.memory_space<vmem>>, vector<16x1xf32>
    tpu.vector_store %arg16[%c0_224, %c0_225], %731 {strides = array<i32>} : memref<16x1xf32, #tpu.memory_space<vmem>>, vector<16x1xf32>,
    return
  }
  func.func @transform_0(%arg0: i32) -> (i32, i32, i32) {
    %c0_i32 = arith.constant 0 : i32
    %c0_i32_0 = arith.constant 0 : i32
    %c0_i32_1 = arith.constant 0 : i32
    return %c0_i32, %arg0, %c0_i32_0 : i32, i32, i32
  }
  func.func @transform_1(%arg0: i32) -> (i32, i32) {
    %c0_i32 = arith.constant 0 : i32
    %c0_i32_0 = arith.constant 0 : i32
    %c0_i32_1 = arith.constant 0 : i32
    return %c0_i32, %c0_i32_0 : i32, i32
  }
  func.func @transform_2(%arg0: i32) -> (i32, i32) {
    %c0_i32 = arith.constant 0 : i32
    %c0_i32_0 = arith.constant 0 : i32
    %c0_i32_1 = arith.constant 0 : i32
    return %c0_i32, %c0_i32_0 : i32, i32
  }
  func.func @transform_3(%arg0: i32) -> (i32, i32) {
    %c0_i32 = arith.constant 0 : i32
    %c0_i32_0 = arith.constant 0 : i32
    %c0_i32_1 = arith.constant 0 : i32
    return %c0_i32, %c0_i32_0 : i32, i32
  }
  func.func @transform_4(%arg0: i32) -> (i32, i32) {
    %c0_i32 = arith.constant 0 : i32
    %c0_i32_0 = arith.constant 0 : i32
    %c0_i32_1 = arith.constant 0 : i32
    return %c0_i32, %c0_i32_0 : i32, i32
  }
  func.func @transform_5(%arg0: i32) -> (i32, i32) {
    %c0_i32 = arith.constant 0 : i32
    %c0_i32_0 = arith.constant 0 : i32
    %c0_i32_1 = arith.constant 0 : i32
    return %c0_i32, %c0_i32_0 : i32, i32
  }
  func.func @transform_6(%arg0: i32) -> (i32, i32) {
    %c0_i32 = arith.constant 0 : i32
    %c0_i32_0 = arith.constant 0 : i32
    %c0_i32_1 = arith.constant 0 : i32
    return %c0_i32, %c0_i32_0 : i32, i32
  }
  func.func @transform_7(%arg0: i32) -> (i32, i32) {
    %c0_i32 = arith.constant 0 : i32
    %c0_i32_0 = arith.constant 0 : i32
    %c0_i32_1 = arith.constant 0 : i32
    return %c0_i32, %c0_i32_0 : i32, i32
  }
  func.func @transform_8(%arg0: i32) -> (i32, i32) {
    %c0_i32 = arith.constant 0 : i32
    %c0_i32_0 = arith.constant 0 : i32
    %c0_i32_1 = arith.constant 0 : i32
    return %c0_i32, %c0_i32_0 : i32, i32
  }
  func.func @transform_9(%arg0: i32) -> (i32, i32) {
    %c0_i32 = arith.constant 0 : i32
    %c0_i32_0 = arith.constant 0 : i32
    %c0_i32_1 = arith.constant 0 : i32
    return %c0_i32, %c0_i32_0 : i32, i32
  }
  func.func @transform_10(%arg0: i32) -> (i32, i32) {
    %c0_i32 = arith.constant 0 : i32
    %c0_i32_0 = arith.constant 0 : i32
    %c0_i32_1 = arith.constant 0 : i32
    return %c0_i32, %c0_i32_0 : i32, i32
  }
  func.func @transform_11(%arg0: i32) -> (i32, i32) {
    %c0_i32 = arith.constant 0 : i32
    %c0_i32_0 = arith.constant 0 : i32
    %c0_i32_1 = arith.constant 0 : i32
    return %c0_i32, %c0_i32_0 : i32, i32
  }
  func.func @transform_12(%arg0: i32) -> (i32, i32) {
    %c0_i32 = arith.constant 0 : i32
    %c0_i32_0 = arith.constant 0 : i32
    %c0_i32_1 = arith.constant 0 : i32
    return %c0_i32, %c0_i32_0 : i32, i32
  }
  func.func @transform_13(%arg0: i32) -> (i32, i32) {
    %c0_i32 = arith.constant 0 : i32
    %c0_i32_0 = arith.constant 0 : i32
    %c0_i32_1 = arith.constant 0 : i32
    return %c0_i32, %c0_i32_0 : i32, i32
  }
  func.func @transform_14(%arg0: i32) -> (i32, i32) {
    %c0_i32 = arith.constant 0 : i32
    %c0_i32_0 = arith.constant 0 : i32
    %c0_i32_1 = arith.constant 0 : i32
    return %c0_i32, %c0_i32_0 : i32, i32
  }
  func.func @transform_15(%arg0: i32) -> (i32, i32) {
    %c0_i32 = arith.constant 0 : i32
    %c0_i32_0 = arith.constant 0 : i32
    return %arg0, %c0_i32 : i32, i32
  }
}

</mosaic_0001>

<llo_original>
// kernel: tpu_custom_call.1
$region0: #{tpu_custom_call.1}
  #allocation0 [shape = 'u32[]', space=smem, size = 0x4, offset = 0x4, fixed_abs, tag = 'smem constant byte address 0x4 - core index']
  #allocation1 [shape = 'u32[144,128]{1,0:T(1,128)}', space=vmem, size = 0x12000, scoped, tag = 'internal scratch']
  #allocation2 [shape = 'f32[8,16,512]{2,1,0:T(8,128)}', space=vmem, size = 0x40000, scoped, tag = 'scratch operand']
  #allocation3 [shape = 'f32[8,16,128]{2,1,0:T(8,128)}', space=vmem, size = 0x10000, scoped, tag = 'scratch operand']
  #allocation4 [shape = 'f32[8,16,1]{2,1,0:T(8,128)}', space=vmem, size = 0x10000, scoped, tag = 'scratch operand']
  #allocation5 [shape = 'f32[1,1]{1,0:T(1,128)S(1)}', space=vmem, size = 0x200, scoped, tag = 'scoped memory for tpu_custom_call.1']
  #allocation6 [shape = 'f32[1,1]{1,0:T(1,128)S(1)}', space=vmem, size = 0x200, scoped, tag = 'scoped memory for tpu_custom_call.1']
  %s0 = inlined_call_operand.vmem [shape: f32[8,16,16], index: 0, kind: input, shape index: {}]
  %s1 = inlined_call_operand.vmem [shape: f32[16,512], index: 1, kind: input, shape index: {}]
  %s2 = inlined_call_operand.hbm [shape: f32[128,512], index: 2, kind: input, shape index: {}]
  %s3 = inlined_call_operand.vmem [shape: f32[1,512], index: 3, kind: input, shape index: {}]
  %s4 = inlined_call_operand.hbm [shape: f32[128,512], index: 4, kind: input, shape index: {}]
  %s5 = inlined_call_operand.hbm [shape: f32[128,512], index: 5, kind: input, shape index: {}]
  %s6 = inlined_call_operand.vmem [shape: f32[1,512], index: 6, kind: input, shape index: {}]
  %s7 = inlined_call_operand.hbm [shape: f32[128,128], index: 7, kind: input, shape index: {}]
  %s8 = inlined_call_operand.vmem [shape: f32[1,128], index: 8, kind: input, shape index: {}]
  %s9 = inlined_call_operand.vmem [shape: f32[1,128], index: 9, kind: input, shape index: {}]
  %s10 = inlined_call_operand.<no memory space> [shape: f32[1,1], index: 10, kind: input, shape index: {}]
  %s11 = inlined_call_operand.vmem [shape: f32[128,64], index: 11, kind: input, shape index: {}]
  %s12 = inlined_call_operand.vmem [shape: f32[1,64], index: 12, kind: input, shape index: {}]
  %s13 = inlined_call_operand.vmem [shape: f32[1,64], index: 13, kind: input, shape index: {}]
  %s14 = inlined_call_operand.<no memory space> [shape: f32[1,1], index: 14, kind: input, shape index: {}]
  %s15 = inlined_call_operand.vmem [shape: f32[16,1], index: 15, kind: output, shape index: {}]
  %s16 = sld [smem:[#allocation0]]
  $region86: #{tpu_custom_call.1} parent=0
    _
  %s18 = ssub.s32 1, %s16
  %s19 = scalar_select 0, %s18, %s16
  %v20 = vstv %s10
  %21 = vst [vmem:[#allocation5] sm:$0x1] %v20
  %v22 = vstv %s14
  %23 = vst [vmem:[#allocation6] sm:$0x1] %v22
  $region1: #{tpu_custom_call.1} parent=0
    #allocation7 [shape = 'u8[262144]{0}', space=vmem, size = 0x40000, scoped, tag = 'input window, operand 2, single buffered']
    #allocation8 [shape = 's32[1]{0}', space=sflag, size = 0x4, scoped, tag = 'scoped memory for tpu_custom_call.1']
    #allocation9 [shape = 'u8[262144]{0}', space=vmem, size = 0x40000, scoped, tag = 'input window, operand 4, single buffered']
    #allocation10 [shape = 's32[1]{0}', space=sflag, size = 0x4, scoped, tag = 'scoped memory for tpu_custom_call.1']
    #allocation11 [shape = 'u8[262144]{0}', space=vmem, size = 0x40000, scoped, tag = 'input window, operand 5, single buffered']
    #allocation12 [shape = 'u8[65536]{0}', space=vmem, size = 0x10000, scoped, tag = 'input window, operand 7, single buffered']
    #allocation13 [shape = 's32[1]{0}', space=sflag, size = 0x4, scoped, tag = 'scoped memory for tpu_custom_call.1']
    %24 = vsyncpa [#allocation8], 0
    %25 = vsyncpa [#allocation10], 0
    %26 = vsyncpa [#allocation13], 0
    // Predicated region
    $region2: #{tpu_custom_call.1} parent=1 // pred_check
      _
    $region3: #{tpu_custom_call.1} parent=1 // pred_check_branch
      %28 = sbr.rel (0) target = $region5
    $region4: #{tpu_custom_call.1} parent=1 // pred_region
      _
    $region5: #{tpu_custom_call.1} parent=1 // pred_fallthru
      _
    // Predicated region
    $region6: #{tpu_custom_call.1} parent=1 // pred_check
      _
    $region7: #{tpu_custom_call.1} parent=1 // pred_check_branch
      %30 = sbr.rel (0) target = $region9
    $region8: #{tpu_custom_call.1} parent=1 // pred_region
      _
    $region9: #{tpu_custom_call.1} parent=1 // pred_fallthru
      _
    // Predicated region
    $region10: #{tpu_custom_call.1} parent=1 // pred_check
      _
    $region11: #{tpu_custom_call.1} parent=1 // pred_check_branch
      %32 = sbr.rel (0) target = $region13
    $region12: #{tpu_custom_call.1} parent=1 // pred_region
      %s34 = ssub.s32 8192, 8192
      %35 = vsyncadd [#allocation8], %s34
      %s36 = sshll.u32 [#allocation7], 4
      %s37 = int_to_ptr.vmem [resolvable:$true] %s36
      %42 = dma.hbm_to_vmem [thread:$0]  %s2, 8192, %s37, [#allocation8], 512, 512, 32
    $region13: #{tpu_custom_call.1} parent=1 // pred_fallthru
      _
    // Predicated region
    $region14: #{tpu_custom_call.1} parent=1 // pred_check
      _
    $region15: #{tpu_custom_call.1} parent=1 // pred_check_branch
      %44 = sbr.rel (0) target = $region17
    $region16: #{tpu_custom_call.1} parent=1 // pred_region
      _
    $region17: #{tpu_custom_call.1} parent=1 // pred_fallthru
      _
    // Predicated region
    $region18: #{tpu_custom_call.1} parent=1 // pred_check
      _
    $region19: #{tpu_custom_call.1} parent=1 // pred_check_branch
      %46 = sbr.rel (0) target = $region21
    $region20: #{tpu_custom_call.1} parent=1 // pred_region
      %s48 = ssub.s32 8192, 8192
      %49 = vsyncadd [#allocation10], %s48
      %s50 = sshll.u32 [#allocation9], 4
      %s51 = int_to_ptr.vmem [resolvable:$true] %s50
      %56 = dma.hbm_to_vmem [thread:$0]  %s4, 8192, %s51, [#allocation10], 512, 512, 32
    $region21: #{tpu_custom_call.1} parent=1 // pred_fallthru
      _
    // Predicated region
    $region22: #{tpu_custom_call.1} parent=1 // pred_check
      _
    $region23: #{tpu_custom_call.1} parent=1 // pred_check_branch
      %58 = sbr.rel (0) target = $region25
    $region24: #{tpu_custom_call.1} parent=1 // pred_region
      %s60 = ssub.s32 8192, 8192
      %61 = vsyncadd [#allocation10], %s60
      %s62 = sshll.u32 [#allocation11], 4
      %s63 = int_to_ptr.vmem [resolvable:$true] %s62
      %68 = dma.hbm_to_vmem [thread:$0]  %s5, 8192, %s63, [#allocation10], 512, 512, 32
    $region25: #{tpu_custom_call.1} parent=1 // pred_fallthru
      _
    // Predicated region
    $region26: #{tpu_custom_call.1} parent=1 // pred_check
      _
    $region27: #{tpu_custom_call.1} parent=1 // pred_check_branch
      %70 = sbr.rel (0) target = $region29
    $region28: #{tpu_custom_call.1} parent=1 // pred_region
      _
    $region29: #{tpu_custom_call.1} parent=1 // pred_fallthru
      _
    // Predicated region
    $region30: #{tpu_custom_call.1} parent=1 // pred_check
      _
    $region31: #{tpu_custom_call.1} parent=1 // pred_check_branch
      %72 = sbr.rel (0) target = $region33
    $region32: #{tpu_custom_call.1} parent=1 // pred_region
      %s74 = ssub.s32 2048, 2048
      %75 = vsyncadd [#allocation13], %s74
      %s76 = sshll.u32 [#allocation12], 4
      %s77 = int_to_ptr.vmem [resolvable:$true] %s76
      %82 = dma.hbm_to_vmem [thread:$0]  %s7, 2048, %s77, [#allocation13], 128, 128, 8
    $region33: #{tpu_custom_call.1} parent=1 // pred_fallthru
      _
    // Predicated region
    $region34: #{tpu_custom_call.1} parent=1 // pred_check
      _
    $region35: #{tpu_custom_call.1} parent=1 // pred_check_branch
      %84 = sbr.rel (0) target = $region37
    $region36: #{tpu_custom_call.1} parent=1 // pred_region
      _
    $region37: #{tpu_custom_call.1} parent=1 // pred_fallthru
      _
    // Predicated region
    $region38: #{tpu_custom_call.1} parent=1 // pred_check
      _
    $region39: #{tpu_custom_call.1} parent=1 // pred_check_branch
      %86 = sbr.rel (0) target = $region41
    $region40: #{tpu_custom_call.1} parent=1 // pred_region
      _
    $region41: #{tpu_custom_call.1} parent=1 // pred_fallthru
      _
    // Predicated region
    $region42: #{tpu_custom_call.1} parent=1 // pred_check
      _
    $region43: #{tpu_custom_call.1} parent=1 // pred_check_branch
      %88 = sbr.rel (0) target = $region45
    $region44: #{tpu_custom_call.1} parent=1 // pred_region
      _
    $region45: #{tpu_custom_call.1} parent=1 // pred_fallthru
      _
    // Predicated region
    $region46: #{tpu_custom_call.1} parent=1 // pred_check
      _
    $region47: #{tpu_custom_call.1} parent=1 // pred_check_branch
      %90 = sbr.rel (0) target = $region49
    $region48: #{tpu_custom_call.1} parent=1 // pred_region
      _
    $region49: #{tpu_custom_call.1} parent=1 // pred_fallthru
      _
    // Predicated region
    $region50: #{tpu_custom_call.1} parent=1 // pred_check
      _
    $region51: #{tpu_custom_call.1} parent=1 // pred_check_branch
      %92 = sbr.rel (0) target = $region53
    $region52: #{tpu_custom_call.1} parent=1 // pred_region
      _
    $region53: #{tpu_custom_call.1} parent=1 // pred_fallthru
      _
    // Predicated region
    $region54: #{tpu_custom_call.1} parent=1 // pred_check
      _
    $region55: #{tpu_custom_call.1} parent=1 // pred_check_branch
      %94 = sbr.rel (0) target = $region57
    $region56: #{tpu_custom_call.1} parent=1 // pred_region
      _
    $region57: #{tpu_custom_call.1} parent=1 // pred_fallthru
      _
    // Predicated region
    $region58: #{tpu_custom_call.1} parent=1 // pred_check
      _
    $region59: #{tpu_custom_call.1} parent=1 // pred_check_branch
      %96 = sbr.rel (0) target = $region61
    $region60: #{tpu_custom_call.1} parent=1 // pred_region
      _
    $region61: #{tpu_custom_call.1} parent=1 // pred_fallthru
      _
    // Predicated region
    $region62: #{tpu_custom_call.1} parent=1 // pred_check
      _
    $region63: #{tpu_custom_call.1} parent=1 // pred_check_branch
      %98 = sbr.rel (0) target = $region65
    $region64: #{tpu_custom_call.1} parent=1 // pred_region
      %99 = dma.done [#allocation8], 8192
    $region65: #{tpu_custom_call.1} parent=1 // pred_fallthru
      _
    // Predicated region
    $region66: #{tpu_custom_call.1} parent=1 // pred_check
      _
    $region67: #{tpu_custom_call.1} parent=1 // pred_check_branch
      %101 = sbr.rel (0) target = $region69
    $region68: #{tpu_custom_call.1} parent=1 // pred_region
      %102 = dma.done [#allocation10], 8192
    $region69: #{tpu_custom_call.1} parent=1 // pred_fallthru
      _
    // Predicated region
    $region70: #{tpu_custom_call.1} parent=1 // pred_check
      _
    $region71: #{tpu_custom_call.1} parent=1 // pred_check_branch
      %104 = sbr.rel (0) target = $region73
    $region72: #{tpu_custom_call.1} parent=1 // pred_region
      %105 = dma.done [#allocation10], 8192
    $region73: #{tpu_custom_call.1} parent=1 // pred_fallthru
      _
    // Predicated region
    $region74: #{tpu_custom_call.1} parent=1 // pred_check
      _
    $region75: #{tpu_custom_call.1} parent=1 // pred_check_branch
      %107 = sbr.rel (0) target = $region77
    $region76: #{tpu_custom_call.1} parent=1 // pred_region
      %108 = dma.done [#allocation13], 2048
    $region77: #{tpu_custom_call.1} parent=1 // pred_fallthru
      _
    %v109 = vld [vmem:[%s0] sm:$0xff]
    %v110 = vld [vmem:[%s0 + $0x8] sm:$0xff]
    %v111 = vld [vmem:[%s0 + $0x10] sm:$0xff]
    %v112 = vld [vmem:[%s0 + $0x18] sm:$0xff]
    %v113 = vld [vmem:[%s0 + $0x20] sm:$0xff]
    %v114 = vld [vmem:[%s0 + $0x28] sm:$0xff]
    %v115 = vld [vmem:[%s0 + $0x30] sm:$0xff]
    %v116 = vld [vmem:[%s0 + $0x38] sm:$0xff]
    %v117 = vld [vmem:[%s0 + $0x40] sm:$0xff]
    %v118 = vld [vmem:[%s0 + $0x48] sm:$0xff]
    %v119 = vld [vmem:[%s0 + $0x50] sm:$0xff]
    %v120 = vld [vmem:[%s0 + $0x58] sm:$0xff]
    %v121 = vld [vmem:[%s0 + $0x60] sm:$0xff]
    %v122 = vld [vmem:[%s0 + $0x68] sm:$0xff]
    %v123 = vld [vmem:[%s0 + $0x70] sm:$0xff]
    %v124 = vld [vmem:[%s0 + $0x78] sm:$0xff]
    %v125 = vld [vmem:[%s1] sm:$0xff]
    %v126 = vld [vmem:[%s1 + $0x8] sm:$0xff]
    %v127 = vld [vmem:[%s1 + $0x10] sm:$0xff]
    %v128 = vld [vmem:[%s1 + $0x18] sm:$0xff]
    %v129 = vld [vmem:[%s1 + $0x20] sm:$0xff]
    %v130 = vld [vmem:[%s1 + $0x28] sm:$0xff]
    %v131 = vld [vmem:[%s1 + $0x30] sm:$0xff]
    %v132 = vld [vmem:[%s1 + $0x38] sm:$0xff]
    %v133 = vld [vmem:[%s3] sm:$0xf]
    %v135 = vlaneseq
    %v136 = vshrl.u32 %v135, 7
    %v137 = vsub.s32 0, %v136
    %v138 = vrot.slane %v133, %v137
    %v139 = vlaneseq
    %v140 = vshrl.u32 %v139, 7
    %v141 = vsub.s32 1, %v140
    %v142 = vrot.slane %v133, %v141
    %v143 = vlaneseq
    %v144 = vshrl.u32 %v143, 7
    %v145 = vsub.s32 2, %v144
    %v146 = vrot.slane %v133, %v145
    %v147 = vlaneseq
    %v148 = vshrl.u32 %v147, 7
    %v149 = vsub.s32 3, %v148
    %v150 = vrot.slane %v133, %v149
    %vm155 = vcmask 130048
    %v157 = vsel %vm155, %v109, 0
    %v160 = vsel %vm155, %v110, 0
    %v163 = vsel %vm155, %v111, 0
    %v166 = vsel %vm155, %v112, 0
    %v169 = vsel %vm155, %v113, 0
    %v172 = vsel %vm155, %v114, 0
    %v175 = vsel %vm155, %v115, 0
    %v178 = vsel %vm155, %v116, 0
    %v181 = vsel %vm155, %v117, 0
    %v184 = vsel %vm155, %v118, 0
    %v187 = vsel %vm155, %v119, 0
    %v190 = vsel %vm155, %v120, 0
    %v193 = vsel %vm155, %v121, 0
    %v196 = vsel %vm155, %v122, 0
    %v199 = vsel %vm155, %v123, 0
    %v202 = vsel %vm155, %v124, 0
    %204 = vmatprep.subr.mxu0 %v126
    %205 = vmatpush1.msra.mxu0 %v125
    %206 = vmatprep.subr.mxu0 %v130
    %207 = vmatpush1.msra.mxu0 %v129
    %208 = vmatprep.subr.mxu0 0.0
    %209 = vmatpush1.msra.mxu0 0.0
    %210 = vmatprep.subr.mxu0 0.0
    %211 = vmatpush1.msra.mxu0 0.0
    %212 = vmatprep.subr.mxu0 0.0
    %213 = vmatpush1.msra.mxu0 0.0
    %214 = vmatprep.subr.mxu0 0.0
    %215 = vmatpush1.msra.mxu0 0.0
    %216 = vmatprep.subr.mxu0 0.0
    %217 = vmatpush1.msra.mxu0 0.0
    %218 = vmatprep.subr.mxu0 0.0
    %219 = vmatpush1.msra.mxu0 0.0
    %220 = vmatprep.subr.mxu0 0.0
    %221 = vmatpush1.msra.mxu0 0.0
    %222 = vmatprep.subr.mxu0 0.0
    %223 = vmatpush1.msra.mxu0 0.0
    %224 = vmatprep.subr.mxu0 0.0
    %225 = vmatpush1.msra.mxu0 0.0
    %226 = vmatprep.subr.mxu0 0.0
    %227 = vmatpush1.msra.mxu0 0.0
    %228 = vmatprep.subr.mxu0 0.0
    %229 = vmatpush1.msra.mxu0 0.0
    %230 = vmatprep.subr.mxu0 0.0
    %231 = vmatpush1.msra.mxu0 0.0
    %232 = vmatprep.subr.mxu0 0.0
    %233 = vmatpush1.msra.mxu0 0.0
    %234 = vmatprep.subr.mxu0 0.0
    %235 = vmatpush1.msra.mxu0 0.0
    %236 = vmatprep.subr.mxu0 0.0
    %237 = vmatpush1.msra.mxu0 0.0
    %238 = vmatprep.subr.mxu0 0.0
    %239 = vmatpush1.msra.mxu0 0.0
    %240 = vmatprep.subr.mxu0 0.0
    %241 = vmatpush1.msra.mxu0 0.0
    %242 = vmatprep.subr.mxu0 0.0
    %243 = vmatpush1.msra.mxu0 0.0
    %244 = vmatprep.subr.mxu0 0.0
    %245 = vmatpush1.msra.mxu0 0.0
    %246 = vmatprep.subr.mxu0 0.0
    %247 = vmatpush1.msra.mxu0 0.0
    %248 = vmatprep.subr.mxu0 0.0
    %249 = vmatpush1.msra.mxu0 0.0
    %250 = vmatprep.subr.mxu0 0.0
    %251 = vmatpush1.msra.mxu0 0.0
    %252 = vmatprep.subr.mxu0 0.0
    %253 = vmatpush1.msra.mxu0 0.0
    %254 = vmatprep.subr.mxu0 0.0
    %255 = vmatpush1.msra.mxu0 0.0
    %256 = vmatprep.subr.mxu0 0.0
    %257 = vmatpush1.msra.mxu0 0.0
    %258 = vmatprep.subr.mxu0 0.0
    %259 = vmatpush1.msra.mxu0 0.0
    %260 = vmatprep.subr.mxu0 0.0
    %261 = vmatpush1.msra.mxu0 0.0
    %262 = vmatprep.subr.mxu0 0.0
    %263 = vmatpush1.msra.mxu0 0.0
    %264 = vmatprep.subr.mxu0 0.0
    %265 = vmatpush1.msra.mxu0 0.0
    %266 = vmatprep.subr.mxu0 0.0
    %267 = vmatpush1.msra.mxu0 0.0
    %268 = vmatprep.mubr.f32.mxu0 0.0
    %269 = vmatmul.mubr.f32.gmra.mrb[0].mxu0 %v157
    %v270 = vpop.f32.mrb[0].mxu0
    %v271 = vadd.f32 %v138, %v270
    %v272 = vpop.f32.mrb[0].mxu0
    %v273 = vadd.f32 %v142, %v272
    %274 = vmatprep.mubr.f32.mxu0 0.0
    %275 = vmatmul.mubr.f32.gmra.mrb[0].mxu0 %v160
    %v276 = vpop.f32.mrb[0].mxu0
    %v277 = vadd.f32 %v138, %v276
    %v278 = vpop.f32.mrb[0].mxu0
    %v279 = vadd.f32 %v142, %v278
    %280 = vmatprep.mubr.f32.mxu0 0.0
    %281 = vmatmul.mubr.f32.gmra.mrb[0].mxu0 %v163
    %v282 = vpop.f32.mrb[0].mxu0
    %v283 = vadd.f32 %v138, %v282
    %v284 = vpop.f32.mrb[0].mxu0
    %v285 = vadd.f32 %v142, %v284
    %286 = vmatprep.mubr.f32.mxu0 0.0
    %287 = vmatmul.mubr.f32.gmra.mrb[0].mxu0 %v166
    %v288 = vpop.f32.mrb[0].mxu0
    %v289 = vadd.f32 %v138, %v288
    %v290 = vpop.f32.mrb[0].mxu0
    %v291 = vadd.f32 %v142, %v290
    %292 = vmatprep.mubr.f32.mxu0 0.0
    %293 = vmatmul.mubr.f32.gmra.mrb[0].mxu0 %v169
    %v294 = vpop.f32.mrb[0].mxu0
    %v295 = vadd.f32 %v138, %v294
    %v296 = vpop.f32.mrb[0].mxu0
    %v297 = vadd.f32 %v142, %v296
    %298 = vmatprep.mubr.f32.mxu0 0.0
    %299 = vmatmul.mubr.f32.gmra.mrb[0].mxu0 %v172
    %v300 = vpop.f32.mrb[0].mxu0
    %v301 = vadd.f32 %v138, %v300
    %v302 = vpop.f32.mrb[0].mxu0
    %v303 = vadd.f32 %v142, %v302
    %304 = vmatprep.mubr.f32.mxu0 0.0
    %305 = vmatmul.mubr.f32.gmra.mrb[0].mxu0 %v175
    %v306 = vpop.f32.mrb[0].mxu0
    %v307 = vadd.f32 %v138, %v306
    %v308 = vpop.f32.mrb[0].mxu0
    %v309 = vadd.f32 %v142, %v308
    %310 = vmatprep.mubr.f32.mxu0 0.0
    %311 = vmatmul.mubr.f32.gmra.mrb[0].mxu0 %v178
    %v312 = vpop.f32.mrb[0].mxu0
    %v313 = vadd.f32 %v138, %v312
    %v314 = vpop.f32.mrb[0].mxu0
    %v315 = vadd.f32 %v142, %v314
    %316 = vmatprep.mubr.f32.mxu0 0.0
    %317 = vmatmul.mubr.f32.gmra.mrb[0].mxu0 %v181
    %v318 = vpop.f32.mrb[0].mxu0
    %v319 = vadd.f32 %v138, %v318
    %v320 = vpop.f32.mrb[0].mxu0
    %v321 = vadd.f32 %v142, %v320
    %322 = vmatprep.mubr.f32.mxu0 0.0
    %323 = vmatmul.mubr.f32.gmra.mrb[0].mxu0 %v184
    %v324 = vpop.f32.mrb[0].mxu0
    %v325 = vadd.f32 %v138, %v324
    %v326 = vpop.f32.mrb[0].mxu0
    %v327 = vadd.f32 %v142, %v326
    %328 = vmatprep.mubr.f32.mxu0 0.0
    %329 = vmatmul.mubr.f32.gmra.mrb[0].mxu0 %v187
    %v330 = vpop.f32.mrb[0].mxu0
    %v331 = vadd.f32 %v138, %v330
    %v332 = vpop.f32.mrb[0].mxu0
    %v333 = vadd.f32 %v142, %v332
    %334 = vmatprep.mubr.f32.mxu0 0.0
    %335 = vmatmul.mubr.f32.gmra.mrb[0].mxu0 %v190
    %v336 = vpop.f32.mrb[0].mxu0
    %v337 = vadd.f32 %v138, %v336
    %v338 = vpop.f32.mrb[0].mxu0
    %v339 = vadd.f32 %v142, %v338
    %340 = vmatprep.mubr.f32.mxu0 0.0
    %341 = vmatmul.mubr.f32.gmra.mrb[0].mxu0 %v193
    %v342 = vpop.f32.mrb[0].mxu0
    %v343 = vadd.f32 %v138, %v342
    %v344 = vpop.f32.mrb[0].mxu0
    %v345 = vadd.f32 %v142, %v344
    %346 = vmatprep.mubr.f32.mxu0 0.0
    %347 = vmatmul.mubr.f32.gmra.mrb[0].mxu0 %v196
    %v348 = vpop.f32.mrb[0].mxu0
    %v349 = vadd.f32 %v138, %v348
    %v350 = vpop.f32.mrb[0].mxu0
    %v351 = vadd.f32 %v142, %v350
    %352 = vmatprep.mubr.f32.mxu0 0.0
    %353 = vmatmul.mubr.f32.gmra.mrb[0].mxu0 %v199
    %v354 = vpop.f32.mrb[0].mxu0
    %v355 = vadd.f32 %v138, %v354
    %v356 = vpop.f32.mrb[0].mxu0
    %v357 = vadd.f32 %v142, %v356
    %358 = vmatprep.mubr.f32.mxu0 0.0
    %359 = vmatmul.mubr.f32.gmra.mrb[0].mxu0 %v202
    %v360 = vpop.f32.mrb[0].mxu0
    %v361 = vadd.f32 %v138, %v360
    %v362 = vpop.f32.mrb[0].mxu0
    %v363 = vadd.f32 %v142, %v362
    %364 = vdwg.mxu0
    %365 = vmatprep.subr.mxu0 %v128
    %366 = vmatpush1.msra.mxu0 %v127
    %367 = vmatprep.subr.mxu0 %v132
    %368 = vmatpush1.msra.mxu0 %v131
    %369 = vmatprep.subr.mxu0 0.0
    %370 = vmatpush1.msra.mxu0 0.0
    %371 = vmatprep.subr.mxu0 0.0
    %372 = vmatpush1.msra.mxu0 0.0
    %373 = vmatprep.subr.mxu0 0.0
    %374 = vmatpush1.msra.mxu0 0.0
    %375 = vmatprep.subr.mxu0 0.0
    %376 = vmatpush1.msra.mxu0 0.0
    %377 = vmatprep.subr.mxu0 0.0
    %378 = vmatpush1.msra.mxu0 0.0
    %379 = vmatprep.subr.mxu0 0.0
    %380 = vmatpush1.msra.mxu0 0.0
    %381 = vmatprep.subr.mxu0 0.0
    %382 = vmatpush1.msra.mxu0 0.0
    %383 = vmatprep.subr.mxu0 0.0
    %384 = vmatpush1.msra.mxu0 0.0
    %385 = vmatprep.subr.mxu0 0.0
    %386 = vmatpush1.msra.mxu0 0.0
    %387 = vmatprep.subr.mxu0 0.0
    %388 = vmatpush1.msra.mxu0 0.0
    %389 = vmatprep.subr.mxu0 0.0
    %390 = vmatpush1.msra.mxu0 0.0
    %391 = vmatprep.subr.mxu0 0.0
    %392 = vmatpush1.msra.mxu0 0.0
    %393 = vmatprep.subr.mxu0 0.0
    %394 = vmatpush1.msra.mxu0 0.0
    %395 = vmatprep.subr.mxu0 0.0
    %396 = vmatpush1.msra.mxu0 0.0
    %397 = vmatprep.subr.mxu0 0.0
    %398 = vmatpush1.msra.mxu0 0.0
    %399 = vmatprep.subr.mxu0 0.0
    %400 = vmatpush1.msra.mxu0 0.0
    %401 = vmatprep.subr.mxu0 0.0
    %402 = vmatpush1.msra.mxu0 0.0
    %403 = vmatprep.subr.mxu0 0.0
    %404 = vmatpush1.msra.mxu0 0.0
    %405 = vmatprep.subr.mxu0 0.0
    %406 = vmatpush1.msra.mxu0 0.0
    %407 = vmatprep.subr.mxu0 0.0
    %408 = vmatpush1.msra.mxu0 0.0
    %409 = vmatprep.subr.mxu0 0.0
    %410 = vmatpush1.msra.mxu0 0.0
    %411 = vmatprep.subr.mxu0 0.0
    %412 = vmatpush1.msra.mxu0 0.0
    %413 = vmatprep.subr.mxu0 0.0
    %414 = vmatpush1.msra.mxu0 0.0
    %415 = vmatprep.subr.mxu0 0.0
    %416 = vmatpush1.msra.mxu0 0.0
    %417 = vmatprep.subr.mxu0 0.0
    %418 = vmatpush1.msra.mxu0 0.0
    %419 = vmatprep.subr.mxu0 0.0
    %420 = vmatpush1.msra.mxu0 0.0
    %421 = vmatprep.subr.mxu0 0.0
    %422 = vmatpush1.msra.mxu0 0.0
    %423 = vmatprep.subr.mxu0 0.0
    %424 = vmatpush1.msra.mxu0 0.0
    %425 = vmatprep.subr.mxu0 0.0
    %426 = vmatpush1.msra.mxu0 0.0
    %427 = vmatprep.subr.mxu0 0.0
    %428 = vmatpush1.msra.mxu0 0.0
    %429 = vmatprep.mubr.f32.mxu0 0.0
    %430 = vmatmul.mubr.f32.gmra.mrb[0].mxu0 %v157
    %v431 = vpop.f32.mrb[0].mxu0
    %v432 = vadd.f32 %v146, %v431
    %v433 = vpop.f32.mrb[0].mxu0
    %v434 = vadd.f32 %v150, %v433
    %435 = vmatprep.mubr.f32.mxu0 0.0
    %436 = vmatmul.mubr.f32.gmra.mrb[0].mxu0 %v160
    %v437 = vpop.f32.mrb[0].mxu0
    %v438 = vadd.f32 %v146, %v437
    %v439 = vpop.f32.mrb[0].mxu0
    %v440 = vadd.f32 %v150, %v439
    %441 = vmatprep.mubr.f32.mxu0 0.0
    %442 = vmatmul.mubr.f32.gmra.mrb[0].mxu0 %v163
    %v443 = vpop.f32.mrb[0].mxu0
    %v444 = vadd.f32 %v146, %v443
    %v445 = vpop.f32.mrb[0].mxu0
    %v446 = vadd.f32 %v150, %v445
    %447 = vmatprep.mubr.f32.mxu0 0.0
    %448 = vmatmul.mubr.f32.gmra.mrb[0].mxu0 %v166
    %v449 = vpop.f32.mrb[0].mxu0
    %v450 = vadd.f32 %v146, %v449
    %v451 = vpop.f32.mrb[0].mxu0
    %v452 = vadd.f32 %v150, %v451
    %453 = vmatprep.mubr.f32.mxu0 0.0
    %454 = vmatmul.mubr.f32.gmra.mrb[0].mxu0 %v169
    %v455 = vpop.f32.mrb[0].mxu0
    %v456 = vadd.f32 %v146, %v455
    %v457 = vpop.f32.mrb[0].mxu0
    %v458 = vadd.f32 %v150, %v457
    %459 = vmatprep.mubr.f32.mxu0 0.0
    %460 = vmatmul.mubr.f32.gmra.mrb[0].mxu0 %v172
    %v461 = vpop.f32.mrb[0].mxu0
    %v462 = vadd.f32 %v146, %v461
    %v463 = vpop.f32.mrb[0].mxu0
    %v464 = vadd.f32 %v150, %v463
    %465 = vmatprep.mubr.f32.mxu0 0.0
    %466 = vmatmul.mubr.f32.gmra.mrb[0].mxu0 %v175
    %v467 = vpop.f32.mrb[0].mxu0
    %v468 = vadd.f32 %v146, %v467
    %v469 = vpop.f32.mrb[0].mxu0
    %v470 = vadd.f32 %v150, %v469
    %471 = vmatprep.mubr.f32.mxu0 0.0
    %472 = vmatmul.mubr.f32.gmra.mrb[0].mxu0 %v178
    %v473 = vpop.f32.mrb[0].mxu0
    %v474 = vadd.f32 %v146, %v473
    %v475 = vpop.f32.mrb[0].mxu0
    %v476 = vadd.f32 %v150, %v475
    %477 = vmatprep.mubr.f32.mxu0 0.0
    %478 = vmatmul.mubr.f32.gmra.mrb[0].mxu0 %v181
    %v479 = vpop.f32.mrb[0].mxu0
    %v480 = vadd.f32 %v146, %v479
    %v481 = vpop.f32.mrb[0].mxu0
    %v482 = vadd.f32 %v150, %v481
    %483 = vmatprep.mubr.f32.mxu0 0.0
    %484 = vmatmul.mubr.f32.gmra.mrb[0].mxu0 %v184
    %v485 = vpop.f32.mrb[0].mxu0
    %v486 = vadd.f32 %v146, %v485
    %v487 = vpop.f32.mrb[0].mxu0
    %v488 = vadd.f32 %v150, %v487
    %489 = vmatprep.mubr.f32.mxu0 0.0
    %490 = vmatmul.mubr.f32.gmra.mrb[0].mxu0 %v187
    %v491 = vpop.f32.mrb[0].mxu0
    %v492 = vadd.f32 %v146, %v491
    %v493 = vpop.f32.mrb[0].mxu0
    %v494 = vadd.f32 %v150, %v493
    %495 = vmatprep.mubr.f32.mxu0 0.0
    %496 = vmatmul.mubr.f32.gmra.mrb[0].mxu0 %v190
    %v497 = vpop.f32.mrb[0].mxu0
    %v498 = vadd.f32 %v146, %v497
    %v499 = vpop.f32.mrb[0].mxu0
    %v500 = vadd.f32 %v150, %v499
    %501 = vmatprep.mubr.f32.mxu0 0.0
    %502 = vmatmul.mubr.f32.gmra.mrb[0].mxu0 %v193
    %v503 = vpop.f32.mrb[0].mxu0
    %v504 = vadd.f32 %v146, %v503
    %v505 = vpop.f32.mrb[0].mxu0
    %v506 = vadd.f32 %v150, %v505
    %507 = vmatprep.mubr.f32.mxu0 0.0
    %508 = vmatmul.mubr.f32.gmra.mrb[0].mxu0 %v196
    %v509 = vpop.f32.mrb[0].mxu0
    %v510 = vadd.f32 %v146, %v509
    %v511 = vpop.f32.mrb[0].mxu0
    %v512 = vadd.f32 %v150, %v511
    %513 = vmatprep.mubr.f32.mxu0 0.0
    %514 = vmatmul.mubr.f32.gmra.mrb[0].mxu0 %v199
    %v515 = vpop.f32.mrb[0].mxu0
    %v516 = vadd.f32 %v146, %v515
    %v517 = vpop.f32.mrb[0].mxu0
    %v518 = vadd.f32 %v150, %v517
    %519 = vmatprep.mubr.f32.mxu0 0.0
    %520 = vmatmul.mubr.f32.gmra.mrb[0].mxu0 %v202
    %v521 = vpop.f32.mrb[0].mxu0
    %v522 = vadd.f32 %v146, %v521
    %v523 = vpop.f32.mrb[0].mxu0
    %v524 = vadd.f32 %v150, %v523
    %525 = vdwg.mxu0
    %526 = vst [vmem:[#allocation2] sm:$0xff] %v271
    %527 = vst [vmem:[#allocation2 + $0x8] sm:$0xff] %v273
    %528 = vst [vmem:[#allocation2 + $0x10] sm:$0xff] %v432
    %529 = vst [vmem:[#allocation2 + $0x18] sm:$0xff] %v434
    %530 = vst [vmem:[#allocation2 + $0x20] sm:$0xff] %v277
    %531 = vst [vmem:[#allocation2 + $0x28] sm:$0xff] %v279
    %532 = vst [vmem:[#allocation2 + $0x30] sm:$0xff] %v438
    %533 = vst [vmem:[#allocation2 + $0x38] sm:$0xff] %v440
    %534 = vst [vmem:[#allocation2 + $0x40] sm:$0xff] %v283
    %535 = vst [vmem:[#allocation2 + $0x48] sm:$0xff] %v285
    %536 = vst [vmem:[#allocation2 + $0x50] sm:$0xff] %v444
    %537 = vst [vmem:[#allocation2 + $0x58] sm:$0xff] %v446
    %538 = vst [vmem:[#allocation2 + $0x60] sm:$0xff] %v289
    %539 = vst [vmem:[#allocation2 + $0x68] sm:$0xff] %v291
    %540 = vst [vmem:[#allocation2 + $0x70] sm:$0xff] %v450
    %541 = vst [vmem:[#allocation2 + $0x78] sm:$0xff] %v452
    %542 = vst [vmem:[#allocation2 + $0x80] sm:$0xff] %v295
    %543 = vst [vmem:[#allocation2 + $0x88] sm:$0xff] %v297
    %544 = vst [vmem:[#allocation2 + $0x90] sm:$0xff] %v456
    %545 = vst [vmem:[#allocation2 + $0x98] sm:$0xff] %v458
    %546 = vst [vmem:[#allocation2 + $0xa0] sm:$0xff] %v301
    %547 = vst [vmem:[#allocation2 + $0xa8] sm:$0xff] %v303
    %548 = vst [vmem:[#allocation2 + $0xb0] sm:$0xff] %v462
    %549 = vst [vmem:[#allocation2 + $0xb8] sm:$0xff] %v464
    %550 = vst [vmem:[#allocation2 + $0xc0] sm:$0xff] %v307
    %551 = vst [vmem:[#allocation2 + $0xc8] sm:$0xff] %v309
    %552 = vst [vmem:[#allocation2 + $0xd0] sm:$0xff] %v468
    %553 = vst [vmem:[#allocation2 + $0xd8] sm:$0xff] %v470
    %554 = vst [vmem:[#allocation2 + $0xe0] sm:$0xff] %v313
    %555 = vst [vmem:[#allocation2 + $0xe8] sm:$0xff] %v315
    %556 = vst [vmem:[#allocation2 + $0xf0] sm:$0xff] %v474
    %557 = vst [vmem:[#allocation2 + $0xf8] sm:$0xff] %v476
    %558 = vst [vmem:[#allocation2 + $0x100] sm:$0xff] %v319
    %559 = vst [vmem:[#allocation2 + $0x108] sm:$0xff] %v321
    %560 = vst [vmem:[#allocation2 + $0x110] sm:$0xff] %v480
    %561 = vst [vmem:[#allocation2 + $0x118] sm:$0xff] %v482
    %562 = vst [vmem:[#allocation2 + $0x120] sm:$0xff] %v325
    %563 = vst [vmem:[#allocation2 + $0x128] sm:$0xff] %v327
    %564 = vst [vmem:[#allocation2 + $0x130] sm:$0xff] %v486
    %565 = vst [vmem:[#allocation2 + $0x138] sm:$0xff] %v488
    %566 = vst [vmem:[#allocation2 + $0x140] sm:$0xff] %v331
    %567 = vst [vmem:[#allocation2 + $0x148] sm:$0xff] %v333
    %568 = vst [vmem:[#allocation2 + $0x150] sm:$0xff] %v492
    %569 = vst [vmem:[#allocation2 + $0x158] sm:$0xff] %v494
    %570 = vst [vmem:[#allocation2 + $0x160] sm:$0xff] %v337
    %571 = vst [vmem:[#allocation2 + $0x168] sm:$0xff] %v339
    %572 = vst [vmem:[#allocation2 + $0x170] sm:$0xff] %v498
    %573 = vst [vmem:[#allocation2 + $0x178] sm:$0xff] %v500
    %574 = vst [vmem:[#allocation2 + $0x180] sm:$0xff] %v343
    %575 = vst [vmem:[#allocation2 + $0x188] sm:$0xff] %v345
    %576 = vst [vmem:[#allocation2 + $0x190] sm:$0xff] %v504
    %577 = vst [vmem:[#allocation2 + $0x198] sm:$0xff] %v506
    %578 = vst [vmem:[#allocation2 + $0x1a0] sm:$0xff] %v349
    %579 = vst [vmem:[#allocation2 + $0x1a8] sm:$0xff] %v351
    %580 = vst [vmem:[#allocation2 + $0x1b0] sm:$0xff] %v510
    %581 = vst [vmem:[#allocation2 + $0x1b8] sm:$0xff] %v512
    %582 = vst [vmem:[#allocation2 + $0x1c0] sm:$0xff] %v355
    %583 = vst [vmem:[#allocation2 + $0x1c8] sm:$0xff] %v357
    %584 = vst [vmem:[#allocation2 + $0x1d0] sm:$0xff] %v516
    %585 = vst [vmem:[#allocation2 + $0x1d8] sm:$0xff] %v518
    %586 = vst [vmem:[#allocation2 + $0x1e0] sm:$0xff] %v361
    %587 = vst [vmem:[#allocation2 + $0x1e8] sm:$0xff] %v363
    %588 = vst [vmem:[#allocation2 + $0x1f0] sm:$0xff] %v522
    %589 = vst [vmem:[#allocation2 + $0x1f8] sm:$0xff] %v524
    %v590 = vld [vmem:[#allocation7] sm:$0xff]
    %v591 = vld [vmem:[#allocation7 + $0x8] sm:$0xff]
    %v592 = vld [vmem:[#allocation7 + $0x10] sm:$0xff]
    %v593 = vld [vmem:[#allocation7 + $0x18] sm:$0xff]
    %v594 = vld [vmem:[#allocation7 + $0x20] sm:$0xff]
    %v595 = vld [vmem:[#allocation7 + $0x28] sm:$0xff]
    %v596 = vld [vmem:[#allocation7 + $0x30] sm:$0xff]
    %v597 = vld [vmem:[#allocation7 + $0x38] sm:$0xff]
    %v598 = vld [vmem:[#allocation7 + $0x40] sm:$0xff]
    %v599 = vld [vmem:[#allocation7 + $0x48] sm:$0xff]
    %v600 = vld [vmem:[#allocation7 + $0x50] sm:$0xff]
    %v601 = vld [vmem:[#allocation7 + $0x58] sm:$0xff]
    %v602 = vld [vmem:[#allocation7 + $0x60] sm:$0xff]
    %v603 = vld [vmem:[#allocation7 + $0x68] sm:$0xff]
    %v604 = vld [vmem:[#allocation7 + $0x70] sm:$0xff]
    %v605 = vld [vmem:[#allocation7 + $0x78] sm:$0xff]
    %v606 = vld [vmem:[#allocation7 + $0x80] sm:$0xff]
    %v607 = vld [vmem:[#allocation7 + $0x88] sm:$0xff]
    %v608 = vld [vmem:[#allocation7 + $0x90] sm:$0xff]
    %v609 = vld [vmem:[#allocation7 + $0x98] sm:$0xff]
    %v610 = vld [vmem:[#allocation7 + $0xa0] sm:$0xff]
    %v611 = vld [vmem:[#allocation7 + $0xa8] sm:$0xff]
    %v612 = vld [vmem:[#allocation7 + $0xb0] sm:$0xff]
    %v613 = vld [vmem:[#allocation7 + $0xb8] sm:$0xff]
    %v614 = vld [vmem:[#allocation7 + $0xc0] sm:$0xff]
    %v615 = vld [vmem:[#allocation7 + $0xc8] sm:$0xff]
    %v616 = vld [vmem:[#allocation7 + $0xd0] sm:$0xff]
    %v617 = vld [vmem:[#allocation7 + $0xd8] sm:$0xff]
    %v618 = vld [vmem:[#allocation7 + $0xe0] sm:$0xff]
    %v619 = vld [vmem:[#allocation7 + $0xe8] sm:$0xff]
    %v620 = vld [vmem:[#allocation7 + $0xf0] sm:$0xff]
    %v621 = vld [vmem:[#allocation7 + $0xf8] sm:$0xff]
    %v622 = vld [vmem:[#allocation7 + $0x100] sm:$0xff]
    %v623 = vld [vmem:[#allocation7 + $0x108] sm:$0xff]
    %v624 = vld [vmem:[#allocation7 + $0x110] sm:$0xff]
    %v625 = vld [vmem:[#allocation7 + $0x118] sm:$0xff]
    %v626 = vld [vmem:[#allocation7 + $0x120] sm:$0xff]
    %v627 = vld [vmem:[#allocation7 + $0x128] sm:$0xff]
    %v628 = vld [vmem:[#allocation7 + $0x130] sm:$0xff]
    %v629 = vld [vmem:[#allocation7 + $0x138] sm:$0xff]
    %v630 = vld [vmem:[#allocation7 + $0x140] sm:$0xff]
    %v631 = vld [vmem:[#allocation7 + $0x148] sm:$0xff]
    %v632 = vld [vmem:[#allocation7 + $0x150] sm:$0xff]
    %v633 = vld [vmem:[#allocation7 + $0x158] sm:$0xff]
    %v634 = vld [vmem:[#allocation7 + $0x160] sm:$0xff]
    %v635 = vld [vmem:[#allocation7 + $0x168] sm:$0xff]
    %v636 = vld [vmem:[#allocation7 + $0x170] sm:$0xff]
    %v637 = vld [vmem:[#allocation7 + $0x178] sm:$0xff]
    %v638 = vld [vmem:[#allocation7 + $0x180] sm:$0xff]
    %v639 = vld [vmem:[#allocation7 + $0x188] sm:$0xff]
    %v640 = vld [vmem:[#allocation7 + $0x190] sm:$0xff]
    %v641 = vld [vmem:[#allocation7 + $0x198] sm:$0xff]
    %v642 = vld [vmem:[#allocation7 + $0x1a0] sm:$0xff]
    %v643 = vld [vmem:[#allocation7 + $0x1a8] sm:$0xff]
    %v644 = vld [vmem:[#allocation7 + $0x1b0] sm:$0xff]
    %v645 = vld [vmem:[#allocation7 + $0x1b8] sm:$0xff]
    %v646 = vld [vmem:[#allocation7 + $0x1c0] sm:$0xff]
    %v647 = vld [vmem:[#allocation7 + $0x1c8] sm:$0xff]
    %v648 = vld [vmem:[#allocation7 + $0x1d0] sm:$0xff]
    %v649 = vld [vmem:[#allocation7 + $0x1d8] sm:$0xff]
    %v650 = vld [vmem:[#allocation7 + $0x1e0] sm:$0xff]
    %v651 = vld [vmem:[#allocation7 + $0x1e8] sm:$0xff]
    %v652 = vld [vmem:[#allocation7 + $0x1f0] sm:$0xff]
    %v653 = vld [vmem:[#allocation7 + $0x1f8] sm:$0xff]
    %v654 = vld [vmem:[#allocation9] sm:$0xff]
    %v655 = vld [vmem:[#allocation9 + $0x8] sm:$0xff]
    %v656 = vld [vmem:[#allocation9 + $0x10] sm:$0xff]
    %v657 = vld [vmem:[#allocation9 + $0x18] sm:$0xff]
    %v658 = vld [vmem:[#allocation9 + $0x20] sm:$0xff]
    %v659 = vld [vmem:[#allocation9 + $0x28] sm:$0xff]
    %v660 = vld [vmem:[#allocation9 + $0x30] sm:$0xff]
    %v661 = vld [vmem:[#allocation9 + $0x38] sm:$0xff]
    %v662 = vld [vmem:[#allocation9 + $0x40] sm:$0xff]
    %v663 = vld [vmem:[#allocation9 + $0x48] sm:$0xff]
    %v664 = vld [vmem:[#allocation9 + $0x50] sm:$0xff]
    %v665 = vld [vmem:[#allocation9 + $0x58] sm:$0xff]
    %v666 = vld [vmem:[#allocation9 + $0x60] sm:$0xff]
    %v667 = vld [vmem:[#allocation9 + $0x68] sm:$0xff]
    %v668 = vld [vmem:[#allocation9 + $0x70] sm:$0xff]
    %v669 = vld [vmem:[#allocation9 + $0x78] sm:$0xff]
    %v670 = vld [vmem:[#allocation9 + $0x80] sm:$0xff]
    %v671 = vld [vmem:[#allocation9 + $0x88] sm:$0xff]
    %v672 = vld [vmem:[#allocation9 + $0x90] sm:$0xff]
    %v673 = vld [vmem:[#allocation9 + $0x98] sm:$0xff]
    %v674 = vld [vmem:[#allocation9 + $0xa0] sm:$0xff]
    %v675 = vld [vmem:[#allocation9 + $0xa8] sm:$0xff]
    %v676 = vld [vmem:[#allocation9 + $0xb0] sm:$0xff]
    %v677 = vld [vmem:[#allocation9 + $0xb8] sm:$0xff]
    %v678 = vld [vmem:[#allocation9 + $0xc0] sm:$0xff]
    %v679 = vld [vmem:[#allocation9 + $0xc8] sm:$0xff]
    %v680 = vld [vmem:[#allocation9 + $0xd0] sm:$0xff]
    %v681 = vld [vmem:[#allocation9 + $0xd8] sm:$0xff]
    %v682 = vld [vmem:[#allocation9 + $0xe0] sm:$0xff]
    %v683 = vld [vmem:[#allocation9 + $0xe8] sm:$0xff]
    %v684 = vld [vmem:[#allocation9 + $0xf0] sm:$0xff]
    %v685 = vld [vmem:[#allocation9 + $0xf8] sm:$0xff]
    %v686 = vld [vmem:[#allocation9 + $0x100] sm:$0xff]
    %v687 = vld [vmem:[#allocation9 + $0x108] sm:$0xff]
    %v688 = vld [vmem:[#allocation9 + $0x110] sm:$0xff]
    %v689 = vld [vmem:[#allocation9 + $0x118] sm:$0xff]
    %v690 = vld [vmem:[#allocation9 + $0x120] sm:$0xff]
    %v691 = vld [vmem:[#allocation9 + $0x128] sm:$0xff]
    %v692 = vld [vmem:[#allocation9 + $0x130] sm:$0xff]
    %v693 = vld [vmem:[#allocation9 + $0x138] sm:$0xff]
    %v694 = vld [vmem:[#allocation9 + $0x140] sm:$0xff]
    %v695 = vld [vmem:[#allocation9 + $0x148] sm:$0xff]
    %v696 = vld [vmem:[#allocation9 + $0x150] sm:$0xff]
    %v697 = vld [vmem:[#allocation9 + $0x158] sm:$0xff]
    %v698 = vld [vmem:[#allocation9 + $0x160] sm:$0xff]
    %v699 = vld [vmem:[#allocation9 + $0x168] sm:$0xff]
    %v700 = vld [vmem:[#allocation9 + $0x170] sm:$0xff]
    %v701 = vld [vmem:[#allocation9 + $0x178] sm:$0xff]
    %v702 = vld [vmem:[#allocation9 + $0x180] sm:$0xff]
    %v703 = vld [vmem:[#allocation9 + $0x188] sm:$0xff]
    %v704 = vld [vmem:[#allocation9 + $0x190] sm:$0xff]
    %v705 = vld [vmem:[#allocation9 + $0x198] sm:$0xff]
    %v706 = vld [vmem:[#allocation9 + $0x1a0] sm:$0xff]
    %v707 = vld [vmem:[#allocation9 + $0x1a8] sm:$0xff]
    %v708 = vld [vmem:[#allocation9 + $0x1b0] sm:$0xff]
    %v709 = vld [vmem:[#allocation9 + $0x1b8] sm:$0xff]
    %v710 = vld [vmem:[#allocation9 + $0x1c0] sm:$0xff]
    %v711 = vld [vmem:[#allocation9 + $0x1c8] sm:$0xff]
    %v712 = vld [vmem:[#allocation9 + $0x1d0] sm:$0xff]
    %v713 = vld [vmem:[#allocation9 + $0x1d8] sm:$0xff]
    %v714 = vld [vmem:[#allocation9 + $0x1e0] sm:$0xff]
    %v715 = vld [vmem:[#allocation9 + $0x1e8] sm:$0xff]
    %v716 = vld [vmem:[#allocation9 + $0x1f0] sm:$0xff]
    %v717 = vld [vmem:[#allocation9 + $0x1f8] sm:$0xff]
    %v718 = vld [vmem:[%s6] sm:$0xf]
    %v719 = vld [vmem:[#allocation11] sm:$0xff]
    %v720 = vld [vmem:[#allocation11 + $0x8] sm:$0xff]
    %v721 = vld [vmem:[#allocation11 + $0x10] sm:$0xff]
    %v722 = vld [vmem:[#allocation11 + $0x18] sm:$0xff]
    %v723 = vld [vmem:[#allocation11 + $0x20] sm:$0xff]
    %v724 = vld [vmem:[#allocation11 + $0x28] sm:$0xff]
    %v725 = vld [vmem:[#allocation11 + $0x30] sm:$0xff]
    %v726 = vld [vmem:[#allocation11 + $0x38] sm:$0xff]
    %v727 = vld [vmem:[#allocation11 + $0x40] sm:$0xff]
    %v728 = vld [vmem:[#allocation11 + $0x48] sm:$0xff]
    %v729 = vld [vmem:[#allocation11 + $0x50] sm:$0xff]
    %v730 = vld [vmem:[#allocation11 + $0x58] sm:$0xff]
    %v731 = vld [vmem:[#allocation11 + $0x60] sm:$0xff]
    %v732 = vld [vmem:[#allocation11 + $0x68] sm:$0xff]
    %v733 = vld [vmem:[#allocation11 + $0x70] sm:$0xff]
    %v734 = vld [vmem:[#allocation11 + $0x78] sm:$0xff]
    %v735 = vld [vmem:[#allocation11 + $0x80] sm:$0xff]
    %v736 = vld [vmem:[#allocation11 + $0x88] sm:$0xff]
    %v737 = vld [vmem:[#allocation11 + $0x90] sm:$0xff]
    %v738 = vld [vmem:[#allocation11 + $0x98] sm:$0xff]
    %v739 = vld [vmem:[#allocation11 + $0xa0] sm:$0xff]
    %v740 = vld [vmem:[#allocation11 + $0xa8] sm:$0xff]
    %v741 = vld [vmem:[#allocation11 + $0xb0] sm:$0xff]
    %v742 = vld [vmem:[#allocation11 + $0xb8] sm:$0xff]
    %v743 = vld [vmem:[#allocation11 + $0xc0] sm:$0xff]
    %v744 = vld [vmem:[#allocation11 + $0xc8] sm:$0xff]
    %v745 = vld [vmem:[#allocation11 + $0xd0] sm:$0xff]
    %v746 = vld [vmem:[#allocation11 + $0xd8] sm:$0xff]
    %v747 = vld [vmem:[#allocation11 + $0xe0] sm:$0xff]
    %v748 = vld [vmem:[#allocation11 + $0xe8] sm:$0xff]
    %v749 = vld [vmem:[#allocation11 + $0xf0] sm:$0xff]
    %v750 = vld [vmem:[#allocation11 + $0xf8] sm:$0xff]
    %v751 = vld [vmem:[#allocation11 + $0x100] sm:$0xff]
    %v752 = vld [vmem:[#allocation11 + $0x108] sm:$0xff]
    %v753 = vld [vmem:[#allocation11 + $0x110] sm:$0xff]
    %v754 = vld [vmem:[#allocation11 + $0x118] sm:$0xff]
    %v755 = vld [vmem:[#allocation11 + $0x120] sm:$0xff]
    %v756 = vld [vmem:[#allocation11 + $0x128] sm:$0xff]
    %v757 = vld [vmem:[#allocation11 + $0x130] sm:$0xff]
    %v758 = vld [vmem:[#allocation11 + $0x138] sm:$0xff]
    %v759 = vld [vmem:[#allocation11 + $0x140] sm:$0xff]
    %v760 = vld [vmem:[#allocation11 + $0x148] sm:$0xff]
    %v761 = vld [vmem:[#allocation11 + $0x150] sm:$0xff]
    %v762 = vld [vmem:[#allocation11 + $0x158] sm:$0xff]
    %v763 = vld [vmem:[#allocation11 + $0x160] sm:$0xff]
    %v764 = vld [vmem:[#allocation11 + $0x168] sm:$0xff]
    %v765 = vld [vmem:[#allocation11 + $0x170] sm:$0xff]
    %v766 = vld [vmem:[#allocation11 + $0x178] sm:$0xff]
    %v767 = vld [vmem:[#allocation11 + $0x180] sm:$0xff]
    %v768 = vld [vmem:[#allocation11 + $0x188] sm:$0xff]
    %v769 = vld [vmem:[#allocation11 + $0x190] sm:$0xff]
    %v770 = vld [vmem:[#allocation11 + $0x198] sm:$0xff]
    %v771 = vld [vmem:[#allocation11 + $0x1a0] sm:$0xff]
    %v772 = vld [vmem:[#allocation11 + $0x1a8] sm:$0xff]
    %v773 = vld [vmem:[#allocation11 + $0x1b0] sm:$0xff]
    %v774 = vld [vmem:[#allocation11 + $0x1b8] sm:$0xff]
    %v775 = vld [vmem:[#allocation11 + $0x1c0] sm:$0xff]
    %v776 = vld [vmem:[#allocation11 + $0x1c8] sm:$0xff]
    %v777 = vld [vmem:[#allocation11 + $0x1d0] sm:$0xff]
    %v778 = vld [vmem:[#allocation11 + $0x1d8] sm:$0xff]
    %v779 = vld [vmem:[#allocation11 + $0x1e0] sm:$0xff]
    %v780 = vld [vmem:[#allocation11 + $0x1e8] sm:$0xff]
    %v781 = vld [vmem:[#allocation11 + $0x1f0] sm:$0xff]
    %v782 = vld [vmem:[#allocation11 + $0x1f8] sm:$0xff]
    %v783 = vld [vmem:[#allocation12] sm:$0xff]
    %v784 = vld [vmem:[#allocation12 + $0x8] sm:$0xff]
    %v785 = vld [vmem:[#allocation12 + $0x10] sm:$0xff]
    %v786 = vld [vmem:[#allocation12 + $0x18] sm:$0xff]
    %v787 = vld [vmem:[#allocation12 + $0x20] sm:$0xff]
    %v788 = vld [vmem:[#allocation12 + $0x28] sm:$0xff]
    %v789 = vld [vmem:[#allocation12 + $0x30] sm:$0xff]
    %v790 = vld [vmem:[#allocation12 + $0x38] sm:$0xff]
    %v791 = vld [vmem:[#allocation12 + $0x40] sm:$0xff]
    %v792 = vld [vmem:[#allocation12 + $0x48] sm:$0xff]
    %v793 = vld [vmem:[#allocation12 + $0x50] sm:$0xff]
    %v794 = vld [vmem:[#allocation12 + $0x58] sm:$0xff]
    %v795 = vld [vmem:[#allocation12 + $0x60] sm:$0xff]
    %v796 = vld [vmem:[#allocation12 + $0x68] sm:$0xff]
    %v797 = vld [vmem:[#allocation12 + $0x70] sm:$0xff]
    %v798 = vld [vmem:[#allocation12 + $0x78] sm:$0xff]
    %v799 = vld [vmem:[%s8] sm:$0x1]
    %v800 = vld [vmem:[%s9] sm:$0x1]
    %v801 = vld [vmem:[#allocation5] sm:$0x1]
    %v802 = vld [vmem:[#allocation2] sm:$0xff]
    %v803 = vld [vmem:[#allocation2 + $0x8] sm:$0xff]
    %v804 = vld [vmem:[#allocation2 + $0x10] sm:$0xff]
    %v805 = vld [vmem:[#allocation2 + $0x18] sm:$0xff]
    %v806 = vld [vmem:[#allocation2 + $0x20] sm:$0xff]
    %v807 = vld [vmem:[#allocation2 + $0x28] sm:$0xff]
    %v808 = vld [vmem:[#allocation2 + $0x30] sm:$0xff]
    %v809 = vld [vmem:[#allocation2 + $0x38] sm:$0xff]
    %810 = vmatprep.subr.mxu0 %v591
    %811 = vmatpush1.msra.mxu0 %v590
    %812 = vmatprep.subr.mxu0 %v595
    %813 = vmatpush1.msra.mxu0 %v594
    %814 = vmatprep.subr.mxu0 %v599
    %815 = vmatpush1.msra.mxu0 %v598
    %816 = vmatprep.subr.mxu0 %v603
    %817 = vmatpush1.msra.mxu0 %v602
    %818 = vmatprep.subr.mxu0 %v607
    %819 = vmatpush1.msra.mxu0 %v606
    %820 = vmatprep.subr.mxu0 %v611
    %821 = vmatpush1.msra.mxu0 %v610
    %822 = vmatprep.subr.mxu0 %v615
    %823 = vmatpush1.msra.mxu0 %v614
    %824 = vmatprep.subr.mxu0 %v619
    %825 = vmatpush1.msra.mxu0 %v618
    %826 = vmatprep.subr.mxu0 %v623
    %827 = vmatpush1.msra.mxu0 %v622
    %828 = vmatprep.subr.mxu0 %v627
    %829 = vmatpush1.msra.mxu0 %v626
    %830 = vmatprep.subr.mxu0 %v631
    %831 = vmatpush1.msra.mxu0 %v630
    %832 = vmatprep.subr.mxu0 %v635
    %833 = vmatpush1.msra.mxu0 %v634
    %834 = vmatprep.subr.mxu0 %v639
    %835 = vmatpush1.msra.mxu0 %v638
    %836 = vmatprep.subr.mxu0 %v643
    %837 = vmatpush1.msra.mxu0 %v642
    %838 = vmatprep.subr.mxu0 %v647
    %839 = vmatpush1.msra.mxu0 %v646
    %840 = vmatprep.subr.mxu0 %v651
    %841 = vmatpush1.msra.mxu0 %v650
    %842 = vmatprep.subr.mxu0 0.0
    %843 = vmatpush1.msra.mxu0 0.0
    %844 = vmatprep.subr.mxu0 0.0
    %845 = vmatpush1.msra.mxu0 0.0
    %846 = vmatprep.subr.mxu0 0.0
    %847 = vmatpush1.msra.mxu0 0.0
    %848 = vmatprep.subr.mxu0 0.0
    %849 = vmatpush1.msra.mxu0 0.0
    %850 = vmatprep.subr.mxu0 0.0
    %851 = vmatpush1.msra.mxu0 0.0
    %852 = vmatprep.subr.mxu0 0.0
    %853 = vmatpush1.msra.mxu0 0.0
    %854 = vmatprep.subr.mxu0 0.0
    %855 = vmatpush1.msra.mxu0 0.0
    %856 = vmatprep.subr.mxu0 0.0
    %857 = vmatpush1.msra.mxu0 0.0
    %858 = vmatprep.subr.mxu0 0.0
    %859 = vmatpush1.msra.mxu0 0.0
    %860 = vmatprep.subr.mxu0 0.0
    %861 = vmatpush1.msra.mxu0 0.0
    %862 = vmatprep.subr.mxu0 0.0
    %863 = vmatpush1.msra.mxu0 0.0
    %864 = vmatprep.subr.mxu0 0.0
    %865 = vmatpush1.msra.mxu0 0.0
    %866 = vmatprep.subr.mxu0 0.0
    %867 = vmatpush1.msra.mxu0 0.0
    %868 = vmatprep.subr.mxu0 0.0
    %869 = vmatpush1.msra.mxu0 0.0
    %870 = vmatprep.subr.mxu0 0.0
    %871 = vmatpush1.msra.mxu0 0.0
    %872 = vmatprep.subr.mxu0 0.0
    %873 = vmatpush1.msra.mxu0 0.0
    %874 = vmatprep.mubr.f32.mxu0 0.0
    %875 = vmatmul.mubr.f32.gmra.mrb[0].mxu0 0.0
    %v876 = vpop.f32.mrb[0].mxu0
    %v877 = vadd.f32 0.0, %v876
    %v878 = vpop.f32.mrb[0].mxu0
    %v879 = vadd.f32 0.0, %v878
    %880 = vmatprep.mubr.f32.mxu0 0.0
    %881 = vmatmul.mubr.f32.gmra.mrb[0].mxu0 0.0
    %v882 = vpop.f32.mrb[0].mxu0
    %v883 = vadd.f32 0.0, %v882
    %v884 = vpop.f32.mrb[0].mxu0
    %v885 = vadd.f32 0.0, %v884
    %886 = vdwg.mxu0
    %887 = vmatprep.subr.mxu0 %v593
    %888 = vmatpush1.msra.mxu0 %v592
    %889 = vmatprep.subr.mxu0 %v597
    %890 = vmatpush1.msra.mxu0 %v596
    %891 = vmatprep.subr.mxu0 %v601
    %892 = vmatpush1.msra.mxu0 %v600
    %893 = vmatprep.subr.mxu0 %v605
    %894 = vmatpush1.msra.mxu0 %v604
    %895 = vmatprep.subr.mxu0 %v609
    %896 = vmatpush1.msra.mxu0 %v608
    %897 = vmatprep.subr.mxu0 %v613
    %898 = vmatpush1.msra.mxu0 %v612
    %899 = vmatprep.subr.mxu0 %v617
    %900 = vmatpush1.msra.mxu0 %v616
    %901 = vmatprep.subr.mxu0 %v621
    %902 = vmatpush1.msra.mxu0 %v620
    %903 = vmatprep.subr.mxu0 %v625
    %904 = vmatpush1.msra.mxu0 %v624
    %905 = vmatprep.subr.mxu0 %v629
    %906 = vmatpush1.msra.mxu0 %v628
    %907 = vmatprep.subr.mxu0 %v633
    %908 = vmatpush1.msra.mxu0 %v632
    %909 = vmatprep.subr.mxu0 %v637
    %910 = vmatpush1.msra.mxu0 %v636
    %911 = vmatprep.subr.mxu0 %v641
    %912 = vmatpush1.msra.mxu0 %v640
    %913 = vmatprep.subr.mxu0 %v645
    %914 = vmatpush1.msra.mxu0 %v644
    %915 = vmatprep.subr.mxu0 %v649
    %916 = vmatpush1.msra.mxu0 %v648
    %917 = vmatprep.subr.mxu0 %v653
    %918 = vmatpush1.msra.mxu0 %v652
    %919 = vmatprep.subr.mxu0 0.0
    %920 = vmatpush1.msra.mxu0 0.0
    %921 = vmatprep.subr.mxu0 0.0
    %922 = vmatpush1.msra.mxu0 0.0
    %923 = vmatprep.subr.mxu0 0.0
    %924 = vmatpush1.msra.mxu0 0.0
    %925 = vmatprep.subr.mxu0 0.0
    %926 = vmatpush1.msra.mxu0 0.0
    %927 = vmatprep.subr.mxu0 0.0
    %928 = vmatpush1.msra.mxu0 0.0
    %929 = vmatprep.subr.mxu0 0.0
    %930 = vmatpush1.msra.mxu0 0.0
    %931 = vmatprep.subr.mxu0 0.0
    %932 = vmatpush1.msra.mxu0 0.0
    %933 = vmatprep.subr.mxu0 0.0
    %934 = vmatpush1.msra.mxu0 0.0
    %935 = vmatprep.subr.mxu0 0.0
    %936 = vmatpush1.msra.mxu0 0.0
    %937 = vmatprep.subr.mxu0 0.0
    %938 = vmatpush1.msra.mxu0 0.0
    %939 = vmatprep.subr.mxu0 0.0
    %940 = vmatpush1.msra.mxu0 0.0
    %941 = vmatprep.subr.mxu0 0.0
    %942 = vmatpush1.msra.mxu0 0.0
    %943 = vmatprep.subr.mxu0 0.0
    %944 = vmatpush1.msra.mxu0 0.0
    %945 = vmatprep.subr.mxu0 0.0
    %946 = vmatpush1.msra.mxu0 0.0
    %947 = vmatprep.subr.mxu0 0.0
    %948 = vmatpush1.msra.mxu0 0.0
    %949 = vmatprep.subr.mxu0 0.0
    %950 = vmatpush1.msra.mxu0 0.0
    %951 = vmatprep.mubr.f32.mxu0 0.0
    %952 = vmatmul.mubr.f32.gmra.mrb[0].mxu0 0.0
    %v953 = vpop.f32.mrb[0].mxu0
    %v954 = vadd.f32 0.0, %v953
    %v955 = vpop.f32.mrb[0].mxu0
    %v956 = vadd.f32 0.0, %v955
    %957 = vmatprep.mubr.f32.mxu0 0.0
    %958 = vmatmul.mubr.f32.gmra.mrb[0].mxu0 0.0
    %v959 = vpop.f32.mrb[0].mxu0
    %v960 = vadd.f32 0.0, %v959
    %v961 = vpop.f32.mrb[0].mxu0
    %v962 = vadd.f32 0.0, %v961
    %963 = vdwg.mxu0
    %v964 = vadd.f32 %v802, %v877
    %v965 = vadd.f32 %v803, %v879
    %v966 = vadd.f32 %v804, %v954
    %v967 = vadd.f32 %v805, %v956
    %v968 = vadd.f32 %v806, %v883
    %v969 = vadd.f32 %v807, %v885
    %v970 = vadd.f32 %v808, %v960
    %v971 = vadd.f32 %v809, %v962
    %v972 = vxor.u32 %v964, 2147483648
    %v973 = vxor.u32 %v968, 2147483648
    %v974 = vmul.f32 %v972, 1.442695
    %v975 = vpow.pop %v974
    %v976 = vmul.f32 %v973, 1.442695
    %v977 = vpow.pop %v976
    %v978 = vadd.f32 %v975, 1.0
    %v979 = vadd.f32 %v977, 1.0
    %v980 = vrcp.pop %v978
    %v981 = vmul.f32 1.0, %v980
    %v982 = vrcp.pop %v979
    %v983 = vmul.f32 1.0, %v982
    %v984 = vxor.u32 %v965, 2147483648
    %v985 = vxor.u32 %v969, 2147483648
    %v986 = vmul.f32 %v984, 1.442695
    %v987 = vpow.pop %v986
    %v988 = vmul.f32 %v985, 1.442695
    %v989 = vpow.pop %v988
    %v990 = vadd.f32 %v987, 1.0
    %v991 = vadd.f32 %v989, 1.0
    %v992 = vrcp.pop %v990
    %v993 = vmul.f32 1.0, %v992
    %v994 = vrcp.pop %v991
    %v995 = vmul.f32 1.0, %v994
    %v996 = vtanh.pop %v966
    %v997 = vtanh.pop %v970
    %v998 = vxor.u32 %v967, 2147483648
    %v999 = vxor.u32 %v971, 2147483648
    %v1000 = vmul.f32 %v998, 1.442695
    %v1001 = vpow.pop %v1000
    %v1002 = vmul.f32 %v999, 1.442695
    %v1003 = vpow.pop %v1002
    %v1004 = vadd.f32 %v1001, 1.0
    %v1005 = vadd.f32 %v1003, 1.0
    %v1006 = vrcp.pop %v1004
    %v1007 = vmul.f32 1.0, %v1006
    %v1008 = vrcp.pop %v1005
    %v1009 = vmul.f32 1.0, %v1008
    %v1010 = vmul.f32 %v993, 0.0
    %v1011 = vmul.f32 %v995, 0.0
    %v1012 = vmul.f32 %v981, %v996
    %v1013 = vmul.f32 %v983, %v997
    %v1014 = vadd.f32 %v1010, %v1012
    %v1015 = vadd.f32 %v1011, %v1013
    %v1016 = vtanh.pop %v1014
    %v1017 = vtanh.pop %v1015
    %v1018 = vmul.f32 %v1007, %v1016
    %v1019 = vmul.f32 %v1009, %v1017
    %v1021 = vlaneseq
    %v1022 = vshrl.u32 %v1021, 7
    %v1023 = vsub.s32 0, %v1022
    %v1024 = vrot.slane %v718, %v1023
    %v1025 = vlaneseq
    %v1026 = vshrl.u32 %v1025, 7
    %v1027 = vsub.s32 1, %v1026
    %v1028 = vrot.slane %v718, %v1027
    %v1029 = vlaneseq
    %v1030 = vshrl.u32 %v1029, 7
    %v1031 = vsub.s32 2, %v1030
    %v1032 = vrot.slane %v718, %v1031
    %v1033 = vlaneseq
    %v1034 = vshrl.u32 %v1033, 7
    %v1035 = vsub.s32 3, %v1034
    %v1036 = vrot.slane %v718, %v1035
    %1041 = vmatprep.subr.mxu0 %v655
    %1042 = vmatpush1.msra.mxu0 %v654
    %1043 = vmatprep.subr.mxu0 %v659
    %1044 = vmatpush1.msra.mxu0 %v658
    %1045 = vmatprep.subr.mxu0 %v663
    %1046 = vmatpush1.msra.mxu0 %v662
    %1047 = vmatprep.subr.mxu0 %v667
    %1048 = vmatpush1.msra.mxu0 %v666
    %1049 = vmatprep.subr.mxu0 %v671
    %1050 = vmatpush1.msra.mxu0 %v670
    %1051 = vmatprep.subr.mxu0 %v675
    %1052 = vmatpush1.msra.mxu0 %v674
    %1053 = vmatprep.subr.mxu0 %v679
    %1054 = vmatpush1.msra.mxu0 %v678
    %1055 = vmatprep.subr.mxu0 %v683
    %1056 = vmatpush1.msra.mxu0 %v682
    %1057 = vmatprep.subr.mxu0 %v687
    %1058 = vmatpush1.msra.mxu0 %v686
    %1059 = vmatprep.subr.mxu0 %v691
    %1060 = vmatpush1.msra.mxu0 %v690
    %1061 = vmatprep.subr.mxu0 %v695
    %1062 = vmatpush1.msra.mxu0 %v694
    %1063 = vmatprep.subr.mxu0 %v699
    %1064 = vmatpush1.msra.mxu0 %v698
    %1065 = vmatprep.subr.mxu0 %v703
    %1066 = vmatpush1.msra.mxu0 %v702
    %1067 = vmatprep.subr.mxu0 %v707
    %1068 = vmatpush1.msra.mxu0 %v706
    %1069 = vmatprep.subr.mxu0 %v711
    %1070 = vmatpush1.msra.mxu0 %v710
    %1071 = vmatprep.subr.mxu0 %v715
    %1072 = vmatpush1.msra.mxu0 %v714
    %1073 = vmatprep.subr.mxu0 0.0
    %1074 = vmatpush1.msra.mxu0 0.0
    %1075 = vmatprep.subr.mxu0 0.0
    %1076 = vmatpush1.msra.mxu0 0.0
    %1077 = vmatprep.subr.mxu0 0.0
    %1078 = vmatpush1.msra.mxu0 0.0
    %1079 = vmatprep.subr.mxu0 0.0
    %1080 = vmatpush1.msra.mxu0 0.0
    %1081 = vmatprep.subr.mxu0 0.0
    %1082 = vmatpush1.msra.mxu0 0.0
    %1083 = vmatprep.subr.mxu0 0.0
    %1084 = vmatpush1.msra.mxu0 0.0
    %1085 = vmatprep.subr.mxu0 0.0
    %1086 = vmatpush1.msra.mxu0 0.0
    %1087 = vmatprep.subr.mxu0 0.0
    %1088 = vmatpush1.msra.mxu0 0.0
    %1089 = vmatprep.subr.mxu0 0.0
    %1090 = vmatpush1.msra.mxu0 0.0
    %1091 = vmatprep.subr.mxu0 0.0
    %1092 = vmatpush1.msra.mxu0 0.0
    %1093 = vmatprep.subr.mxu0 0.0
    %1094 = vmatpush1.msra.mxu0 0.0
    %1095 = vmatprep.subr.mxu0 0.0
    %1096 = vmatpush1.msra.mxu0 0.0
    %1097 = vmatprep.subr.mxu0 0.0
    %1098 = vmatpush1.msra.mxu0 0.0
    %1099 = vmatprep.subr.mxu0 0.0
    %1100 = vmatpush1.msra.mxu0 0.0
    %1101 = vmatprep.subr.mxu0 0.0
    %1102 = vmatpush1.msra.mxu0 0.0
    %1103 = vmatprep.subr.mxu0 0.0
    %1104 = vmatpush1.msra.mxu0 0.0
    %1105 = vmatprep.mubr.f32.mxu0 0.0
    %1106 = vmatmul.mubr.f32.gmra.mrb[0].mxu0 %v1018
    %v1107 = vpop.f32.mrb[0].mxu0
    %v1108 = vadd.f32 %v1024, %v1107
    %v1109 = vpop.f32.mrb[0].mxu0
    %v1110 = vadd.f32 %v1028, %v1109
    %1111 = vmatprep.mubr.f32.mxu0 0.0
    %1112 = vmatmul.mubr.f32.gmra.mrb[0].mxu0 %v1019
    %v1113 = vpop.f32.mrb[0].mxu0
    %v1114 = vadd.f32 %v1024, %v1113
    %v1115 = vpop.f32.mrb[0].mxu0
    %v1116 = vadd.f32 %v1028, %v1115
    %1117 = vdwg.mxu0
    %1118 = vmatprep.subr.mxu0 %v657
    %1119 = vmatpush1.msra.mxu0 %v656
    %1120 = vmatprep.subr.mxu0 %v661
    %1121 = vmatpush1.msra.mxu0 %v660
    %1122 = vmatprep.subr.mxu0 %v665
    %1123 = vmatpush1.msra.mxu0 %v664
    %1124 = vmatprep.subr.mxu0 %v669
    %1125 = vmatpush1.msra.mxu0 %v668
    %1126 = vmatprep.subr.mxu0 %v673
    %1127 = vmatpush1.msra.mxu0 %v672
    %1128 = vmatprep.subr.mxu0 %v677
    %1129 = vmatpush1.msra.mxu0 %v676
    %1130 = vmatprep.subr.mxu0 %v681
    %1131 = vmatpush1.msra.mxu0 %v680
    %1132 = vmatprep.subr.mxu0 %v685
    %1133 = vmatpush1.msra.mxu0 %v684
    %1134 = vmatprep.subr.mxu0 %v689
    %1135 = vmatpush1.msra.mxu0 %v688
    %1136 = vmatprep.subr.mxu0 %v693
    %1137 = vmatpush1.msra.mxu0 %v692
    %1138 = vmatprep.subr.mxu0 %v697
    %1139 = vmatpush1.msra.mxu0 %v696
    %1140 = vmatprep.subr.mxu0 %v701
    %1141 = vmatpush1.msra.mxu0 %v700
    %1142 = vmatprep.subr.mxu0 %v705
    %1143 = vmatpush1.msra.mxu0 %v704
    %1144 = vmatprep.subr.mxu0 %v709
    %1145 = vmatpush1.msra.mxu0 %v708
    %1146 = vmatprep.subr.mxu0 %v713
    %1147 = vmatpush1.msra.mxu0 %v712
    %1148 = vmatprep.subr.mxu0 %v717
    %1149 = vmatpush1.msra.mxu0 %v716
    %1150 = vmatprep.subr.mxu0 0.0
    %1151 = vmatpush1.msra.mxu0 0.0
    %1152 = vmatprep.subr.mxu0 0.0
    %1153 = vmatpush1.msra.mxu0 0.0
    %1154 = vmatprep.subr.mxu0 0.0
    %1155 = vmatpush1.msra.mxu0 0.0
    %1156 = vmatprep.subr.mxu0 0.0
    %1157 = vmatpush1.msra.mxu0 0.0
    %1158 = vmatprep.subr.mxu0 0.0
    %1159 = vmatpush1.msra.mxu0 0.0
    %1160 = vmatprep.subr.mxu0 0.0
    %1161 = vmatpush1.msra.mxu0 0.0
    %1162 = vmatprep.subr.mxu0 0.0
    %1163 = vmatpush1.msra.mxu0 0.0
    %1164 = vmatprep.subr.mxu0 0.0
    %1165 = vmatpush1.msra.mxu0 0.0
    %1166 = vmatprep.subr.mxu0 0.0
    %1167 = vmatpush1.msra.mxu0 0.0
    %1168 = vmatprep.subr.mxu0 0.0
    %1169 = vmatpush1.msra.mxu0 0.0
    %1170 = vmatprep.subr.mxu0 0.0
    %1171 = vmatpush1.msra.mxu0 0.0
    %1172 = vmatprep.subr.mxu0 0.0
    %1173 = vmatpush1.msra.mxu0 0.0
    %1174 = vmatprep.subr.mxu0 0.0
    %1175 = vmatpush1.msra.mxu0 0.0
    %1176 = vmatprep.subr.mxu0 0.0
    %1177 = vmatpush1.msra.mxu0 0.0
    %1178 = vmatprep.subr.mxu0 0.0
    %1179 = vmatpush1.msra.mxu0 0.0
    %1180 = vmatprep.subr.mxu0 0.0
    %1181 = vmatpush1.msra.mxu0 0.0
    %1182 = vmatprep.mubr.f32.mxu0 0.0
    %1183 = vmatmul.mubr.f32.gmra.mrb[0].mxu0 %v1018
    %v1184 = vpop.f32.mrb[0].mxu0
    %v1185 = vadd.f32 %v1032, %v1184
    %v1186 = vpop.f32.mrb[0].mxu0
    %v1187 = vadd.f32 %v1036, %v1186
    %1188 = vmatprep.mubr.f32.mxu0 0.0
    %1189 = vmatmul.mubr.f32.gmra.mrb[0].mxu0 %v1019
    %v1190 = vpop.f32.mrb[0].mxu0
    %v1191 = vadd.f32 %v1032, %v1190
    %v1192 = vpop.f32.mrb[0].mxu0
    %v1193 = vadd.f32 %v1036, %v1192
    %1194 = vdwg.mxu0
    %1195 = vst [vmem:[#allocation2] sm:$0xff] %v1108
    %1196 = vst [vmem:[#allocation2 + $0x8] sm:$0xff] %v1110
    %1197 = vst [vmem:[#allocation2 + $0x10] sm:$0xff] %v1185
    %1198 = vst [vmem:[#allocation2 + $0x18] sm:$0xff] %v1187
    %1199 = vst [vmem:[#allocation2 + $0x20] sm:$0xff] %v1114
    %1200 = vst [vmem:[#allocation2 + $0x28] sm:$0xff] %v1116
    %1201 = vst [vmem:[#allocation2 + $0x30] sm:$0xff] %v1191
    %1202 = vst [vmem:[#allocation2 + $0x38] sm:$0xff] %v1193
    %s1203 = scalar_lea.vmem [#allocation2], 64
    %v1204 = vld [vmem:[%s1203] sm:$0xff]
    %v1205 = vld [vmem:[%s1203 + $0x8] sm:$0xff]
    %v1206 = vld [vmem:[%s1203 + $0x10] sm:$0xff]
    %v1207 = vld [vmem:[%s1203 + $0x18] sm:$0xff]
    %v1208 = vld [vmem:[%s1203 + $0x20] sm:$0xff]
    %v1209 = vld [vmem:[%s1203 + $0x28] sm:$0xff]
    %v1210 = vld [vmem:[%s1203 + $0x30] sm:$0xff]
    %v1211 = vld [vmem:[%s1203 + $0x38] sm:$0xff]
    %1212 = vmatprep.subr.mxu0 %v591
    %1213 = vmatpush1.msra.mxu0 %v590
    %1214 = vmatprep.subr.mxu0 %v595
    %1215 = vmatpush1.msra.mxu0 %v594
    %1216 = vmatprep.subr.mxu0 %v599
    %1217 = vmatpush1.msra.mxu0 %v598
    %1218 = vmatprep.subr.mxu0 %v603
    %1219 = vmatpush1.msra.mxu0 %v602
    %1220 = vmatprep.subr.mxu0 %v607
    %1221 = vmatpush1.msra.mxu0 %v606
    %1222 = vmatprep.subr.mxu0 %v611
    %1223 = vmatpush1.msra.mxu0 %v610
    %1224 = vmatprep.subr.mxu0 %v615
    %1225 = vmatpush1.msra.mxu0 %v614
    %1226 = vmatprep.subr.mxu0 %v619
    %1227 = vmatpush1.msra.mxu0 %v618
    %1228 = vmatprep.subr.mxu0 %v623
    %1229 = vmatpush1.msra.mxu0 %v622
    %1230 = vmatprep.subr.mxu0 %v627
    %1231 = vmatpush1.msra.mxu0 %v626
    %1232 = vmatprep.subr.mxu0 %v631
    %1233 = vmatpush1.msra.mxu0 %v630
    %1234 = vmatprep.subr.mxu0 %v635
    %1235 = vmatpush1.msra.mxu0 %v634
    %1236 = vmatprep.subr.mxu0 %v639
    %1237 = vmatpush1.msra.mxu0 %v638
    %1238 = vmatprep.subr.mxu0 %v643
    %1239 = vmatpush1.msra.mxu0 %v642
    %1240 = vmatprep.subr.mxu0 %v647
    %1241 = vmatpush1.msra.mxu0 %v646
    %1242 = vmatprep.subr.mxu0 %v651
    %1243 = vmatpush1.msra.mxu0 %v650
    %1244 = vmatprep.subr.mxu0 0.0
    %1245 = vmatpush1.msra.mxu0 0.0
    %1246 = vmatprep.subr.mxu0 0.0
    %1247 = vmatpush1.msra.mxu0 0.0
    %1248 = vmatprep.subr.mxu0 0.0
    %1249 = vmatpush1.msra.mxu0 0.0
    %1250 = vmatprep.subr.mxu0 0.0
    %1251 = vmatpush1.msra.mxu0 0.0
    %1252 = vmatprep.subr.mxu0 0.0
    %1253 = vmatpush1.msra.mxu0 0.0
    %1254 = vmatprep.subr.mxu0 0.0
    %1255 = vmatpush1.msra.mxu0 0.0
    %1256 = vmatprep.subr.mxu0 0.0
    %1257 = vmatpush1.msra.mxu0 0.0
    %1258 = vmatprep.subr.mxu0 0.0
    %1259 = vmatpush1.msra.mxu0 0.0
    %1260 = vmatprep.subr.mxu0 0.0
    %1261 = vmatpush1.msra.mxu0 0.0
    %1262 = vmatprep.subr.mxu0 0.0
    %1263 = vmatpush1.msra.mxu0 0.0
    %1264 = vmatprep.subr.mxu0 0.0
    %1265 = vmatpush1.msra.mxu0 0.0
    %1266 = vmatprep.subr.mxu0 0.0
    %1267 = vmatpush1.msra.mxu0 0.0
    %1268 = vmatprep.subr.mxu0 0.0
    %1269 = vmatpush1.msra.mxu0 0.0
    %1270 = vmatprep.subr.mxu0 0.0
    %1271 = vmatpush1.msra.mxu0 0.0
    %1272 = vmatprep.subr.mxu0 0.0
    %1273 = vmatpush1.msra.mxu0 0.0
    %1274 = vmatprep.subr.mxu0 0.0
    %1275 = vmatpush1.msra.mxu0 0.0
    %1276 = vmatprep.mubr.f32.mxu0 0.0
    %1277 = vmatmul.mubr.f32.gmra.mrb[0].mxu0 %v1018
    %v1278 = vpop.f32.mrb[0].mxu0
    %v1279 = vadd.f32 0.0, %v1278
    %v1280 = vpop.f32.mrb[0].mxu0
    %v1281 = vadd.f32 0.0, %v1280
    %1282 = vmatprep.mubr.f32.mxu0 0.0
    %1283 = vmatmul.mubr.f32.gmra.mrb[0].mxu0 %v1019
    %v1284 = vpop.f32.mrb[0].mxu0
    %v1285 = vadd.f32 0.0, %v1284
    %v1286 = vpop.f32.mrb[0].mxu0
    %v1287 = vadd.f32 0.0, %v1286
    %1288 = vdwg.mxu0
    %1289 = vmatprep.subr.mxu0 %v593
    %1290 = vmatpush1.msra.mxu0 %v592
    %1291 = vmatprep.subr.mxu0 %v597
    %1292 = vmatpush1.msra.mxu0 %v596
    %1293 = vmatprep.subr.mxu0 %v601
    %1294 = vmatpush1.msra.mxu0 %v600
    %1295 = vmatprep.subr.mxu0 %v605
    %1296 = vmatpush1.msra.mxu0 %v604
    %1297 = vmatprep.subr.mxu0 %v609
    %1298 = vmatpush1.msra.mxu0 %v608
    %1299 = vmatprep.subr.mxu0 %v613
    %1300 = vmatpush1.msra.mxu0 %v612
    %1301 = vmatprep.subr.mxu0 %v617
    %1302 = vmatpush1.msra.mxu0 %v616
    %1303 = vmatprep.subr.mxu0 %v621
    %1304 = vmatpush1.msra.mxu0 %v620
    %1305 = vmatprep.subr.mxu0 %v625
    %1306 = vmatpush1.msra.mxu0 %v624
    %1307 = vmatprep.subr.mxu0 %v629
    %1308 = vmatpush1.msra.mxu0 %v628
    %1309 = vmatprep.subr.mxu0 %v633
    %1310 = vmatpush1.msra.mxu0 %v632
    %1311 = vmatprep.subr.mxu0 %v637
    %1312 = vmatpush1.msra.mxu0 %v636
    %1313 = vmatprep.subr.mxu0 %v641
    %1314 = vmatpush1.msra.mxu0 %v640
    %1315 = vmatprep.subr.mxu0 %v645
    %1316 = vmatpush1.msra.mxu0 %v644
    %1317 = vmatprep.subr.mxu0 %v649
    %1318 = vmatpush1.msra.mxu0 %v648
    %1319 = vmatprep.subr.mxu0 %v653
    %1320 = vmatpush1.msra.mxu0 %v652
    %1321 = vmatprep.subr.mxu0 0.0
    %1322 = vmatpush1.msra.mxu0 0.0
    %1323 = vmatprep.subr.mxu0 0.0
    %1324 = vmatpush1.msra.mxu0 0.0
    %1325 = vmatprep.subr.mxu0 0.0
    %1326 = vmatpush1.msra.mxu0 0.0
    %1327 = vmatprep.subr.mxu0 0.0
    %1328 = vmatpush1.msra.mxu0 0.0
    %1329 = vmatprep.subr.mxu0 0.0
    %1330 = vmatpush1.msra.mxu0 0.0
    %1331 = vmatprep.subr.mxu0 0.0
    %1332 = vmatpush1.msra.mxu0 0.0
    %1333 = vmatprep.subr.mxu0 0.0
    %1334 = vmatpush1.msra.mxu0 0.0
    %1335 = vmatprep.subr.mxu0 0.0
    %1336 = vmatpush1.msra.mxu0 0.0
    %1337 = vmatprep.subr.mxu0 0.0
    %1338 = vmatpush1.msra.mxu0 0.0
    %1339 = vmatprep.subr.mxu0 0.0
    %1340 = vmatpush1.msra.mxu0 0.0
    %1341 = vmatprep.subr.mxu0 0.0
    %1342 = vmatpush1.msra.mxu0 0.0
    %1343 = vmatprep.subr.mxu0 0.0
    %1344 = vmatpush1.msra.mxu0 0.0
    %1345 = vmatprep.subr.mxu0 0.0
    %1346 = vmatpush1.msra.mxu0 0.0
    %1347 = vmatprep.subr.mxu0 0.0
    %1348 = vmatpush1.msra.mxu0 0.0
    %1349 = vmatprep.subr.mxu0 0.0
    %1350 = vmatpush1.msra.mxu0 0.0
    %1351 = vmatprep.subr.mxu0 0.0
    %1352 = vmatpush1.msra.mxu0 0.0
    %1353 = vmatprep.mubr.f32.mxu0 0.0
    %1354 = vmatmul.mubr.f32.gmra.mrb[0].mxu0 %v1018
    %v1355 = vpop.f32.mrb[0].mxu0
    %v1356 = vadd.f32 0.0, %v1355
    %v1357 = vpop.f32.mrb[0].mxu0
    %v1358 = vadd.f32 0.0, %v1357
    %1359 = vmatprep.mubr.f32.mxu0 0.0
    %1360 = vmatmul.mubr.f32.gmra.mrb[0].mxu0 %v1019
    %v1361 = vpop.f32.mrb[0].mxu0
    %v1362 = vadd.f32 0.0, %v1361
    %v1363 = vpop.f32.mrb[0].mxu0
    %v1364 = vadd.f32 0.0, %v1363
    %1365 = vdwg.mxu0
    %v1366 = vadd.f32 %v1204, %v1279
    %v1367 = vadd.f32 %v1205, %v1281
    %v1368 = vadd.f32 %v1206, %v1356
    %v1369 = vadd.f32 %v1207, %v1358
    %v1370 = vadd.f32 %v1208, %v1285
    %v1371 = vadd.f32 %v1209, %v1287
    %v1372 = vadd.f32 %v1210, %v1362
    %v1373 = vadd.f32 %v1211, %v1364
    %v1374 = vxor.u32 %v1366, 2147483648
    %v1375 = vxor.u32 %v1370, 2147483648
    %v1376 = vmul.f32 %v1374, 1.442695
    %v1377 = vpow.pop %v1376
    %v1378 = vmul.f32 %v1375, 1.442695
    %v1379 = vpow.pop %v1378
    %v1380 = vadd.f32 %v1377, 1.0
    %v1381 = vadd.f32 %v1379, 1.0
    %v1382 = vrcp.pop %v1380
    %v1383 = vmul.f32 1.0, %v1382
    %v1384 = vrcp.pop %v1381
    %v1385 = vmul.f32 1.0, %v1384
    %v1386 = vxor.u32 %v1367, 2147483648
    %v1387 = vxor.u32 %v1371, 2147483648
    %v1388 = vmul.f32 %v1386, 1.442695
    %v1389 = vpow.pop %v1388
    %v1390 = vmul.f32 %v1387, 1.442695
    %v1391 = vpow.pop %v1390
    %v1392 = vadd.f32 %v1389, 1.0
    %v1393 = vadd.f32 %v1391, 1.0
    %v1394 = vrcp.pop %v1392
    %v1395 = vmul.f32 1.0, %v1394
    %v1396 = vrcp.pop %v1393
    %v1397 = vmul.f32 1.0, %v1396
    %v1398 = vtanh.pop %v1368
    %v1399 = vtanh.pop %v1372
    %v1400 = vxor.u32 %v1369, 2147483648
    %v1401 = vxor.u32 %v1373, 2147483648
    %v1402 = vmul.f32 %v1400, 1.442695
    %v1403 = vpow.pop %v1402
    %v1404 = vmul.f32 %v1401, 1.442695
    %v1405 = vpow.pop %v1404
    %v1406 = vadd.f32 %v1403, 1.0
    %v1407 = vadd.f32 %v1405, 1.0
    %v1408 = vrcp.pop %v1406
    %v1409 = vmul.f32 1.0, %v1408
    %v1410 = vrcp.pop %v1407
    %v1411 = vmul.f32 1.0, %v1410
    %v1412 = vmul.f32 %v1395, %v1014
    %v1413 = vmul.f32 %v1397, %v1015
    %v1414 = vmul.f32 %v1383, %v1398
    %v1415 = vmul.f32 %v1385, %v1399
    %v1416 = vadd.f32 %v1412, %v1414
    %v1417 = vadd.f32 %v1413, %v1415
    %v1418 = vtanh.pop %v1416
    %v1419 = vtanh.pop %v1417
    %v1420 = vmul.f32 %v1409, %v1418
    %v1421 = vmul.f32 %v1411, %v1419
    %1422 = vmatprep.subr.mxu0 %v655
    %1423 = vmatpush1.msra.mxu0 %v654
    %1424 = vmatprep.subr.mxu0 %v659
    %1425 = vmatpush1.msra.mxu0 %v658
    %1426 = vmatprep.subr.mxu0 %v663
    %1427 = vmatpush1.msra.mxu0 %v662
    %1428 = vmatprep.subr.mxu0 %v667
    %1429 = vmatpush1.msra.mxu0 %v666
    %1430 = vmatprep.subr.mxu0 %v671
    %1431 = vmatpush1.msra.mxu0 %v670
    %1432 = vmatprep.subr.mxu0 %v675
    %1433 = vmatpush1.msra.mxu0 %v674
    %1434 = vmatprep.subr.mxu0 %v679
    %1435 = vmatpush1.msra.mxu0 %v678
    %1436 = vmatprep.subr.mxu0 %v683
    %1437 = vmatpush1.msra.mxu0 %v682
    %1438 = vmatprep.subr.mxu0 %v687
    %1439 = vmatpush1.msra.mxu0 %v686
    %1440 = vmatprep.subr.mxu0 %v691
    %1441 = vmatpush1.msra.mxu0 %v690
    %1442 = vmatprep.subr.mxu0 %v695
    %1443 = vmatpush1.msra.mxu0 %v694
    %1444 = vmatprep.subr.mxu0 %v699
    %1445 = vmatpush1.msra.mxu0 %v698
    %1446 = vmatprep.subr.mxu0 %v703
    %1447 = vmatpush1.msra.mxu0 %v702
    %1448 = vmatprep.subr.mxu0 %v707
    %1449 = vmatpush1.msra.mxu0 %v706
    %1450 = vmatprep.subr.mxu0 %v711
    %1451 = vmatpush1.msra.mxu0 %v710
    %1452 = vmatprep.subr.mxu0 %v715
    %1453 = vmatpush1.msra.mxu0 %v714
    %1454 = vmatprep.subr.mxu0 0.0
    %1455 = vmatpush1.msra.mxu0 0.0
    %1456 = vmatprep.subr.mxu0 0.0
    %1457 = vmatpush1.msra.mxu0 0.0
    %1458 = vmatprep.subr.mxu0 0.0
    %1459 = vmatpush1.msra.mxu0 0.0
    %1460 = vmatprep.subr.mxu0 0.0
    %1461 = vmatpush1.msra.mxu0 0.0
    %1462 = vmatprep.subr.mxu0 0.0
    %1463 = vmatpush1.msra.mxu0 0.0
    %1464 = vmatprep.subr.mxu0 0.0
    %1465 = vmatpush1.msra.mxu0 0.0
    %1466 = vmatprep.subr.mxu0 0.0
    %1467 = vmatpush1.msra.mxu0 0.0
    %1468 = vmatprep.subr.mxu0 0.0
    %1469 = vmatpush1.msra.mxu0 0.0
    %1470 = vmatprep.subr.mxu0 0.0
    %1471 = vmatpush1.msra.mxu0 0.0
    %1472 = vmatprep.subr.mxu0 0.0
    %1473 = vmatpush1.msra.mxu0 0.0
    %1474 = vmatprep.subr.mxu0 0.0
    %1475 = vmatpush1.msra.mxu0 0.0
    %1476 = vmatprep.subr.mxu0 0.0
    %1477 = vmatpush1.msra.mxu0 0.0
    %1478 = vmatprep.subr.mxu0 0.0
    %1479 = vmatpush1.msra.mxu0 0.0
    %1480 = vmatprep.subr.mxu0 0.0
    %1481 = vmatpush1.msra.mxu0 0.0
    %1482 = vmatprep.subr.mxu0 0.0
    %1483 = vmatpush1.msra.mxu0 0.0
    %1484 = vmatprep.subr.mxu0 0.0
    %1485 = vmatpush1.msra.mxu0 0.0
    %1486 = vmatprep.mubr.f32.mxu0 0.0
    %1487 = vmatmul.mubr.f32.gmra.mrb[0].mxu0 %v1420
    %v1488 = vpop.f32.mrb[0].mxu0
    %v1489 = vadd.f32 %v1024, %v1488
    %v1490 = vpop.f32.mrb[0].mxu0
    %v1491 = vadd.f32 %v1028, %v1490
    %1492 = vmatprep.mubr.f32.mxu0 0.0
    %1493 = vmatmul.mubr.f32.gmra.mrb[0].mxu0 %v1421
    %v1494 = vpop.f32.mrb[0].mxu0
    %v1495 = vadd.f32 %v1024, %v1494
    %v1496 = vpop.f32.mrb[0].mxu0
    %v1497 = vadd.f32 %v1028, %v1496
    %1498 = vdwg.mxu0
    %1499 = vmatprep.subr.mxu0 %v657
    %1500 = vmatpush1.msra.mxu0 %v656
    %1501 = vmatprep.subr.mxu0 %v661
    %1502 = vmatpush1.msra.mxu0 %v660
    %1503 = vmatprep.subr.mxu0 %v665
    %1504 = vmatpush1.msra.mxu0 %v664
    %1505 = vmatprep.subr.mxu0 %v669
    %1506 = vmatpush1.msra.mxu0 %v668
    %1507 = vmatprep.subr.mxu0 %v673
    %1508 = vmatpush1.msra.mxu0 %v672
    %1509 = vmatprep.subr.mxu0 %v677
    %1510 = vmatpush1.msra.mxu0 %v676
    %1511 = vmatprep.subr.mxu0 %v681
    %1512 = vmatpush1.msra.mxu0 %v680
    %1513 = vmatprep.subr.mxu0 %v685
    %1514 = vmatpush1.msra.mxu0 %v684
    %1515 = vmatprep.subr.mxu0 %v689
    %1516 = vmatpush1.msra.mxu0 %v688
    %1517 = vmatprep.subr.mxu0 %v693
    %1518 = vmatpush1.msra.mxu0 %v692
    %1519 = vmatprep.subr.mxu0 %v697
    %1520 = vmatpush1.msra.mxu0 %v696
    %1521 = vmatprep.subr.mxu0 %v701
    %1522 = vmatpush1.msra.mxu0 %v700
    %1523 = vmatprep.subr.mxu0 %v705
    %1524 = vmatpush1.msra.mxu0 %v704
    %1525 = vmatprep.subr.mxu0 %v709
    %1526 = vmatpush1.msra.mxu0 %v708
    %1527 = vmatprep.subr.mxu0 %v713
    %1528 = vmatpush1.msra.mxu0 %v712
    %1529 = vmatprep.subr.mxu0 %v717
    %1530 = vmatpush1.msra.mxu0 %v716
    %1531 = vmatprep.subr.mxu0 0.0
    %1532 = vmatpush1.msra.mxu0 0.0
    %1533 = vmatprep.subr.mxu0 0.0
    %1534 = vmatpush1.msra.mxu0 0.0
    %1535 = vmatprep.subr.mxu0 0.0
    %1536 = vmatpush1.msra.mxu0 0.0
    %1537 = vmatprep.subr.mxu0 0.0
    %1538 = vmatpush1.msra.mxu0 0.0
    %1539 = vmatprep.subr.mxu0 0.0
    %1540 = vmatpush1.msra.mxu0 0.0
    %1541 = vmatprep.subr.mxu0 0.0
    %1542 = vmatpush1.msra.mxu0 0.0
    %1543 = vmatprep.subr.mxu0 0.0
    %1544 = vmatpush1.msra.mxu0 0.0
    %1545 = vmatprep.subr.mxu0 0.0
    %1546 = vmatpush1.msra.mxu0 0.0
    %1547 = vmatprep.subr.mxu0 0.0
    %1548 = vmatpush1.msra.mxu0 0.0
    %1549 = vmatprep.subr.mxu0 0.0
    %1550 = vmatpush1.msra.mxu0 0.0
    %1551 = vmatprep.subr.mxu0 0.0
    %1552 = vmatpush1.msra.mxu0 0.0
    %1553 = vmatprep.subr.mxu0 0.0
    %1554 = vmatpush1.msra.mxu0 0.0
    %1555 = vmatprep.subr.mxu0 0.0
    %1556 = vmatpush1.msra.mxu0 0.0
    %1557 = vmatprep.subr.mxu0 0.0
    %1558 = vmatpush1.msra.mxu0 0.0
    %1559 = vmatprep.subr.mxu0 0.0
    %1560 = vmatpush1.msra.mxu0 0.0
    %1561 = vmatprep.subr.mxu0 0.0
    %1562 = vmatpush1.msra.mxu0 0.0
    %1563 = vmatprep.mubr.f32.mxu0 0.0
    %1564 = vmatmul.mubr.f32.gmra.mrb[0].mxu0 %v1420
    %v1565 = vpop.f32.mrb[0].mxu0
    %v1566 = vadd.f32 %v1032, %v1565
    %v1567 = vpop.f32.mrb[0].mxu0
    %v1568 = vadd.f32 %v1036, %v1567
    %1569 = vmatprep.mubr.f32.mxu0 0.0
    %1570 = vmatmul.mubr.f32.gmra.mrb[0].mxu0 %v1421
    %v1571 = vpop.f32.mrb[0].mxu0
    %v1572 = vadd.f32 %v1032, %v1571
    %v1573 = vpop.f32.mrb[0].mxu0
    %v1574 = vadd.f32 %v1036, %v1573
    %1575 = vdwg.mxu0
    %1576 = vst [vmem:[%s1203] sm:$0xff] %v1489
    %1577 = vst [vmem:[%s1203 + $0x8] sm:$0xff] %v1491
    %1578 = vst [vmem:[%s1203 + $0x10] sm:$0xff] %v1566
    %1579 = vst [vmem:[%s1203 + $0x18] sm:$0xff] %v1568
    %1580 = vst [vmem:[%s1203 + $0x20] sm:$0xff] %v1495
    %1581 = vst [vmem:[%s1203 + $0x28] sm:$0xff] %v1497
    %1582 = vst [vmem:[%s1203 + $0x30] sm:$0xff] %v1572
    %1583 = vst [vmem:[%s1203 + $0x38] sm:$0xff] %v1574
    %s1584 = scalar_lea.vmem [#allocation2], 128
    %v1585 = vld [vmem:[%s1584] sm:$0xff]
    %v1586 = vld [vmem:[%s1584 + $0x8] sm:$0xff]
    %v1587 = vld [vmem:[%s1584 + $0x10] sm:$0xff]
    %v1588 = vld [vmem:[%s1584 + $0x18] sm:$0xff]
    %v1589 = vld [vmem:[%s1584 + $0x20] sm:$0xff]
    %v1590 = vld [vmem:[%s1584 + $0x28] sm:$0xff]
    %v1591 = vld [vmem:[%s1584 + $0x30] sm:$0xff]
    %v1592 = vld [vmem:[%s1584 + $0x38] sm:$0xff]
    %1593 = vmatprep.subr.mxu0 %v591
    %1594 = vmatpush1.msra.mxu0 %v590
    %1595 = vmatprep.subr.mxu0 %v595
    %1596 = vmatpush1.msra.mxu0 %v594
    %1597 = vmatprep.subr.mxu0 %v599
    %1598 = vmatpush1.msra.mxu0 %v598
    %1599 = vmatprep.subr.mxu0 %v603
    %1600 = vmatpush1.msra.mxu0 %v602
    %1601 = vmatprep.subr.mxu0 %v607
    %1602 = vmatpush1.msra.mxu0 %v606
    %1603 = vmatprep.subr.mxu0 %v611
    %1604 = vmatpush1.msra.mxu0 %v610
    %1605 = vmatprep.subr.mxu0 %v615
    %1606 = vmatpush1.msra.mxu0 %v614
    %1607 = vmatprep.subr.mxu0 %v619
    %1608 = vmatpush1.msra.mxu0 %v618
    %1609 = vmatprep.subr.mxu0 %v623
    %1610 = vmatpush1.msra.mxu0 %v622
    %1611 = vmatprep.subr.mxu0 %v627
    %1612 = vmatpush1.msra.mxu0 %v626
    %1613 = vmatprep.subr.mxu0 %v631
    %1614 = vmatpush1.msra.mxu0 %v630
    %1615 = vmatprep.subr.mxu0 %v635
    %1616 = vmatpush1.msra.mxu0 %v634
    %1617 = vmatprep.subr.mxu0 %v639
    %1618 = vmatpush1.msra.mxu0 %v638
    %1619 = vmatprep.subr.mxu0 %v643
    %1620 = vmatpush1.msra.mxu0 %v642
    %1621 = vmatprep.subr.mxu0 %v647
    %1622 = vmatpush1.msra.mxu0 %v646
    %1623 = vmatprep.subr.mxu0 %v651
    %1624 = vmatpush1.msra.mxu0 %v650
    %1625 = vmatprep.subr.mxu0 0.0
    %1626 = vmatpush1.msra.mxu0 0.0
    %1627 = vmatprep.subr.mxu0 0.0
    %1628 = vmatpush1.msra.mxu0 0.0
    %1629 = vmatprep.subr.mxu0 0.0
    %1630 = vmatpush1.msra.mxu0 0.0
    %1631 = vmatprep.subr.mxu0 0.0
    %1632 = vmatpush1.msra.mxu0 0.0
    %1633 = vmatprep.subr.mxu0 0.0
    %1634 = vmatpush1.msra.mxu0 0.0
    %1635 = vmatprep.subr.mxu0 0.0
    %1636 = vmatpush1.msra.mxu0 0.0
    %1637 = vmatprep.subr.mxu0 0.0
    %1638 = vmatpush1.msra.mxu0 0.0
    %1639 = vmatprep.subr.mxu0 0.0
    %1640 = vmatpush1.msra.mxu0 0.0
    %1641 = vmatprep.subr.mxu0 0.0
    %1642 = vmatpush1.msra.mxu0 0.0
    %1643 = vmatprep.subr.mxu0 0.0
    %1644 = vmatpush1.msra.mxu0 0.0
    %1645 = vmatprep.subr.mxu0 0.0
    %1646 = vmatpush1.msra.mxu0 0.0
    %1647 = vmatprep.subr.mxu0 0.0
    %1648 = vmatpush1.msra.mxu0 0.0
    %1649 = vmatprep.subr.mxu0 0.0
    %1650 = vmatpush1.msra.mxu0 0.0
    %1651 = vmatprep.subr.mxu0 0.0
    %1652 = vmatpush1.msra.mxu0 0.0
    %1653 = vmatprep.subr.mxu0 0.0
    %1654 = vmatpush1.msra.mxu0 0.0
    %1655 = vmatprep.subr.mxu0 0.0
    %1656 = vmatpush1.msra.mxu0 0.0
    %1657 = vmatprep.mubr.f32.mxu0 0.0
    %1658 = vmatmul.mubr.f32.gmra.mrb[0].mxu0 %v1420
    %v1659 = vpop.f32.mrb[0].mxu0
    %v1660 = vadd.f32 0.0, %v1659
    %v1661 = vpop.f32.mrb[0].mxu0
    %v1662 = vadd.f32 0.0, %v1661
    %1663 = vmatprep.mubr.f32.mxu0 0.0
    %1664 = vmatmul.mubr.f32.gmra.mrb[0].mxu0 %v1421
    %v1665 = vpop.f32.mrb[0].mxu0
    %v1666 = vadd.f32 0.0, %v1665
    %v1667 = vpop.f32.mrb[0].mxu0
    %v1668 = vadd.f32 0.0, %v1667
    %1669 = vdwg.mxu0
    %1670 = vmatprep.subr.mxu0 %v593
    %1671 = vmatpush1.msra.mxu0 %v592
    %1672 = vmatprep.subr.mxu0 %v597
    %1673 = vmatpush1.msra.mxu0 %v596
    %1674 = vmatprep.subr.mxu0 %v601
    %1675 = vmatpush1.msra.mxu0 %v600
    %1676 = vmatprep.subr.mxu0 %v605
    %1677 = vmatpush1.msra.mxu0 %v604
    %1678 = vmatprep.subr.mxu0 %v609
    %1679 = vmatpush1.msra.mxu0 %v608
    %1680 = vmatprep.subr.mxu0 %v613
    %1681 = vmatpush1.msra.mxu0 %v612
    %1682 = vmatprep.subr.mxu0 %v617
    %1683 = vmatpush1.msra.mxu0 %v616
    %1684 = vmatprep.subr.mxu0 %v621
    %1685 = vmatpush1.msra.mxu0 %v620
    %1686 = vmatprep.subr.mxu0 %v625
    %1687 = vmatpush1.msra.mxu0 %v624
    %1688 = vmatprep.subr.mxu0 %v629
    %1689 = vmatpush1.msra.mxu0 %v628
    %1690 = vmatprep.subr.mxu0 %v633
    %1691 = vmatpush1.msra.mxu0 %v632
    %1692 = vmatprep.subr.mxu0 %v637
    %1693 = vmatpush1.msra.mxu0 %v636
    %1694 = vmatprep.subr.mxu0 %v641
    %1695 = vmatpush1.msra.mxu0 %v640
    %1696 = vmatprep.subr.mxu0 %v645
    %1697 = vmatpush1.msra.mxu0 %v644
    %1698 = vmatprep.subr.mxu0 %v649
    %1699 = vmatpush1.msra.mxu0 %v648
    %1700 = vmatprep.subr.mxu0 %v653
    %1701 = vmatpush1.msra.mxu0 %v652
    %1702 = vmatprep.subr.mxu0 0.0
    %1703 = vmatpush1.msra.mxu0 0.0
    %1704 = vmatprep.subr.mxu0 0.0
    %1705 = vmatpush1.msra.mxu0 0.0
    %1706 = vmatprep.subr.mxu0 0.0
    %1707 = vmatpush1.msra.mxu0 0.0
    %1708 = vmatprep.subr.mxu0 0.0
    %1709 = vmatpush1.msra.mxu0 0.0
    %1710 = vmatprep.subr.mxu0 0.0
    %1711 = vmatpush1.msra.mxu0 0.0
    %1712 = vmatprep.subr.mxu0 0.0
    %1713 = vmatpush1.msra.mxu0 0.0
    %1714 = vmatprep.subr.mxu0 0.0
    %1715 = vmatpush1.msra.mxu0 0.0
    %1716 = vmatprep.subr.mxu0 0.0
    %1717 = vmatpush1.msra.mxu0 0.0
    %1718 = vmatprep.subr.mxu0 0.0
    %1719 = vmatpush1.msra.mxu0 0.0
    %1720 = vmatprep.subr.mxu0 0.0
    %1721 = vmatpush1.msra.mxu0 0.0
    %1722 = vmatprep.subr.mxu0 0.0
    %1723 = vmatpush1.msra.mxu0 0.0
    %1724 = vmatprep.subr.mxu0 0.0
    %1725 = vmatpush1.msra.mxu0 0.0
    %1726 = vmatprep.subr.mxu0 0.0
    %1727 = vmatpush1.msra.mxu0 0.0
    %1728 = vmatprep.subr.mxu0 0.0
    %1729 = vmatpush1.msra.mxu0 0.0
    %1730 = vmatprep.subr.mxu0 0.0
    %1731 = vmatpush1.msra.mxu0 0.0
    %1732 = vmatprep.subr.mxu0 0.0
    %1733 = vmatpush1.msra.mxu0 0.0
    %1734 = vmatprep.mubr.f32.mxu0 0.0
    %1735 = vmatmul.mubr.f32.gmra.mrb[0].mxu0 %v1420
    %v1736 = vpop.f32.mrb[0].mxu0
    %v1737 = vadd.f32 0.0, %v1736
    %v1738 = vpop.f32.mrb[0].mxu0
    %v1739 = vadd.f32 0.0, %v1738
    %1740 = vmatprep.mubr.f32.mxu0 0.0
    %1741 = vmatmul.mubr.f32.gmra.mrb[0].mxu0 %v1421
    %v1742 = vpop.f32.mrb[0].mxu0
    %v1743 = vadd.f32 0.0, %v1742
    %v1744 = vpop.f32.mrb[0].mxu0
    %v1745 = vadd.f32 0.0, %v1744
    %1746 = vdwg.mxu0
    %v1747 = vadd.f32 %v1585, %v1660
    %v1748 = vadd.f32 %v1586, %v1662
    %v1749 = vadd.f32 %v1587, %v1737
    %v1750 = vadd.f32 %v1588, %v1739
    %v1751 = vadd.f32 %v1589, %v1666
    %v1752 = vadd.f32 %v1590, %v1668
    %v1753 = vadd.f32 %v1591, %v1743
    %v1754 = vadd.f32 %v1592, %v1745
    %v1755 = vxor.u32 %v1747, 2147483648
    %v1756 = vxor.u32 %v1751, 2147483648
    %v1757 = vmul.f32 %v1755, 1.442695
    %v1758 = vpow.pop %v1757
    %v1759 = vmul.f32 %v1756, 1.442695
    %v1760 = vpow.pop %v1759
    %v1761 = vadd.f32 %v1758, 1.0
    %v1762 = vadd.f32 %v1760, 1.0
    %v1763 = vrcp.pop %v1761
    %v1764 = vmul.f32 1.0, %v1763
    %v1765 = vrcp.pop %v1762
    %v1766 = vmul.f32 1.0, %v1765
    %v1767 = vxor.u32 %v1748, 2147483648
    %v1768 = vxor.u32 %v1752, 2147483648
    %v1769 = vmul.f32 %v1767, 1.442695
    %v1770 = vpow.pop %v1769
    %v1771 = vmul.f32 %v1768, 1.442695
    %v1772 = vpow.pop %v1771
    %v1773 = vadd.f32 %v1770, 1.0
    %v1774 = vadd.f32 %v1772, 1.0
    %v1775 = vrcp.pop %v1773
    %v1776 = vmul.f32 1.0, %v1775
    %v1777 = vrcp.pop %v1774
    %v1778 = vmul.f32 1.0, %v1777
    %v1779 = vtanh.pop %v1749
    %v1780 = vtanh.pop %v1753
    %v1781 = vxor.u32 %v1750, 2147483648
    %v1782 = vxor.u32 %v1754, 2147483648
    %v1783 = vmul.f32 %v1781, 1.442695
    %v1784 = vpow.pop %v1783
    %v1785 = vmul.f32 %v1782, 1.442695
    %v1786 = vpow.pop %v1785
    %v1787 = vadd.f32 %v1784, 1.0
    %v1788 = vadd.f32 %v1786, 1.0
    %v1789 = vrcp.pop %v1787
    %v1790 = vmul.f32 1.0, %v1789
    %v1791 = vrcp.pop %v1788
    %v1792 = vmul.f32 1.0, %v1791
    %v1793 = vmul.f32 %v1776, %v1416
    %v1794 = vmul.f32 %v1778, %v1417
    %v1795 = vmul.f32 %v1764, %v1779
    %v1796 = vmul.f32 %v1766, %v1780
    %v1797 = vadd.f32 %v1793, %v1795
    %v1798 = vadd.f32 %v1794, %v1796
    %v1799 = vtanh.pop %v1797
    %v1800 = vtanh.pop %v1798
    %v1801 = vmul.f32 %v1790, %v1799
    %v1802 = vmul.f32 %v1792, %v1800
    %1803 = vmatprep.subr.mxu0 %v655
    %1804 = vmatpush1.msra.mxu0 %v654
    %1805 = vmatprep.subr.mxu0 %v659
    %1806 = vmatpush1.msra.mxu0 %v658
    %1807 = vmatprep.subr.mxu0 %v663
    %1808 = vmatpush1.msra.mxu0 %v662
    %1809 = vmatprep.subr.mxu0 %v667
    %1810 = vmatpush1.msra.mxu0 %v666
    %1811 = vmatprep.subr.mxu0 %v671
    %1812 = vmatpush1.msra.mxu0 %v670
    %1813 = vmatprep.subr.mxu0 %v675
    %1814 = vmatpush1.msra.mxu0 %v674
    %1815 = vmatprep.subr.mxu0 %v679
    %1816 = vmatpush1.msra.mxu0 %v678
    %1817 = vmatprep.subr.mxu0 %v683
    %1818 = vmatpush1.msra.mxu0 %v682
    %1819 = vmatprep.subr.mxu0 %v687
    %1820 = vmatpush1.msra.mxu0 %v686
    %1821 = vmatprep.subr.mxu0 %v691
    %1822 = vmatpush1.msra.mxu0 %v690
    %1823 = vmatprep.subr.mxu0 %v695
    %1824 = vmatpush1.msra.mxu0 %v694
    %1825 = vmatprep.subr.mxu0 %v699
    %1826 = vmatpush1.msra.mxu0 %v698
    %1827 = vmatprep.subr.mxu0 %v703
    %1828 = vmatpush1.msra.mxu0 %v702
    %1829 = vmatprep.subr.mxu0 %v707
    %1830 = vmatpush1.msra.mxu0 %v706
    %1831 = vmatprep.subr.mxu0 %v711
    %1832 = vmatpush1.msra.mxu0 %v710
    %1833 = vmatprep.subr.mxu0 %v715
    %1834 = vmatpush1.msra.mxu0 %v714
    %1835 = vmatprep.subr.mxu0 0.0
    %1836 = vmatpush1.msra.mxu0 0.0
    %1837 = vmatprep.subr.mxu0 0.0
    %1838 = vmatpush1.msra.mxu0 0.0
    %1839 = vmatprep.subr.mxu0 0.0
    %1840 = vmatpush1.msra.mxu0 0.0
    %1841 = vmatprep.subr.mxu0 0.0
    %1842 = vmatpush1.msra.mxu0 0.0
    %1843 = vmatprep.subr.mxu0 0.0
    %1844 = vmatpush1.msra.mxu0 0.0
    %1845 = vmatprep.subr.mxu0 0.0
    %1846 = vmatpush1.msra.mxu0 0.0
    %1847 = vmatprep.subr.mxu0 0.0
    %1848 = vmatpush1.msra.mxu0 0.0
    %1849 = vmatprep.subr.mxu0 0.0
    %1850 = vmatpush1.msra.mxu0 0.0
    %1851 = vmatprep.subr.mxu0 0.0
    %1852 = vmatpush1.msra.mxu0 0.0
    %1853 = vmatprep.subr.mxu0 0.0
    %1854 = vmatpush1.msra.mxu0 0.0
    %1855 = vmatprep.subr.mxu0 0.0
    %1856 = vmatpush1.msra.mxu0 0.0
    %1857 = vmatprep.subr.mxu0 0.0
    %1858 = vmatpush1.msra.mxu0 0.0
    %1859 = vmatprep.subr.mxu0 0.0
    %1860 = vmatpush1.msra.mxu0 0.0
    %1861 = vmatprep.subr.mxu0 0.0
    %1862 = vmatpush1.msra.mxu0 0.0
    %1863 = vmatprep.subr.mxu0 0.0
    %1864 = vmatpush1.msra.mxu0 0.0
    %1865 = vmatprep.subr.mxu0 0.0
    %1866 = vmatpush1.msra.mxu0 0.0
    %1867 = vmatprep.mubr.f32.mxu0 0.0
    %1868 = vmatmul.mubr.f32.gmra.mrb[0].mxu0 %v1801
    %v1869 = vpop.f32.mrb[0].mxu0
    %v1870 = vadd.f32 %v1024, %v1869
    %v1871 = vpop.f32.mrb[0].mxu0
    %v1872 = vadd.f32 %v1028, %v1871
    %1873 = vmatprep.mubr.f32.mxu0 0.0
    %1874 = vmatmul.mubr.f32.gmra.mrb[0].mxu0 %v1802
    %v1875 = vpop.f32.mrb[0].mxu0
    %v1876 = vadd.f32 %v1024, %v1875
    %v1877 = vpop.f32.mrb[0].mxu0
    %v1878 = vadd.f32 %v1028, %v1877
    %1879 = vdwg.mxu0
    %1880 = vmatprep.subr.mxu0 %v657
    %1881 = vmatpush1.msra.mxu0 %v656
    %1882 = vmatprep.subr.mxu0 %v661
    %1883 = vmatpush1.msra.mxu0 %v660
    %1884 = vmatprep.subr.mxu0 %v665
    %1885 = vmatpush1.msra.mxu0 %v664
    %1886 = vmatprep.subr.mxu0 %v669
    %1887 = vmatpush1.msra.mxu0 %v668
    %1888 = vmatprep.subr.mxu0 %v673
    %1889 = vmatpush1.msra.mxu0 %v672
    %1890 = vmatprep.subr.mxu0 %v677
    %1891 = vmatpush1.msra.mxu0 %v676
    %1892 = vmatprep.subr.mxu0 %v681
    %1893 = vmatpush1.msra.mxu0 %v680
    %1894 = vmatprep.subr.mxu0 %v685
    %1895 = vmatpush1.msra.mxu0 %v684
    %1896 = vmatprep.subr.mxu0 %v689
    %1897 = vmatpush1.msra.mxu0 %v688
    %1898 = vmatprep.subr.mxu0 %v693
    %1899 = vmatpush1.msra.mxu0 %v692
    %1900 = vmatprep.subr.mxu0 %v697
    %1901 = vmatpush1.msra.mxu0 %v696
    %1902 = vmatprep.subr.mxu0 %v701
    %1903 = vmatpush1.msra.mxu0 %v700
    %1904 = vmatprep.subr.mxu0 %v705
    %1905 = vmatpush1.msra.mxu0 %v704
    %1906 = vmatprep.subr.mxu0 %v709
    %1907 = vmatpush1.msra.mxu0 %v708
    %1908 = vmatprep.subr.mxu0 %v713
    %1909 = vmatpush1.msra.mxu0 %v712
    %1910 = vmatprep.subr.mxu0 %v717
    %1911 = vmatpush1.msra.mxu0 %v716
    %1912 = vmatprep.subr.mxu0 0.0
    %1913 = vmatpush1.msra.mxu0 0.0
    %1914 = vmatprep.subr.mxu0 0.0
    %1915 = vmatpush1.msra.mxu0 0.0
    %1916 = vmatprep.subr.mxu0 0.0
    %1917 = vmatpush1.msra.mxu0 0.0
    %1918 = vmatprep.subr.mxu0 0.0
    %1919 = vmatpush1.msra.mxu0 0.0
    %1920 = vmatprep.subr.mxu0 0.0
    %1921 = vmatpush1.msra.mxu0 0.0
    %1922 = vmatprep.subr.mxu0 0.0
    %1923 = vmatpush1.msra.mxu0 0.0
    %1924 = vmatprep.subr.mxu0 0.0
    %1925 = vmatpush1.msra.mxu0 0.0
    %1926 = vmatprep.subr.mxu0 0.0
    %1927 = vmatpush1.msra.mxu0 0.0
    %1928 = vmatprep.subr.mxu0 0.0
    %1929 = vmatpush1.msra.mxu0 0.0
    %1930 = vmatprep.subr.mxu0 0.0
    %1931 = vmatpush1.msra.mxu0 0.0
    %1932 = vmatprep.subr.mxu0 0.0
    %1933 = vmatpush1.msra.mxu0 0.0
    %1934 = vmatprep.subr.mxu0 0.0
    %1935 = vmatpush1.msra.mxu0 0.0
    %1936 = vmatprep.subr.mxu0 0.0
    %1937 = vmatpush1.msra.mxu0 0.0
    %1938 = vmatprep.subr.mxu0 0.0
    %1939 = vmatpush1.msra.mxu0 0.0
    %1940 = vmatprep.subr.mxu0 0.0
    %1941 = vmatpush1.msra.mxu0 0.0
    %1942 = vmatprep.subr.mxu0 0.0
    %1943 = vmatpush1.msra.mxu0 0.0
    %1944 = vmatprep.mubr.f32.mxu0 0.0
    %1945 = vmatmul.mubr.f32.gmra.mrb[0].mxu0 %v1801
    %v1946 = vpop.f32.mrb[0].mxu0
    %v1947 = vadd.f32 %v1032, %v1946
    %v1948 = vpop.f32.mrb[0].mxu0
    %v1949 = vadd.f32 %v1036, %v1948
    %1950 = vmatprep.mubr.f32.mxu0 0.0
    %1951 = vmatmul.mubr.f32.gmra.mrb[0].mxu0 %v1802
    %v1952 = vpop.f32.mrb[0].mxu0
    %v1953 = vadd.f32 %v1032, %v1952
    %v1954 = vpop.f32.mrb[0].mxu0
    %v1955 = vadd.f32 %v1036, %v1954
    %1956 = vdwg.mxu0
    %1957 = vst [vmem:[%s1584] sm:$0xff] %v1870
    %1958 = vst [vmem:[%s1584 + $0x8] sm:$0xff] %v1872
    %1959 = vst [vmem:[%s1584 + $0x10] sm:$0xff] %v1947
    %1960 = vst [vmem:[%s1584 + $0x18] sm:$0xff] %v1949
    %1961 = vst [vmem:[%s1584 + $0x20] sm:$0xff] %v1876
    %1962 = vst [vmem:[%s1584 + $0x28] sm:$0xff] %v1878
    %1963 = vst [vmem:[%s1584 + $0x30] sm:$0xff] %v1953
    %1964 = vst [vmem:[%s1584 + $0x38] sm:$0xff] %v1955
    %s1965 = scalar_lea.vmem [#allocation2], 192
    %v1966 = vld [vmem:[%s1965] sm:$0xff]
    %v1967 = vld [vmem:[%s1965 + $0x8] sm:$0xff]
    %v1968 = vld [vmem:[%s1965 + $0x10] sm:$0xff]
    %v1969 = vld [vmem:[%s1965 + $0x18] sm:$0xff]
    %v1970 = vld [vmem:[%s1965 + $0x20] sm:$0xff]
    %v1971 = vld [vmem:[%s1965 + $0x28] sm:$0xff]
    %v1972 = vld [vmem:[%s1965 + $0x30] sm:$0xff]
    %v1973 = vld [vmem:[%s1965 + $0x38] sm:$0xff]
    %1974 = vmatprep.subr.mxu0 %v591
    %1975 = vmatpush1.msra.mxu0 %v590
    %1976 = vmatprep.subr.mxu0 %v595
    %1977 = vmatpush1.msra.mxu0 %v594
    %1978 = vmatprep.subr.mxu0 %v599
    %1979 = vmatpush1.msra.mxu0 %v598
    %1980 = vmatprep.subr.mxu0 %v603
    %1981 = vmatpush1.msra.mxu0 %v602
    %1982 = vmatprep.subr.mxu0 %v607
    %1983 = vmatpush1.msra.mxu0 %v606
    %1984 = vmatprep.subr.mxu0 %v611
    %1985 = vmatpush1.msra.mxu0 %v610
    %1986 = vmatprep.subr.mxu0 %v615
    %1987 = vmatpush1.msra.mxu0 %v614
    %1988 = vmatprep.subr.mxu0 %v619
    %1989 = vmatpush1.msra.mxu0 %v618
    %1990 = vmatprep.subr.mxu0 %v623
    %1991 = vmatpush1.msra.mxu0 %v622
    %1992 = vmatprep.subr.mxu0 %v627
    %1993 = vmatpush1.msra.mxu0 %v626
    %1994 = vmatprep.subr.mxu0 %v631
    %1995 = vmatpush1.msra.mxu0 %v630
    %1996 = vmatprep.subr.mxu0 %v635
    %1997 = vmatpush1.msra.mxu0 %v634
    %1998 = vmatprep.subr.mxu0 %v639
    %1999 = vmatpush1.msra.mxu0 %v638
    %2000 = vmatprep.subr.mxu0 %v643
    %2001 = vmatpush1.msra.mxu0 %v642
    %2002 = vmatprep.subr.mxu0 %v647
    %2003 = vmatpush1.msra.mxu0 %v646
    %2004 = vmatprep.subr.mxu0 %v651
    %2005 = vmatpush1.msra.mxu0 %v650
    %2006 = vmatprep.subr.mxu0 0.0
    %2007 = vmatpush1.msra.mxu0 0.0
    %2008 = vmatprep.subr.mxu0 0.0
    %2009 = vmatpush1.msra.mxu0 0.0
    %2010 = vmatprep.subr.mxu0 0.0
    %2011 = vmatpush1.msra.mxu0 0.0
    %2012 = vmatprep.subr.mxu0 0.0
    %2013 = vmatpush1.msra.mxu0 0.0
    %2014 = vmatprep.subr.mxu0 0.0
    %2015 = vmatpush1.msra.mxu0 0.0
    %2016 = vmatprep.subr.mxu0 0.0
    %2017 = vmatpush1.msra.mxu0 0.0
    %2018 = vmatprep.subr.mxu0 0.0
    %2019 = vmatpush1.msra.mxu0 0.0
    %2020 = vmatprep.subr.mxu0 0.0
    %2021 = vmatpush1.msra.mxu0 0.0
    %2022 = vmatprep.subr.mxu0 0.0
    %2023 = vmatpush1.msra.mxu0 0.0
    %2024 = vmatprep.subr.mxu0 0.0
    %2025 = vmatpush1.msra.mxu0 0.0
    %2026 = vmatprep.subr.mxu0 0.0
    %2027 = vmatpush1.msra.mxu0 0.0
    %2028 = vmatprep.subr.mxu0 0.0
    %2029 = vmatpush1.msra.mxu0 0.0
    %2030 = vmatprep.subr.mxu0 0.0
    %2031 = vmatpush1.msra.mxu0 0.0
    %2032 = vmatprep.subr.mxu0 0.0
    %2033 = vmatpush1.msra.mxu0 0.0
    %2034 = vmatprep.subr.mxu0 0.0
    %2035 = vmatpush1.msra.mxu0 0.0
    %2036 = vmatprep.subr.mxu0 0.0
    %2037 = vmatpush1.msra.mxu0 0.0
    %2038 = vmatprep.mubr.f32.mxu0 0.0
    %2039 = vmatmul.mubr.f32.gmra.mrb[0].mxu0 %v1801
    %v2040 = vpop.f32.mrb[0].mxu0
    %v2041 = vadd.f32 0.0, %v2040
    %v2042 = vpop.f32.mrb[0].mxu0
    %v2043 = vadd.f32 0.0, %v2042
    %2044 = vmatprep.mubr.f32.mxu0 0.0
    %2045 = vmatmul.mubr.f32.gmra.mrb[0].mxu0 %v1802
    %v2046 = vpop.f32.mrb[0].mxu0
    %v2047 = vadd.f32 0.0, %v2046
    %v2048 = vpop.f32.mrb[0].mxu0
    %v2049 = vadd.f32 0.0, %v2048
    %2050 = vdwg.mxu0
    %2051 = vmatprep.subr.mxu0 %v593
    %2052 = vmatpush1.msra.mxu0 %v592
    %2053 = vmatprep.subr.mxu0 %v597
    %2054 = vmatpush1.msra.mxu0 %v596
    %2055 = vmatprep.subr.mxu0 %v601
    %2056 = vmatpush1.msra.mxu0 %v600
    %2057 = vmatprep.subr.mxu0 %v605
    %2058 = vmatpush1.msra.mxu0 %v604
    %2059 = vmatprep.subr.mxu0 %v609
    %2060 = vmatpush1.msra.mxu0 %v608
    %2061 = vmatprep.subr.mxu0 %v613
    %2062 = vmatpush1.msra.mxu0 %v612
    %2063 = vmatprep.subr.mxu0 %v617
    %2064 = vmatpush1.msra.mxu0 %v616
    %2065 = vmatprep.subr.mxu0 %v621
    %2066 = vmatpush1.msra.mxu0 %v620
    %2067 = vmatprep.subr.mxu0 %v625
    %2068 = vmatpush1.msra.mxu0 %v624
    %2069 = vmatprep.subr.mxu0 %v629
    %2070 = vmatpush1.msra.mxu0 %v628
    %2071 = vmatprep.subr.mxu0 %v633
    %2072 = vmatpush1.msra.mxu0 %v632
    %2073 = vmatprep.subr.mxu0 %v637
    %2074 = vmatpush1.msra.mxu0 %v636
    %2075 = vmatprep.subr.mxu0 %v641
    %2076 = vmatpush1.msra.mxu0 %v640
    %2077 = vmatprep.subr.mxu0 %v645
    %2078 = vmatpush1.msra.mxu0 %v644
    %2079 = vmatprep.subr.mxu0 %v649
    %2080 = vmatpush1.msra.mxu0 %v648
    %2081 = vmatprep.subr.mxu0 %v653
    %2082 = vmatpush1.msra.mxu0 %v652
    %2083 = vmatprep.subr.mxu0 0.0
    %2084 = vmatpush1.msra.mxu0 0.0
    %2085 = vmatprep.subr.mxu0 0.0
    %2086 = vmatpush1.msra.mxu0 0.0
    %2087 = vmatprep.subr.mxu0 0.0
    %2088 = vmatpush1.msra.mxu0 0.0
    %2089 = vmatprep.subr.mxu0 0.0
    %2090 = vmatpush1.msra.mxu0 0.0
    %2091 = vmatprep.subr.mxu0 0.0
    %2092 = vmatpush1.msra.mxu0 0.0
    %2093 = vmatprep.subr.mxu0 0.0
    %2094 = vmatpush1.msra.mxu0 0.0
    %2095 = vmatprep.subr.mxu0 0.0
    %2096 = vmatpush1.msra.mxu0 0.0
    %2097 = vmatprep.subr.mxu0 0.0
    %2098 = vmatpush1.msra.mxu0 0.0
    %2099 = vmatprep.subr.mxu0 0.0
    %2100 = vmatpush1.msra.mxu0 0.0
    %2101 = vmatprep.subr.mxu0 0.0
    %2102 = vmatpush1.msra.mxu0 0.0
    %2103 = vmatprep.subr.mxu0 0.0
    %2104 = vmatpush1.msra.mxu0 0.0
    %2105 = vmatprep.subr.mxu0 0.0
    %2106 = vmatpush1.msra.mxu0 0.0
    %2107 = vmatprep.subr.mxu0 0.0
    %2108 = vmatpush1.msra.mxu0 0.0
    %2109 = vmatprep.subr.mxu0 0.0
    %2110 = vmatpush1.msra.mxu0 0.0
    %2111 = vmatprep.subr.mxu0 0.0
    %2112 = vmatpush1.msra.mxu0 0.0
    %2113 = vmatprep.subr.mxu0 0.0
    %2114 = vmatpush1.msra.mxu0 0.0
    %2115 = vmatprep.mubr.f32.mxu0 0.0
    %2116 = vmatmul.mubr.f32.gmra.mrb[0].mxu0 %v1801
    %v2117 = vpop.f32.mrb[0].mxu0
    %v2118 = vadd.f32 0.0, %v2117
    %v2119 = vpop.f32.mrb[0].mxu0
    %v2120 = vadd.f32 0.0, %v2119
    %2121 = vmatprep.mubr.f32.mxu0 0.0
    %2122 = vmatmul.mubr.f32.gmra.mrb[0].mxu0 %v1802
    %v2123 = vpop.f32.mrb[0].mxu0
    %v2124 = vadd.f32 0.0, %v2123
    %v2125 = vpop.f32.mrb[0].mxu0
    %v2126 = vadd.f32 0.0, %v2125
    %2127 = vdwg.mxu0
    %v2128 = vadd.f32 %v1966, %v2041
    %v2129 = vadd.f32 %v1967, %v2043
    %v2130 = vadd.f32 %v1968, %v2118
    %v2131 = vadd.f32 %v1969, %v2120
    %v2132 = vadd.f32 %v1970, %v2047
    %v2133 = vadd.f32 %v1971, %v2049
    %v2134 = vadd.f32 %v1972, %v2124
    %v2135 = vadd.f32 %v1973, %v2126
    %v2136 = vxor.u32 %v2128, 2147483648
    %v2137 = vxor.u32 %v2132, 2147483648
    %v2138 = vmul.f32 %v2136, 1.442695
    %v2139 = vpow.pop %v2138
    %v2140 = vmul.f32 %v2137, 1.442695
    %v2141 = vpow.pop %v2140
    %v2142 = vadd.f32 %v2139, 1.0
    %v2143 = vadd.f32 %v2141, 1.0
    %v2144 = vrcp.pop %v2142
    %v2145 = vmul.f32 1.0, %v2144
    %v2146 = vrcp.pop %v2143
    %v2147 = vmul.f32 1.0, %v2146
    %v2148 = vxor.u32 %v2129, 2147483648
    %v2149 = vxor.u32 %v2133, 2147483648
    %v2150 = vmul.f32 %v2148, 1.442695
    %v2151 = vpow.pop %v2150
    %v2152 = vmul.f32 %v2149, 1.442695
    %v2153 = vpow.pop %v2152
    %v2154 = vadd.f32 %v2151, 1.0
    %v2155 = vadd.f32 %v2153, 1.0
    %v2156 = vrcp.pop %v2154
    %v2157 = vmul.f32 1.0, %v2156
    %v2158 = vrcp.pop %v2155
    %v2159 = vmul.f32 1.0, %v2158
    %v2160 = vtanh.pop %v2130
    %v2161 = vtanh.pop %v2134
    %v2162 = vxor.u32 %v2131, 2147483648
    %v2163 = vxor.u32 %v2135, 2147483648
    %v2164 = vmul.f32 %v2162, 1.442695
    %v2165 = vpow.pop %v2164
    %v2166 = vmul.f32 %v2163, 1.442695
    %v2167 = vpow.pop %v2166
    %v2168 = vadd.f32 %v2165, 1.0
    %v2169 = vadd.f32 %v2167, 1.0
    %v2170 = vrcp.pop %v2168
    %v2171 = vmul.f32 1.0, %v2170
    %v2172 = vrcp.pop %v2169
    %v2173 = vmul.f32 1.0, %v2172
    %v2174 = vmul.f32 %v2157, %v1797
    %v2175 = vmul.f32 %v2159, %v1798
    %v2176 = vmul.f32 %v2145, %v2160
    %v2177 = vmul.f32 %v2147, %v2161
    %v2178 = vadd.f32 %v2174, %v2176
    %v2179 = vadd.f32 %v2175, %v2177
    %v2180 = vtanh.pop %v2178
    %v2181 = vtanh.pop %v2179
    %v2182 = vmul.f32 %v2171, %v2180
    %v2183 = vmul.f32 %v2173, %v2181
    %2184 = vmatprep.subr.mxu0 %v655
    %2185 = vmatpush1.msra.mxu0 %v654
    %2186 = vmatprep.subr.mxu0 %v659
    %2187 = vmatpush1.msra.mxu0 %v658
    %2188 = vmatprep.subr.mxu0 %v663
    %2189 = vmatpush1.msra.mxu0 %v662
    %2190 = vmatprep.subr.mxu0 %v667
    %2191 = vmatpush1.msra.mxu0 %v666
    %2192 = vmatprep.subr.mxu0 %v671
    %2193 = vmatpush1.msra.mxu0 %v670
    %2194 = vmatprep.subr.mxu0 %v675
    %2195 = vmatpush1.msra.mxu0 %v674
    %2196 = vmatprep.subr.mxu0 %v679
    %2197 = vmatpush1.msra.mxu0 %v678
    %2198 = vmatprep.subr.mxu0 %v683
    %2199 = vmatpush1.msra.mxu0 %v682
    %2200 = vmatprep.subr.mxu0 %v687
    %2201 = vmatpush1.msra.mxu0 %v686
    %2202 = vmatprep.subr.mxu0 %v691
    %2203 = vmatpush1.msra.mxu0 %v690
    %2204 = vmatprep.subr.mxu0 %v695
    %2205 = vmatpush1.msra.mxu0 %v694
    %2206 = vmatprep.subr.mxu0 %v699
    %2207 = vmatpush1.msra.mxu0 %v698
    %2208 = vmatprep.subr.mxu0 %v703
    %2209 = vmatpush1.msra.mxu0 %v702
    %2210 = vmatprep.subr.mxu0 %v707
    %2211 = vmatpush1.msra.mxu0 %v706
    %2212 = vmatprep.subr.mxu0 %v711
    %2213 = vmatpush1.msra.mxu0 %v710
    %2214 = vmatprep.subr.mxu0 %v715
    %2215 = vmatpush1.msra.mxu0 %v714
    %2216 = vmatprep.subr.mxu0 0.0
    %2217 = vmatpush1.msra.mxu0 0.0
    %2218 = vmatprep.subr.mxu0 0.0
    %2219 = vmatpush1.msra.mxu0 0.0
    %2220 = vmatprep.subr.mxu0 0.0
    %2221 = vmatpush1.msra.mxu0 0.0
    %2222 = vmatprep.subr.mxu0 0.0
    %2223 = vmatpush1.msra.mxu0 0.0
    %2224 = vmatprep.subr.mxu0 0.0
    %2225 = vmatpush1.msra.mxu0 0.0
    %2226 = vmatprep.subr.mxu0 0.0
    %2227 = vmatpush1.msra.mxu0 0.0
    %2228 = vmatprep.subr.mxu0 0.0
    %2229 = vmatpush1.msra.mxu0 0.0
    %2230 = vmatprep.subr.mxu0 0.0
    %2231 = vmatpush1.msra.mxu0 0.0
    %2232 = vmatprep.subr.mxu0 0.0
    %2233 = vmatpush1.msra.mxu0 0.0
    %2234 = vmatprep.subr.mxu0 0.0
    %2235 = vmatpush1.msra.mxu0 0.0
    %2236 = vmatprep.subr.mxu0 0.0
    %2237 = vmatpush1.msra.mxu0 0.0
    %2238 = vmatprep.subr.mxu0 0.0
    %2239 = vmatpush1.msra.mxu0 0.0
    %2240 = vmatprep.subr.mxu0 0.0
    %2241 = vmatpush1.msra.mxu0 0.0
    %2242 = vmatprep.subr.mxu0 0.0
    %2243 = vmatpush1.msra.mxu0 0.0
    %2244 = vmatprep.subr.mxu0 0.0
    %2245 = vmatpush1.msra.mxu0 0.0
    %2246 = vmatprep.subr.mxu0 0.0
    %2247 = vmatpush1.msra.mxu0 0.0
    %2248 = vmatprep.mubr.f32.mxu0 0.0
    %2249 = vmatmul.mubr.f32.gmra.mrb[0].mxu0 %v2182
    %v2250 = vpop.f32.mrb[0].mxu0
    %v2251 = vadd.f32 %v1024, %v2250
    %v2252 = vpop.f32.mrb[0].mxu0
    %v2253 = vadd.f32 %v1028, %v2252
    %2254 = vmatprep.mubr.f32.mxu0 0.0
    %2255 = vmatmul.mubr.f32.gmra.mrb[0].mxu0 %v2183
    %v2256 = vpop.f32.mrb[0].mxu0
    %v2257 = vadd.f32 %v1024, %v2256
    %v2258 = vpop.f32.mrb[0].mxu0
    %v2259 = vadd.f32 %v1028, %v2258
    %2260 = vdwg.mxu0
    %2261 = vmatprep.subr.mxu0 %v657
    %2262 = vmatpush1.msra.mxu0 %v656
    %2263 = vmatprep.subr.mxu0 %v661
    %2264 = vmatpush1.msra.mxu0 %v660
    %2265 = vmatprep.subr.mxu0 %v665
    %2266 = vmatpush1.msra.mxu0 %v664
    %2267 = vmatprep.subr.mxu0 %v669
    %2268 = vmatpush1.msra.mxu0 %v668
    %2269 = vmatprep.subr.mxu0 %v673
    %2270 = vmatpush1.msra.mxu0 %v672
    %2271 = vmatprep.subr.mxu0 %v677
    %2272 = vmatpush1.msra.mxu0 %v676
    %2273 = vmatprep.subr.mxu0 %v681
    %2274 = vmatpush1.msra.mxu0 %v680
    %2275 = vmatprep.subr.mxu0 %v685
    %2276 = vmatpush1.msra.mxu0 %v684
    %2277 = vmatprep.subr.mxu0 %v689
    %2278 = vmatpush1.msra.mxu0 %v688
    %2279 = vmatprep.subr.mxu0 %v693
    %2280 = vmatpush1.msra.mxu0 %v692
    %2281 = vmatprep.subr.mxu0 %v697
    %2282 = vmatpush1.msra.mxu0 %v696
    %2283 = vmatprep.subr.mxu0 %v701
    %2284 = vmatpush1.msra.mxu0 %v700
    %2285 = vmatprep.subr.mxu0 %v705
    %2286 = vmatpush1.msra.mxu0 %v704
    %2287 = vmatprep.subr.mxu0 %v709
    %2288 = vmatpush1.msra.mxu0 %v708
    %2289 = vmatprep.subr.mxu0 %v713
    %2290 = vmatpush1.msra.mxu0 %v712
    %2291 = vmatprep.subr.mxu0 %v717
    %2292 = vmatpush1.msra.mxu0 %v716
    %2293 = vmatprep.subr.mxu0 0.0
    %2294 = vmatpush1.msra.mxu0 0.0
    %2295 = vmatprep.subr.mxu0 0.0
    %2296 = vmatpush1.msra.mxu0 0.0
    %2297 = vmatprep.subr.mxu0 0.0
    %2298 = vmatpush1.msra.mxu0 0.0
    %2299 = vmatprep.subr.mxu0 0.0
    %2300 = vmatpush1.msra.mxu0 0.0
    %2301 = vmatprep.subr.mxu0 0.0
    %2302 = vmatpush1.msra.mxu0 0.0
    %2303 = vmatprep.subr.mxu0 0.0
    %2304 = vmatpush1.msra.mxu0 0.0
    %2305 = vmatprep.subr.mxu0 0.0
    %2306 = vmatpush1.msra.mxu0 0.0
    %2307 = vmatprep.subr.mxu0 0.0
    %2308 = vmatpush1.msra.mxu0 0.0
    %2309 = vmatprep.subr.mxu0 0.0
    %2310 = vmatpush1.msra.mxu0 0.0
    %2311 = vmatprep.subr.mxu0 0.0
    %2312 = vmatpush1.msra.mxu0 0.0
    %2313 = vmatprep.subr.mxu0 0.0
    %2314 = vmatpush1.msra.mxu0 0.0
    %2315 = vmatprep.subr.mxu0 0.0
    %2316 = vmatpush1.msra.mxu0 0.0
    %2317 = vmatprep.subr.mxu0 0.0
    %2318 = vmatpush1.msra.mxu0 0.0
    %2319 = vmatprep.subr.mxu0 0.0
    %2320 = vmatpush1.msra.mxu0 0.0
    %2321 = vmatprep.subr.mxu0 0.0
    %2322 = vmatpush1.msra.mxu0 0.0
    %2323 = vmatprep.subr.mxu0 0.0
    %2324 = vmatpush1.msra.mxu0 0.0
    %2325 = vmatprep.mubr.f32.mxu0 0.0
    %2326 = vmatmul.mubr.f32.gmra.mrb[0].mxu0 %v2182
    %v2327 = vpop.f32.mrb[0].mxu0
    %v2328 = vadd.f32 %v1032, %v2327
    %v2329 = vpop.f32.mrb[0].mxu0
    %v2330 = vadd.f32 %v1036, %v2329
    %2331 = vmatprep.mubr.f32.mxu0 0.0
    %2332 = vmatmul.mubr.f32.gmra.mrb[0].mxu0 %v2183
    %v2333 = vpop.f32.mrb[0].mxu0
    %v2334 = vadd.f32 %v1032, %v2333
    %v2335 = vpop.f32.mrb[0].mxu0
    %v2336 = vadd.f32 %v1036, %v2335
    %2337 = vdwg.mxu0
    %2338 = vst [vmem:[%s1965] sm:$0xff] %v2251
    %2339 = vst [vmem:[%s1965 + $0x8] sm:$0xff] %v2253
    %2340 = vst [vmem:[%s1965 + $0x10] sm:$0xff] %v2328
    %2341 = vst [vmem:[%s1965 + $0x18] sm:$0xff] %v2330
    %2342 = vst [vmem:[%s1965 + $0x20] sm:$0xff] %v2257
    %2343 = vst [vmem:[%s1965 + $0x28] sm:$0xff] %v2259
    %2344 = vst [vmem:[%s1965 + $0x30] sm:$0xff] %v2334
    %2345 = vst [vmem:[%s1965 + $0x38] sm:$0xff] %v2336
    %s2346 = scalar_lea.vmem [#allocation2], 256
    %v2347 = vld [vmem:[%s2346] sm:$0xff]
    %v2348 = vld [vmem:[%s2346 + $0x8] sm:$0xff]
    %v2349 = vld [vmem:[%s2346 + $0x10] sm:$0xff]
    %v2350 = vld [vmem:[%s2346 + $0x18] sm:$0xff]
    %v2351 = vld [vmem:[%s2346 + $0x20] sm:$0xff]
    %v2352 = vld [vmem:[%s2346 + $0x28] sm:$0xff]
    %v2353 = vld [vmem:[%s2346 + $0x30] sm:$0xff]
    %v2354 = vld [vmem:[%s2346 + $0x38] sm:$0xff]
    %2355 = vmatprep.subr.mxu0 %v591
    %2356 = vmatpush1.msra.mxu0 %v590
    %2357 = vmatprep.subr.mxu0 %v595
    %2358 = vmatpush1.msra.mxu0 %v594
    %2359 = vmatprep.subr.mxu0 %v599
    %2360 = vmatpush1.msra.mxu0 %v598
    %2361 = vmatprep.subr.mxu0 %v603
    %2362 = vmatpush1.msra.mxu0 %v602
    %2363 = vmatprep.subr.mxu0 %v607
    %2364 = vmatpush1.msra.mxu0 %v606
    %2365 = vmatprep.subr.mxu0 %v611
    %2366 = vmatpush1.msra.mxu0 %v610
    %2367 = vmatprep.subr.mxu0 %v615
    %2368 = vmatpush1.msra.mxu0 %v614
    %2369 = vmatprep.subr.mxu0 %v619
    %2370 = vmatpush1.msra.mxu0 %v618
    %2371 = vmatprep.subr.mxu0 %v623
    %2372 = vmatpush1.msra.mxu0 %v622
    %2373 = vmatprep.subr.mxu0 %v627
    %2374 = vmatpush1.msra.mxu0 %v626
    %2375 = vmatprep.subr.mxu0 %v631
    %2376 = vmatpush1.msra.mxu0 %v630
    %2377 = vmatprep.subr.mxu0 %v635
    %2378 = vmatpush1.msra.mxu0 %v634
    %2379 = vmatprep.subr.mxu0 %v639
    %2380 = vmatpush1.msra.mxu0 %v638
    %2381 = vmatprep.subr.mxu0 %v643
    %2382 = vmatpush1.msra.mxu0 %v642
    %2383 = vmatprep.subr.mxu0 %v647
    %2384 = vmatpush1.msra.mxu0 %v646
    %2385 = vmatprep.subr.mxu0 %v651
    %2386 = vmatpush1.msra.mxu0 %v650
    %2387 = vmatprep.subr.mxu0 0.0
    %2388 = vmatpush1.msra.mxu0 0.0
    %2389 = vmatprep.subr.mxu0 0.0
    %2390 = vmatpush1.msra.mxu0 0.0
    %2391 = vmatprep.subr.mxu0 0.0
    %2392 = vmatpush1.msra.mxu0 0.0
    %2393 = vmatprep.subr.mxu0 0.0
    %2394 = vmatpush1.msra.mxu0 0.0
    %2395 = vmatprep.subr.mxu0 0.0
    %2396 = vmatpush1.msra.mxu0 0.0
    %2397 = vmatprep.subr.mxu0 0.0
    %2398 = vmatpush1.msra.mxu0 0.0
    %2399 = vmatprep.subr.mxu0 0.0
    %2400 = vmatpush1.msra.mxu0 0.0
    %2401 = vmatprep.subr.mxu0 0.0
    %2402 = vmatpush1.msra.mxu0 0.0
    %2403 = vmatprep.subr.mxu0 0.0
    %2404 = vmatpush1.msra.mxu0 0.0
    %2405 = vmatprep.subr.mxu0 0.0
    %2406 = vmatpush1.msra.mxu0 0.0
    %2407 = vmatprep.subr.mxu0 0.0
    %2408 = vmatpush1.msra.mxu0 0.0
    %2409 = vmatprep.subr.mxu0 0.0
    %2410 = vmatpush1.msra.mxu0 0.0
    %2411 = vmatprep.subr.mxu0 0.0
    %2412 = vmatpush1.msra.mxu0 0.0
    %2413 = vmatprep.subr.mxu0 0.0
    %2414 = vmatpush1.msra.mxu0 0.0
    %2415 = vmatprep.subr.mxu0 0.0
    %2416 = vmatpush1.msra.mxu0 0.0
    %2417 = vmatprep.subr.mxu0 0.0
    %2418 = vmatpush1.msra.mxu0 0.0
    %2419 = vmatprep.mubr.f32.mxu0 0.0
    %2420 = vmatmul.mubr.f32.gmra.mrb[0].mxu0 %v2182
    %v2421 = vpop.f32.mrb[0].mxu0
    %v2422 = vadd.f32 0.0, %v2421
    %v2423 = vpop.f32.mrb[0].mxu0
    %v2424 = vadd.f32 0.0, %v2423
    %2425 = vmatprep.mubr.f32.mxu0 0.0
    %2426 = vmatmul.mubr.f32.gmra.mrb[0].mxu0 %v2183
    %v2427 = vpop.f32.mrb[0].mxu0
    %v2428 = vadd.f32 0.0, %v2427
    %v2429 = vpop.f32.mrb[0].mxu0
    %v2430 = vadd.f32 0.0, %v2429
    %2431 = vdwg.mxu0
    %2432 = vmatprep.subr.mxu0 %v593
    %2433 = vmatpush1.msra.mxu0 %v592
    %2434 = vmatprep.subr.mxu0 %v597
    %2435 = vmatpush1.msra.mxu0 %v596
    %2436 = vmatprep.subr.mxu0 %v601
    %2437 = vmatpush1.msra.mxu0 %v600
    %2438 = vmatprep.subr.mxu0 %v605
    %2439 = vmatpush1.msra.mxu0 %v604
    %2440 = vmatprep.subr.mxu0 %v609
    %2441 = vmatpush1.msra.mxu0 %v608
    %2442 = vmatprep.subr.mxu0 %v613
    %2443 = vmatpush1.msra.mxu0 %v612
    %2444 = vmatprep.subr.mxu0 %v617
    %2445 = vmatpush1.msra.mxu0 %v616
    %2446 = vmatprep.subr.mxu0 %v621
    %2447 = vmatpush1.msra.mxu0 %v620
    %2448 = vmatprep.subr.mxu0 %v625
    %2449 = vmatpush1.msra.mxu0 %v624
    %2450 = vmatprep.subr.mxu0 %v629
    %2451 = vmatpush1.msra.mxu0 %v628
    %2452 = vmatprep.subr.mxu0 %v633
    %2453 = vmatpush1.msra.mxu0 %v632
    %2454 = vmatprep.subr.mxu0 %v637
    %2455 = vmatpush1.msra.mxu0 %v636
    %2456 = vmatprep.subr.mxu0 %v641
    %2457 = vmatpush1.msra.mxu0 %v640
    %2458 = vmatprep.subr.mxu0 %v645
    %2459 = vmatpush1.msra.mxu0 %v644
    %2460 = vmatprep.subr.mxu0 %v649
    %2461 = vmatpush1.msra.mxu0 %v648
    %2462 = vmatprep.subr.mxu0 %v653
    %2463 = vmatpush1.msra.mxu0 %v652
    %2464 = vmatprep.subr.mxu0 0.0
    %2465 = vmatpush1.msra.mxu0 0.0
    %2466 = vmatprep.subr.mxu0 0.0
    %2467 = vmatpush1.msra.mxu0 0.0
    %2468 = vmatprep.subr.mxu0 0.0
    %2469 = vmatpush1.msra.mxu0 0.0
    %2470 = vmatprep.subr.mxu0 0.0
    %2471 = vmatpush1.msra.mxu0 0.0
    %2472 = vmatprep.subr.mxu0 0.0
    %2473 = vmatpush1.msra.mxu0 0.0
    %2474 = vmatprep.subr.mxu0 0.0
    %2475 = vmatpush1.msra.mxu0 0.0
    %2476 = vmatprep.subr.mxu0 0.0
    %2477 = vmatpush1.msra.mxu0 0.0
    %2478 = vmatprep.subr.mxu0 0.0
    %2479 = vmatpush1.msra.mxu0 0.0
    %2480 = vmatprep.subr.mxu0 0.0
    %2481 = vmatpush1.msra.mxu0 0.0
    %2482 = vmatprep.subr.mxu0 0.0
    %2483 = vmatpush1.msra.mxu0 0.0
    %2484 = vmatprep.subr.mxu0 0.0
    %2485 = vmatpush1.msra.mxu0 0.0
    %2486 = vmatprep.subr.mxu0 0.0
    %2487 = vmatpush1.msra.mxu0 0.0
    %2488 = vmatprep.subr.mxu0 0.0
    %2489 = vmatpush1.msra.mxu0 0.0
    %2490 = vmatprep.subr.mxu0 0.0
    %2491 = vmatpush1.msra.mxu0 0.0
    %2492 = vmatprep.subr.mxu0 0.0
    %2493 = vmatpush1.msra.mxu0 0.0
    %2494 = vmatprep.subr.mxu0 0.0
    %2495 = vmatpush1.msra.mxu0 0.0
    %2496 = vmatprep.mubr.f32.mxu0 0.0
    %2497 = vmatmul.mubr.f32.gmra.mrb[0].mxu0 %v2182
    %v2498 = vpop.f32.mrb[0].mxu0
    %v2499 = vadd.f32 0.0, %v2498
    %v2500 = vpop.f32.mrb[0].mxu0
    %v2501 = vadd.f32 0.0, %v2500
    %2502 = vmatprep.mubr.f32.mxu0 0.0
    %2503 = vmatmul.mubr.f32.gmra.mrb[0].mxu0 %v2183
    %v2504 = vpop.f32.mrb[0].mxu0
    %v2505 = vadd.f32 0.0, %v2504
    %v2506 = vpop.f32.mrb[0].mxu0
    %v2507 = vadd.f32 0.0, %v2506
    %2508 = vdwg.mxu0
    %v2509 = vadd.f32 %v2347, %v2422
    %v2510 = vadd.f32 %v2348, %v2424
    %v2511 = vadd.f32 %v2349, %v2499
    %v2512 = vadd.f32 %v2350, %v2501
    %v2513 = vadd.f32 %v2351, %v2428
    %v2514 = vadd.f32 %v2352, %v2430
    %v2515 = vadd.f32 %v2353, %v2505
    %v2516 = vadd.f32 %v2354, %v2507
    %v2517 = vxor.u32 %v2509, 2147483648
    %v2518 = vxor.u32 %v2513, 2147483648
    %v2519 = vmul.f32 %v2517, 1.442695
    %v2520 = vpow.pop %v2519
    %v2521 = vmul.f32 %v2518, 1.442695
    %v2522 = vpow.pop %v2521
    %v2523 = vadd.f32 %v2520, 1.0
    %v2524 = vadd.f32 %v2522, 1.0
    %v2525 = vrcp.pop %v2523
    %v2526 = vmul.f32 1.0, %v2525
    %v2527 = vrcp.pop %v2524
    %v2528 = vmul.f32 1.0, %v2527
    %v2529 = vxor.u32 %v2510, 2147483648
    %v2530 = vxor.u32 %v2514, 2147483648
    %v2531 = vmul.f32 %v2529, 1.442695
    %v2532 = vpow.pop %v2531
    %v2533 = vmul.f32 %v2530, 1.442695
    %v2534 = vpow.pop %v2533
    %v2535 = vadd.f32 %v2532, 1.0
    %v2536 = vadd.f32 %v2534, 1.0
    %v2537 = vrcp.pop %v2535
    %v2538 = vmul.f32 1.0, %v2537
    %v2539 = vrcp.pop %v2536
    %v2540 = vmul.f32 1.0, %v2539
    %v2541 = vtanh.pop %v2511
    %v2542 = vtanh.pop %v2515
    %v2543 = vxor.u32 %v2512, 2147483648
    %v2544 = vxor.u32 %v2516, 2147483648
    %v2545 = vmul.f32 %v2543, 1.442695
    %v2546 = vpow.pop %v2545
    %v2547 = vmul.f32 %v2544, 1.442695
    %v2548 = vpow.pop %v2547
    %v2549 = vadd.f32 %v2546, 1.0
    %v2550 = vadd.f32 %v2548, 1.0
    %v2551 = vrcp.pop %v2549
    %v2552 = vmul.f32 1.0, %v2551
    %v2553 = vrcp.pop %v2550
    %v2554 = vmul.f32 1.0, %v2553
    %v2555 = vmul.f32 %v2538, %v2178
    %v2556 = vmul.f32 %v2540, %v2179
    %v2557 = vmul.f32 %v2526, %v2541
    %v2558 = vmul.f32 %v2528, %v2542
    %v2559 = vadd.f32 %v2555, %v2557
    %v2560 = vadd.f32 %v2556, %v2558
    %v2561 = vtanh.pop %v2559
    %v2562 = vtanh.pop %v2560
    %v2563 = vmul.f32 %v2552, %v2561
    %v2564 = vmul.f32 %v2554, %v2562
    %2565 = vmatprep.subr.mxu0 %v655
    %2566 = vmatpush1.msra.mxu0 %v654
    %2567 = vmatprep.subr.mxu0 %v659
    %2568 = vmatpush1.msra.mxu0 %v658
    %2569 = vmatprep.subr.mxu0 %v663
    %2570 = vmatpush1.msra.mxu0 %v662
    %2571 = vmatprep.subr.mxu0 %v667
    %2572 = vmatpush1.msra.mxu0 %v666
    %2573 = vmatprep.subr.mxu0 %v671
    %2574 = vmatpush1.msra.mxu0 %v670
    %2575 = vmatprep.subr.mxu0 %v675
    %2576 = vmatpush1.msra.mxu0 %v674
    %2577 = vmatprep.subr.mxu0 %v679
    %2578 = vmatpush1.msra.mxu0 %v678
    %2579 = vmatprep.subr.mxu0 %v683
    %2580 = vmatpush1.msra.mxu0 %v682
    %2581 = vmatprep.subr.mxu0 %v687
    %2582 = vmatpush1.msra.mxu0 %v686
    %2583 = vmatprep.subr.mxu0 %v691
    %2584 = vmatpush1.msra.mxu0 %v690
    %2585 = vmatprep.subr.mxu0 %v695
    %2586 = vmatpush1.msra.mxu0 %v694
    %2587 = vmatprep.subr.mxu0 %v699
    %2588 = vmatpush1.msra.mxu0 %v698
    %2589 = vmatprep.subr.mxu0 %v703
    %2590 = vmatpush1.msra.mxu0 %v702
    %2591 = vmatprep.subr.mxu0 %v707
    %2592 = vmatpush1.msra.mxu0 %v706
    %2593 = vmatprep.subr.mxu0 %v711
    %2594 = vmatpush1.msra.mxu0 %v710
    %2595 = vmatprep.subr.mxu0 %v715
    %2596 = vmatpush1.msra.mxu0 %v714
    %2597 = vmatprep.subr.mxu0 0.0
    %2598 = vmatpush1.msra.mxu0 0.0
    %2599 = vmatprep.subr.mxu0 0.0
    %2600 = vmatpush1.msra.mxu0 0.0
    %2601 = vmatprep.subr.mxu0 0.0
    %2602 = vmatpush1.msra.mxu0 0.0
    %2603 = vmatprep.subr.mxu0 0.0
    %2604 = vmatpush1.msra.mxu0 0.0
    %2605 = vmatprep.subr.mxu0 0.0
    %2606 = vmatpush1.msra.mxu0 0.0
    %2607 = vmatprep.subr.mxu0 0.0
    %2608 = vmatpush1.msra.mxu0 0.0
    %2609 = vmatprep.subr.mxu0 0.0
    %2610 = vmatpush1.msra.mxu0 0.0
    %2611 = vmatprep.subr.mxu0 0.0
    %2612 = vmatpush1.msra.mxu0 0.0
    %2613 = vmatprep.subr.mxu0 0.0
    %2614 = vmatpush1.msra.mxu0 0.0
    %2615 = vmatprep.subr.mxu0 0.0
    %2616 = vmatpush1.msra.mxu0 0.0
    %2617 = vmatprep.subr.mxu0 0.0
    %2618 = vmatpush1.msra.mxu0 0.0
    %2619 = vmatprep.subr.mxu0 0.0
    %2620 = vmatpush1.msra.mxu0 0.0
    %2621 = vmatprep.subr.mxu0 0.0
    %2622 = vmatpush1.msra.mxu0 0.0
    %2623 = vmatprep.subr.mxu0 0.0
    %2624 = vmatpush1.msra.mxu0 0.0
    %2625 = vmatprep.subr.mxu0 0.0
    %2626 = vmatpush1.msra.mxu0 0.0
    %2627 = vmatprep.subr.mxu0 0.0
    %2628 = vmatpush1.msra.mxu0 0.0
    %2629 = vmatprep.mubr.f32.mxu0 0.0
    %2630 = vmatmul.mubr.f32.gmra.mrb[0].mxu0 %v2563
    %v2631 = vpop.f32.mrb[0].mxu0
    %v2632 = vadd.f32 %v1024, %v2631
    %v2633 = vpop.f32.mrb[0].mxu0
    %v2634 = vadd.f32 %v1028, %v2633
    %2635 = vmatprep.mubr.f32.mxu0 0.0
    %2636 = vmatmul.mubr.f32.gmra.mrb[0].mxu0 %v2564
    %v2637 = vpop.f32.mrb[0].mxu0
    %v2638 = vadd.f32 %v1024, %v2637
    %v2639 = vpop.f32.mrb[0].mxu0
    %v2640 = vadd.f32 %v1028, %v2639
    %2641 = vdwg.mxu0
    %2642 = vmatprep.subr.mxu0 %v657
    %2643 = vmatpush1.msra.mxu0 %v656
    %2644 = vmatprep.subr.mxu0 %v661
    %2645 = vmatpush1.msra.mxu0 %v660
    %2646 = vmatprep.subr.mxu0 %v665
    %2647 = vmatpush1.msra.mxu0 %v664
    %2648 = vmatprep.subr.mxu0 %v669
    %2649 = vmatpush1.msra.mxu0 %v668
    %2650 = vmatprep.subr.mxu0 %v673
    %2651 = vmatpush1.msra.mxu0 %v672
    %2652 = vmatprep.subr.mxu0 %v677
    %2653 = vmatpush1.msra.mxu0 %v676
    %2654 = vmatprep.subr.mxu0 %v681
    %2655 = vmatpush1.msra.mxu0 %v680
    %2656 = vmatprep.subr.mxu0 %v685
    %2657 = vmatpush1.msra.mxu0 %v684
    %2658 = vmatprep.subr.mxu0 %v689
    %2659 = vmatpush1.msra.mxu0 %v688
    %2660 = vmatprep.subr.mxu0 %v693
    %2661 = vmatpush1.msra.mxu0 %v692
    %2662 = vmatprep.subr.mxu0 %v697
    %2663 = vmatpush1.msra.mxu0 %v696
    %2664 = vmatprep.subr.mxu0 %v701
    %2665 = vmatpush1.msra.mxu0 %v700
    %2666 = vmatprep.subr.mxu0 %v705
    %2667 = vmatpush1.msra.mxu0 %v704
    %2668 = vmatprep.subr.mxu0 %v709
    %2669 = vmatpush1.msra.mxu0 %v708
    %2670 = vmatprep.subr.mxu0 %v713
    %2671 = vmatpush1.msra.mxu0 %v712
    %2672 = vmatprep.subr.mxu0 %v717
    %2673 = vmatpush1.msra.mxu0 %v716
    %2674 = vmatprep.subr.mxu0 0.0
    %2675 = vmatpush1.msra.mxu0 0.0
    %2676 = vmatprep.subr.mxu0 0.0
    %2677 = vmatpush1.msra.mxu0 0.0
    %2678 = vmatprep.subr.mxu0 0.0
    %2679 = vmatpush1.msra.mxu0 0.0
    %2680 = vmatprep.subr.mxu0 0.0
    %2681 = vmatpush1.msra.mxu0 0.0
    %2682 = vmatprep.subr.mxu0 0.0
    %2683 = vmatpush1.msra.mxu0 0.0
    %2684 = vmatprep.subr.mxu0 0.0
    %2685 = vmatpush1.msra.mxu0 0.0
    %2686 = vmatprep.subr.mxu0 0.0
    %2687 = vmatpush1.msra.mxu0 0.0
    %2688 = vmatprep.subr.mxu0 0.0
    %2689 = vmatpush1.msra.mxu0 0.0
    %2690 = vmatprep.subr.mxu0 0.0
    %2691 = vmatpush1.msra.mxu0 0.0
    %2692 = vmatprep.subr.mxu0 0.0
    %2693 = vmatpush1.msra.mxu0 0.0
    %2694 = vmatprep.subr.mxu0 0.0
    %2695 = vmatpush1.msra.mxu0 0.0
    %2696 = vmatprep.subr.mxu0 0.0
    %2697 = vmatpush1.msra.mxu0 0.0
    %2698 = vmatprep.subr.mxu0 0.0
    %2699 = vmatpush1.msra.mxu0 0.0
    %2700 = vmatprep.subr.mxu0 0.0
    %2701 = vmatpush1.msra.mxu0 0.0
    %2702 = vmatprep.subr.mxu0 0.0
    %2703 = vmatpush1.msra.mxu0 0.0
    %2704 = vmatprep.subr.mxu0 0.0
    %2705 = vmatpush1.msra.mxu0 0.0
    %2706 = vmatprep.mubr.f32.mxu0 0.0
    %2707 = vmatmul.mubr.f32.gmra.mrb[0].mxu0 %v2563
    %v2708 = vpop.f32.mrb[0].mxu0
    %v2709 = vadd.f32 %v1032, %v2708
    %v2710 = vpop.f32.mrb[0].mxu0
    %v2711 = vadd.f32 %v1036, %v2710
    %2712 = vmatprep.mubr.f32.mxu0 0.0
    %2713 = vmatmul.mubr.f32.gmra.mrb[0].mxu0 %v2564
    %v2714 = vpop.f32.mrb[0].mxu0
    %v2715 = vadd.f32 %v1032, %v2714
    %v2716 = vpop.f32.mrb[0].mxu0
    %v2717 = vadd.f32 %v1036, %v2716
    %2718 = vdwg.mxu0
    %2719 = vst [vmem:[%s2346] sm:$0xff] %v2632
    %2720 = vst [vmem:[%s2346 + $0x8] sm:$0xff] %v2634
    %2721 = vst [vmem:[%s2346 + $0x10] sm:$0xff] %v2709
    %2722 = vst [vmem:[%s2346 + $0x18] sm:$0xff] %v2711
    %2723 = vst [vmem:[%s2346 + $0x20] sm:$0xff] %v2638
    %2724 = vst [vmem:[%s2346 + $0x28] sm:$0xff] %v2640
    %2725 = vst [vmem:[%s2346 + $0x30] sm:$0xff] %v2715
    %2726 = vst [vmem:[%s2346 + $0x38] sm:$0xff] %v2717
    %s2727 = scalar_lea.vmem [#allocation2], 320
    %v2728 = vld [vmem:[%s2727] sm:$0xff]
    %v2729 = vld [vmem:[%s2727 + $0x8] sm:$0xff]
    %v2730 = vld [vmem:[%s2727 + $0x10] sm:$0xff]
    %v2731 = vld [vmem:[%s2727 + $0x18] sm:$0xff]
    %v2732 = vld [vmem:[%s2727 + $0x20] sm:$0xff]
    %v2733 = vld [vmem:[%s2727 + $0x28] sm:$0xff]
    %v2734 = vld [vmem:[%s2727 + $0x30] sm:$0xff]
    %v2735 = vld [vmem:[%s2727 + $0x38] sm:$0xff]
    %2736 = vmatprep.subr.mxu0 %v591
    %2737 = vmatpush1.msra.mxu0 %v590
    %2738 = vmatprep.subr.mxu0 %v595
    %2739 = vmatpush1.msra.mxu0 %v594
    %2740 = vmatprep.subr.mxu0 %v599
    %2741 = vmatpush1.msra.mxu0 %v598
    %2742 = vmatprep.subr.mxu0 %v603
    %2743 = vmatpush1.msra.mxu0 %v602
    %2744 = vmatprep.subr.mxu0 %v607
    %2745 = vmatpush1.msra.mxu0 %v606
    %2746 = vmatprep.subr.mxu0 %v611
    %2747 = vmatpush1.msra.mxu0 %v610
    %2748 = vmatprep.subr.mxu0 %v615
    %2749 = vmatpush1.msra.mxu0 %v614
    %2750 = vmatprep.subr.mxu0 %v619
    %2751 = vmatpush1.msra.mxu0 %v618
    %2752 = vmatprep.subr.mxu0 %v623
    %2753 = vmatpush1.msra.mxu0 %v622
    %2754 = vmatprep.subr.mxu0 %v627
    %2755 = vmatpush1.msra.mxu0 %v626
    %2756 = vmatprep.subr.mxu0 %v631
    %2757 = vmatpush1.msra.mxu0 %v630
    %2758 = vmatprep.subr.mxu0 %v635
    %2759 = vmatpush1.msra.mxu0 %v634
    %2760 = vmatprep.subr.mxu0 %v639
    %2761 = vmatpush1.msra.mxu0 %v638
    %2762 = vmatprep.subr.mxu0 %v643
    %2763 = vmatpush1.msra.mxu0 %v642
    %2764 = vmatprep.subr.mxu0 %v647
    %2765 = vmatpush1.msra.mxu0 %v646
    %2766 = vmatprep.subr.mxu0 %v651
    %2767 = vmatpush1.msra.mxu0 %v650
    %2768 = vmatprep.subr.mxu0 0.0
    %2769 = vmatpush1.msra.mxu0 0.0
    %2770 = vmatprep.subr.mxu0 0.0
    %2771 = vmatpush1.msra.mxu0 0.0
    %2772 = vmatprep.subr.mxu0 0.0
    %2773 = vmatpush1.msra.mxu0 0.0
    %2774 = vmatprep.subr.mxu0 0.0
    %2775 = vmatpush1.msra.mxu0 0.0
    %2776 = vmatprep.subr.mxu0 0.0
    %2777 = vmatpush1.msra.mxu0 0.0
    %2778 = vmatprep.subr.mxu0 0.0
    %2779 = vmatpush1.msra.mxu0 0.0
    %2780 = vmatprep.subr.mxu0 0.0
    %2781 = vmatpush1.msra.mxu0 0.0
    %2782 = vmatprep.subr.mxu0 0.0
    %2783 = vmatpush1.msra.mxu0 0.0
    %2784 = vmatprep.subr.mxu0 0.0
    %2785 = vmatpush1.msra.mxu0 0.0
    %2786 = vmatprep.subr.mxu0 0.0
    %2787 = vmatpush1.msra.mxu0 0.0
    %2788 = vmatprep.subr.mxu0 0.0
    %2789 = vmatpush1.msra.mxu0 0.0
    %2790 = vmatprep.subr.mxu0 0.0
    %2791 = vmatpush1.msra.mxu0 0.0
    %2792 = vmatprep.subr.mxu0 0.0
    %2793 = vmatpush1.msra.mxu0 0.0
    %2794 = vmatprep.subr.mxu0 0.0
    %2795 = vmatpush1.msra.mxu0 0.0
    %2796 = vmatprep.subr.mxu0 0.0
    %2797 = vmatpush1.msra.mxu0 0.0
    %2798 = vmatprep.subr.mxu0 0.0
    %2799 = vmatpush1.msra.mxu0 0.0
    %2800 = vmatprep.mubr.f32.mxu0 0.0
    %2801 = vmatmul.mubr.f32.gmra.mrb[0].mxu0 %v2563
    %v2802 = vpop.f32.mrb[0].mxu0
    %v2803 = vadd.f32 0.0, %v2802
    %v2804 = vpop.f32.mrb[0].mxu0
    %v2805 = vadd.f32 0.0, %v2804
    %2806 = vmatprep.mubr.f32.mxu0 0.0
    %2807 = vmatmul.mubr.f32.gmra.mrb[0].mxu0 %v2564
    %v2808 = vpop.f32.mrb[0].mxu0
    %v2809 = vadd.f32 0.0, %v2808
    %v2810 = vpop.f32.mrb[0].mxu0
    %v2811 = vadd.f32 0.0, %v2810
    %2812 = vdwg.mxu0
    %2813 = vmatprep.subr.mxu0 %v593
    %2814 = vmatpush1.msra.mxu0 %v592
    %2815 = vmatprep.subr.mxu0 %v597
    %2816 = vmatpush1.msra.mxu0 %v596
    %2817 = vmatprep.subr.mxu0 %v601
    %2818 = vmatpush1.msra.mxu0 %v600
    %2819 = vmatprep.subr.mxu0 %v605
    %2820 = vmatpush1.msra.mxu0 %v604
    %2821 = vmatprep.subr.mxu0 %v609
    %2822 = vmatpush1.msra.mxu0 %v608
    %2823 = vmatprep.subr.mxu0 %v613
    %2824 = vmatpush1.msra.mxu0 %v612
    %2825 = vmatprep.subr.mxu0 %v617
    %2826 = vmatpush1.msra.mxu0 %v616
    %2827 = vmatprep.subr.mxu0 %v621
    %2828 = vmatpush1.msra.mxu0 %v620
    %2829 = vmatprep.subr.mxu0 %v625
    %2830 = vmatpush1.msra.mxu0 %v624
    %2831 = vmatprep.subr.mxu0 %v629
    %2832 = vmatpush1.msra.mxu0 %v628
    %2833 = vmatprep.subr.mxu0 %v633
    %2834 = vmatpush1.msra.mxu0 %v632
    %2835 = vmatprep.subr.mxu0 %v637
    %2836 = vmatpush1.msra.mxu0 %v636
    %2837 = vmatprep.subr.mxu0 %v641
    %2838 = vmatpush1.msra.mxu0 %v640
    %2839 = vmatprep.subr.mxu0 %v645
    %2840 = vmatpush1.msra.mxu0 %v644
    %2841 = vmatprep.subr.mxu0 %v649
    %2842 = vmatpush1.msra.mxu0 %v648
    %2843 = vmatprep.subr.mxu0 %v653
    %2844 = vmatpush1.msra.mxu0 %v652
    %2845 = vmatprep.subr.mxu0 0.0
    %2846 = vmatpush1.msra.mxu0 0.0
    %2847 = vmatprep.subr.mxu0 0.0
    %2848 = vmatpush1.msra.mxu0 0.0
    %2849 = vmatprep.subr.mxu0 0.0
    %2850 = vmatpush1.msra.mxu0 0.0
    %2851 = vmatprep.subr.mxu0 0.0
    %2852 = vmatpush1.msra.mxu0 0.0
    %2853 = vmatprep.subr.mxu0 0.0
    %2854 = vmatpush1.msra.mxu0 0.0
    %2855 = vmatprep.subr.mxu0 0.0
    %2856 = vmatpush1.msra.mxu0 0.0
    %2857 = vmatprep.subr.mxu0 0.0
    %2858 = vmatpush1.msra.mxu0 0.0
    %2859 = vmatprep.subr.mxu0 0.0
    %2860 = vmatpush1.msra.mxu0 0.0
    %2861 = vmatprep.subr.mxu0 0.0
    %2862 = vmatpush1.msra.mxu0 0.0
    %2863 = vmatprep.subr.mxu0 0.0
    %2864 = vmatpush1.msra.mxu0 0.0
    %2865 = vmatprep.subr.mxu0 0.0
    %2866 = vmatpush1.msra.mxu0 0.0
    %2867 = vmatprep.subr.mxu0 0.0
    %2868 = vmatpush1.msra.mxu0 0.0
    %2869 = vmatprep.subr.mxu0 0.0
    %2870 = vmatpush1.msra.mxu0 0.0
    %2871 = vmatprep.subr.mxu0 0.0
    %2872 = vmatpush1.msra.mxu0 0.0
    %2873 = vmatprep.subr.mxu0 0.0
    %2874 = vmatpush1.msra.mxu0 0.0
    %2875 = vmatprep.subr.mxu0 0.0
    %2876 = vmatpush1.msra.mxu0 0.0
    %2877 = vmatprep.mubr.f32.mxu0 0.0
    %2878 = vmatmul.mubr.f32.gmra.mrb[0].mxu0 %v2563
    %v2879 = vpop.f32.mrb[0].mxu0
    %v2880 = vadd.f32 0.0, %v2879
    %v2881 = vpop.f32.mrb[0].mxu0
    %v2882 = vadd.f32 0.0, %v2881
    %2883 = vmatprep.mubr.f32.mxu0 0.0
    %2884 = vmatmul.mubr.f32.gmra.mrb[0].mxu0 %v2564
    %v2885 = vpop.f32.mrb[0].mxu0
    %v2886 = vadd.f32 0.0, %v2885
    %v2887 = vpop.f32.mrb[0].mxu0
    %v2888 = vadd.f32 0.0, %v2887
    %2889 = vdwg.mxu0
    %v2890 = vadd.f32 %v2728, %v2803
    %v2891 = vadd.f32 %v2729, %v2805
    %v2892 = vadd.f32 %v2730, %v2880
    %v2893 = vadd.f32 %v2731, %v2882
    %v2894 = vadd.f32 %v2732, %v2809
    %v2895 = vadd.f32 %v2733, %v2811
    %v2896 = vadd.f32 %v2734, %v2886
    %v2897 = vadd.f32 %v2735, %v2888
    %v2898 = vxor.u32 %v2890, 2147483648
    %v2899 = vxor.u32 %v2894, 2147483648
    %v2900 = vmul.f32 %v2898, 1.442695
    %v2901 = vpow.pop %v2900
    %v2902 = vmul.f32 %v2899, 1.442695
    %v2903 = vpow.pop %v2902
    %v2904 = vadd.f32 %v2901, 1.0
    %v2905 = vadd.f32 %v2903, 1.0
    %v2906 = vrcp.pop %v2904
    %v2907 = vmul.f32 1.0, %v2906
    %v2908 = vrcp.pop %v2905
    %v2909 = vmul.f32 1.0, %v2908
    %v2910 = vxor.u32 %v2891, 2147483648
    %v2911 = vxor.u32 %v2895, 2147483648
    %v2912 = vmul.f32 %v2910, 1.442695
    %v2913 = vpow.pop %v2912
    %v2914 = vmul.f32 %v2911, 1.442695
    %v2915 = vpow.pop %v2914
    %v2916 = vadd.f32 %v2913, 1.0
    %v2917 = vadd.f32 %v2915, 1.0
    %v2918 = vrcp.pop %v2916
    %v2919 = vmul.f32 1.0, %v2918
    %v2920 = vrcp.pop %v2917
    %v2921 = vmul.f32 1.0, %v2920
    %v2922 = vtanh.pop %v2892
    %v2923 = vtanh.pop %v2896
    %v2924 = vxor.u32 %v2893, 2147483648
    %v2925 = vxor.u32 %v2897, 2147483648
    %v2926 = vmul.f32 %v2924, 1.442695
    %v2927 = vpow.pop %v2926
    %v2928 = vmul.f32 %v2925, 1.442695
    %v2929 = vpow.pop %v2928
    %v2930 = vadd.f32 %v2927, 1.0
    %v2931 = vadd.f32 %v2929, 1.0
    %v2932 = vrcp.pop %v2930
    %v2933 = vmul.f32 1.0, %v2932
    %v2934 = vrcp.pop %v2931
    %v2935 = vmul.f32 1.0, %v2934
    %v2936 = vmul.f32 %v2919, %v2559
    %v2937 = vmul.f32 %v2921, %v2560
    %v2938 = vmul.f32 %v2907, %v2922
    %v2939 = vmul.f32 %v2909, %v2923
    %v2940 = vadd.f32 %v2936, %v2938
    %v2941 = vadd.f32 %v2937, %v2939
    %v2942 = vtanh.pop %v2940
    %v2943 = vtanh.pop %v2941
    %v2944 = vmul.f32 %v2933, %v2942
    %v2945 = vmul.f32 %v2935, %v2943
    %2946 = vmatprep.subr.mxu0 %v655
    %2947 = vmatpush1.msra.mxu0 %v654
    %2948 = vmatprep.subr.mxu0 %v659
    %2949 = vmatpush1.msra.mxu0 %v658
    %2950 = vmatprep.subr.mxu0 %v663
    %2951 = vmatpush1.msra.mxu0 %v662
    %2952 = vmatprep.subr.mxu0 %v667
    %2953 = vmatpush1.msra.mxu0 %v666
    %2954 = vmatprep.subr.mxu0 %v671
    %2955 = vmatpush1.msra.mxu0 %v670
    %2956 = vmatprep.subr.mxu0 %v675
    %2957 = vmatpush1.msra.mxu0 %v674
    %2958 = vmatprep.subr.mxu0 %v679
    %2959 = vmatpush1.msra.mxu0 %v678
    %2960 = vmatprep.subr.mxu0 %v683
    %2961 = vmatpush1.msra.mxu0 %v682
    %2962 = vmatprep.subr.mxu0 %v687
    %2963 = vmatpush1.msra.mxu0 %v686
    %2964 = vmatprep.subr.mxu0 %v691
    %2965 = vmatpush1.msra.mxu0 %v690
    %2966 = vmatprep.subr.mxu0 %v695
    %2967 = vmatpush1.msra.mxu0 %v694
    %2968 = vmatprep.subr.mxu0 %v699
    %2969 = vmatpush1.msra.mxu0 %v698
    %2970 = vmatprep.subr.mxu0 %v703
    %2971 = vmatpush1.msra.mxu0 %v702
    %2972 = vmatprep.subr.mxu0 %v707
    %2973 = vmatpush1.msra.mxu0 %v706
    %2974 = vmatprep.subr.mxu0 %v711
    %2975 = vmatpush1.msra.mxu0 %v710
    %2976 = vmatprep.subr.mxu0 %v715
    %2977 = vmatpush1.msra.mxu0 %v714
    %2978 = vmatprep.subr.mxu0 0.0
    %2979 = vmatpush1.msra.mxu0 0.0
    %2980 = vmatprep.subr.mxu0 0.0
    %2981 = vmatpush1.msra.mxu0 0.0
    %2982 = vmatprep.subr.mxu0 0.0
    %2983 = vmatpush1.msra.mxu0 0.0
    %2984 = vmatprep.subr.mxu0 0.0
    %2985 = vmatpush1.msra.mxu0 0.0
    %2986 = vmatprep.subr.mxu0 0.0
    %2987 = vmatpush1.msra.mxu0 0.0
    %2988 = vmatprep.subr.mxu0 0.0
    %2989 = vmatpush1.msra.mxu0 0.0
    %2990 = vmatprep.subr.mxu0 0.0
    %2991 = vmatpush1.msra.mxu0 0.0
    %2992 = vmatprep.subr.mxu0 0.0
    %2993 = vmatpush1.msra.mxu0 0.0
    %2994 = vmatprep.subr.mxu0 0.0
    %2995 = vmatpush1.msra.mxu0 0.0
    %2996 = vmatprep.subr.mxu0 0.0
    %2997 = vmatpush1.msra.mxu0 0.0
    %2998 = vmatprep.subr.mxu0 0.0
    %2999 = vmatpush1.msra.mxu0 0.0
    %3000 = vmatprep.subr.mxu0 0.0
    %3001 = vmatpush1.msra.mxu0 0.0
    %3002 = vmatprep.subr.mxu0 0.0
    %3003 = vmatpush1.msra.mxu0 0.0
    %3004 = vmatprep.subr.mxu0 0.0
    %3005 = vmatpush1.msra.mxu0 0.0
    %3006 = vmatprep.subr.mxu0 0.0
    %3007 = vmatpush1.msra.mxu0 0.0
    %3008 = vmatprep.subr.mxu0 0.0
    %3009 = vmatpush1.msra.mxu0 0.0
    %3010 = vmatprep.mubr.f32.mxu0 0.0
    %3011 = vmatmul.mubr.f32.gmra.mrb[0].mxu0 %v2944
    %v3012 = vpop.f32.mrb[0].mxu0
    %v3013 = vadd.f32 %v1024, %v3012
    %v3014 = vpop.f32.mrb[0].mxu0
    %v3015 = vadd.f32 %v1028, %v3014
    %3016 = vmatprep.mubr.f32.mxu0 0.0
    %3017 = vmatmul.mubr.f32.gmra.mrb[0].mxu0 %v2945
    %v3018 = vpop.f32.mrb[0].mxu0
    %v3019 = vadd.f32 %v1024, %v3018
    %v3020 = vpop.f32.mrb[0].mxu0
    %v3021 = vadd.f32 %v1028, %v3020
    %3022 = vdwg.mxu0
    %3023 = vmatprep.subr.mxu0 %v657
    %3024 = vmatpush1.msra.mxu0 %v656
    %3025 = vmatprep.subr.mxu0 %v661
    %3026 = vmatpush1.msra.mxu0 %v660
    %3027 = vmatprep.subr.mxu0 %v665
    %3028 = vmatpush1.msra.mxu0 %v664
    %3029 = vmatprep.subr.mxu0 %v669
    %3030 = vmatpush1.msra.mxu0 %v668
    %3031 = vmatprep.subr.mxu0 %v673
    %3032 = vmatpush1.msra.mxu0 %v672
    %3033 = vmatprep.subr.mxu0 %v677
    %3034 = vmatpush1.msra.mxu0 %v676
    %3035 = vmatprep.subr.mxu0 %v681
    %3036 = vmatpush1.msra.mxu0 %v680
    %3037 = vmatprep.subr.mxu0 %v685
    %3038 = vmatpush1.msra.mxu0 %v684
    %3039 = vmatprep.subr.mxu0 %v689
    %3040 = vmatpush1.msra.mxu0 %v688
    %3041 = vmatprep.subr.mxu0 %v693
    %3042 = vmatpush1.msra.mxu0 %v692
    %3043 = vmatprep.subr.mxu0 %v697
    %3044 = vmatpush1.msra.mxu0 %v696
    %3045 = vmatprep.subr.mxu0 %v701
    %3046 = vmatpush1.msra.mxu0 %v700
    %3047 = vmatprep.subr.mxu0 %v705
    %3048 = vmatpush1.msra.mxu0 %v704
    %3049 = vmatprep.subr.mxu0 %v709
    %3050 = vmatpush1.msra.mxu0 %v708
    %3051 = vmatprep.subr.mxu0 %v713
    %3052 = vmatpush1.msra.mxu0 %v712
    %3053 = vmatprep.subr.mxu0 %v717
    %3054 = vmatpush1.msra.mxu0 %v716
    %3055 = vmatprep.subr.mxu0 0.0
    %3056 = vmatpush1.msra.mxu0 0.0
    %3057 = vmatprep.subr.mxu0 0.0
    %3058 = vmatpush1.msra.mxu0 0.0
    %3059 = vmatprep.subr.mxu0 0.0
    %3060 = vmatpush1.msra.mxu0 0.0
    %3061 = vmatprep.subr.mxu0 0.0
    %3062 = vmatpush1.msra.mxu0 0.0
    %3063 = vmatprep.subr.mxu0 0.0
    %3064 = vmatpush1.msra.mxu0 0.0
    %3065 = vmatprep.subr.mxu0 0.0
    %3066 = vmatpush1.msra.mxu0 0.0
    %3067 = vmatprep.subr.mxu0 0.0
    %3068 = vmatpush1.msra.mxu0 0.0
    %3069 = vmatprep.subr.mxu0 0.0
    %3070 = vmatpush1.msra.mxu0 0.0
    %3071 = vmatprep.subr.mxu0 0.0
    %3072 = vmatpush1.msra.mxu0 0.0
    %3073 = vmatprep.subr.mxu0 0.0
    %3074 = vmatpush1.msra.mxu0 0.0
    %3075 = vmatprep.subr.mxu0 0.0
    %3076 = vmatpush1.msra.mxu0 0.0
    %3077 = vmatprep.subr.mxu0 0.0
    %3078 = vmatpush1.msra.mxu0 0.0
    %3079 = vmatprep.subr.mxu0 0.0
    %3080 = vmatpush1.msra.mxu0 0.0
    %3081 = vmatprep.subr.mxu0 0.0
    %3082 = vmatpush1.msra.mxu0 0.0
    %3083 = vmatprep.subr.mxu0 0.0
    %3084 = vmatpush1.msra.mxu0 0.0
    %3085 = vmatprep.subr.mxu0 0.0
    %3086 = vmatpush1.msra.mxu0 0.0
    %3087 = vmatprep.mubr.f32.mxu0 0.0
    %3088 = vmatmul.mubr.f32.gmra.mrb[0].mxu0 %v2944
    %v3089 = vpop.f32.mrb[0].mxu0
    %v3090 = vadd.f32 %v1032, %v3089
    %v3091 = vpop.f32.mrb[0].mxu0
    %v3092 = vadd.f32 %v1036, %v3091
    %3093 = vmatprep.mubr.f32.mxu0 0.0
    %3094 = vmatmul.mubr.f32.gmra.mrb[0].mxu0 %v2945
    %v3095 = vpop.f32.mrb[0].mxu0
    %v3096 = vadd.f32 %v1032, %v3095
    %v3097 = vpop.f32.mrb[0].mxu0
    %v3098 = vadd.f32 %v1036, %v3097
    %3099 = vdwg.mxu0
    %3100 = vst [vmem:[%s2727] sm:$0xff] %v3013
    %3101 = vst [vmem:[%s2727 + $0x8] sm:$0xff] %v3015
    %3102 = vst [vmem:[%s2727 + $0x10] sm:$0xff] %v3090
    %3103 = vst [vmem:[%s2727 + $0x18] sm:$0xff] %v3092
    %3104 = vst [vmem:[%s2727 + $0x20] sm:$0xff] %v3019
    %3105 = vst [vmem:[%s2727 + $0x28] sm:$0xff] %v3021
    %3106 = vst [vmem:[%s2727 + $0x30] sm:$0xff] %v3096
    %3107 = vst [vmem:[%s2727 + $0x38] sm:$0xff] %v3098
    %s3108 = scalar_lea.vmem [#allocation2], 384
    %v3109 = vld [vmem:[%s3108] sm:$0xff]
    %v3110 = vld [vmem:[%s3108 + $0x8] sm:$0xff]
    %v3111 = vld [vmem:[%s3108 + $0x10] sm:$0xff]
    %v3112 = vld [vmem:[%s3108 + $0x18] sm:$0xff]
    %v3113 = vld [vmem:[%s3108 + $0x20] sm:$0xff]
    %v3114 = vld [vmem:[%s3108 + $0x28] sm:$0xff]
    %v3115 = vld [vmem:[%s3108 + $0x30] sm:$0xff]
    %v3116 = vld [vmem:[%s3108 + $0x38] sm:$0xff]
    %3117 = vmatprep.subr.mxu0 %v591
    %3118 = vmatpush1.msra.mxu0 %v590
    %3119 = vmatprep.subr.mxu0 %v595
    %3120 = vmatpush1.msra.mxu0 %v594
    %3121 = vmatprep.subr.mxu0 %v599
    %3122 = vmatpush1.msra.mxu0 %v598
    %3123 = vmatprep.subr.mxu0 %v603
    %3124 = vmatpush1.msra.mxu0 %v602
    %3125 = vmatprep.subr.mxu0 %v607
    %3126 = vmatpush1.msra.mxu0 %v606
    %3127 = vmatprep.subr.mxu0 %v611
    %3128 = vmatpush1.msra.mxu0 %v610
    %3129 = vmatprep.subr.mxu0 %v615
    %3130 = vmatpush1.msra.mxu0 %v614
    %3131 = vmatprep.subr.mxu0 %v619
    %3132 = vmatpush1.msra.mxu0 %v618
    %3133 = vmatprep.subr.mxu0 %v623
    %3134 = vmatpush1.msra.mxu0 %v622
    %3135 = vmatprep.subr.mxu0 %v627
    %3136 = vmatpush1.msra.mxu0 %v626
    %3137 = vmatprep.subr.mxu0 %v631
    %3138 = vmatpush1.msra.mxu0 %v630
    %3139 = vmatprep.subr.mxu0 %v635
    %3140 = vmatpush1.msra.mxu0 %v634
    %3141 = vmatprep.subr.mxu0 %v639
    %3142 = vmatpush1.msra.mxu0 %v638
    %3143 = vmatprep.subr.mxu0 %v643
    %3144 = vmatpush1.msra.mxu0 %v642
    %3145 = vmatprep.subr.mxu0 %v647
    %3146 = vmatpush1.msra.mxu0 %v646
    %3147 = vmatprep.subr.mxu0 %v651
    %3148 = vmatpush1.msra.mxu0 %v650
    %3149 = vmatprep.subr.mxu0 0.0
    %3150 = vmatpush1.msra.mxu0 0.0
    %3151 = vmatprep.subr.mxu0 0.0
    %3152 = vmatpush1.msra.mxu0 0.0
    %3153 = vmatprep.subr.mxu0 0.0
    %3154 = vmatpush1.msra.mxu0 0.0
    %3155 = vmatprep.subr.mxu0 0.0
    %3156 = vmatpush1.msra.mxu0 0.0
    %3157 = vmatprep.subr.mxu0 0.0
    %3158 = vmatpush1.msra.mxu0 0.0
    %3159 = vmatprep.subr.mxu0 0.0
    %3160 = vmatpush1.msra.mxu0 0.0
    %3161 = vmatprep.subr.mxu0 0.0
    %3162 = vmatpush1.msra.mxu0 0.0
    %3163 = vmatprep.subr.mxu0 0.0
    %3164 = vmatpush1.msra.mxu0 0.0
    %3165 = vmatprep.subr.mxu0 0.0
    %3166 = vmatpush1.msra.mxu0 0.0
    %3167 = vmatprep.subr.mxu0 0.0
    %3168 = vmatpush1.msra.mxu0 0.0
    %3169 = vmatprep.subr.mxu0 0.0
    %3170 = vmatpush1.msra.mxu0 0.0
    %3171 = vmatprep.subr.mxu0 0.0
    %3172 = vmatpush1.msra.mxu0 0.0
    %3173 = vmatprep.subr.mxu0 0.0
    %3174 = vmatpush1.msra.mxu0 0.0
    %3175 = vmatprep.subr.mxu0 0.0
    %3176 = vmatpush1.msra.mxu0 0.0
    %3177 = vmatprep.subr.mxu0 0.0
    %3178 = vmatpush1.msra.mxu0 0.0
    %3179 = vmatprep.subr.mxu0 0.0
    %3180 = vmatpush1.msra.mxu0 0.0
    %3181 = vmatprep.mubr.f32.mxu0 0.0
    %3182 = vmatmul.mubr.f32.gmra.mrb[0].mxu0 %v2944
    %v3183 = vpop.f32.mrb[0].mxu0
    %v3184 = vadd.f32 0.0, %v3183
    %v3185 = vpop.f32.mrb[0].mxu0
    %v3186 = vadd.f32 0.0, %v3185
    %3187 = vmatprep.mubr.f32.mxu0 0.0
    %3188 = vmatmul.mubr.f32.gmra.mrb[0].mxu0 %v2945
    %v3189 = vpop.f32.mrb[0].mxu0
    %v3190 = vadd.f32 0.0, %v3189
    %v3191 = vpop.f32.mrb[0].mxu0
    %v3192 = vadd.f32 0.0, %v3191
    %3193 = vdwg.mxu0
    %3194 = vmatprep.subr.mxu0 %v593
    %3195 = vmatpush1.msra.mxu0 %v592
    %3196 = vmatprep.subr.mxu0 %v597
    %3197 = vmatpush1.msra.mxu0 %v596
    %3198 = vmatprep.subr.mxu0 %v601
    %3199 = vmatpush1.msra.mxu0 %v600
    %3200 = vmatprep.subr.mxu0 %v605
    %3201 = vmatpush1.msra.mxu0 %v604
    %3202 = vmatprep.subr.mxu0 %v609
    %3203 = vmatpush1.msra.mxu0 %v608
    %3204 = vmatprep.subr.mxu0 %v613
    %3205 = vmatpush1.msra.mxu0 %v612
    %3206 = vmatprep.subr.mxu0 %v617
    %3207 = vmatpush1.msra.mxu0 %v616
    %3208 = vmatprep.subr.mxu0 %v621
    %3209 = vmatpush1.msra.mxu0 %v620
    %3210 = vmatprep.subr.mxu0 %v625
    %3211 = vmatpush1.msra.mxu0 %v624
    %3212 = vmatprep.subr.mxu0 %v629
    %3213 = vmatpush1.msra.mxu0 %v628
    %3214 = vmatprep.subr.mxu0 %v633
    %3215 = vmatpush1.msra.mxu0 %v632
    %3216 = vmatprep.subr.mxu0 %v637
    %3217 = vmatpush1.msra.mxu0 %v636
    %3218 = vmatprep.subr.mxu0 %v641
    %3219 = vmatpush1.msra.mxu0 %v640
    %3220 = vmatprep.subr.mxu0 %v645
    %3221 = vmatpush1.msra.mxu0 %v644
    %3222 = vmatprep.subr.mxu0 %v649
    %3223 = vmatpush1.msra.mxu0 %v648
    %3224 = vmatprep.subr.mxu0 %v653
    %3225 = vmatpush1.msra.mxu0 %v652
    %3226 = vmatprep.subr.mxu0 0.0
    %3227 = vmatpush1.msra.mxu0 0.0
    %3228 = vmatprep.subr.mxu0 0.0
    %3229 = vmatpush1.msra.mxu0 0.0
    %3230 = vmatprep.subr.mxu0 0.0
    %3231 = vmatpush1.msra.mxu0 0.0
    %3232 = vmatprep.subr.mxu0 0.0
    %3233 = vmatpush1.msra.mxu0 0.0
    %3234 = vmatprep.subr.mxu0 0.0
    %3235 = vmatpush1.msra.mxu0 0.0
    %3236 = vmatprep.subr.mxu0 0.0
    %3237 = vmatpush1.msra.mxu0 0.0
    %3238 = vmatprep.subr.mxu0 0.0
    %3239 = vmatpush1.msra.mxu0 0.0
    %3240 = vmatprep.subr.mxu0 0.0
    %3241 = vmatpush1.msra.mxu0 0.0
    %3242 = vmatprep.subr.mxu0 0.0
    %3243 = vmatpush1.msra.mxu0 0.0
    %3244 = vmatprep.subr.mxu0 0.0
    %3245 = vmatpush1.msra.mxu0 0.0
    %3246 = vmatprep.subr.mxu0 0.0
    %3247 = vmatpush1.msra.mxu0 0.0
    %3248 = vmatprep.subr.mxu0 0.0
    %3249 = vmatpush1.msra.mxu0 0.0
    %3250 = vmatprep.subr.mxu0 0.0
    %3251 = vmatpush1.msra.mxu0 0.0
    %3252 = vmatprep.subr.mxu0 0.0
    %3253 = vmatpush1.msra.mxu0 0.0
    %3254 = vmatprep.subr.mxu0 0.0
    %3255 = vmatpush1.msra.mxu0 0.0
    %3256 = vmatprep.subr.mxu0 0.0
    %3257 = vmatpush1.msra.mxu0 0.0
    %3258 = vmatprep.mubr.f32.mxu0 0.0
    %3259 = vmatmul.mubr.f32.gmra.mrb[0].mxu0 %v2944
    %v3260 = vpop.f32.mrb[0].mxu0
    %v3261 = vadd.f32 0.0, %v3260
    %v3262 = vpop.f32.mrb[0].mxu0
    %v3263 = vadd.f32 0.0, %v3262
    %3264 = vmatprep.mubr.f32.mxu0 0.0
    %3265 = vmatmul.mubr.f32.gmra.mrb[0].mxu0 %v2945
    %v3266 = vpop.f32.mrb[0].mxu0
    %v3267 = vadd.f32 0.0, %v3266
    %v3268 = vpop.f32.mrb[0].mxu0
    %v3269 = vadd.f32 0.0, %v3268
    %3270 = vdwg.mxu0
    %v3271 = vadd.f32 %v3109, %v3184
    %v3272 = vadd.f32 %v3110, %v3186
    %v3273 = vadd.f32 %v3111, %v3261
    %v3274 = vadd.f32 %v3112, %v3263
    %v3275 = vadd.f32 %v3113, %v3190
    %v3276 = vadd.f32 %v3114, %v3192
    %v3277 = vadd.f32 %v3115, %v3267
    %v3278 = vadd.f32 %v3116, %v3269
    %v3279 = vxor.u32 %v3271, 2147483648
    %v3280 = vxor.u32 %v3275, 2147483648
    %v3281 = vmul.f32 %v3279, 1.442695
    %v3282 = vpow.pop %v3281
    %v3283 = vmul.f32 %v3280, 1.442695
    %v3284 = vpow.pop %v3283
    %v3285 = vadd.f32 %v3282, 1.0
    %v3286 = vadd.f32 %v3284, 1.0
    %v3287 = vrcp.pop %v3285
    %v3288 = vmul.f32 1.0, %v3287
    %v3289 = vrcp.pop %v3286
    %v3290 = vmul.f32 1.0, %v3289
    %v3291 = vxor.u32 %v3272, 2147483648
    %v3292 = vxor.u32 %v3276, 2147483648
    %v3293 = vmul.f32 %v3291, 1.442695
    %v3294 = vpow.pop %v3293
    %v3295 = vmul.f32 %v3292, 1.442695
    %v3296 = vpow.pop %v3295
    %v3297 = vadd.f32 %v3294, 1.0
    %v3298 = vadd.f32 %v3296, 1.0
    %v3299 = vrcp.pop %v3297
    %v3300 = vmul.f32 1.0, %v3299
    %v3301 = vrcp.pop %v3298
    %v3302 = vmul.f32 1.0, %v3301
    %v3303 = vtanh.pop %v3273
    %v3304 = vtanh.pop %v3277
    %v3305 = vxor.u32 %v3274, 2147483648
    %v3306 = vxor.u32 %v3278, 2147483648
    %v3307 = vmul.f32 %v3305, 1.442695
    %v3308 = vpow.pop %v3307
    %v3309 = vmul.f32 %v3306, 1.442695
    %v3310 = vpow.pop %v3309
    %v3311 = vadd.f32 %v3308, 1.0
    %v3312 = vadd.f32 %v3310, 1.0
    %v3313 = vrcp.pop %v3311
    %v3314 = vmul.f32 1.0, %v3313
    %v3315 = vrcp.pop %v3312
    %v3316 = vmul.f32 1.0, %v3315
    %v3317 = vmul.f32 %v3300, %v2940
    %v3318 = vmul.f32 %v3302, %v2941
    %v3319 = vmul.f32 %v3288, %v3303
    %v3320 = vmul.f32 %v3290, %v3304
    %v3321 = vadd.f32 %v3317, %v3319
    %v3322 = vadd.f32 %v3318, %v3320
    %v3323 = vtanh.pop %v3321
    %v3324 = vtanh.pop %v3322
    %v3325 = vmul.f32 %v3314, %v3323
    %v3326 = vmul.f32 %v3316, %v3324
    %3327 = vmatprep.subr.mxu0 %v655
    %3328 = vmatpush1.msra.mxu0 %v654
    %3329 = vmatprep.subr.mxu0 %v659
    %3330 = vmatpush1.msra.mxu0 %v658
    %3331 = vmatprep.subr.mxu0 %v663
    %3332 = vmatpush1.msra.mxu0 %v662
    %3333 = vmatprep.subr.mxu0 %v667
    %3334 = vmatpush1.msra.mxu0 %v666
    %3335 = vmatprep.subr.mxu0 %v671
    %3336 = vmatpush1.msra.mxu0 %v670
    %3337 = vmatprep.subr.mxu0 %v675
    %3338 = vmatpush1.msra.mxu0 %v674
    %3339 = vmatprep.subr.mxu0 %v679
    %3340 = vmatpush1.msra.mxu0 %v678
    %3341 = vmatprep.subr.mxu0 %v683
    %3342 = vmatpush1.msra.mxu0 %v682
    %3343 = vmatprep.subr.mxu0 %v687
    %3344 = vmatpush1.msra.mxu0 %v686
    %3345 = vmatprep.subr.mxu0 %v691
    %3346 = vmatpush1.msra.mxu0 %v690
    %3347 = vmatprep.subr.mxu0 %v695
    %3348 = vmatpush1.msra.mxu0 %v694
    %3349 = vmatprep.subr.mxu0 %v699
    %3350 = vmatpush1.msra.mxu0 %v698
    %3351 = vmatprep.subr.mxu0 %v703
    %3352 = vmatpush1.msra.mxu0 %v702
    %3353 = vmatprep.subr.mxu0 %v707
    %3354 = vmatpush1.msra.mxu0 %v706
    %3355 = vmatprep.subr.mxu0 %v711
    %3356 = vmatpush1.msra.mxu0 %v710
    %3357 = vmatprep.subr.mxu0 %v715
    %3358 = vmatpush1.msra.mxu0 %v714
    %3359 = vmatprep.subr.mxu0 0.0
    %3360 = vmatpush1.msra.mxu0 0.0
    %3361 = vmatprep.subr.mxu0 0.0
    %3362 = vmatpush1.msra.mxu0 0.0
    %3363 = vmatprep.subr.mxu0 0.0
    %3364 = vmatpush1.msra.mxu0 0.0
    %3365 = vmatprep.subr.mxu0 0.0
    %3366 = vmatpush1.msra.mxu0 0.0
    %3367 = vmatprep.subr.mxu0 0.0
    %3368 = vmatpush1.msra.mxu0 0.0
    %3369 = vmatprep.subr.mxu0 0.0
    %3370 = vmatpush1.msra.mxu0 0.0
    %3371 = vmatprep.subr.mxu0 0.0
    %3372 = vmatpush1.msra.mxu0 0.0
    %3373 = vmatprep.subr.mxu0 0.0
    %3374 = vmatpush1.msra.mxu0 0.0
    %3375 = vmatprep.subr.mxu0 0.0
    %3376 = vmatpush1.msra.mxu0 0.0
    %3377 = vmatprep.subr.mxu0 0.0
    %3378 = vmatpush1.msra.mxu0 0.0
    %3379 = vmatprep.subr.mxu0 0.0
    %3380 = vmatpush1.msra.mxu0 0.0
    %3381 = vmatprep.subr.mxu0 0.0
    %3382 = vmatpush1.msra.mxu0 0.0
    %3383 = vmatprep.subr.mxu0 0.0
    %3384 = vmatpush1.msra.mxu0 0.0
    %3385 = vmatprep.subr.mxu0 0.0
    %3386 = vmatpush1.msra.mxu0 0.0
    %3387 = vmatprep.subr.mxu0 0.0
    %3388 = vmatpush1.msra.mxu0 0.0
    %3389 = vmatprep.subr.mxu0 0.0
    %3390 = vmatpush1.msra.mxu0 0.0
    %3391 = vmatprep.mubr.f32.mxu0 0.0
    %3392 = vmatmul.mubr.f32.gmra.mrb[0].mxu0 %v3325
    %v3393 = vpop.f32.mrb[0].mxu0
    %v3394 = vadd.f32 %v1024, %v3393
    %v3395 = vpop.f32.mrb[0].mxu0
    %v3396 = vadd.f32 %v1028, %v3395
    %3397 = vmatprep.mubr.f32.mxu0 0.0
    %3398 = vmatmul.mubr.f32.gmra.mrb[0].mxu0 %v3326
    %v3399 = vpop.f32.mrb[0].mxu0
    %v3400 = vadd.f32 %v1024, %v3399
    %v3401 = vpop.f32.mrb[0].mxu0
    %v3402 = vadd.f32 %v1028, %v3401
    %3403 = vdwg.mxu0
    %3404 = vmatprep.subr.mxu0 %v657
    %3405 = vmatpush1.msra.mxu0 %v656
    %3406 = vmatprep.subr.mxu0 %v661
    %3407 = vmatpush1.msra.mxu0 %v660
    %3408 = vmatprep.subr.mxu0 %v665
    %3409 = vmatpush1.msra.mxu0 %v664
    %3410 = vmatprep.subr.mxu0 %v669
    %3411 = vmatpush1.msra.mxu0 %v668
    %3412 = vmatprep.subr.mxu0 %v673
    %3413 = vmatpush1.msra.mxu0 %v672
    %3414 = vmatprep.subr.mxu0 %v677
    %3415 = vmatpush1.msra.mxu0 %v676
    %3416 = vmatprep.subr.mxu0 %v681
    %3417 = vmatpush1.msra.mxu0 %v680
    %3418 = vmatprep.subr.mxu0 %v685
    %3419 = vmatpush1.msra.mxu0 %v684
    %3420 = vmatprep.subr.mxu0 %v689
    %3421 = vmatpush1.msra.mxu0 %v688
    %3422 = vmatprep.subr.mxu0 %v693
    %3423 = vmatpush1.msra.mxu0 %v692
    %3424 = vmatprep.subr.mxu0 %v697
    %3425 = vmatpush1.msra.mxu0 %v696
    %3426 = vmatprep.subr.mxu0 %v701
    %3427 = vmatpush1.msra.mxu0 %v700
    %3428 = vmatprep.subr.mxu0 %v705
    %3429 = vmatpush1.msra.mxu0 %v704
    %3430 = vmatprep.subr.mxu0 %v709
    %3431 = vmatpush1.msra.mxu0 %v708
    %3432 = vmatprep.subr.mxu0 %v713
    %3433 = vmatpush1.msra.mxu0 %v712
    %3434 = vmatprep.subr.mxu0 %v717
    %3435 = vmatpush1.msra.mxu0 %v716
    %3436 = vmatprep.subr.mxu0 0.0
    %3437 = vmatpush1.msra.mxu0 0.0
    %3438 = vmatprep.subr.mxu0 0.0
    %3439 = vmatpush1.msra.mxu0 0.0
    %3440 = vmatprep.subr.mxu0 0.0
    %3441 = vmatpush1.msra.mxu0 0.0
    %3442 = vmatprep.subr.mxu0 0.0
    %3443 = vmatpush1.msra.mxu0 0.0
    %3444 = vmatprep.subr.mxu0 0.0
    %3445 = vmatpush1.msra.mxu0 0.0
    %3446 = vmatprep.subr.mxu0 0.0
    %3447 = vmatpush1.msra.mxu0 0.0
    %3448 = vmatprep.subr.mxu0 0.0
    %3449 = vmatpush1.msra.mxu0 0.0
    %3450 = vmatprep.subr.mxu0 0.0
    %3451 = vmatpush1.msra.mxu0 0.0
    %3452 = vmatprep.subr.mxu0 0.0
    %3453 = vmatpush1.msra.mxu0 0.0
    %3454 = vmatprep.subr.mxu0 0.0
    %3455 = vmatpush1.msra.mxu0 0.0
    %3456 = vmatprep.subr.mxu0 0.0
    %3457 = vmatpush1.msra.mxu0 0.0
    %3458 = vmatprep.subr.mxu0 0.0
    %3459 = vmatpush1.msra.mxu0 0.0
    %3460 = vmatprep.subr.mxu0 0.0
    %3461 = vmatpush1.msra.mxu0 0.0
    %3462 = vmatprep.subr.mxu0 0.0
    %3463 = vmatpush1.msra.mxu0 0.0
    %3464 = vmatprep.subr.mxu0 0.0
    %3465 = vmatpush1.msra.mxu0 0.0
    %3466 = vmatprep.subr.mxu0 0.0
    %3467 = vmatpush1.msra.mxu0 0.0
    %3468 = vmatprep.mubr.f32.mxu0 0.0
    %3469 = vmatmul.mubr.f32.gmra.mrb[0].mxu0 %v3325
    %v3470 = vpop.f32.mrb[0].mxu0
    %v3471 = vadd.f32 %v1032, %v3470
    %v3472 = vpop.f32.mrb[0].mxu0
    %v3473 = vadd.f32 %v1036, %v3472
    %3474 = vmatprep.mubr.f32.mxu0 0.0
    %3475 = vmatmul.mubr.f32.gmra.mrb[0].mxu0 %v3326
    %v3476 = vpop.f32.mrb[0].mxu0
    %v3477 = vadd.f32 %v1032, %v3476
    %v3478 = vpop.f32.mrb[0].mxu0
    %v3479 = vadd.f32 %v1036, %v3478
    %3480 = vdwg.mxu0
    %3481 = vst [vmem:[%s3108] sm:$0xff] %v3394
    %3482 = vst [vmem:[%s3108 + $0x8] sm:$0xff] %v3396
    %3483 = vst [vmem:[%s3108 + $0x10] sm:$0xff] %v3471
    %3484 = vst [vmem:[%s3108 + $0x18] sm:$0xff] %v3473
    %3485 = vst [vmem:[%s3108 + $0x20] sm:$0xff] %v3400
    %3486 = vst [vmem:[%s3108 + $0x28] sm:$0xff] %v3402
    %3487 = vst [vmem:[%s3108 + $0x30] sm:$0xff] %v3477
    %3488 = vst [vmem:[%s3108 + $0x38] sm:$0xff] %v3479
    %s3489 = scalar_lea.vmem [#allocation2], 448
    %v3490 = vld [vmem:[%s3489] sm:$0xff]
    %v3491 = vld [vmem:[%s3489 + $0x8] sm:$0xff]
    %v3492 = vld [vmem:[%s3489 + $0x10] sm:$0xff]
    %v3493 = vld [vmem:[%s3489 + $0x18] sm:$0xff]
    %v3494 = vld [vmem:[%s3489 + $0x20] sm:$0xff]
    %v3495 = vld [vmem:[%s3489 + $0x28] sm:$0xff]
    %v3496 = vld [vmem:[%s3489 + $0x30] sm:$0xff]
    %v3497 = vld [vmem:[%s3489 + $0x38] sm:$0xff]
    %3498 = vmatprep.subr.mxu0 %v591
    %3499 = vmatpush1.msra.mxu0 %v590
    %3500 = vmatprep.subr.mxu0 %v595
    %3501 = vmatpush1.msra.mxu0 %v594
    %3502 = vmatprep.subr.mxu0 %v599
    %3503 = vmatpush1.msra.mxu0 %v598
    %3504 = vmatprep.subr.mxu0 %v603
    %3505 = vmatpush1.msra.mxu0 %v602
    %3506 = vmatprep.subr.mxu0 %v607
    %3507 = vmatpush1.msra.mxu0 %v606
    %3508 = vmatprep.subr.mxu0 %v611
    %3509 = vmatpush1.msra.mxu0 %v610
    %3510 = vmatprep.subr.mxu0 %v615
    %3511 = vmatpush1.msra.mxu0 %v614
    %3512 = vmatprep.subr.mxu0 %v619
    %3513 = vmatpush1.msra.mxu0 %v618
    %3514 = vmatprep.subr.mxu0 %v623
    %3515 = vmatpush1.msra.mxu0 %v622
    %3516 = vmatprep.subr.mxu0 %v627
    %3517 = vmatpush1.msra.mxu0 %v626
    %3518 = vmatprep.subr.mxu0 %v631
    %3519 = vmatpush1.msra.mxu0 %v630
    %3520 = vmatprep.subr.mxu0 %v635
    %3521 = vmatpush1.msra.mxu0 %v634
    %3522 = vmatprep.subr.mxu0 %v639
    %3523 = vmatpush1.msra.mxu0 %v638
    %3524 = vmatprep.subr.mxu0 %v643
    %3525 = vmatpush1.msra.mxu0 %v642
    %3526 = vmatprep.subr.mxu0 %v647
    %3527 = vmatpush1.msra.mxu0 %v646
    %3528 = vmatprep.subr.mxu0 %v651
    %3529 = vmatpush1.msra.mxu0 %v650
    %3530 = vmatprep.subr.mxu0 0.0
    %3531 = vmatpush1.msra.mxu0 0.0
    %3532 = vmatprep.subr.mxu0 0.0
    %3533 = vmatpush1.msra.mxu0 0.0
    %3534 = vmatprep.subr.mxu0 0.0
    %3535 = vmatpush1.msra.mxu0 0.0
    %3536 = vmatprep.subr.mxu0 0.0
    %3537 = vmatpush1.msra.mxu0 0.0
    %3538 = vmatprep.subr.mxu0 0.0
    %3539 = vmatpush1.msra.mxu0 0.0
    %3540 = vmatprep.subr.mxu0 0.0
    %3541 = vmatpush1.msra.mxu0 0.0
    %3542 = vmatprep.subr.mxu0 0.0
    %3543 = vmatpush1.msra.mxu0 0.0
    %3544 = vmatprep.subr.mxu0 0.0
    %3545 = vmatpush1.msra.mxu0 0.0
    %3546 = vmatprep.subr.mxu0 0.0
    %3547 = vmatpush1.msra.mxu0 0.0
    %3548 = vmatprep.subr.mxu0 0.0
    %3549 = vmatpush1.msra.mxu0 0.0
    %3550 = vmatprep.subr.mxu0 0.0
    %3551 = vmatpush1.msra.mxu0 0.0
    %3552 = vmatprep.subr.mxu0 0.0
    %3553 = vmatpush1.msra.mxu0 0.0
    %3554 = vmatprep.subr.mxu0 0.0
    %3555 = vmatpush1.msra.mxu0 0.0
    %3556 = vmatprep.subr.mxu0 0.0
    %3557 = vmatpush1.msra.mxu0 0.0
    %3558 = vmatprep.subr.mxu0 0.0
    %3559 = vmatpush1.msra.mxu0 0.0
    %3560 = vmatprep.subr.mxu0 0.0
    %3561 = vmatpush1.msra.mxu0 0.0
    %3562 = vmatprep.mubr.f32.mxu0 0.0
    %3563 = vmatmul.mubr.f32.gmra.mrb[0].mxu0 %v3325
    %v3564 = vpop.f32.mrb[0].mxu0
    %v3565 = vadd.f32 0.0, %v3564
    %v3566 = vpop.f32.mrb[0].mxu0
    %v3567 = vadd.f32 0.0, %v3566
    %3568 = vmatprep.mubr.f32.mxu0 0.0
    %3569 = vmatmul.mubr.f32.gmra.mrb[0].mxu0 %v3326
    %v3570 = vpop.f32.mrb[0].mxu0
    %v3571 = vadd.f32 0.0, %v3570
    %v3572 = vpop.f32.mrb[0].mxu0
    %v3573 = vadd.f32 0.0, %v3572
    %3574 = vdwg.mxu0
    %3575 = vmatprep.subr.mxu0 %v593
    %3576 = vmatpush1.msra.mxu0 %v592
    %3577 = vmatprep.subr.mxu0 %v597
    %3578 = vmatpush1.msra.mxu0 %v596
    %3579 = vmatprep.subr.mxu0 %v601
    %3580 = vmatpush1.msra.mxu0 %v600
    %3581 = vmatprep.subr.mxu0 %v605
    %3582 = vmatpush1.msra.mxu0 %v604
    %3583 = vmatprep.subr.mxu0 %v609
    %3584 = vmatpush1.msra.mxu0 %v608
    %3585 = vmatprep.subr.mxu0 %v613
    %3586 = vmatpush1.msra.mxu0 %v612
    %3587 = vmatprep.subr.mxu0 %v617
    %3588 = vmatpush1.msra.mxu0 %v616
    %3589 = vmatprep.subr.mxu0 %v621
    %3590 = vmatpush1.msra.mxu0 %v620
    %3591 = vmatprep.subr.mxu0 %v625
    %3592 = vmatpush1.msra.mxu0 %v624
    %3593 = vmatprep.subr.mxu0 %v629
    %3594 = vmatpush1.msra.mxu0 %v628
    %3595 = vmatprep.subr.mxu0 %v633
    %3596 = vmatpush1.msra.mxu0 %v632
    %3597 = vmatprep.subr.mxu0 %v637
    %3598 = vmatpush1.msra.mxu0 %v636
    %3599 = vmatprep.subr.mxu0 %v641
    %3600 = vmatpush1.msra.mxu0 %v640
    %3601 = vmatprep.subr.mxu0 %v645
    %3602 = vmatpush1.msra.mxu0 %v644
    %3603 = vmatprep.subr.mxu0 %v649
    %3604 = vmatpush1.msra.mxu0 %v648
    %3605 = vmatprep.subr.mxu0 %v653
    %3606 = vmatpush1.msra.mxu0 %v652
    %3607 = vmatprep.subr.mxu0 0.0
    %3608 = vmatpush1.msra.mxu0 0.0
    %3609 = vmatprep.subr.mxu0 0.0
    %3610 = vmatpush1.msra.mxu0 0.0
    %3611 = vmatprep.subr.mxu0 0.0
    %3612 = vmatpush1.msra.mxu0 0.0
    %3613 = vmatprep.subr.mxu0 0.0
    %3614 = vmatpush1.msra.mxu0 0.0
    %3615 = vmatprep.subr.mxu0 0.0
    %3616 = vmatpush1.msra.mxu0 0.0
    %3617 = vmatprep.subr.mxu0 0.0
    %3618 = vmatpush1.msra.mxu0 0.0
    %3619 = vmatprep.subr.mxu0 0.0
    %3620 = vmatpush1.msra.mxu0 0.0
    %3621 = vmatprep.subr.mxu0 0.0
    %3622 = vmatpush1.msra.mxu0 0.0
    %3623 = vmatprep.subr.mxu0 0.0
    %3624 = vmatpush1.msra.mxu0 0.0
    %3625 = vmatprep.subr.mxu0 0.0
    %3626 = vmatpush1.msra.mxu0 0.0
    %3627 = vmatprep.subr.mxu0 0.0
    %3628 = vmatpush1.msra.mxu0 0.0
    %3629 = vmatprep.subr.mxu0 0.0
    %3630 = vmatpush1.msra.mxu0 0.0
    %3631 = vmatprep.subr.mxu0 0.0
    %3632 = vmatpush1.msra.mxu0 0.0
    %3633 = vmatprep.subr.mxu0 0.0
    %3634 = vmatpush1.msra.mxu0 0.0
    %3635 = vmatprep.subr.mxu0 0.0
    %3636 = vmatpush1.msra.mxu0 0.0
    %3637 = vmatprep.subr.mxu0 0.0
    %3638 = vmatpush1.msra.mxu0 0.0
    %3639 = vmatprep.mubr.f32.mxu0 0.0
    %3640 = vmatmul.mubr.f32.gmra.mrb[0].mxu0 %v3325
    %v3641 = vpop.f32.mrb[0].mxu0
    %v3642 = vadd.f32 0.0, %v3641
    %v3643 = vpop.f32.mrb[0].mxu0
    %v3644 = vadd.f32 0.0, %v3643
    %3645 = vmatprep.mubr.f32.mxu0 0.0
    %3646 = vmatmul.mubr.f32.gmra.mrb[0].mxu0 %v3326
    %v3647 = vpop.f32.mrb[0].mxu0
    %v3648 = vadd.f32 0.0, %v3647
    %v3649 = vpop.f32.mrb[0].mxu0
    %v3650 = vadd.f32 0.0, %v3649
    %3651 = vdwg.mxu0
    %v3652 = vadd.f32 %v3490, %v3565
    %v3653 = vadd.f32 %v3491, %v3567
    %v3654 = vadd.f32 %v3492, %v3642
    %v3655 = vadd.f32 %v3493, %v3644
    %v3656 = vadd.f32 %v3494, %v3571
    %v3657 = vadd.f32 %v3495, %v3573
    %v3658 = vadd.f32 %v3496, %v3648
    %v3659 = vadd.f32 %v3497, %v3650
    %v3660 = vxor.u32 %v3652, 2147483648
    %v3661 = vxor.u32 %v3656, 2147483648
    %v3662 = vmul.f32 %v3660, 1.442695
    %v3663 = vpow.pop %v3662
    %v3664 = vmul.f32 %v3661, 1.442695
    %v3665 = vpow.pop %v3664
    %v3666 = vadd.f32 %v3663, 1.0
    %v3667 = vadd.f32 %v3665, 1.0
    %v3668 = vrcp.pop %v3666
    %v3669 = vmul.f32 1.0, %v3668
    %v3670 = vrcp.pop %v3667
    %v3671 = vmul.f32 1.0, %v3670
    %v3672 = vxor.u32 %v3653, 2147483648
    %v3673 = vxor.u32 %v3657, 2147483648
    %v3674 = vmul.f32 %v3672, 1.442695
    %v3675 = vpow.pop %v3674
    %v3676 = vmul.f32 %v3673, 1.442695
    %v3677 = vpow.pop %v3676
    %v3678 = vadd.f32 %v3675, 1.0
    %v3679 = vadd.f32 %v3677, 1.0
    %v3680 = vrcp.pop %v3678
    %v3681 = vmul.f32 1.0, %v3680
    %v3682 = vrcp.pop %v3679
    %v3683 = vmul.f32 1.0, %v3682
    %v3684 = vtanh.pop %v3654
    %v3685 = vtanh.pop %v3658
    %v3686 = vxor.u32 %v3655, 2147483648
    %v3687 = vxor.u32 %v3659, 2147483648
    %v3688 = vmul.f32 %v3686, 1.442695
    %v3689 = vpow.pop %v3688
    %v3690 = vmul.f32 %v3687, 1.442695
    %v3691 = vpow.pop %v3690
    %v3692 = vadd.f32 %v3689, 1.0
    %v3693 = vadd.f32 %v3691, 1.0
    %v3694 = vrcp.pop %v3692
    %v3695 = vmul.f32 1.0, %v3694
    %v3696 = vrcp.pop %v3693
    %v3697 = vmul.f32 1.0, %v3696
    %v3698 = vmul.f32 %v3681, %v3321
    %v3699 = vmul.f32 %v3683, %v3322
    %v3700 = vmul.f32 %v3669, %v3684
    %v3701 = vmul.f32 %v3671, %v3685
    %v3702 = vadd.f32 %v3698, %v3700
    %v3703 = vadd.f32 %v3699, %v3701
    %v3704 = vtanh.pop %v3702
    %v3705 = vtanh.pop %v3703
    %v3706 = vmul.f32 %v3695, %v3704
    %v3707 = vmul.f32 %v3697, %v3705
    %3708 = vmatprep.subr.mxu0 %v655
    %3709 = vmatpush1.msra.mxu0 %v654
    %3710 = vmatprep.subr.mxu0 %v659
    %3711 = vmatpush1.msra.mxu0 %v658
    %3712 = vmatprep.subr.mxu0 %v663
    %3713 = vmatpush1.msra.mxu0 %v662
    %3714 = vmatprep.subr.mxu0 %v667
    %3715 = vmatpush1.msra.mxu0 %v666
    %3716 = vmatprep.subr.mxu0 %v671
    %3717 = vmatpush1.msra.mxu0 %v670
    %3718 = vmatprep.subr.mxu0 %v675
    %3719 = vmatpush1.msra.mxu0 %v674
    %3720 = vmatprep.subr.mxu0 %v679
    %3721 = vmatpush1.msra.mxu0 %v678
    %3722 = vmatprep.subr.mxu0 %v683
    %3723 = vmatpush1.msra.mxu0 %v682
    %3724 = vmatprep.subr.mxu0 %v687
    %3725 = vmatpush1.msra.mxu0 %v686
    %3726 = vmatprep.subr.mxu0 %v691
    %3727 = vmatpush1.msra.mxu0 %v690
    %3728 = vmatprep.subr.mxu0 %v695
    %3729 = vmatpush1.msra.mxu0 %v694
    %3730 = vmatprep.subr.mxu0 %v699
    %3731 = vmatpush1.msra.mxu0 %v698
    %3732 = vmatprep.subr.mxu0 %v703
    %3733 = vmatpush1.msra.mxu0 %v702
    %3734 = vmatprep.subr.mxu0 %v707
    %3735 = vmatpush1.msra.mxu0 %v706
    %3736 = vmatprep.subr.mxu0 %v711
    %3737 = vmatpush1.msra.mxu0 %v710
    %3738 = vmatprep.subr.mxu0 %v715
    %3739 = vmatpush1.msra.mxu0 %v714
    %3740 = vmatprep.subr.mxu0 0.0
    %3741 = vmatpush1.msra.mxu0 0.0
    %3742 = vmatprep.subr.mxu0 0.0
    %3743 = vmatpush1.msra.mxu0 0.0
    %3744 = vmatprep.subr.mxu0 0.0
    %3745 = vmatpush1.msra.mxu0 0.0
    %3746 = vmatprep.subr.mxu0 0.0
    %3747 = vmatpush1.msra.mxu0 0.0
    %3748 = vmatprep.subr.mxu0 0.0
    %3749 = vmatpush1.msra.mxu0 0.0
    %3750 = vmatprep.subr.mxu0 0.0
    %3751 = vmatpush1.msra.mxu0 0.0
    %3752 = vmatprep.subr.mxu0 0.0
    %3753 = vmatpush1.msra.mxu0 0.0
    %3754 = vmatprep.subr.mxu0 0.0
    %3755 = vmatpush1.msra.mxu0 0.0
    %3756 = vmatprep.subr.mxu0 0.0
    %3757 = vmatpush1.msra.mxu0 0.0
    %3758 = vmatprep.subr.mxu0 0.0
    %3759 = vmatpush1.msra.mxu0 0.0
    %3760 = vmatprep.subr.mxu0 0.0
    %3761 = vmatpush1.msra.mxu0 0.0
    %3762 = vmatprep.subr.mxu0 0.0
    %3763 = vmatpush1.msra.mxu0 0.0
    %3764 = vmatprep.subr.mxu0 0.0
    %3765 = vmatpush1.msra.mxu0 0.0
    %3766 = vmatprep.subr.mxu0 0.0
    %3767 = vmatpush1.msra.mxu0 0.0
    %3768 = vmatprep.subr.mxu0 0.0
    %3769 = vmatpush1.msra.mxu0 0.0
    %3770 = vmatprep.subr.mxu0 0.0
    %3771 = vmatpush1.msra.mxu0 0.0
    %3772 = vmatprep.mubr.f32.mxu0 0.0
    %3773 = vmatmul.mubr.f32.gmra.mrb[0].mxu0 %v3706
    %v3774 = vpop.f32.mrb[0].mxu0
    %v3775 = vadd.f32 %v1024, %v3774
    %v3776 = vpop.f32.mrb[0].mxu0
    %v3777 = vadd.f32 %v1028, %v3776
    %3778 = vmatprep.mubr.f32.mxu0 0.0
    %3779 = vmatmul.mubr.f32.gmra.mrb[0].mxu0 %v3707
    %v3780 = vpop.f32.mrb[0].mxu0
    %v3781 = vadd.f32 %v1024, %v3780
    %v3782 = vpop.f32.mrb[0].mxu0
    %v3783 = vadd.f32 %v1028, %v3782
    %3784 = vdwg.mxu0
    %3785 = vmatprep.subr.mxu0 %v657
    %3786 = vmatpush1.msra.mxu0 %v656
    %3787 = vmatprep.subr.mxu0 %v661
    %3788 = vmatpush1.msra.mxu0 %v660
    %3789 = vmatprep.subr.mxu0 %v665
    %3790 = vmatpush1.msra.mxu0 %v664
    %3791 = vmatprep.subr.mxu0 %v669
    %3792 = vmatpush1.msra.mxu0 %v668
    %3793 = vmatprep.subr.mxu0 %v673
    %3794 = vmatpush1.msra.mxu0 %v672
    %3795 = vmatprep.subr.mxu0 %v677
    %3796 = vmatpush1.msra.mxu0 %v676
    %3797 = vmatprep.subr.mxu0 %v681
    %3798 = vmatpush1.msra.mxu0 %v680
    %3799 = vmatprep.subr.mxu0 %v685
    %3800 = vmatpush1.msra.mxu0 %v684
    %3801 = vmatprep.subr.mxu0 %v689
    %3802 = vmatpush1.msra.mxu0 %v688
    %3803 = vmatprep.subr.mxu0 %v693
    %3804 = vmatpush1.msra.mxu0 %v692
    %3805 = vmatprep.subr.mxu0 %v697
    %3806 = vmatpush1.msra.mxu0 %v696
    %3807 = vmatprep.subr.mxu0 %v701
    %3808 = vmatpush1.msra.mxu0 %v700
    %3809 = vmatprep.subr.mxu0 %v705
    %3810 = vmatpush1.msra.mxu0 %v704
    %3811 = vmatprep.subr.mxu0 %v709
    %3812 = vmatpush1.msra.mxu0 %v708
    %3813 = vmatprep.subr.mxu0 %v713
    %3814 = vmatpush1.msra.mxu0 %v712
    %3815 = vmatprep.subr.mxu0 %v717
    %3816 = vmatpush1.msra.mxu0 %v716
    %3817 = vmatprep.subr.mxu0 0.0
    %3818 = vmatpush1.msra.mxu0 0.0
    %3819 = vmatprep.subr.mxu0 0.0
    %3820 = vmatpush1.msra.mxu0 0.0
    %3821 = vmatprep.subr.mxu0 0.0
    %3822 = vmatpush1.msra.mxu0 0.0
    %3823 = vmatprep.subr.mxu0 0.0
    %3824 = vmatpush1.msra.mxu0 0.0
    %3825 = vmatprep.subr.mxu0 0.0
    %3826 = vmatpush1.msra.mxu0 0.0
    %3827 = vmatprep.subr.mxu0 0.0
    %3828 = vmatpush1.msra.mxu0 0.0
    %3829 = vmatprep.subr.mxu0 0.0
    %3830 = vmatpush1.msra.mxu0 0.0
    %3831 = vmatprep.subr.mxu0 0.0
    %3832 = vmatpush1.msra.mxu0 0.0
    %3833 = vmatprep.subr.mxu0 0.0
    %3834 = vmatpush1.msra.mxu0 0.0
    %3835 = vmatprep.subr.mxu0 0.0
    %3836 = vmatpush1.msra.mxu0 0.0
    %3837 = vmatprep.subr.mxu0 0.0
    %3838 = vmatpush1.msra.mxu0 0.0
    %3839 = vmatprep.subr.mxu0 0.0
    %3840 = vmatpush1.msra.mxu0 0.0
    %3841 = vmatprep.subr.mxu0 0.0
    %3842 = vmatpush1.msra.mxu0 0.0
    %3843 = vmatprep.subr.mxu0 0.0
    %3844 = vmatpush1.msra.mxu0 0.0
    %3845 = vmatprep.subr.mxu0 0.0
    %3846 = vmatpush1.msra.mxu0 0.0
    %3847 = vmatprep.subr.mxu0 0.0
    %3848 = vmatpush1.msra.mxu0 0.0
    %3849 = vmatprep.mubr.f32.mxu0 0.0
    %3850 = vmatmul.mubr.f32.gmra.mrb[0].mxu0 %v3706
    %v3851 = vpop.f32.mrb[0].mxu0
    %v3852 = vadd.f32 %v1032, %v3851
    %v3853 = vpop.f32.mrb[0].mxu0
    %v3854 = vadd.f32 %v1036, %v3853
    %3855 = vmatprep.mubr.f32.mxu0 0.0
    %3856 = vmatmul.mubr.f32.gmra.mrb[0].mxu0 %v3707
    %v3857 = vpop.f32.mrb[0].mxu0
    %v3858 = vadd.f32 %v1032, %v3857
    %v3859 = vpop.f32.mrb[0].mxu0
    %v3860 = vadd.f32 %v1036, %v3859
    %3861 = vdwg.mxu0
    %3862 = vst [vmem:[%s3489] sm:$0xff] %v3775
    %3863 = vst [vmem:[%s3489 + $0x8] sm:$0xff] %v3777
    %3864 = vst [vmem:[%s3489 + $0x10] sm:$0xff] %v3852
    %3865 = vst [vmem:[%s3489 + $0x18] sm:$0xff] %v3854
    %3866 = vst [vmem:[%s3489 + $0x20] sm:$0xff] %v3781
    %3867 = vst [vmem:[%s3489 + $0x28] sm:$0xff] %v3783
    %3868 = vst [vmem:[%s3489 + $0x30] sm:$0xff] %v3858
    %3869 = vst [vmem:[%s3489 + $0x38] sm:$0xff] %v3860
    %v3870 = vld [vmem:[#allocation2] sm:$0xff]
    %v3871 = vld [vmem:[#allocation2 + $0x8] sm:$0xff]
    %v3872 = vld [vmem:[#allocation2 + $0x10] sm:$0xff]
    %v3873 = vld [vmem:[#allocation2 + $0x18] sm:$0xff]
    %v3874 = vld [vmem:[#allocation2 + $0x20] sm:$0xff]
    %v3875 = vld [vmem:[#allocation2 + $0x28] sm:$0xff]
    %v3876 = vld [vmem:[#allocation2 + $0x30] sm:$0xff]
    %v3877 = vld [vmem:[#allocation2 + $0x38] sm:$0xff]
    %3878 = vmatprep.subr.mxu0 %v720
    %3879 = vmatpush1.msra.mxu0 %v719
    %3880 = vmatprep.subr.mxu0 %v724
    %3881 = vmatpush1.msra.mxu0 %v723
    %3882 = vmatprep.subr.mxu0 %v728
    %3883 = vmatpush1.msra.mxu0 %v727
    %3884 = vmatprep.subr.mxu0 %v732
    %3885 = vmatpush1.msra.mxu0 %v731
    %3886 = vmatprep.subr.mxu0 %v736
    %3887 = vmatpush1.msra.mxu0 %v735
    %3888 = vmatprep.subr.mxu0 %v740
    %3889 = vmatpush1.msra.mxu0 %v739
    %3890 = vmatprep.subr.mxu0 %v744
    %3891 = vmatpush1.msra.mxu0 %v743
    %3892 = vmatprep.subr.mxu0 %v748
    %3893 = vmatpush1.msra.mxu0 %v747
    %3894 = vmatprep.subr.mxu0 %v752
    %3895 = vmatpush1.msra.mxu0 %v751
    %3896 = vmatprep.subr.mxu0 %v756
    %3897 = vmatpush1.msra.mxu0 %v755
    %3898 = vmatprep.subr.mxu0 %v760
    %3899 = vmatpush1.msra.mxu0 %v759
    %3900 = vmatprep.subr.mxu0 %v764
    %3901 = vmatpush1.msra.mxu0 %v763
    %3902 = vmatprep.subr.mxu0 %v768
    %3903 = vmatpush1.msra.mxu0 %v767
    %3904 = vmatprep.subr.mxu0 %v772
    %3905 = vmatpush1.msra.mxu0 %v771
    %3906 = vmatprep.subr.mxu0 %v776
    %3907 = vmatpush1.msra.mxu0 %v775
    %3908 = vmatprep.subr.mxu0 %v780
    %3909 = vmatpush1.msra.mxu0 %v779
    %3910 = vmatprep.subr.mxu0 0.0
    %3911 = vmatpush1.msra.mxu0 0.0
    %3912 = vmatprep.subr.mxu0 0.0
    %3913 = vmatpush1.msra.mxu0 0.0
    %3914 = vmatprep.subr.mxu0 0.0
    %3915 = vmatpush1.msra.mxu0 0.0
    %3916 = vmatprep.subr.mxu0 0.0
    %3917 = vmatpush1.msra.mxu0 0.0
    %3918 = vmatprep.subr.mxu0 0.0
    %3919 = vmatpush1.msra.mxu0 0.0
    %3920 = vmatprep.subr.mxu0 0.0
    %3921 = vmatpush1.msra.mxu0 0.0
    %3922 = vmatprep.subr.mxu0 0.0
    %3923 = vmatpush1.msra.mxu0 0.0
    %3924 = vmatprep.subr.mxu0 0.0
    %3925 = vmatpush1.msra.mxu0 0.0
    %3926 = vmatprep.subr.mxu0 0.0
    %3927 = vmatpush1.msra.mxu0 0.0
    %3928 = vmatprep.subr.mxu0 0.0
    %3929 = vmatpush1.msra.mxu0 0.0
    %3930 = vmatprep.subr.mxu0 0.0
    %3931 = vmatpush1.msra.mxu0 0.0
    %3932 = vmatprep.subr.mxu0 0.0
    %3933 = vmatpush1.msra.mxu0 0.0
    %3934 = vmatprep.subr.mxu0 0.0
    %3935 = vmatpush1.msra.mxu0 0.0
    %3936 = vmatprep.subr.mxu0 0.0
    %3937 = vmatpush1.msra.mxu0 0.0
    %3938 = vmatprep.subr.mxu0 0.0
    %3939 = vmatpush1.msra.mxu0 0.0
    %3940 = vmatprep.subr.mxu0 0.0
    %3941 = vmatpush1.msra.mxu0 0.0
    %3942 = vmatprep.mubr.f32.mxu0 0.0
    %3943 = vmatmul.mubr.f32.gmra.mrb[0].mxu0 0.0
    %v3944 = vpop.f32.mrb[0].mxu0
    %v3945 = vadd.f32 0.0, %v3944
    %v3946 = vpop.f32.mrb[0].mxu0
    %v3947 = vadd.f32 0.0, %v3946
    %3948 = vmatprep.mubr.f32.mxu0 0.0
    %3949 = vmatmul.mubr.f32.gmra.mrb[0].mxu0 0.0
    %v3950 = vpop.f32.mrb[0].mxu0
    %v3951 = vadd.f32 0.0, %v3950
    %v3952 = vpop.f32.mrb[0].mxu0
    %v3953 = vadd.f32 0.0, %v3952
    %3954 = vdwg.mxu0
    %3955 = vmatprep.subr.mxu0 %v722
    %3956 = vmatpush1.msra.mxu0 %v721
    %3957 = vmatprep.subr.mxu0 %v726
    %3958 = vmatpush1.msra.mxu0 %v725
    %3959 = vmatprep.subr.mxu0 %v730
    %3960 = vmatpush1.msra.mxu0 %v729
    %3961 = vmatprep.subr.mxu0 %v734
    %3962 = vmatpush1.msra.mxu0 %v733
    %3963 = vmatprep.subr.mxu0 %v738
    %3964 = vmatpush1.msra.mxu0 %v737
    %3965 = vmatprep.subr.mxu0 %v742
    %3966 = vmatpush1.msra.mxu0 %v741
    %3967 = vmatprep.subr.mxu0 %v746
    %3968 = vmatpush1.msra.mxu0 %v745
    %3969 = vmatprep.subr.mxu0 %v750
    %3970 = vmatpush1.msra.mxu0 %v749
    %3971 = vmatprep.subr.mxu0 %v754
    %3972 = vmatpush1.msra.mxu0 %v753
    %3973 = vmatprep.subr.mxu0 %v758
    %3974 = vmatpush1.msra.mxu0 %v757
    %3975 = vmatprep.subr.mxu0 %v762
    %3976 = vmatpush1.msra.mxu0 %v761
    %3977 = vmatprep.subr.mxu0 %v766
    %3978 = vmatpush1.msra.mxu0 %v765
    %3979 = vmatprep.subr.mxu0 %v770
    %3980 = vmatpush1.msra.mxu0 %v769
    %3981 = vmatprep.subr.mxu0 %v774
    %3982 = vmatpush1.msra.mxu0 %v773
    %3983 = vmatprep.subr.mxu0 %v778
    %3984 = vmatpush1.msra.mxu0 %v777
    %3985 = vmatprep.subr.mxu0 %v782
    %3986 = vmatpush1.msra.mxu0 %v781
    %3987 = vmatprep.subr.mxu0 0.0
    %3988 = vmatpush1.msra.mxu0 0.0
    %3989 = vmatprep.subr.mxu0 0.0
    %3990 = vmatpush1.msra.mxu0 0.0
    %3991 = vmatprep.subr.mxu0 0.0
    %3992 = vmatpush1.msra.mxu0 0.0
    %3993 = vmatprep.subr.mxu0 0.0
    %3994 = vmatpush1.msra.mxu0 0.0
    %3995 = vmatprep.subr.mxu0 0.0
    %3996 = vmatpush1.msra.mxu0 0.0
    %3997 = vmatprep.subr.mxu0 0.0
    %3998 = vmatpush1.msra.mxu0 0.0
    %3999 = vmatprep.subr.mxu0 0.0
    %4000 = vmatpush1.msra.mxu0 0.0
    %4001 = vmatprep.subr.mxu0 0.0
    %4002 = vmatpush1.msra.mxu0 0.0
    %4003 = vmatprep.subr.mxu0 0.0
    %4004 = vmatpush1.msra.mxu0 0.0
    %4005 = vmatprep.subr.mxu0 0.0
    %4006 = vmatpush1.msra.mxu0 0.0
    %4007 = vmatprep.subr.mxu0 0.0
    %4008 = vmatpush1.msra.mxu0 0.0
    %4009 = vmatprep.subr.mxu0 0.0
    %4010 = vmatpush1.msra.mxu0 0.0
    %4011 = vmatprep.subr.mxu0 0.0
    %4012 = vmatpush1.msra.mxu0 0.0
    %4013 = vmatprep.subr.mxu0 0.0
    %4014 = vmatpush1.msra.mxu0 0.0
    %4015 = vmatprep.subr.mxu0 0.0
    %4016 = vmatpush1.msra.mxu0 0.0
    %4017 = vmatprep.subr.mxu0 0.0
    %4018 = vmatpush1.msra.mxu0 0.0
    %4019 = vmatprep.mubr.f32.mxu0 0.0
    %4020 = vmatmul.mubr.f32.gmra.mrb[0].mxu0 0.0
    %v4021 = vpop.f32.mrb[0].mxu0
    %v4022 = vadd.f32 0.0, %v4021
    %v4023 = vpop.f32.mrb[0].mxu0
    %v4024 = vadd.f32 0.0, %v4023
    %4025 = vmatprep.mubr.f32.mxu0 0.0
    %4026 = vmatmul.mubr.f32.gmra.mrb[0].mxu0 0.0
    %v4027 = vpop.f32.mrb[0].mxu0
    %v4028 = vadd.f32 0.0, %v4027
    %v4029 = vpop.f32.mrb[0].mxu0
    %v4030 = vadd.f32 0.0, %v4029
    %4031 = vdwg.mxu0
    %v4032 = vadd.f32 %v3870, %v3945
    %v4033 = vadd.f32 %v3871, %v3947
    %v4034 = vadd.f32 %v3872, %v4022
    %v4035 = vadd.f32 %v3873, %v4024
    %v4036 = vadd.f32 %v3874, %v3951
    %v4037 = vadd.f32 %v3875, %v3953
    %v4038 = vadd.f32 %v3876, %v4028
    %v4039 = vadd.f32 %v3877, %v4030
    %v4040 = vxor.u32 %v4032, 2147483648
    %v4041 = vxor.u32 %v4036, 2147483648
    %v4042 = vmul.f32 %v4040, 1.442695
    %v4043 = vpow.pop %v4042
    %v4044 = vmul.f32 %v4041, 1.442695
    %v4045 = vpow.pop %v4044
    %v4046 = vadd.f32 %v4043, 1.0
    %v4047 = vadd.f32 %v4045, 1.0
    %v4048 = vrcp.pop %v4046
    %v4049 = vmul.f32 1.0, %v4048
    %v4050 = vrcp.pop %v4047
    %v4051 = vmul.f32 1.0, %v4050
    %v4052 = vxor.u32 %v4033, 2147483648
    %v4053 = vxor.u32 %v4037, 2147483648
    %v4054 = vmul.f32 %v4052, 1.442695
    %v4055 = vpow.pop %v4054
    %v4056 = vmul.f32 %v4053, 1.442695
    %v4057 = vpow.pop %v4056
    %v4058 = vadd.f32 %v4055, 1.0
    %v4059 = vadd.f32 %v4057, 1.0
    %v4060 = vrcp.pop %v4058
    %v4061 = vmul.f32 1.0, %v4060
    %v4062 = vrcp.pop %v4059
    %v4063 = vmul.f32 1.0, %v4062
    %v4064 = vtanh.pop %v4034
    %v4065 = vtanh.pop %v4038
    %v4066 = vxor.u32 %v4035, 2147483648
    %v4067 = vxor.u32 %v4039, 2147483648
    %v4068 = vmul.f32 %v4066, 1.442695
    %v4069 = vpow.pop %v4068
    %v4070 = vmul.f32 %v4067, 1.442695
    %v4071 = vpow.pop %v4070
    %v4072 = vadd.f32 %v4069, 1.0
    %v4073 = vadd.f32 %v4071, 1.0
    %v4074 = vrcp.pop %v4072
    %v4075 = vmul.f32 1.0, %v4074
    %v4076 = vrcp.pop %v4073
    %v4077 = vmul.f32 1.0, %v4076
    %v4078 = vmul.f32 %v4061, 0.0
    %v4079 = vmul.f32 %v4063, 0.0
    %v4080 = vmul.f32 %v4049, %v4064
    %v4081 = vmul.f32 %v4051, %v4065
    %v4082 = vadd.f32 %v4078, %v4080
    %v4083 = vadd.f32 %v4079, %v4081
    %v4084 = vtanh.pop %v4082
    %v4085 = vtanh.pop %v4083
    %v4086 = vmul.f32 %v4075, %v4084
    %v4087 = vmul.f32 %v4077, %v4085
    %4088 = vst [vmem:[#allocation3] sm:$0xff] %v4086
    %4089 = vst [vmem:[#allocation3 + $0x8] sm:$0xff] %v4087
    %v4091 = vlaneseq
    %v4092 = vshrl.u32 %v4091, 7
    %v4093 = vsub.s32 0, %v4092
    %v4094 = vrot.slane %v799, %v4093
    %4096 = vmatprep.subr.mxu0 0.0
    %4097 = vmatpush1.msra.mxu0 %v783
    %4098 = vmatprep.subr.mxu0 0.0
    %4099 = vmatpush1.msra.mxu0 %v784
    %4100 = vmatprep.subr.mxu0 0.0
    %4101 = vmatpush1.msra.mxu0 %v785
    %4102 = vmatprep.subr.mxu0 0.0
    %4103 = vmatpush1.msra.mxu0 %v786
    %4104 = vmatprep.subr.mxu0 0.0
    %4105 = vmatpush1.msra.mxu0 %v787
    %4106 = vmatprep.subr.mxu0 0.0
    %4107 = vmatpush1.msra.mxu0 %v788
    %4108 = vmatprep.subr.mxu0 0.0
    %4109 = vmatpush1.msra.mxu0 %v789
    %4110 = vmatprep.subr.mxu0 0.0
    %4111 = vmatpush1.msra.mxu0 %v790
    %4112 = vmatprep.subr.mxu0 0.0
    %4113 = vmatpush1.msra.mxu0 %v791
    %4114 = vmatprep.subr.mxu0 0.0
    %4115 = vmatpush1.msra.mxu0 %v792
    %4116 = vmatprep.subr.mxu0 0.0
    %4117 = vmatpush1.msra.mxu0 %v793
    %4118 = vmatprep.subr.mxu0 0.0
    %4119 = vmatpush1.msra.mxu0 %v794
    %4120 = vmatprep.subr.mxu0 0.0
    %4121 = vmatpush1.msra.mxu0 %v795
    %4122 = vmatprep.subr.mxu0 0.0
    %4123 = vmatpush1.msra.mxu0 %v796
    %4124 = vmatprep.subr.mxu0 0.0
    %4125 = vmatpush1.msra.mxu0 %v797
    %4126 = vmatprep.subr.mxu0 0.0
    %4127 = vmatpush1.msra.mxu0 %v798
    %4128 = vmatprep.subr.mxu0 0.0
    %4129 = vmatpush1.msra.mxu0 0.0
    %4130 = vmatprep.subr.mxu0 0.0
    %4131 = vmatpush1.msra.mxu0 0.0
    %4132 = vmatprep.subr.mxu0 0.0
    %4133 = vmatpush1.msra.mxu0 0.0
    %4134 = vmatprep.subr.mxu0 0.0
    %4135 = vmatpush1.msra.mxu0 0.0
    %4136 = vmatprep.subr.mxu0 0.0
    %4137 = vmatpush1.msra.mxu0 0.0
    %4138 = vmatprep.subr.mxu0 0.0
    %4139 = vmatpush1.msra.mxu0 0.0
    %4140 = vmatprep.subr.mxu0 0.0
    %4141 = vmatpush1.msra.mxu0 0.0
    %4142 = vmatprep.subr.mxu0 0.0
    %4143 = vmatpush1.msra.mxu0 0.0
    %4144 = vmatprep.subr.mxu0 0.0
    %4145 = vmatpush1.msra.mxu0 0.0
    %4146 = vmatprep.subr.mxu0 0.0
    %4147 = vmatpush1.msra.mxu0 0.0
    %4148 = vmatprep.subr.mxu0 0.0
    %4149 = vmatpush1.msra.mxu0 0.0
    %4150 = vmatprep.subr.mxu0 0.0
    %4151 = vmatpush1.msra.mxu0 0.0
    %4152 = vmatprep.subr.mxu0 0.0
    %4153 = vmatpush1.msra.mxu0 0.0
    %4154 = vmatprep.subr.mxu0 0.0
    %4155 = vmatpush1.msra.mxu0 0.0
    %4156 = vmatprep.subr.mxu0 0.0
    %4157 = vmatpush1.msra.mxu0 0.0
    %4158 = vmatprep.subr.mxu0 0.0
    %4159 = vmatpush1.msra.mxu0 0.0
    %4160 = vmatprep.mubr.f32.mxu0 0.0
    %4161 = vmatmul.mubr.f32.gmra.mrb[0].mxu0 %v4086
    %v4162 = vpop.f32.mrb[0].mxu0
    %v4163 = vadd.f32 %v4094, %v4162
    %v4164 = vpop.f32.mrb[0].mxu0
    %4165 = vmatprep.mubr.f32.mxu0 0.0
    %4166 = vmatmul.mubr.f32.gmra.mrb[0].mxu0 %v4087
    %v4167 = vpop.f32.mrb[0].mxu0
    %v4168 = vadd.f32 %v4094, %v4167
    %v4169 = vpop.f32.mrb[0].mxu0
    %4170 = vdwg.mxu0
    %v4171 = vtanh.pop %v4163
    %v4172 = vtanh.pop %v4168
    %v4174 = vlaneseq
    %v4175 = vshrl.u32 %v4174, 7
    %v4176 = vsub.s32 0, %v4175
    %v4177 = vrot.slane %v800, %v4176
    %v4179 = vmul.f32 %v4171, %v4177
    %v4180 = vmul.f32 %v4172, %v4177
    %4181 = vadd.xlane.f32.xlu0 %v4179
    %v4182 = vpop.xlane.xlu0 %4181
    %4183 = vadd.xlane.f32.xlu0 %v4180
    %v4184 = vpop.xlane.xlu0 %4183
    %v4186 = vlaneseq
    %v4187 = vshrl.u32 %v4186, 7
    %v4188 = vsub.s32 0, %v4187
    %v4189 = vrot.slane %v801, %v4188
    %v4191 = vadd.f32 %v4182, %v4189
    %v4192 = vadd.f32 %v4184, %v4189
    %vm4193 = vcmask 7168
    %4194 = vst.msk [vmem:[#allocation4] sm:$0xff] %vm4193, %v4191
    %4195 = vst.msk [vmem:[#allocation4 + $0x8] sm:$0xff] %vm4193, %v4192
    %v4196 = vld [vmem:[%s1203] sm:$0xff]
    %v4197 = vld [vmem:[%s1203 + $0x8] sm:$0xff]
    %v4198 = vld [vmem:[%s1203 + $0x10] sm:$0xff]
    %v4199 = vld [vmem:[%s1203 + $0x18] sm:$0xff]
    %v4200 = vld [vmem:[%s1203 + $0x20] sm:$0xff]
    %v4201 = vld [vmem:[%s1203 + $0x28] sm:$0xff]
    %v4202 = vld [vmem:[%s1203 + $0x30] sm:$0xff]
    %v4203 = vld [vmem:[%s1203 + $0x38] sm:$0xff]
    %4204 = vmatprep.subr.mxu0 %v720
    %4205 = vmatpush1.msra.mxu0 %v719
    %4206 = vmatprep.subr.mxu0 %v724
    %4207 = vmatpush1.msra.mxu0 %v723
    %4208 = vmatprep.subr.mxu0 %v728
    %4209 = vmatpush1.msra.mxu0 %v727
    %4210 = vmatprep.subr.mxu0 %v732
    %4211 = vmatpush1.msra.mxu0 %v731
    %4212 = vmatprep.subr.mxu0 %v736
    %4213 = vmatpush1.msra.mxu0 %v735
    %4214 = vmatprep.subr.mxu0 %v740
    %4215 = vmatpush1.msra.mxu0 %v739
    %4216 = vmatprep.subr.mxu0 %v744
    %4217 = vmatpush1.msra.mxu0 %v743
    %4218 = vmatprep.subr.mxu0 %v748
    %4219 = vmatpush1.msra.mxu0 %v747
    %4220 = vmatprep.subr.mxu0 %v752
    %4221 = vmatpush1.msra.mxu0 %v751
    %4222 = vmatprep.subr.mxu0 %v756
    %4223 = vmatpush1.msra.mxu0 %v755
    %4224 = vmatprep.subr.mxu0 %v760
    %4225 = vmatpush1.msra.mxu0 %v759
    %4226 = vmatprep.subr.mxu0 %v764
    %4227 = vmatpush1.msra.mxu0 %v763
    %4228 = vmatprep.subr.mxu0 %v768
    %4229 = vmatpush1.msra.mxu0 %v767
    %4230 = vmatprep.subr.mxu0 %v772
    %4231 = vmatpush1.msra.mxu0 %v771
    %4232 = vmatprep.subr.mxu0 %v776
    %4233 = vmatpush1.msra.mxu0 %v775
    %4234 = vmatprep.subr.mxu0 %v780
    %4235 = vmatpush1.msra.mxu0 %v779
    %4236 = vmatprep.subr.mxu0 0.0
    %4237 = vmatpush1.msra.mxu0 0.0
    %4238 = vmatprep.subr.mxu0 0.0
    %4239 = vmatpush1.msra.mxu0 0.0
    %4240 = vmatprep.subr.mxu0 0.0
    %4241 = vmatpush1.msra.mxu0 0.0
    %4242 = vmatprep.subr.mxu0 0.0
    %4243 = vmatpush1.msra.mxu0 0.0
    %4244 = vmatprep.subr.mxu0 0.0
    %4245 = vmatpush1.msra.mxu0 0.0
    %4246 = vmatprep.subr.mxu0 0.0
    %4247 = vmatpush1.msra.mxu0 0.0
    %4248 = vmatprep.subr.mxu0 0.0
    %4249 = vmatpush1.msra.mxu0 0.0
    %4250 = vmatprep.subr.mxu0 0.0
    %4251 = vmatpush1.msra.mxu0 0.0
    %4252 = vmatprep.subr.mxu0 0.0
    %4253 = vmatpush1.msra.mxu0 0.0
    %4254 = vmatprep.subr.mxu0 0.0
    %4255 = vmatpush1.msra.mxu0 0.0
    %4256 = vmatprep.subr.mxu0 0.0
    %4257 = vmatpush1.msra.mxu0 0.0
    %4258 = vmatprep.subr.mxu0 0.0
    %4259 = vmatpush1.msra.mxu0 0.0
    %4260 = vmatprep.subr.mxu0 0.0
    %4261 = vmatpush1.msra.mxu0 0.0
    %4262 = vmatprep.subr.mxu0 0.0
    %4263 = vmatpush1.msra.mxu0 0.0
    %4264 = vmatprep.subr.mxu0 0.0
    %4265 = vmatpush1.msra.mxu0 0.0
    %4266 = vmatprep.subr.mxu0 0.0
    %4267 = vmatpush1.msra.mxu0 0.0
    %4268 = vmatprep.mubr.f32.mxu0 0.0
    %4269 = vmatmul.mubr.f32.gmra.mrb[0].mxu0 %v4086
    %v4270 = vpop.f32.mrb[0].mxu0
    %v4271 = vadd.f32 0.0, %v4270
    %v4272 = vpop.f32.mrb[0].mxu0
    %v4273 = vadd.f32 0.0, %v4272
    %4274 = vmatprep.mubr.f32.mxu0 0.0
    %4275 = vmatmul.mubr.f32.gmra.mrb[0].mxu0 %v4087
    %v4276 = vpop.f32.mrb[0].mxu0
    %v4277 = vadd.f32 0.0, %v4276
    %v4278 = vpop.f32.mrb[0].mxu0
    %v4279 = vadd.f32 0.0, %v4278
    %4280 = vdwg.mxu0
    %4281 = vmatprep.subr.mxu0 %v722
    %4282 = vmatpush1.msra.mxu0 %v721
    %4283 = vmatprep.subr.mxu0 %v726
    %4284 = vmatpush1.msra.mxu0 %v725
    %4285 = vmatprep.subr.mxu0 %v730
    %4286 = vmatpush1.msra.mxu0 %v729
    %4287 = vmatprep.subr.mxu0 %v734
    %4288 = vmatpush1.msra.mxu0 %v733
    %4289 = vmatprep.subr.mxu0 %v738
    %4290 = vmatpush1.msra.mxu0 %v737
    %4291 = vmatprep.subr.mxu0 %v742
    %4292 = vmatpush1.msra.mxu0 %v741
    %4293 = vmatprep.subr.mxu0 %v746
    %4294 = vmatpush1.msra.mxu0 %v745
    %4295 = vmatprep.subr.mxu0 %v750
    %4296 = vmatpush1.msra.mxu0 %v749
    %4297 = vmatprep.subr.mxu0 %v754
    %4298 = vmatpush1.msra.mxu0 %v753
    %4299 = vmatprep.subr.mxu0 %v758
    %4300 = vmatpush1.msra.mxu0 %v757
    %4301 = vmatprep.subr.mxu0 %v762
    %4302 = vmatpush1.msra.mxu0 %v761
    %4303 = vmatprep.subr.mxu0 %v766
    %4304 = vmatpush1.msra.mxu0 %v765
    %4305 = vmatprep.subr.mxu0 %v770
    %4306 = vmatpush1.msra.mxu0 %v769
    %4307 = vmatprep.subr.mxu0 %v774
    %4308 = vmatpush1.msra.mxu0 %v773
    %4309 = vmatprep.subr.mxu0 %v778
    %4310 = vmatpush1.msra.mxu0 %v777
    %4311 = vmatprep.subr.mxu0 %v782
    %4312 = vmatpush1.msra.mxu0 %v781
    %4313 = vmatprep.subr.mxu0 0.0
    %4314 = vmatpush1.msra.mxu0 0.0
    %4315 = vmatprep.subr.mxu0 0.0
    %4316 = vmatpush1.msra.mxu0 0.0
    %4317 = vmatprep.subr.mxu0 0.0
    %4318 = vmatpush1.msra.mxu0 0.0
    %4319 = vmatprep.subr.mxu0 0.0
    %4320 = vmatpush1.msra.mxu0 0.0
    %4321 = vmatprep.subr.mxu0 0.0
    %4322 = vmatpush1.msra.mxu0 0.0
    %4323 = vmatprep.subr.mxu0 0.0
    %4324 = vmatpush1.msra.mxu0 0.0
    %4325 = vmatprep.subr.mxu0 0.0
    %4326 = vmatpush1.msra.mxu0 0.0
    %4327 = vmatprep.subr.mxu0 0.0
    %4328 = vmatpush1.msra.mxu0 0.0
    %4329 = vmatprep.subr.mxu0 0.0
    %4330 = vmatpush1.msra.mxu0 0.0
    %4331 = vmatprep.subr.mxu0 0.0
    %4332 = vmatpush1.msra.mxu0 0.0
    %4333 = vmatprep.subr.mxu0 0.0
    %4334 = vmatpush1.msra.mxu0 0.0
    %4335 = vmatprep.subr.mxu0 0.0
    %4336 = vmatpush1.msra.mxu0 0.0
    %4337 = vmatprep.subr.mxu0 0.0
    %4338 = vmatpush1.msra.mxu0 0.0
    %4339 = vmatprep.subr.mxu0 0.0
    %4340 = vmatpush1.msra.mxu0 0.0
    %4341 = vmatprep.subr.mxu0 0.0
    %4342 = vmatpush1.msra.mxu0 0.0
    %4343 = vmatprep.subr.mxu0 0.0
    %4344 = vmatpush1.msra.mxu0 0.0
    %4345 = vmatprep.mubr.f32.mxu0 0.0
    %4346 = vmatmul.mubr.f32.gmra.mrb[0].mxu0 %v4086
    %v4347 = vpop.f32.mrb[0].mxu0
    %v4348 = vadd.f32 0.0, %v4347
    %v4349 = vpop.f32.mrb[0].mxu0
    %v4350 = vadd.f32 0.0, %v4349
    %4351 = vmatprep.mubr.f32.mxu0 0.0
    %4352 = vmatmul.mubr.f32.gmra.mrb[0].mxu0 %v4087
    %v4353 = vpop.f32.mrb[0].mxu0
    %v4354 = vadd.f32 0.0, %v4353
    %v4355 = vpop.f32.mrb[0].mxu0
    %v4356 = vadd.f32 0.0, %v4355
    %4357 = vdwg.mxu0
    %v4358 = vadd.f32 %v4196, %v4271
    %v4359 = vadd.f32 %v4197, %v4273
    %v4360 = vadd.f32 %v4198, %v4348
    %v4361 = vadd.f32 %v4199, %v4350
    %v4362 = vadd.f32 %v4200, %v4277
    %v4363 = vadd.f32 %v4201, %v4279
    %v4364 = vadd.f32 %v4202, %v4354
    %v4365 = vadd.f32 %v4203, %v4356
    %v4366 = vxor.u32 %v4358, 2147483648
    %v4367 = vxor.u32 %v4362, 2147483648
    %v4368 = vmul.f32 %v4366, 1.442695
    %v4369 = vpow.pop %v4368
    %v4370 = vmul.f32 %v4367, 1.442695
    %v4371 = vpow.pop %v4370
    %v4372 = vadd.f32 %v4369, 1.0
    %v4373 = vadd.f32 %v4371, 1.0
    %v4374 = vrcp.pop %v4372
    %v4375 = vmul.f32 1.0, %v4374
    %v4376 = vrcp.pop %v4373
    %v4377 = vmul.f32 1.0, %v4376
    %v4378 = vxor.u32 %v4359, 2147483648
    %v4379 = vxor.u32 %v4363, 2147483648
    %v4380 = vmul.f32 %v4378, 1.442695
    %v4381 = vpow.pop %v4380
    %v4382 = vmul.f32 %v4379, 1.442695
    %v4383 = vpow.pop %v4382
    %v4384 = vadd.f32 %v4381, 1.0
    %v4385 = vadd.f32 %v4383, 1.0
    %v4386 = vrcp.pop %v4384
    %v4387 = vmul.f32 1.0, %v4386
    %v4388 = vrcp.pop %v4385
    %v4389 = vmul.f32 1.0, %v4388
    %v4390 = vtanh.pop %v4360
    %v4391 = vtanh.pop %v4364
    %v4392 = vxor.u32 %v4361, 2147483648
    %v4393 = vxor.u32 %v4365, 2147483648
    %v4394 = vmul.f32 %v4392, 1.442695
    %v4395 = vpow.pop %v4394
    %v4396 = vmul.f32 %v4393, 1.442695
    %v4397 = vpow.pop %v4396
    %v4398 = vadd.f32 %v4395, 1.0
    %v4399 = vadd.f32 %v4397, 1.0
    %v4400 = vrcp.pop %v4398
    %v4401 = vmul.f32 1.0, %v4400
    %v4402 = vrcp.pop %v4399
    %v4403 = vmul.f32 1.0, %v4402
    %v4404 = vmul.f32 %v4387, %v4082
    %v4405 = vmul.f32 %v4389, %v4083
    %v4406 = vmul.f32 %v4375, %v4390
    %v4407 = vmul.f32 %v4377, %v4391
    %v4408 = vadd.f32 %v4404, %v4406
    %v4409 = vadd.f32 %v4405, %v4407
    %v4410 = vtanh.pop %v4408
    %v4411 = vtanh.pop %v4409
    %v4412 = vmul.f32 %v4401, %v4410
    %v4413 = vmul.f32 %v4403, %v4411
    %s4414 = scalar_lea.vmem [#allocation3], 16
    %4415 = vst [vmem:[%s4414] sm:$0xff] %v4412
    %4416 = vst [vmem:[%s4414 + $0x8] sm:$0xff] %v4413
    %4417 = vmatprep.subr.mxu0 0.0
    %4418 = vmatpush1.msra.mxu0 %v783
    %4419 = vmatprep.subr.mxu0 0.0
    %4420 = vmatpush1.msra.mxu0 %v784
    %4421 = vmatprep.subr.mxu0 0.0
    %4422 = vmatpush1.msra.mxu0 %v785
    %4423 = vmatprep.subr.mxu0 0.0
    %4424 = vmatpush1.msra.mxu0 %v786
    %4425 = vmatprep.subr.mxu0 0.0
    %4426 = vmatpush1.msra.mxu0 %v787
    %4427 = vmatprep.subr.mxu0 0.0
    %4428 = vmatpush1.msra.mxu0 %v788
    %4429 = vmatprep.subr.mxu0 0.0
    %4430 = vmatpush1.msra.mxu0 %v789
    %4431 = vmatprep.subr.mxu0 0.0
    %4432 = vmatpush1.msra.mxu0 %v790
    %4433 = vmatprep.subr.mxu0 0.0
    %4434 = vmatpush1.msra.mxu0 %v791
    %4435 = vmatprep.subr.mxu0 0.0
    %4436 = vmatpush1.msra.mxu0 %v792
    %4437 = vmatprep.subr.mxu0 0.0
    %4438 = vmatpush1.msra.mxu0 %v793
    %4439 = vmatprep.subr.mxu0 0.0
    %4440 = vmatpush1.msra.mxu0 %v794
    %4441 = vmatprep.subr.mxu0 0.0
    %4442 = vmatpush1.msra.mxu0 %v795
    %4443 = vmatprep.subr.mxu0 0.0
    %4444 = vmatpush1.msra.mxu0 %v796
    %4445 = vmatprep.subr.mxu0 0.0
    %4446 = vmatpush1.msra.mxu0 %v797
    %4447 = vmatprep.subr.mxu0 0.0
    %4448 = vmatpush1.msra.mxu0 %v798
    %4449 = vmatprep.subr.mxu0 0.0
    %4450 = vmatpush1.msra.mxu0 0.0
    %4451 = vmatprep.subr.mxu0 0.0
    %4452 = vmatpush1.msra.mxu0 0.0
    %4453 = vmatprep.subr.mxu0 0.0
    %4454 = vmatpush1.msra.mxu0 0.0
    %4455 = vmatprep.subr.mxu0 0.0
    %4456 = vmatpush1.msra.mxu0 0.0
    %4457 = vmatprep.subr.mxu0 0.0
    %4458 = vmatpush1.msra.mxu0 0.0
    %4459 = vmatprep.subr.mxu0 0.0
    %4460 = vmatpush1.msra.mxu0 0.0
    %4461 = vmatprep.subr.mxu0 0.0
    %4462 = vmatpush1.msra.mxu0 0.0
    %4463 = vmatprep.subr.mxu0 0.0
    %4464 = vmatpush1.msra.mxu0 0.0
    %4465 = vmatprep.subr.mxu0 0.0
    %4466 = vmatpush1.msra.mxu0 0.0
    %4467 = vmatprep.subr.mxu0 0.0
    %4468 = vmatpush1.msra.mxu0 0.0
    %4469 = vmatprep.subr.mxu0 0.0
    %4470 = vmatpush1.msra.mxu0 0.0
    %4471 = vmatprep.subr.mxu0 0.0
    %4472 = vmatpush1.msra.mxu0 0.0
    %4473 = vmatprep.subr.mxu0 0.0
    %4474 = vmatpush1.msra.mxu0 0.0
    %4475 = vmatprep.subr.mxu0 0.0
    %4476 = vmatpush1.msra.mxu0 0.0
    %4477 = vmatprep.subr.mxu0 0.0
    %4478 = vmatpush1.msra.mxu0 0.0
    %4479 = vmatprep.subr.mxu0 0.0
    %4480 = vmatpush1.msra.mxu0 0.0
    %4481 = vmatprep.mubr.f32.mxu0 0.0
    %4482 = vmatmul.mubr.f32.gmra.mrb[0].mxu0 %v4412
    %v4483 = vpop.f32.mrb[0].mxu0
    %v4484 = vadd.f32 %v4094, %v4483
    %v4485 = vpop.f32.mrb[0].mxu0
    %4486 = vmatprep.mubr.f32.mxu0 0.0
    %4487 = vmatmul.mubr.f32.gmra.mrb[0].mxu0 %v4413
    %v4488 = vpop.f32.mrb[0].mxu0
    %v4489 = vadd.f32 %v4094, %v4488
    %v4490 = vpop.f32.mrb[0].mxu0
    %4491 = vdwg.mxu0
    %v4492 = vtanh.pop %v4484
    %v4493 = vtanh.pop %v4489
    %v4494 = vmul.f32 %v4492, %v4177
    %v4495 = vmul.f32 %v4493, %v4177
    %4496 = vadd.xlane.f32.xlu0 %v4494
    %v4497 = vpop.xlane.xlu0 %4496
    %4498 = vadd.xlane.f32.xlu0 %v4495
    %v4499 = vpop.xlane.xlu0 %4498
    %v4500 = vadd.f32 %v4497, %v4189
    %v4501 = vadd.f32 %v4499, %v4189
    %s4502 = scalar_lea.vmem [#allocation4], 16
    %4503 = vst.msk [vmem:[%s4502] sm:$0xff] %vm4193, %v4500
    %4504 = vst.msk [vmem:[%s4502 + $0x8] sm:$0xff] %vm4193, %v4501
    %v4505 = vld [vmem:[%s1584] sm:$0xff]
    %v4506 = vld [vmem:[%s1584 + $0x8] sm:$0xff]
    %v4507 = vld [vmem:[%s1584 + $0x10] sm:$0xff]
    %v4508 = vld [vmem:[%s1584 + $0x18] sm:$0xff]
    %v4509 = vld [vmem:[%s1584 + $0x20] sm:$0xff]
    %v4510 = vld [vmem:[%s1584 + $0x28] sm:$0xff]
    %v4511 = vld [vmem:[%s1584 + $0x30] sm:$0xff]
    %v4512 = vld [vmem:[%s1584 + $0x38] sm:$0xff]
    %4513 = vmatprep.subr.mxu0 %v720
    %4514 = vmatpush1.msra.mxu0 %v719
    %4515 = vmatprep.subr.mxu0 %v724
    %4516 = vmatpush1.msra.mxu0 %v723
    %4517 = vmatprep.subr.mxu0 %v728
    %4518 = vmatpush1.msra.mxu0 %v727
    %4519 = vmatprep.subr.mxu0 %v732
    %4520 = vmatpush1.msra.mxu0 %v731
    %4521 = vmatprep.subr.mxu0 %v736
    %4522 = vmatpush1.msra.mxu0 %v735
    %4523 = vmatprep.subr.mxu0 %v740
    %4524 = vmatpush1.msra.mxu0 %v739
    %4525 = vmatprep.subr.mxu0 %v744
    %4526 = vmatpush1.msra.mxu0 %v743
    %4527 = vmatprep.subr.mxu0 %v748
    %4528 = vmatpush1.msra.mxu0 %v747
    %4529 = vmatprep.subr.mxu0 %v752
    %4530 = vmatpush1.msra.mxu0 %v751
    %4531 = vmatprep.subr.mxu0 %v756
    %4532 = vmatpush1.msra.mxu0 %v755
    %4533 = vmatprep.subr.mxu0 %v760
    %4534 = vmatpush1.msra.mxu0 %v759
    %4535 = vmatprep.subr.mxu0 %v764
    %4536 = vmatpush1.msra.mxu0 %v763
    %4537 = vmatprep.subr.mxu0 %v768
    %4538 = vmatpush1.msra.mxu0 %v767
    %4539 = vmatprep.subr.mxu0 %v772
    %4540 = vmatpush1.msra.mxu0 %v771
    %4541 = vmatprep.subr.mxu0 %v776
    %4542 = vmatpush1.msra.mxu0 %v775
    %4543 = vmatprep.subr.mxu0 %v780
    %4544 = vmatpush1.msra.mxu0 %v779
    %4545 = vmatprep.subr.mxu0 0.0
    %4546 = vmatpush1.msra.mxu0 0.0
    %4547 = vmatprep.subr.mxu0 0.0
    %4548 = vmatpush1.msra.mxu0 0.0
    %4549 = vmatprep.subr.mxu0 0.0
    %4550 = vmatpush1.msra.mxu0 0.0
    %4551 = vmatprep.subr.mxu0 0.0
    %4552 = vmatpush1.msra.mxu0 0.0
    %4553 = vmatprep.subr.mxu0 0.0
    %4554 = vmatpush1.msra.mxu0 0.0
    %4555 = vmatprep.subr.mxu0 0.0
    %4556 = vmatpush1.msra.mxu0 0.0
    %4557 = vmatprep.subr.mxu0 0.0
    %4558 = vmatpush1.msra.mxu0 0.0
    %4559 = vmatprep.subr.mxu0 0.0
    %4560 = vmatpush1.msra.mxu0 0.0
    %4561 = vmatprep.subr.mxu0 0.0
    %4562 = vmatpush1.msra.mxu0 0.0
    %4563 = vmatprep.subr.mxu0 0.0
    %4564 = vmatpush1.msra.mxu0 0.0
    %4565 = vmatprep.subr.mxu0 0.0
    %4566 = vmatpush1.msra.mxu0 0.0
    %4567 = vmatprep.subr.mxu0 0.0
    %4568 = vmatpush1.msra.mxu0 0.0
    %4569 = vmatprep.subr.mxu0 0.0
    %4570 = vmatpush1.msra.mxu0 0.0
    %4571 = vmatprep.subr.mxu0 0.0
    %4572 = vmatpush1.msra.mxu0 0.0
    %4573 = vmatprep.subr.mxu0 0.0
    %4574 = vmatpush1.msra.mxu0 0.0
    %4575 = vmatprep.subr.mxu0 0.0
    %4576 = vmatpush1.msra.mxu0 0.0
    %4577 = vmatprep.mubr.f32.mxu0 0.0
    %4578 = vmatmul.mubr.f32.gmra.mrb[0].mxu0 %v4412
    %v4579 = vpop.f32.mrb[0].mxu0
    %v4580 = vadd.f32 0.0, %v4579
    %v4581 = vpop.f32.mrb[0].mxu0
    %v4582 = vadd.f32 0.0, %v4581
    %4583 = vmatprep.mubr.f32.mxu0 0.0
    %4584 = vmatmul.mubr.f32.gmra.mrb[0].mxu0 %v4413
    %v4585 = vpop.f32.mrb[0].mxu0
    %v4586 = vadd.f32 0.0, %v4585
    %v4587 = vpop.f32.mrb[0].mxu0
    %v4588 = vadd.f32 0.0, %v4587
    %4589 = vdwg.mxu0
    %4590 = vmatprep.subr.mxu0 %v722
    %4591 = vmatpush1.msra.mxu0 %v721
    %4592 = vmatprep.subr.mxu0 %v726
    %4593 = vmatpush1.msra.mxu0 %v725
    %4594 = vmatprep.subr.mxu0 %v730
    %4595 = vmatpush1.msra.mxu0 %v729
    %4596 = vmatprep.subr.mxu0 %v734
    %4597 = vmatpush1.msra.mxu0 %v733
    %4598 = vmatprep.subr.mxu0 %v738
    %4599 = vmatpush1.msra.mxu0 %v737
    %4600 = vmatprep.subr.mxu0 %v742
    %4601 = vmatpush1.msra.mxu0 %v741
    %4602 = vmatprep.subr.mxu0 %v746
    %4603 = vmatpush1.msra.mxu0 %v745
    %4604 = vmatprep.subr.mxu0 %v750
    %4605 = vmatpush1.msra.mxu0 %v749
    %4606 = vmatprep.subr.mxu0 %v754
    %4607 = vmatpush1.msra.mxu0 %v753
    %4608 = vmatprep.subr.mxu0 %v758
    %4609 = vmatpush1.msra.mxu0 %v757
    %4610 = vmatprep.subr.mxu0 %v762
    %4611 = vmatpush1.msra.mxu0 %v761
    %4612 = vmatprep.subr.mxu0 %v766
    %4613 = vmatpush1.msra.mxu0 %v765
    %4614 = vmatprep.subr.mxu0 %v770
    %4615 = vmatpush1.msra.mxu0 %v769
    %4616 = vmatprep.subr.mxu0 %v774
    %4617 = vmatpush1.msra.mxu0 %v773
    %4618 = vmatprep.subr.mxu0 %v778
    %4619 = vmatpush1.msra.mxu0 %v777
    %4620 = vmatprep.subr.mxu0 %v782
    %4621 = vmatpush1.msra.mxu0 %v781
    %4622 = vmatprep.subr.mxu0 0.0
    %4623 = vmatpush1.msra.mxu0 0.0
    %4624 = vmatprep.subr.mxu0 0.0
    %4625 = vmatpush1.msra.mxu0 0.0
    %4626 = vmatprep.subr.mxu0 0.0
    %4627 = vmatpush1.msra.mxu0 0.0
    %4628 = vmatprep.subr.mxu0 0.0
    %4629 = vmatpush1.msra.mxu0 0.0
    %4630 = vmatprep.subr.mxu0 0.0
    %4631 = vmatpush1.msra.mxu0 0.0
    %4632 = vmatprep.subr.mxu0 0.0
    %4633 = vmatpush1.msra.mxu0 0.0
    %4634 = vmatprep.subr.mxu0 0.0
    %4635 = vmatpush1.msra.mxu0 0.0
    %4636 = vmatprep.subr.mxu0 0.0
    %4637 = vmatpush1.msra.mxu0 0.0
    %4638 = vmatprep.subr.mxu0 0.0
    %4639 = vmatpush1.msra.mxu0 0.0
    %4640 = vmatprep.subr.mxu0 0.0
    %4641 = vmatpush1.msra.mxu0 0.0
    %4642 = vmatprep.subr.mxu0 0.0
    %4643 = vmatpush1.msra.mxu0 0.0
    %4644 = vmatprep.subr.mxu0 0.0
    %4645 = vmatpush1.msra.mxu0 0.0
    %4646 = vmatprep.subr.mxu0 0.0
    %4647 = vmatpush1.msra.mxu0 0.0
    %4648 = vmatprep.subr.mxu0 0.0
    %4649 = vmatpush1.msra.mxu0 0.0
    %4650 = vmatprep.subr.mxu0 0.0
    %4651 = vmatpush1.msra.mxu0 0.0
    %4652 = vmatprep.subr.mxu0 0.0
    %4653 = vmatpush1.msra.mxu0 0.0
    %4654 = vmatprep.mubr.f32.mxu0 0.0
    %4655 = vmatmul.mubr.f32.gmra.mrb[0].mxu0 %v4412
    %v4656 = vpop.f32.mrb[0].mxu0
    %v4657 = vadd.f32 0.0, %v4656
    %v4658 = vpop.f32.mrb[0].mxu0
    %v4659 = vadd.f32 0.0, %v4658
    %4660 = vmatprep.mubr.f32.mxu0 0.0
    %4661 = vmatmul.mubr.f32.gmra.mrb[0].mxu0 %v4413
    %v4662 = vpop.f32.mrb[0].mxu0
    %v4663 = vadd.f32 0.0, %v4662
    %v4664 = vpop.f32.mrb[0].mxu0
    %v4665 = vadd.f32 0.0, %v4664
    %4666 = vdwg.mxu0
    %v4667 = vadd.f32 %v4505, %v4580
    %v4668 = vadd.f32 %v4506, %v4582
    %v4669 = vadd.f32 %v4507, %v4657
    %v4670 = vadd.f32 %v4508, %v4659
    %v4671 = vadd.f32 %v4509, %v4586
    %v4672 = vadd.f32 %v4510, %v4588
    %v4673 = vadd.f32 %v4511, %v4663
    %v4674 = vadd.f32 %v4512, %v4665
    %v4675 = vxor.u32 %v4667, 2147483648
    %v4676 = vxor.u32 %v4671, 2147483648
    %v4677 = vmul.f32 %v4675, 1.442695
    %v4678 = vpow.pop %v4677
    %v4679 = vmul.f32 %v4676, 1.442695
    %v4680 = vpow.pop %v4679
    %v4681 = vadd.f32 %v4678, 1.0
    %v4682 = vadd.f32 %v4680, 1.0
    %v4683 = vrcp.pop %v4681
    %v4684 = vmul.f32 1.0, %v4683
    %v4685 = vrcp.pop %v4682
    %v4686 = vmul.f32 1.0, %v4685
    %v4687 = vxor.u32 %v4668, 2147483648
    %v4688 = vxor.u32 %v4672, 2147483648
    %v4689 = vmul.f32 %v4687, 1.442695
    %v4690 = vpow.pop %v4689
    %v4691 = vmul.f32 %v4688, 1.442695
    %v4692 = vpow.pop %v4691
    %v4693 = vadd.f32 %v4690, 1.0
    %v4694 = vadd.f32 %v4692, 1.0
    %v4695 = vrcp.pop %v4693
    %v4696 = vmul.f32 1.0, %v4695
    %v4697 = vrcp.pop %v4694
    %v4698 = vmul.f32 1.0, %v4697
    %v4699 = vtanh.pop %v4669
    %v4700 = vtanh.pop %v4673
    %v4701 = vxor.u32 %v4670, 2147483648
    %v4702 = vxor.u32 %v4674, 2147483648
    %v4703 = vmul.f32 %v4701, 1.442695
    %v4704 = vpow.pop %v4703
    %v4705 = vmul.f32 %v4702, 1.442695
    %v4706 = vpow.pop %v4705
    %v4707 = vadd.f32 %v4704, 1.0
    %v4708 = vadd.f32 %v4706, 1.0
    %v4709 = vrcp.pop %v4707
    %v4710 = vmul.f32 1.0, %v4709
    %v4711 = vrcp.pop %v4708
    %v4712 = vmul.f32 1.0, %v4711
    %v4713 = vmul.f32 %v4696, %v4408
    %v4714 = vmul.f32 %v4698, %v4409
    %v4715 = vmul.f32 %v4684, %v4699
    %v4716 = vmul.f32 %v4686, %v4700
    %v4717 = vadd.f32 %v4713, %v4715
    %v4718 = vadd.f32 %v4714, %v4716
    %v4719 = vtanh.pop %v4717
    %v4720 = vtanh.pop %v4718
    %v4721 = vmul.f32 %v4710, %v4719
    %v4722 = vmul.f32 %v4712, %v4720
    %s4723 = scalar_lea.vmem [#allocation3], 32
    %4724 = vst [vmem:[%s4723] sm:$0xff] %v4721
    %4725 = vst [vmem:[%s4723 + $0x8] sm:$0xff] %v4722
    %4726 = vmatprep.subr.mxu0 0.0
    %4727 = vmatpush1.msra.mxu0 %v783
    %4728 = vmatprep.subr.mxu0 0.0
    %4729 = vmatpush1.msra.mxu0 %v784
    %4730 = vmatprep.subr.mxu0 0.0
    %4731 = vmatpush1.msra.mxu0 %v785
    %4732 = vmatprep.subr.mxu0 0.0
    %4733 = vmatpush1.msra.mxu0 %v786
    %4734 = vmatprep.subr.mxu0 0.0
    %4735 = vmatpush1.msra.mxu0 %v787
    %4736 = vmatprep.subr.mxu0 0.0
    %4737 = vmatpush1.msra.mxu0 %v788
    %4738 = vmatprep.subr.mxu0 0.0
    %4739 = vmatpush1.msra.mxu0 %v789
    %4740 = vmatprep.subr.mxu0 0.0
    %4741 = vmatpush1.msra.mxu0 %v790
    %4742 = vmatprep.subr.mxu0 0.0
    %4743 = vmatpush1.msra.mxu0 %v791
    %4744 = vmatprep.subr.mxu0 0.0
    %4745 = vmatpush1.msra.mxu0 %v792
    %4746 = vmatprep.subr.mxu0 0.0
    %4747 = vmatpush1.msra.mxu0 %v793
    %4748 = vmatprep.subr.mxu0 0.0
    %4749 = vmatpush1.msra.mxu0 %v794
    %4750 = vmatprep.subr.mxu0 0.0
    %4751 = vmatpush1.msra.mxu0 %v795
    %4752 = vmatprep.subr.mxu0 0.0
    %4753 = vmatpush1.msra.mxu0 %v796
    %4754 = vmatprep.subr.mxu0 0.0
    %4755 = vmatpush1.msra.mxu0 %v797
    %4756 = vmatprep.subr.mxu0 0.0
    %4757 = vmatpush1.msra.mxu0 %v798
    %4758 = vmatprep.subr.mxu0 0.0
    %4759 = vmatpush1.msra.mxu0 0.0
    %4760 = vmatprep.subr.mxu0 0.0
    %4761 = vmatpush1.msra.mxu0 0.0
    %4762 = vmatprep.subr.mxu0 0.0
    %4763 = vmatpush1.msra.mxu0 0.0
    %4764 = vmatprep.subr.mxu0 0.0
    %4765 = vmatpush1.msra.mxu0 0.0
    %4766 = vmatprep.subr.mxu0 0.0
    %4767 = vmatpush1.msra.mxu0 0.0
    %4768 = vmatprep.subr.mxu0 0.0
    %4769 = vmatpush1.msra.mxu0 0.0
    %4770 = vmatprep.subr.mxu0 0.0
    %4771 = vmatpush1.msra.mxu0 0.0
    %4772 = vmatprep.subr.mxu0 0.0
    %4773 = vmatpush1.msra.mxu0 0.0
    %4774 = vmatprep.subr.mxu0 0.0
    %4775 = vmatpush1.msra.mxu0 0.0
    %4776 = vmatprep.subr.mxu0 0.0
    %4777 = vmatpush1.msra.mxu0 0.0
    %4778 = vmatprep.subr.mxu0 0.0
    %4779 = vmatpush1.msra.mxu0 0.0
    %4780 = vmatprep.subr.mxu0 0.0
    %4781 = vmatpush1.msra.mxu0 0.0
    %4782 = vmatprep.subr.mxu0 0.0
    %4783 = vmatpush1.msra.mxu0 0.0
    %4784 = vmatprep.subr.mxu0 0.0
    %4785 = vmatpush1.msra.mxu0 0.0
    %4786 = vmatprep.subr.mxu0 0.0
    %4787 = vmatpush1.msra.mxu0 0.0
    %4788 = vmatprep.subr.mxu0 0.0
    %4789 = vmatpush1.msra.mxu0 0.0
    %4790 = vmatprep.mubr.f32.mxu0 0.0
    %4791 = vmatmul.mubr.f32.gmra.mrb[0].mxu0 %v4721
    %v4792 = vpop.f32.mrb[0].mxu0
    %v4793 = vadd.f32 %v4094, %v4792
    %v4794 = vpop.f32.mrb[0].mxu0
    %4795 = vmatprep.mubr.f32.mxu0 0.0
    %4796 = vmatmul.mubr.f32.gmra.mrb[0].mxu0 %v4722
    %v4797 = vpop.f32.mrb[0].mxu0
    %v4798 = vadd.f32 %v4094, %v4797
    %v4799 = vpop.f32.mrb[0].mxu0
    %4800 = vdwg.mxu0
    %v4801 = vtanh.pop %v4793
    %v4802 = vtanh.pop %v4798
    %v4803 = vmul.f32 %v4801, %v4177
    %v4804 = vmul.f32 %v4802, %v4177
    %4805 = vadd.xlane.f32.xlu0 %v4803
    %v4806 = vpop.xlane.xlu0 %4805
    %4807 = vadd.xlane.f32.xlu0 %v4804
    %v4808 = vpop.xlane.xlu0 %4807
    %v4809 = vadd.f32 %v4806, %v4189
    %v4810 = vadd.f32 %v4808, %v4189
    %s4811 = scalar_lea.vmem [#allocation4], 32
    %4812 = vst.msk [vmem:[%s4811] sm:$0xff] %vm4193, %v4809
    %4813 = vst.msk [vmem:[%s4811 + $0x8] sm:$0xff] %vm4193, %v4810
    %v4814 = vld [vmem:[%s1965] sm:$0xff]
    %v4815 = vld [vmem:[%s1965 + $0x8] sm:$0xff]
    %v4816 = vld [vmem:[%s1965 + $0x10] sm:$0xff]
    %v4817 = vld [vmem:[%s1965 + $0x18] sm:$0xff]
    %v4818 = vld [vmem:[%s1965 + $0x20] sm:$0xff]
    %v4819 = vld [vmem:[%s1965 + $0x28] sm:$0xff]
    %v4820 = vld [vmem:[%s1965 + $0x30] sm:$0xff]
    %v4821 = vld [vmem:[%s1965 + $0x38] sm:$0xff]
    %4822 = vmatprep.subr.mxu0 %v720
    %4823 = vmatpush1.msra.mxu0 %v719
    %4824 = vmatprep.subr.mxu0 %v724
    %4825 = vmatpush1.msra.mxu0 %v723
    %4826 = vmatprep.subr.mxu0 %v728
    %4827 = vmatpush1.msra.mxu0 %v727
    %4828 = vmatprep.subr.mxu0 %v732
    %4829 = vmatpush1.msra.mxu0 %v731
    %4830 = vmatprep.subr.mxu0 %v736
    %4831 = vmatpush1.msra.mxu0 %v735
    %4832 = vmatprep.subr.mxu0 %v740
    %4833 = vmatpush1.msra.mxu0 %v739
    %4834 = vmatprep.subr.mxu0 %v744
    %4835 = vmatpush1.msra.mxu0 %v743
    %4836 = vmatprep.subr.mxu0 %v748
    %4837 = vmatpush1.msra.mxu0 %v747
    %4838 = vmatprep.subr.mxu0 %v752
    %4839 = vmatpush1.msra.mxu0 %v751
    %4840 = vmatprep.subr.mxu0 %v756
    %4841 = vmatpush1.msra.mxu0 %v755
    %4842 = vmatprep.subr.mxu0 %v760
    %4843 = vmatpush1.msra.mxu0 %v759
    %4844 = vmatprep.subr.mxu0 %v764
    %4845 = vmatpush1.msra.mxu0 %v763
    %4846 = vmatprep.subr.mxu0 %v768
    %4847 = vmatpush1.msra.mxu0 %v767
    %4848 = vmatprep.subr.mxu0 %v772
    %4849 = vmatpush1.msra.mxu0 %v771
    %4850 = vmatprep.subr.mxu0 %v776
    %4851 = vmatpush1.msra.mxu0 %v775
    %4852 = vmatprep.subr.mxu0 %v780
    %4853 = vmatpush1.msra.mxu0 %v779
    %4854 = vmatprep.subr.mxu0 0.0
    %4855 = vmatpush1.msra.mxu0 0.0
    %4856 = vmatprep.subr.mxu0 0.0
    %4857 = vmatpush1.msra.mxu0 0.0
    %4858 = vmatprep.subr.mxu0 0.0
    %4859 = vmatpush1.msra.mxu0 0.0
    %4860 = vmatprep.subr.mxu0 0.0
    %4861 = vmatpush1.msra.mxu0 0.0
    %4862 = vmatprep.subr.mxu0 0.0
    %4863 = vmatpush1.msra.mxu0 0.0
    %4864 = vmatprep.subr.mxu0 0.0
    %4865 = vmatpush1.msra.mxu0 0.0
    %4866 = vmatprep.subr.mxu0 0.0
    %4867 = vmatpush1.msra.mxu0 0.0
    %4868 = vmatprep.subr.mxu0 0.0
    %4869 = vmatpush1.msra.mxu0 0.0
    %4870 = vmatprep.subr.mxu0 0.0
    %4871 = vmatpush1.msra.mxu0 0.0
    %4872 = vmatprep.subr.mxu0 0.0
    %4873 = vmatpush1.msra.mxu0 0.0
    %4874 = vmatprep.subr.mxu0 0.0
    %4875 = vmatpush1.msra.mxu0 0.0
    %4876 = vmatprep.subr.mxu0 0.0
    %4877 = vmatpush1.msra.mxu0 0.0
    %4878 = vmatprep.subr.mxu0 0.0
    %4879 = vmatpush1.msra.mxu0 0.0
    %4880 = vmatprep.subr.mxu0 0.0
    %4881 = vmatpush1.msra.mxu0 0.0
    %4882 = vmatprep.subr.mxu0 0.0
    %4883 = vmatpush1.msra.mxu0 0.0
    %4884 = vmatprep.subr.mxu0 0.0
    %4885 = vmatpush1.msra.mxu0 0.0
    %4886 = vmatprep.mubr.f32.mxu0 0.0
    %4887 = vmatmul.mubr.f32.gmra.mrb[0].mxu0 %v4721
    %v4888 = vpop.f32.mrb[0].mxu0
    %v4889 = vadd.f32 0.0, %v4888
    %v4890 = vpop.f32.mrb[0].mxu0
    %v4891 = vadd.f32 0.0, %v4890
    %4892 = vmatprep.mubr.f32.mxu0 0.0
    %4893 = vmatmul.mubr.f32.gmra.mrb[0].mxu0 %v4722
    %v4894 = vpop.f32.mrb[0].mxu0
    %v4895 = vadd.f32 0.0, %v4894
    %v4896 = vpop.f32.mrb[0].mxu0
    %v4897 = vadd.f32 0.0, %v4896
    %4898 = vdwg.mxu0
    %4899 = vmatprep.subr.mxu0 %v722
    %4900 = vmatpush1.msra.mxu0 %v721
    %4901 = vmatprep.subr.mxu0 %v726
    %4902 = vmatpush1.msra.mxu0 %v725
    %4903 = vmatprep.subr.mxu0 %v730
    %4904 = vmatpush1.msra.mxu0 %v729
    %4905 = vmatprep.subr.mxu0 %v734
    %4906 = vmatpush1.msra.mxu0 %v733
    %4907 = vmatprep.subr.mxu0 %v738
    %4908 = vmatpush1.msra.mxu0 %v737
    %4909 = vmatprep.subr.mxu0 %v742
    %4910 = vmatpush1.msra.mxu0 %v741
    %4911 = vmatprep.subr.mxu0 %v746
    %4912 = vmatpush1.msra.mxu0 %v745
    %4913 = vmatprep.subr.mxu0 %v750
    %4914 = vmatpush1.msra.mxu0 %v749
    %4915 = vmatprep.subr.mxu0 %v754
    %4916 = vmatpush1.msra.mxu0 %v753
    %4917 = vmatprep.subr.mxu0 %v758
    %4918 = vmatpush1.msra.mxu0 %v757
    %4919 = vmatprep.subr.mxu0 %v762
    %4920 = vmatpush1.msra.mxu0 %v761
    %4921 = vmatprep.subr.mxu0 %v766
    %4922 = vmatpush1.msra.mxu0 %v765
    %4923 = vmatprep.subr.mxu0 %v770
    %4924 = vmatpush1.msra.mxu0 %v769
    %4925 = vmatprep.subr.mxu0 %v774
    %4926 = vmatpush1.msra.mxu0 %v773
    %4927 = vmatprep.subr.mxu0 %v778
    %4928 = vmatpush1.msra.mxu0 %v777
    %4929 = vmatprep.subr.mxu0 %v782
    %4930 = vmatpush1.msra.mxu0 %v781
    %4931 = vmatprep.subr.mxu0 0.0
    %4932 = vmatpush1.msra.mxu0 0.0
    %4933 = vmatprep.subr.mxu0 0.0
    %4934 = vmatpush1.msra.mxu0 0.0
    %4935 = vmatprep.subr.mxu0 0.0
    %4936 = vmatpush1.msra.mxu0 0.0
    %4937 = vmatprep.subr.mxu0 0.0
    %4938 = vmatpush1.msra.mxu0 0.0
    %4939 = vmatprep.subr.mxu0 0.0
    %4940 = vmatpush1.msra.mxu0 0.0
    %4941 = vmatprep.subr.mxu0 0.0
    %4942 = vmatpush1.msra.mxu0 0.0
    %4943 = vmatprep.subr.mxu0 0.0
    %4944 = vmatpush1.msra.mxu0 0.0
    %4945 = vmatprep.subr.mxu0 0.0
    %4946 = vmatpush1.msra.mxu0 0.0
    %4947 = vmatprep.subr.mxu0 0.0
    %4948 = vmatpush1.msra.mxu0 0.0
    %4949 = vmatprep.subr.mxu0 0.0
    %4950 = vmatpush1.msra.mxu0 0.0
    %4951 = vmatprep.subr.mxu0 0.0
    %4952 = vmatpush1.msra.mxu0 0.0
    %4953 = vmatprep.subr.mxu0 0.0
    %4954 = vmatpush1.msra.mxu0 0.0
    %4955 = vmatprep.subr.mxu0 0.0
    %4956 = vmatpush1.msra.mxu0 0.0
    %4957 = vmatprep.subr.mxu0 0.0
    %4958 = vmatpush1.msra.mxu0 0.0
    %4959 = vmatprep.subr.mxu0 0.0
    %4960 = vmatpush1.msra.mxu0 0.0
    %4961 = vmatprep.subr.mxu0 0.0
    %4962 = vmatpush1.msra.mxu0 0.0
    %4963 = vmatprep.mubr.f32.mxu0 0.0
    %4964 = vmatmul.mubr.f32.gmra.mrb[0].mxu0 %v4721
    %v4965 = vpop.f32.mrb[0].mxu0
    %v4966 = vadd.f32 0.0, %v4965
    %v4967 = vpop.f32.mrb[0].mxu0
    %v4968 = vadd.f32 0.0, %v4967
    %4969 = vmatprep.mubr.f32.mxu0 0.0
    %4970 = vmatmul.mubr.f32.gmra.mrb[0].mxu0 %v4722
    %v4971 = vpop.f32.mrb[0].mxu0
    %v4972 = vadd.f32 0.0, %v4971
    %v4973 = vpop.f32.mrb[0].mxu0
    %v4974 = vadd.f32 0.0, %v4973
    %4975 = vdwg.mxu0
    %v4976 = vadd.f32 %v4814, %v4889
    %v4977 = vadd.f32 %v4815, %v4891
    %v4978 = vadd.f32 %v4816, %v4966
    %v4979 = vadd.f32 %v4817, %v4968
    %v4980 = vadd.f32 %v4818, %v4895
    %v4981 = vadd.f32 %v4819, %v4897
    %v4982 = vadd.f32 %v4820, %v4972
    %v4983 = vadd.f32 %v4821, %v4974
    %v4984 = vxor.u32 %v4976, 2147483648
    %v4985 = vxor.u32 %v4980, 2147483648
    %v4986 = vmul.f32 %v4984, 1.442695
    %v4987 = vpow.pop %v4986
    %v4988 = vmul.f32 %v4985, 1.442695
    %v4989 = vpow.pop %v4988
    %v4990 = vadd.f32 %v4987, 1.0
    %v4991 = vadd.f32 %v4989, 1.0
    %v4992 = vrcp.pop %v4990
    %v4993 = vmul.f32 1.0, %v4992
    %v4994 = vrcp.pop %v4991
    %v4995 = vmul.f32 1.0, %v4994
    %v4996 = vxor.u32 %v4977, 2147483648
    %v4997 = vxor.u32 %v4981, 2147483648
    %v4998 = vmul.f32 %v4996, 1.442695
    %v4999 = vpow.pop %v4998
    %v5000 = vmul.f32 %v4997, 1.442695
    %v5001 = vpow.pop %v5000
    %v5002 = vadd.f32 %v4999, 1.0
    %v5003 = vadd.f32 %v5001, 1.0
    %v5004 = vrcp.pop %v5002
    %v5005 = vmul.f32 1.0, %v5004
    %v5006 = vrcp.pop %v5003
    %v5007 = vmul.f32 1.0, %v5006
    %v5008 = vtanh.pop %v4978
    %v5009 = vtanh.pop %v4982
    %v5010 = vxor.u32 %v4979, 2147483648
    %v5011 = vxor.u32 %v4983, 2147483648
    %v5012 = vmul.f32 %v5010, 1.442695
    %v5013 = vpow.pop %v5012
    %v5014 = vmul.f32 %v5011, 1.442695
    %v5015 = vpow.pop %v5014
    %v5016 = vadd.f32 %v5013, 1.0
    %v5017 = vadd.f32 %v5015, 1.0
    %v5018 = vrcp.pop %v5016
    %v5019 = vmul.f32 1.0, %v5018
    %v5020 = vrcp.pop %v5017
    %v5021 = vmul.f32 1.0, %v5020
    %v5022 = vmul.f32 %v5005, %v4717
    %v5023 = vmul.f32 %v5007, %v4718
    %v5024 = vmul.f32 %v4993, %v5008
    %v5025 = vmul.f32 %v4995, %v5009
    %v5026 = vadd.f32 %v5022, %v5024
    %v5027 = vadd.f32 %v5023, %v5025
    %v5028 = vtanh.pop %v5026
    %v5029 = vtanh.pop %v5027
    %v5030 = vmul.f32 %v5019, %v5028
    %v5031 = vmul.f32 %v5021, %v5029
    %s5032 = scalar_lea.vmem [#allocation3], 48
    %5033 = vst [vmem:[%s5032] sm:$0xff] %v5030
    %5034 = vst [vmem:[%s5032 + $0x8] sm:$0xff] %v5031
    %5035 = vmatprep.subr.mxu0 0.0
    %5036 = vmatpush1.msra.mxu0 %v783
    %5037 = vmatprep.subr.mxu0 0.0
    %5038 = vmatpush1.msra.mxu0 %v784
    %5039 = vmatprep.subr.mxu0 0.0
    %5040 = vmatpush1.msra.mxu0 %v785
    %5041 = vmatprep.subr.mxu0 0.0
    %5042 = vmatpush1.msra.mxu0 %v786
    %5043 = vmatprep.subr.mxu0 0.0
    %5044 = vmatpush1.msra.mxu0 %v787
    %5045 = vmatprep.subr.mxu0 0.0
    %5046 = vmatpush1.msra.mxu0 %v788
    %5047 = vmatprep.subr.mxu0 0.0
    %5048 = vmatpush1.msra.mxu0 %v789
    %5049 = vmatprep.subr.mxu0 0.0
    %5050 = vmatpush1.msra.mxu0 %v790
    %5051 = vmatprep.subr.mxu0 0.0
    %5052 = vmatpush1.msra.mxu0 %v791
    %5053 = vmatprep.subr.mxu0 0.0
    %5054 = vmatpush1.msra.mxu0 %v792
    %5055 = vmatprep.subr.mxu0 0.0
    %5056 = vmatpush1.msra.mxu0 %v793
    %5057 = vmatprep.subr.mxu0 0.0
    %5058 = vmatpush1.msra.mxu0 %v794
    %5059 = vmatprep.subr.mxu0 0.0
    %5060 = vmatpush1.msra.mxu0 %v795
    %5061 = vmatprep.subr.mxu0 0.0
    %5062 = vmatpush1.msra.mxu0 %v796
    %5063 = vmatprep.subr.mxu0 0.0
    %5064 = vmatpush1.msra.mxu0 %v797
    %5065 = vmatprep.subr.mxu0 0.0
    %5066 = vmatpush1.msra.mxu0 %v798
    %5067 = vmatprep.subr.mxu0 0.0
    %5068 = vmatpush1.msra.mxu0 0.0
    %5069 = vmatprep.subr.mxu0 0.0
    %5070 = vmatpush1.msra.mxu0 0.0
    %5071 = vmatprep.subr.mxu0 0.0
    %5072 = vmatpush1.msra.mxu0 0.0
    %5073 = vmatprep.subr.mxu0 0.0
    %5074 = vmatpush1.msra.mxu0 0.0
    %5075 = vmatprep.subr.mxu0 0.0
    %5076 = vmatpush1.msra.mxu0 0.0
    %5077 = vmatprep.subr.mxu0 0.0
    %5078 = vmatpush1.msra.mxu0 0.0
    %5079 = vmatprep.subr.mxu0 0.0
    %5080 = vmatpush1.msra.mxu0 0.0
    %5081 = vmatprep.subr.mxu0 0.0
    %5082 = vmatpush1.msra.mxu0 0.0
    %5083 = vmatprep.subr.mxu0 0.0
    %5084 = vmatpush1.msra.mxu0 0.0
    %5085 = vmatprep.subr.mxu0 0.0
    %5086 = vmatpush1.msra.mxu0 0.0
    %5087 = vmatprep.subr.mxu0 0.0
    %5088 = vmatpush1.msra.mxu0 0.0
    %5089 = vmatprep.subr.mxu0 0.0
    %5090 = vmatpush1.msra.mxu0 0.0
    %5091 = vmatprep.subr.mxu0 0.0
    %5092 = vmatpush1.msra.mxu0 0.0
    %5093 = vmatprep.subr.mxu0 0.0
    %5094 = vmatpush1.msra.mxu0 0.0
    %5095 = vmatprep.subr.mxu0 0.0
    %5096 = vmatpush1.msra.mxu0 0.0
    %5097 = vmatprep.subr.mxu0 0.0
    %5098 = vmatpush1.msra.mxu0 0.0
    %5099 = vmatprep.mubr.f32.mxu0 0.0
    %5100 = vmatmul.mubr.f32.gmra.mrb[0].mxu0 %v5030
    %v5101 = vpop.f32.mrb[0].mxu0
    %v5102 = vadd.f32 %v4094, %v5101
    %v5103 = vpop.f32.mrb[0].mxu0
    %5104 = vmatprep.mubr.f32.mxu0 0.0
    %5105 = vmatmul.mubr.f32.gmra.mrb[0].mxu0 %v5031
    %v5106 = vpop.f32.mrb[0].mxu0
    %v5107 = vadd.f32 %v4094, %v5106
    %v5108 = vpop.f32.mrb[0].mxu0
    %5109 = vdwg.mxu0
    %v5110 = vtanh.pop %v5102
    %v5111 = vtanh.pop %v5107
    %v5112 = vmul.f32 %v5110, %v4177
    %v5113 = vmul.f32 %v5111, %v4177
    %5114 = vadd.xlane.f32.xlu0 %v5112
    %v5115 = vpop.xlane.xlu0 %5114
    %5116 = vadd.xlane.f32.xlu0 %v5113
    %v5117 = vpop.xlane.xlu0 %5116
    %v5118 = vadd.f32 %v5115, %v4189
    %v5119 = vadd.f32 %v5117, %v4189
    %s5120 = scalar_lea.vmem [#allocation4], 48
    %5121 = vst.msk [vmem:[%s5120] sm:$0xff] %vm4193, %v5118
    %5122 = vst.msk [vmem:[%s5120 + $0x8] sm:$0xff] %vm4193, %v5119
    %v5123 = vld [vmem:[%s2346] sm:$0xff]
    %v5124 = vld [vmem:[%s2346 + $0x8] sm:$0xff]
    %v5125 = vld [vmem:[%s2346 + $0x10] sm:$0xff]
    %v5126 = vld [vmem:[%s2346 + $0x18] sm:$0xff]
    %v5127 = vld [vmem:[%s2346 + $0x20] sm:$0xff]
    %v5128 = vld [vmem:[%s2346 + $0x28] sm:$0xff]
    %v5129 = vld [vmem:[%s2346 + $0x30] sm:$0xff]
    %v5130 = vld [vmem:[%s2346 + $0x38] sm:$0xff]
    %5131 = vmatprep.subr.mxu0 %v720
    %5132 = vmatpush1.msra.mxu0 %v719
    %5133 = vmatprep.subr.mxu0 %v724
    %5134 = vmatpush1.msra.mxu0 %v723
    %5135 = vmatprep.subr.mxu0 %v728
    %5136 = vmatpush1.msra.mxu0 %v727
    %5137 = vmatprep.subr.mxu0 %v732
    %5138 = vmatpush1.msra.mxu0 %v731
    %5139 = vmatprep.subr.mxu0 %v736
    %5140 = vmatpush1.msra.mxu0 %v735
    %5141 = vmatprep.subr.mxu0 %v740
    %5142 = vmatpush1.msra.mxu0 %v739
    %5143 = vmatprep.subr.mxu0 %v744
    %5144 = vmatpush1.msra.mxu0 %v743
    %5145 = vmatprep.subr.mxu0 %v748
    %5146 = vmatpush1.msra.mxu0 %v747
    %5147 = vmatprep.subr.mxu0 %v752
    %5148 = vmatpush1.msra.mxu0 %v751
    %5149 = vmatprep.subr.mxu0 %v756
    %5150 = vmatpush1.msra.mxu0 %v755
    %5151 = vmatprep.subr.mxu0 %v760
    %5152 = vmatpush1.msra.mxu0 %v759
    %5153 = vmatprep.subr.mxu0 %v764
    %5154 = vmatpush1.msra.mxu0 %v763
    %5155 = vmatprep.subr.mxu0 %v768
    %5156 = vmatpush1.msra.mxu0 %v767
    %5157 = vmatprep.subr.mxu0 %v772
    %5158 = vmatpush1.msra.mxu0 %v771
    %5159 = vmatprep.subr.mxu0 %v776
    %5160 = vmatpush1.msra.mxu0 %v775
    %5161 = vmatprep.subr.mxu0 %v780
    %5162 = vmatpush1.msra.mxu0 %v779
    %5163 = vmatprep.subr.mxu0 0.0
    %5164 = vmatpush1.msra.mxu0 0.0
    %5165 = vmatprep.subr.mxu0 0.0
    %5166 = vmatpush1.msra.mxu0 0.0
    %5167 = vmatprep.subr.mxu0 0.0
    %5168 = vmatpush1.msra.mxu0 0.0
    %5169 = vmatprep.subr.mxu0 0.0
    %5170 = vmatpush1.msra.mxu0 0.0
    %5171 = vmatprep.subr.mxu0 0.0
    %5172 = vmatpush1.msra.mxu0 0.0
    %5173 = vmatprep.subr.mxu0 0.0
    %5174 = vmatpush1.msra.mxu0 0.0
    %5175 = vmatprep.subr.mxu0 0.0
    %5176 = vmatpush1.msra.mxu0 0.0
    %5177 = vmatprep.subr.mxu0 0.0
    %5178 = vmatpush1.msra.mxu0 0.0
    %5179 = vmatprep.subr.mxu0 0.0
    %5180 = vmatpush1.msra.mxu0 0.0
    %5181 = vmatprep.subr.mxu0 0.0
    %5182 = vmatpush1.msra.mxu0 0.0
    %5183 = vmatprep.subr.mxu0 0.0
    %5184 = vmatpush1.msra.mxu0 0.0
    %5185 = vmatprep.subr.mxu0 0.0
    %5186 = vmatpush1.msra.mxu0 0.0
    %5187 = vmatprep.subr.mxu0 0.0
    %5188 = vmatpush1.msra.mxu0 0.0
    %5189 = vmatprep.subr.mxu0 0.0
    %5190 = vmatpush1.msra.mxu0 0.0
    %5191 = vmatprep.subr.mxu0 0.0
    %5192 = vmatpush1.msra.mxu0 0.0
    %5193 = vmatprep.subr.mxu0 0.0
    %5194 = vmatpush1.msra.mxu0 0.0
    %5195 = vmatprep.mubr.f32.mxu0 0.0
    %5196 = vmatmul.mubr.f32.gmra.mrb[0].mxu0 %v5030
    %v5197 = vpop.f32.mrb[0].mxu0
    %v5198 = vadd.f32 0.0, %v5197
    %v5199 = vpop.f32.mrb[0].mxu0
    %v5200 = vadd.f32 0.0, %v5199
    %5201 = vmatprep.mubr.f32.mxu0 0.0
    %5202 = vmatmul.mubr.f32.gmra.mrb[0].mxu0 %v5031
    %v5203 = vpop.f32.mrb[0].mxu0
    %v5204 = vadd.f32 0.0, %v5203
    %v5205 = vpop.f32.mrb[0].mxu0
    %v5206 = vadd.f32 0.0, %v5205
    %5207 = vdwg.mxu0
    %5208 = vmatprep.subr.mxu0 %v722
    %5209 = vmatpush1.msra.mxu0 %v721
    %5210 = vmatprep.subr.mxu0 %v726
    %5211 = vmatpush1.msra.mxu0 %v725
    %5212 = vmatprep.subr.mxu0 %v730
    %5213 = vmatpush1.msra.mxu0 %v729
    %5214 = vmatprep.subr.mxu0 %v734
    %5215 = vmatpush1.msra.mxu0 %v733
    %5216 = vmatprep.subr.mxu0 %v738
    %5217 = vmatpush1.msra.mxu0 %v737
    %5218 = vmatprep.subr.mxu0 %v742
    %5219 = vmatpush1.msra.mxu0 %v741
    %5220 = vmatprep.subr.mxu0 %v746
    %5221 = vmatpush1.msra.mxu0 %v745
    %5222 = vmatprep.subr.mxu0 %v750
    %5223 = vmatpush1.msra.mxu0 %v749
    %5224 = vmatprep.subr.mxu0 %v754
    %5225 = vmatpush1.msra.mxu0 %v753
    %5226 = vmatprep.subr.mxu0 %v758
    %5227 = vmatpush1.msra.mxu0 %v757
    %5228 = vmatprep.subr.mxu0 %v762
    %5229 = vmatpush1.msra.mxu0 %v761
    %5230 = vmatprep.subr.mxu0 %v766
    %5231 = vmatpush1.msra.mxu0 %v765
    %5232 = vmatprep.subr.mxu0 %v770
    %5233 = vmatpush1.msra.mxu0 %v769
    %5234 = vmatprep.subr.mxu0 %v774
    %5235 = vmatpush1.msra.mxu0 %v773
    %5236 = vmatprep.subr.mxu0 %v778
    %5237 = vmatpush1.msra.mxu0 %v777
    %5238 = vmatprep.subr.mxu0 %v782
    %5239 = vmatpush1.msra.mxu0 %v781
    %5240 = vmatprep.subr.mxu0 0.0
    %5241 = vmatpush1.msra.mxu0 0.0
    %5242 = vmatprep.subr.mxu0 0.0
    %5243 = vmatpush1.msra.mxu0 0.0
    %5244 = vmatprep.subr.mxu0 0.0
    %5245 = vmatpush1.msra.mxu0 0.0
    %5246 = vmatprep.subr.mxu0 0.0
    %5247 = vmatpush1.msra.mxu0 0.0
    %5248 = vmatprep.subr.mxu0 0.0
    %5249 = vmatpush1.msra.mxu0 0.0
    %5250 = vmatprep.subr.mxu0 0.0
    %5251 = vmatpush1.msra.mxu0 0.0
    %5252 = vmatprep.subr.mxu0 0.0
    %5253 = vmatpush1.msra.mxu0 0.0
    %5254 = vmatprep.subr.mxu0 0.0
    %5255 = vmatpush1.msra.mxu0 0.0
    %5256 = vmatprep.subr.mxu0 0.0
    %5257 = vmatpush1.msra.mxu0 0.0
    %5258 = vmatprep.subr.mxu0 0.0
    %5259 = vmatpush1.msra.mxu0 0.0
    %5260 = vmatprep.subr.mxu0 0.0
    %5261 = vmatpush1.msra.mxu0 0.0
    %5262 = vmatprep.subr.mxu0 0.0
    %5263 = vmatpush1.msra.mxu0 0.0
    %5264 = vmatprep.subr.mxu0 0.0
    %5265 = vmatpush1.msra.mxu0 0.0
    %5266 = vmatprep.subr.mxu0 0.0
    %5267 = vmatpush1.msra.mxu0 0.0
    %5268 = vmatprep.subr.mxu0 0.0
    %5269 = vmatpush1.msra.mxu0 0.0
    %5270 = vmatprep.subr.mxu0 0.0
    %5271 = vmatpush1.msra.mxu0 0.0
    %5272 = vmatprep.mubr.f32.mxu0 0.0
    %5273 = vmatmul.mubr.f32.gmra.mrb[0].mxu0 %v5030
    %v5274 = vpop.f32.mrb[0].mxu0
    %v5275 = vadd.f32 0.0, %v5274
    %v5276 = vpop.f32.mrb[0].mxu0
    %v5277 = vadd.f32 0.0, %v5276
    %5278 = vmatprep.mubr.f32.mxu0 0.0
    %5279 = vmatmul.mubr.f32.gmra.mrb[0].mxu0 %v5031
    %v5280 = vpop.f32.mrb[0].mxu0
    %v5281 = vadd.f32 0.0, %v5280
    %v5282 = vpop.f32.mrb[0].mxu0
    %v5283 = vadd.f32 0.0, %v5282
    %5284 = vdwg.mxu0
    %v5285 = vadd.f32 %v5123, %v5198
    %v5286 = vadd.f32 %v5124, %v5200
    %v5287 = vadd.f32 %v5125, %v5275
    %v5288 = vadd.f32 %v5126, %v5277
    %v5289 = vadd.f32 %v5127, %v5204
    %v5290 = vadd.f32 %v5128, %v5206
    %v5291 = vadd.f32 %v5129, %v5281
    %v5292 = vadd.f32 %v5130, %v5283
    %v5293 = vxor.u32 %v5285, 2147483648
    %v5294 = vxor.u32 %v5289, 2147483648
    %v5295 = vmul.f32 %v5293, 1.442695
    %v5296 = vpow.pop %v5295
    %v5297 = vmul.f32 %v5294, 1.442695
    %v5298 = vpow.pop %v5297
    %v5299 = vadd.f32 %v5296, 1.0
    %v5300 = vadd.f32 %v5298, 1.0
    %v5301 = vrcp.pop %v5299
    %v5302 = vmul.f32 1.0, %v5301
    %v5303 = vrcp.pop %v5300
    %v5304 = vmul.f32 1.0, %v5303
    %v5305 = vxor.u32 %v5286, 2147483648
    %v5306 = vxor.u32 %v5290, 2147483648
    %v5307 = vmul.f32 %v5305, 1.442695
    %v5308 = vpow.pop %v5307
    %v5309 = vmul.f32 %v5306, 1.442695
    %v5310 = vpow.pop %v5309
    %v5311 = vadd.f32 %v5308, 1.0
    %v5312 = vadd.f32 %v5310, 1.0
    %v5313 = vrcp.pop %v5311
    %v5314 = vmul.f32 1.0, %v5313
    %v5315 = vrcp.pop %v5312
    %v5316 = vmul.f32 1.0, %v5315
    %v5317 = vtanh.pop %v5287
    %v5318 = vtanh.pop %v5291
    %v5319 = vxor.u32 %v5288, 2147483648
    %v5320 = vxor.u32 %v5292, 2147483648
    %v5321 = vmul.f32 %v5319, 1.442695
    %v5322 = vpow.pop %v5321
    %v5323 = vmul.f32 %v5320, 1.442695
    %v5324 = vpow.pop %v5323
    %v5325 = vadd.f32 %v5322, 1.0
    %v5326 = vadd.f32 %v5324, 1.0
    %v5327 = vrcp.pop %v5325
    %v5328 = vmul.f32 1.0, %v5327
    %v5329 = vrcp.pop %v5326
    %v5330 = vmul.f32 1.0, %v5329
    %v5331 = vmul.f32 %v5314, %v5026
    %v5332 = vmul.f32 %v5316, %v5027
    %v5333 = vmul.f32 %v5302, %v5317
    %v5334 = vmul.f32 %v5304, %v5318
    %v5335 = vadd.f32 %v5331, %v5333
    %v5336 = vadd.f32 %v5332, %v5334
    %v5337 = vtanh.pop %v5335
    %v5338 = vtanh.pop %v5336
    %v5339 = vmul.f32 %v5328, %v5337
    %v5340 = vmul.f32 %v5330, %v5338
    %s5341 = scalar_lea.vmem [#allocation3], 64
    %5342 = vst [vmem:[%s5341] sm:$0xff] %v5339
    %5343 = vst [vmem:[%s5341 + $0x8] sm:$0xff] %v5340
    %5344 = vmatprep.subr.mxu0 0.0
    %5345 = vmatpush1.msra.mxu0 %v783
    %5346 = vmatprep.subr.mxu0 0.0
    %5347 = vmatpush1.msra.mxu0 %v784
    %5348 = vmatprep.subr.mxu0 0.0
    %5349 = vmatpush1.msra.mxu0 %v785
    %5350 = vmatprep.subr.mxu0 0.0
    %5351 = vmatpush1.msra.mxu0 %v786
    %5352 = vmatprep.subr.mxu0 0.0
    %5353 = vmatpush1.msra.mxu0 %v787
    %5354 = vmatprep.subr.mxu0 0.0
    %5355 = vmatpush1.msra.mxu0 %v788
    %5356 = vmatprep.subr.mxu0 0.0
    %5357 = vmatpush1.msra.mxu0 %v789
    %5358 = vmatprep.subr.mxu0 0.0
    %5359 = vmatpush1.msra.mxu0 %v790
    %5360 = vmatprep.subr.mxu0 0.0
    %5361 = vmatpush1.msra.mxu0 %v791
    %5362 = vmatprep.subr.mxu0 0.0
    %5363 = vmatpush1.msra.mxu0 %v792
    %5364 = vmatprep.subr.mxu0 0.0
    %5365 = vmatpush1.msra.mxu0 %v793
    %5366 = vmatprep.subr.mxu0 0.0
    %5367 = vmatpush1.msra.mxu0 %v794
    %5368 = vmatprep.subr.mxu0 0.0
    %5369 = vmatpush1.msra.mxu0 %v795
    %5370 = vmatprep.subr.mxu0 0.0
    %5371 = vmatpush1.msra.mxu0 %v796
    %5372 = vmatprep.subr.mxu0 0.0
    %5373 = vmatpush1.msra.mxu0 %v797
    %5374 = vmatprep.subr.mxu0 0.0
    %5375 = vmatpush1.msra.mxu0 %v798
    %5376 = vmatprep.subr.mxu0 0.0
    %5377 = vmatpush1.msra.mxu0 0.0
    %5378 = vmatprep.subr.mxu0 0.0
    %5379 = vmatpush1.msra.mxu0 0.0
    %5380 = vmatprep.subr.mxu0 0.0
    %5381 = vmatpush1.msra.mxu0 0.0
    %5382 = vmatprep.subr.mxu0 0.0
    %5383 = vmatpush1.msra.mxu0 0.0
    %5384 = vmatprep.subr.mxu0 0.0
    %5385 = vmatpush1.msra.mxu0 0.0
    %5386 = vmatprep.subr.mxu0 0.0
    %5387 = vmatpush1.msra.mxu0 0.0
    %5388 = vmatprep.subr.mxu0 0.0
    %5389 = vmatpush1.msra.mxu0 0.0
    %5390 = vmatprep.subr.mxu0 0.0
    %5391 = vmatpush1.msra.mxu0 0.0
    %5392 = vmatprep.subr.mxu0 0.0
    %5393 = vmatpush1.msra.mxu0 0.0
    %5394 = vmatprep.subr.mxu0 0.0
    %5395 = vmatpush1.msra.mxu0 0.0
    %5396 = vmatprep.subr.mxu0 0.0
    %5397 = vmatpush1.msra.mxu0 0.0
    %5398 = vmatprep.subr.mxu0 0.0
    %5399 = vmatpush1.msra.mxu0 0.0
    %5400 = vmatprep.subr.mxu0 0.0
    %5401 = vmatpush1.msra.mxu0 0.0
    %5402 = vmatprep.subr.mxu0 0.0
    %5403 = vmatpush1.msra.mxu0 0.0
    %5404 = vmatprep.subr.mxu0 0.0
    %5405 = vmatpush1.msra.mxu0 0.0
    %5406 = vmatprep.subr.mxu0 0.0
    %5407 = vmatpush1.msra.mxu0 0.0
    %5408 = vmatprep.mubr.f32.mxu0 0.0
    %5409 = vmatmul.mubr.f32.gmra.mrb[0].mxu0 %v5339
    %v5410 = vpop.f32.mrb[0].mxu0
    %v5411 = vadd.f32 %v4094, %v5410
    %v5412 = vpop.f32.mrb[0].mxu0
    %5413 = vmatprep.mubr.f32.mxu0 0.0
    %5414 = vmatmul.mubr.f32.gmra.mrb[0].mxu0 %v5340
    %v5415 = vpop.f32.mrb[0].mxu0
    %v5416 = vadd.f32 %v4094, %v5415
    %v5417 = vpop.f32.mrb[0].mxu0
    %5418 = vdwg.mxu0
    %v5419 = vtanh.pop %v5411
    %v5420 = vtanh.pop %v5416
    %v5421 = vmul.f32 %v5419, %v4177
    %v5422 = vmul.f32 %v5420, %v4177
    %5423 = vadd.xlane.f32.xlu0 %v5421
    %v5424 = vpop.xlane.xlu0 %5423
    %5425 = vadd.xlane.f32.xlu0 %v5422
    %v5426 = vpop.xlane.xlu0 %5425
    %v5427 = vadd.f32 %v5424, %v4189
    %v5428 = vadd.f32 %v5426, %v4189
    %s5429 = scalar_lea.vmem [#allocation4], 64
    %5430 = vst.msk [vmem:[%s5429] sm:$0xff] %vm4193, %v5427
    %5431 = vst.msk [vmem:[%s5429 + $0x8] sm:$0xff] %vm4193, %v5428
    %v5432 = vld [vmem:[%s2727] sm:$0xff]
    %v5433 = vld [vmem:[%s2727 + $0x8] sm:$0xff]
    %v5434 = vld [vmem:[%s2727 + $0x10] sm:$0xff]
    %v5435 = vld [vmem:[%s2727 + $0x18] sm:$0xff]
    %v5436 = vld [vmem:[%s2727 + $0x20] sm:$0xff]
    %v5437 = vld [vmem:[%s2727 + $0x28] sm:$0xff]
    %v5438 = vld [vmem:[%s2727 + $0x30] sm:$0xff]
    %v5439 = vld [vmem:[%s2727 + $0x38] sm:$0xff]
    %5440 = vmatprep.subr.mxu0 %v720
    %5441 = vmatpush1.msra.mxu0 %v719
    %5442 = vmatprep.subr.mxu0 %v724
    %5443 = vmatpush1.msra.mxu0 %v723
    %5444 = vmatprep.subr.mxu0 %v728
    %5445 = vmatpush1.msra.mxu0 %v727
    %5446 = vmatprep.subr.mxu0 %v732
    %5447 = vmatpush1.msra.mxu0 %v731
    %5448 = vmatprep.subr.mxu0 %v736
    %5449 = vmatpush1.msra.mxu0 %v735
    %5450 = vmatprep.subr.mxu0 %v740
    %5451 = vmatpush1.msra.mxu0 %v739
    %5452 = vmatprep.subr.mxu0 %v744
    %5453 = vmatpush1.msra.mxu0 %v743
    %5454 = vmatprep.subr.mxu0 %v748
    %5455 = vmatpush1.msra.mxu0 %v747
    %5456 = vmatprep.subr.mxu0 %v752
    %5457 = vmatpush1.msra.mxu0 %v751
    %5458 = vmatprep.subr.mxu0 %v756
    %5459 = vmatpush1.msra.mxu0 %v755
    %5460 = vmatprep.subr.mxu0 %v760
    %5461 = vmatpush1.msra.mxu0 %v759
    %5462 = vmatprep.subr.mxu0 %v764
    %5463 = vmatpush1.msra.mxu0 %v763
    %5464 = vmatprep.subr.mxu0 %v768
    %5465 = vmatpush1.msra.mxu0 %v767
    %5466 = vmatprep.subr.mxu0 %v772
    %5467 = vmatpush1.msra.mxu0 %v771
    %5468 = vmatprep.subr.mxu0 %v776
    %5469 = vmatpush1.msra.mxu0 %v775
    %5470 = vmatprep.subr.mxu0 %v780
    %5471 = vmatpush1.msra.mxu0 %v779
    %5472 = vmatprep.subr.mxu0 0.0
    %5473 = vmatpush1.msra.mxu0 0.0
    %5474 = vmatprep.subr.mxu0 0.0
    %5475 = vmatpush1.msra.mxu0 0.0
    %5476 = vmatprep.subr.mxu0 0.0
    %5477 = vmatpush1.msra.mxu0 0.0
    %5478 = vmatprep.subr.mxu0 0.0
    %5479 = vmatpush1.msra.mxu0 0.0
    %5480 = vmatprep.subr.mxu0 0.0
    %5481 = vmatpush1.msra.mxu0 0.0
    %5482 = vmatprep.subr.mxu0 0.0
    %5483 = vmatpush1.msra.mxu0 0.0
    %5484 = vmatprep.subr.mxu0 0.0
    %5485 = vmatpush1.msra.mxu0 0.0
    %5486 = vmatprep.subr.mxu0 0.0
    %5487 = vmatpush1.msra.mxu0 0.0
    %5488 = vmatprep.subr.mxu0 0.0
    %5489 = vmatpush1.msra.mxu0 0.0
    %5490 = vmatprep.subr.mxu0 0.0
    %5491 = vmatpush1.msra.mxu0 0.0
    %5492 = vmatprep.subr.mxu0 0.0
    %5493 = vmatpush1.msra.mxu0 0.0
    %5494 = vmatprep.subr.mxu0 0.0
    %5495 = vmatpush1.msra.mxu0 0.0
    %5496 = vmatprep.subr.mxu0 0.0
    %5497 = vmatpush1.msra.mxu0 0.0
    %5498 = vmatprep.subr.mxu0 0.0
    %5499 = vmatpush1.msra.mxu0 0.0
    %5500 = vmatprep.subr.mxu0 0.0
    %5501 = vmatpush1.msra.mxu0 0.0
    %5502 = vmatprep.subr.mxu0 0.0
    %5503 = vmatpush1.msra.mxu0 0.0
    %5504 = vmatprep.mubr.f32.mxu0 0.0
    %5505 = vmatmul.mubr.f32.gmra.mrb[0].mxu0 %v5339
    %v5506 = vpop.f32.mrb[0].mxu0
    %v5507 = vadd.f32 0.0, %v5506
    %v5508 = vpop.f32.mrb[0].mxu0
    %v5509 = vadd.f32 0.0, %v5508
    %5510 = vmatprep.mubr.f32.mxu0 0.0
    %5511 = vmatmul.mubr.f32.gmra.mrb[0].mxu0 %v5340
    %v5512 = vpop.f32.mrb[0].mxu0
    %v5513 = vadd.f32 0.0, %v5512
    %v5514 = vpop.f32.mrb[0].mxu0
    %v5515 = vadd.f32 0.0, %v5514
    %5516 = vdwg.mxu0
    %5517 = vmatprep.subr.mxu0 %v722
    %5518 = vmatpush1.msra.mxu0 %v721
    %5519 = vmatprep.subr.mxu0 %v726
    %5520 = vmatpush1.msra.mxu0 %v725
    %5521 = vmatprep.subr.mxu0 %v730
    %5522 = vmatpush1.msra.mxu0 %v729
    %5523 = vmatprep.subr.mxu0 %v734
    %5524 = vmatpush1.msra.mxu0 %v733
    %5525 = vmatprep.subr.mxu0 %v738
    %5526 = vmatpush1.msra.mxu0 %v737
    %5527 = vmatprep.subr.mxu0 %v742
    %5528 = vmatpush1.msra.mxu0 %v741
    %5529 = vmatprep.subr.mxu0 %v746
    %5530 = vmatpush1.msra.mxu0 %v745
    %5531 = vmatprep.subr.mxu0 %v750
    %5532 = vmatpush1.msra.mxu0 %v749
    %5533 = vmatprep.subr.mxu0 %v754
    %5534 = vmatpush1.msra.mxu0 %v753
    %5535 = vmatprep.subr.mxu0 %v758
    %5536 = vmatpush1.msra.mxu0 %v757
    %5537 = vmatprep.subr.mxu0 %v762
    %5538 = vmatpush1.msra.mxu0 %v761
    %5539 = vmatprep.subr.mxu0 %v766
    %5540 = vmatpush1.msra.mxu0 %v765
    %5541 = vmatprep.subr.mxu0 %v770
    %5542 = vmatpush1.msra.mxu0 %v769
    %5543 = vmatprep.subr.mxu0 %v774
    %5544 = vmatpush1.msra.mxu0 %v773
    %5545 = vmatprep.subr.mxu0 %v778
    %5546 = vmatpush1.msra.mxu0 %v777
    %5547 = vmatprep.subr.mxu0 %v782
    %5548 = vmatpush1.msra.mxu0 %v781
    %5549 = vmatprep.subr.mxu0 0.0
    %5550 = vmatpush1.msra.mxu0 0.0
    %5551 = vmatprep.subr.mxu0 0.0
    %5552 = vmatpush1.msra.mxu0 0.0
    %5553 = vmatprep.subr.mxu0 0.0
    %5554 = vmatpush1.msra.mxu0 0.0
    %5555 = vmatprep.subr.mxu0 0.0
    %5556 = vmatpush1.msra.mxu0 0.0
    %5557 = vmatprep.subr.mxu0 0.0
    %5558 = vmatpush1.msra.mxu0 0.0
    %5559 = vmatprep.subr.mxu0 0.0
    %5560 = vmatpush1.msra.mxu0 0.0
    %5561 = vmatprep.subr.mxu0 0.0
    %5562 = vmatpush1.msra.mxu0 0.0
    %5563 = vmatprep.subr.mxu0 0.0
    %5564 = vmatpush1.msra.mxu0 0.0
    %5565 = vmatprep.subr.mxu0 0.0
    %5566 = vmatpush1.msra.mxu0 0.0
    %5567 = vmatprep.subr.mxu0 0.0
    %5568 = vmatpush1.msra.mxu0 0.0
    %5569 = vmatprep.subr.mxu0 0.0
    %5570 = vmatpush1.msra.mxu0 0.0
    %5571 = vmatprep.subr.mxu0 0.0
    %5572 = vmatpush1.msra.mxu0 0.0
    %5573 = vmatprep.subr.mxu0 0.0
    %5574 = vmatpush1.msra.mxu0 0.0
    %5575 = vmatprep.subr.mxu0 0.0
    %5576 = vmatpush1.msra.mxu0 0.0
    %5577 = vmatprep.subr.mxu0 0.0
    %5578 = vmatpush1.msra.mxu0 0.0
    %5579 = vmatprep.subr.mxu0 0.0
    %5580 = vmatpush1.msra.mxu0 0.0
    %5581 = vmatprep.mubr.f32.mxu0 0.0
    %5582 = vmatmul.mubr.f32.gmra.mrb[0].mxu0 %v5339
    %v5583 = vpop.f32.mrb[0].mxu0
    %v5584 = vadd.f32 0.0, %v5583
    %v5585 = vpop.f32.mrb[0].mxu0
    %v5586 = vadd.f32 0.0, %v5585
    %5587 = vmatprep.mubr.f32.mxu0 0.0
    %5588 = vmatmul.mubr.f32.gmra.mrb[0].mxu0 %v5340
    %v5589 = vpop.f32.mrb[0].mxu0
    %v5590 = vadd.f32 0.0, %v5589
    %v5591 = vpop.f32.mrb[0].mxu0
    %v5592 = vadd.f32 0.0, %v5591
    %5593 = vdwg.mxu0
    %v5594 = vadd.f32 %v5432, %v5507
    %v5595 = vadd.f32 %v5433, %v5509
    %v5596 = vadd.f32 %v5434, %v5584
    %v5597 = vadd.f32 %v5435, %v5586
    %v5598 = vadd.f32 %v5436, %v5513
    %v5599 = vadd.f32 %v5437, %v5515
    %v5600 = vadd.f32 %v5438, %v5590
    %v5601 = vadd.f32 %v5439, %v5592
    %v5602 = vxor.u32 %v5594, 2147483648
    %v5603 = vxor.u32 %v5598, 2147483648
    %v5604 = vmul.f32 %v5602, 1.442695
    %v5605 = vpow.pop %v5604
    %v5606 = vmul.f32 %v5603, 1.442695
    %v5607 = vpow.pop %v5606
    %v5608 = vadd.f32 %v5605, 1.0
    %v5609 = vadd.f32 %v5607, 1.0
    %v5610 = vrcp.pop %v5608
    %v5611 = vmul.f32 1.0, %v5610
    %v5612 = vrcp.pop %v5609
    %v5613 = vmul.f32 1.0, %v5612
    %v5614 = vxor.u32 %v5595, 2147483648
    %v5615 = vxor.u32 %v5599, 2147483648
    %v5616 = vmul.f32 %v5614, 1.442695
    %v5617 = vpow.pop %v5616
    %v5618 = vmul.f32 %v5615, 1.442695
    %v5619 = vpow.pop %v5618
    %v5620 = vadd.f32 %v5617, 1.0
    %v5621 = vadd.f32 %v5619, 1.0
    %v5622 = vrcp.pop %v5620
    %v5623 = vmul.f32 1.0, %v5622
    %v5624 = vrcp.pop %v5621
    %v5625 = vmul.f32 1.0, %v5624
    %v5626 = vtanh.pop %v5596
    %v5627 = vtanh.pop %v5600
    %v5628 = vxor.u32 %v5597, 2147483648
    %v5629 = vxor.u32 %v5601, 2147483648
    %v5630 = vmul.f32 %v5628, 1.442695
    %v5631 = vpow.pop %v5630
    %v5632 = vmul.f32 %v5629, 1.442695
    %v5633 = vpow.pop %v5632
    %v5634 = vadd.f32 %v5631, 1.0
    %v5635 = vadd.f32 %v5633, 1.0
    %v5636 = vrcp.pop %v5634
    %v5637 = vmul.f32 1.0, %v5636
    %v5638 = vrcp.pop %v5635
    %v5639 = vmul.f32 1.0, %v5638
    %v5640 = vmul.f32 %v5623, %v5335
    %v5641 = vmul.f32 %v5625, %v5336
    %v5642 = vmul.f32 %v5611, %v5626
    %v5643 = vmul.f32 %v5613, %v5627
    %v5644 = vadd.f32 %v5640, %v5642
    %v5645 = vadd.f32 %v5641, %v5643
    %v5646 = vtanh.pop %v5644
    %v5647 = vtanh.pop %v5645
    %v5648 = vmul.f32 %v5637, %v5646
    %v5649 = vmul.f32 %v5639, %v5647
    %s5650 = scalar_lea.vmem [#allocation3], 80
    %5651 = vst [vmem:[%s5650] sm:$0xff] %v5648
    %5652 = vst [vmem:[%s5650 + $0x8] sm:$0xff] %v5649
    %5653 = vmatprep.subr.mxu0 0.0
    %5654 = vmatpush1.msra.mxu0 %v783
    %5655 = vmatprep.subr.mxu0 0.0
    %5656 = vmatpush1.msra.mxu0 %v784
    %5657 = vmatprep.subr.mxu0 0.0
    %5658 = vmatpush1.msra.mxu0 %v785
    %5659 = vmatprep.subr.mxu0 0.0
    %5660 = vmatpush1.msra.mxu0 %v786
    %5661 = vmatprep.subr.mxu0 0.0
    %5662 = vmatpush1.msra.mxu0 %v787
    %5663 = vmatprep.subr.mxu0 0.0
    %5664 = vmatpush1.msra.mxu0 %v788
    %5665 = vmatprep.subr.mxu0 0.0
    %5666 = vmatpush1.msra.mxu0 %v789
    %5667 = vmatprep.subr.mxu0 0.0
    %5668 = vmatpush1.msra.mxu0 %v790
    %5669 = vmatprep.subr.mxu0 0.0
    %5670 = vmatpush1.msra.mxu0 %v791
    %5671 = vmatprep.subr.mxu0 0.0
    %5672 = vmatpush1.msra.mxu0 %v792
    %5673 = vmatprep.subr.mxu0 0.0
    %5674 = vmatpush1.msra.mxu0 %v793
    %5675 = vmatprep.subr.mxu0 0.0
    %5676 = vmatpush1.msra.mxu0 %v794
    %5677 = vmatprep.subr.mxu0 0.0
    %5678 = vmatpush1.msra.mxu0 %v795
    %5679 = vmatprep.subr.mxu0 0.0
    %5680 = vmatpush1.msra.mxu0 %v796
    %5681 = vmatprep.subr.mxu0 0.0
    %5682 = vmatpush1.msra.mxu0 %v797
    %5683 = vmatprep.subr.mxu0 0.0
    %5684 = vmatpush1.msra.mxu0 %v798
    %5685 = vmatprep.subr.mxu0 0.0
    %5686 = vmatpush1.msra.mxu0 0.0
    %5687 = vmatprep.subr.mxu0 0.0
    %5688 = vmatpush1.msra.mxu0 0.0
    %5689 = vmatprep.subr.mxu0 0.0
    %5690 = vmatpush1.msra.mxu0 0.0
    %5691 = vmatprep.subr.mxu0 0.0
    %5692 = vmatpush1.msra.mxu0 0.0
    %5693 = vmatprep.subr.mxu0 0.0
    %5694 = vmatpush1.msra.mxu0 0.0
    %5695 = vmatprep.subr.mxu0 0.0
    %5696 = vmatpush1.msra.mxu0 0.0
    %5697 = vmatprep.subr.mxu0 0.0
    %5698 = vmatpush1.msra.mxu0 0.0
    %5699 = vmatprep.subr.mxu0 0.0
    %5700 = vmatpush1.msra.mxu0 0.0
    %5701 = vmatprep.subr.mxu0 0.0
    %5702 = vmatpush1.msra.mxu0 0.0
    %5703 = vmatprep.subr.mxu0 0.0
    %5704 = vmatpush1.msra.mxu0 0.0
    %5705 = vmatprep.subr.mxu0 0.0
    %5706 = vmatpush1.msra.mxu0 0.0
    %5707 = vmatprep.subr.mxu0 0.0
    %5708 = vmatpush1.msra.mxu0 0.0
    %5709 = vmatprep.subr.mxu0 0.0
    %5710 = vmatpush1.msra.mxu0 0.0
    %5711 = vmatprep.subr.mxu0 0.0
    %5712 = vmatpush1.msra.mxu0 0.0
    %5713 = vmatprep.subr.mxu0 0.0
    %5714 = vmatpush1.msra.mxu0 0.0
    %5715 = vmatprep.subr.mxu0 0.0
    %5716 = vmatpush1.msra.mxu0 0.0
    %5717 = vmatprep.mubr.f32.mxu0 0.0
    %5718 = vmatmul.mubr.f32.gmra.mrb[0].mxu0 %v5648
    %v5719 = vpop.f32.mrb[0].mxu0
    %v5720 = vadd.f32 %v4094, %v5719
    %v5721 = vpop.f32.mrb[0].mxu0
    %5722 = vmatprep.mubr.f32.mxu0 0.0
    %5723 = vmatmul.mubr.f32.gmra.mrb[0].mxu0 %v5649
    %v5724 = vpop.f32.mrb[0].mxu0
    %v5725 = vadd.f32 %v4094, %v5724
    %v5726 = vpop.f32.mrb[0].mxu0
    %5727 = vdwg.mxu0
    %v5728 = vtanh.pop %v5720
    %v5729 = vtanh.pop %v5725
    %v5730 = vmul.f32 %v5728, %v4177
    %v5731 = vmul.f32 %v5729, %v4177
    %5732 = vadd.xlane.f32.xlu0 %v5730
    %v5733 = vpop.xlane.xlu0 %5732
    %5734 = vadd.xlane.f32.xlu0 %v5731
    %v5735 = vpop.xlane.xlu0 %5734
    %v5736 = vadd.f32 %v5733, %v4189
    %v5737 = vadd.f32 %v5735, %v4189
    %s5738 = scalar_lea.vmem [#allocation4], 80
    %5739 = vst.msk [vmem:[%s5738] sm:$0xff] %vm4193, %v5736
    %5740 = vst.msk [vmem:[%s5738 + $0x8] sm:$0xff] %vm4193, %v5737
    %v5741 = vld [vmem:[%s3108] sm:$0xff]
    %v5742 = vld [vmem:[%s3108 + $0x8] sm:$0xff]
    %v5743 = vld [vmem:[%s3108 + $0x10] sm:$0xff]
    %v5744 = vld [vmem:[%s3108 + $0x18] sm:$0xff]
    %v5745 = vld [vmem:[%s3108 + $0x20] sm:$0xff]
    %v5746 = vld [vmem:[%s3108 + $0x28] sm:$0xff]
    %v5747 = vld [vmem:[%s3108 + $0x30] sm:$0xff]
    %v5748 = vld [vmem:[%s3108 + $0x38] sm:$0xff]
    %5749 = vmatprep.subr.mxu0 %v720
    %5750 = vmatpush1.msra.mxu0 %v719
    %5751 = vmatprep.subr.mxu0 %v724
    %5752 = vmatpush1.msra.mxu0 %v723
    %5753 = vmatprep.subr.mxu0 %v728
    %5754 = vmatpush1.msra.mxu0 %v727
    %5755 = vmatprep.subr.mxu0 %v732
    %5756 = vmatpush1.msra.mxu0 %v731
    %5757 = vmatprep.subr.mxu0 %v736
    %5758 = vmatpush1.msra.mxu0 %v735
    %5759 = vmatprep.subr.mxu0 %v740
    %5760 = vmatpush1.msra.mxu0 %v739
    %5761 = vmatprep.subr.mxu0 %v744
    %5762 = vmatpush1.msra.mxu0 %v743
    %5763 = vmatprep.subr.mxu0 %v748
    %5764 = vmatpush1.msra.mxu0 %v747
    %5765 = vmatprep.subr.mxu0 %v752
    %5766 = vmatpush1.msra.mxu0 %v751
    %5767 = vmatprep.subr.mxu0 %v756
    %5768 = vmatpush1.msra.mxu0 %v755
    %5769 = vmatprep.subr.mxu0 %v760
    %5770 = vmatpush1.msra.mxu0 %v759
    %5771 = vmatprep.subr.mxu0 %v764
    %5772 = vmatpush1.msra.mxu0 %v763
    %5773 = vmatprep.subr.mxu0 %v768
    %5774 = vmatpush1.msra.mxu0 %v767
    %5775 = vmatprep.subr.mxu0 %v772
    %5776 = vmatpush1.msra.mxu0 %v771
    %5777 = vmatprep.subr.mxu0 %v776
    %5778 = vmatpush1.msra.mxu0 %v775
    %5779 = vmatprep.subr.mxu0 %v780
    %5780 = vmatpush1.msra.mxu0 %v779
    %5781 = vmatprep.subr.mxu0 0.0
    %5782 = vmatpush1.msra.mxu0 0.0
    %5783 = vmatprep.subr.mxu0 0.0
    %5784 = vmatpush1.msra.mxu0 0.0
    %5785 = vmatprep.subr.mxu0 0.0
    %5786 = vmatpush1.msra.mxu0 0.0
    %5787 = vmatprep.subr.mxu0 0.0
    %5788 = vmatpush1.msra.mxu0 0.0
    %5789 = vmatprep.subr.mxu0 0.0
    %5790 = vmatpush1.msra.mxu0 0.0
    %5791 = vmatprep.subr.mxu0 0.0
    %5792 = vmatpush1.msra.mxu0 0.0
    %5793 = vmatprep.subr.mxu0 0.0
    %5794 = vmatpush1.msra.mxu0 0.0
    %5795 = vmatprep.subr.mxu0 0.0
    %5796 = vmatpush1.msra.mxu0 0.0
    %5797 = vmatprep.subr.mxu0 0.0
    %5798 = vmatpush1.msra.mxu0 0.0
    %5799 = vmatprep.subr.mxu0 0.0
    %5800 = vmatpush1.msra.mxu0 0.0
    %5801 = vmatprep.subr.mxu0 0.0
    %5802 = vmatpush1.msra.mxu0 0.0
    %5803 = vmatprep.subr.mxu0 0.0
    %5804 = vmatpush1.msra.mxu0 0.0
    %5805 = vmatprep.subr.mxu0 0.0
    %5806 = vmatpush1.msra.mxu0 0.0
    %5807 = vmatprep.subr.mxu0 0.0
    %5808 = vmatpush1.msra.mxu0 0.0
    %5809 = vmatprep.subr.mxu0 0.0
    %5810 = vmatpush1.msra.mxu0 0.0
    %5811 = vmatprep.subr.mxu0 0.0
    %5812 = vmatpush1.msra.mxu0 0.0
    %5813 = vmatprep.mubr.f32.mxu0 0.0
    %5814 = vmatmul.mubr.f32.gmra.mrb[0].mxu0 %v5648
    %v5815 = vpop.f32.mrb[0].mxu0
    %v5816 = vadd.f32 0.0, %v5815
    %v5817 = vpop.f32.mrb[0].mxu0
    %v5818 = vadd.f32 0.0, %v5817
    %5819 = vmatprep.mubr.f32.mxu0 0.0
    %5820 = vmatmul.mubr.f32.gmra.mrb[0].mxu0 %v5649
    %v5821 = vpop.f32.mrb[0].mxu0
    %v5822 = vadd.f32 0.0, %v5821
    %v5823 = vpop.f32.mrb[0].mxu0
    %v5824 = vadd.f32 0.0, %v5823
    %5825 = vdwg.mxu0
    %5826 = vmatprep.subr.mxu0 %v722
    %5827 = vmatpush1.msra.mxu0 %v721
    %5828 = vmatprep.subr.mxu0 %v726
    %5829 = vmatpush1.msra.mxu0 %v725
    %5830 = vmatprep.subr.mxu0 %v730
    %5831 = vmatpush1.msra.mxu0 %v729
    %5832 = vmatprep.subr.mxu0 %v734
    %5833 = vmatpush1.msra.mxu0 %v733
    %5834 = vmatprep.subr.mxu0 %v738
    %5835 = vmatpush1.msra.mxu0 %v737
    %5836 = vmatprep.subr.mxu0 %v742
    %5837 = vmatpush1.msra.mxu0 %v741
    %5838 = vmatprep.subr.mxu0 %v746
    %5839 = vmatpush1.msra.mxu0 %v745
    %5840 = vmatprep.subr.mxu0 %v750
    %5841 = vmatpush1.msra.mxu0 %v749
    %5842 = vmatprep.subr.mxu0 %v754
    %5843 = vmatpush1.msra.mxu0 %v753
    %5844 = vmatprep.subr.mxu0 %v758
    %5845 = vmatpush1.msra.mxu0 %v757
    %5846 = vmatprep.subr.mxu0 %v762
    %5847 = vmatpush1.msra.mxu0 %v761
    %5848 = vmatprep.subr.mxu0 %v766
    %5849 = vmatpush1.msra.mxu0 %v765
    %5850 = vmatprep.subr.mxu0 %v770
    %5851 = vmatpush1.msra.mxu0 %v769
    %5852 = vmatprep.subr.mxu0 %v774
    %5853 = vmatpush1.msra.mxu0 %v773
    %5854 = vmatprep.subr.mxu0 %v778
    %5855 = vmatpush1.msra.mxu0 %v777
    %5856 = vmatprep.subr.mxu0 %v782
    %5857 = vmatpush1.msra.mxu0 %v781
    %5858 = vmatprep.subr.mxu0 0.0
    %5859 = vmatpush1.msra.mxu0 0.0
    %5860 = vmatprep.subr.mxu0 0.0
    %5861 = vmatpush1.msra.mxu0 0.0
    %5862 = vmatprep.subr.mxu0 0.0
    %5863 = vmatpush1.msra.mxu0 0.0
    %5864 = vmatprep.subr.mxu0 0.0
    %5865 = vmatpush1.msra.mxu0 0.0
    %5866 = vmatprep.subr.mxu0 0.0
    %5867 = vmatpush1.msra.mxu0 0.0
    %5868 = vmatprep.subr.mxu0 0.0
    %5869 = vmatpush1.msra.mxu0 0.0
    %5870 = vmatprep.subr.mxu0 0.0
    %5871 = vmatpush1.msra.mxu0 0.0
    %5872 = vmatprep.subr.mxu0 0.0
    %5873 = vmatpush1.msra.mxu0 0.0
    %5874 = vmatprep.subr.mxu0 0.0
    %5875 = vmatpush1.msra.mxu0 0.0
    %5876 = vmatprep.subr.mxu0 0.0
    %5877 = vmatpush1.msra.mxu0 0.0
    %5878 = vmatprep.subr.mxu0 0.0
    %5879 = vmatpush1.msra.mxu0 0.0
    %5880 = vmatprep.subr.mxu0 0.0
    %5881 = vmatpush1.msra.mxu0 0.0
    %5882 = vmatprep.subr.mxu0 0.0
    %5883 = vmatpush1.msra.mxu0 0.0
    %5884 = vmatprep.subr.mxu0 0.0
    %5885 = vmatpush1.msra.mxu0 0.0
    %5886 = vmatprep.subr.mxu0 0.0
    %5887 = vmatpush1.msra.mxu0 0.0
    %5888 = vmatprep.subr.mxu0 0.0
    %5889 = vmatpush1.msra.mxu0 0.0
    %5890 = vmatprep.mubr.f32.mxu0 0.0
    %5891 = vmatmul.mubr.f32.gmra.mrb[0].mxu0 %v5648
    %v5892 = vpop.f32.mrb[0].mxu0
    %v5893 = vadd.f32 0.0, %v5892
    %v5894 = vpop.f32.mrb[0].mxu0
    %v5895 = vadd.f32 0.0, %v5894
    %5896 = vmatprep.mubr.f32.mxu0 0.0
    %5897 = vmatmul.mubr.f32.gmra.mrb[0].mxu0 %v5649
    %v5898 = vpop.f32.mrb[0].mxu0
    %v5899 = vadd.f32 0.0, %v5898
    %v5900 = vpop.f32.mrb[0].mxu0
    %v5901 = vadd.f32 0.0, %v5900
    %5902 = vdwg.mxu0
    %v5903 = vadd.f32 %v5741, %v5816
    %v5904 = vadd.f32 %v5742, %v5818
    %v5905 = vadd.f32 %v5743, %v5893
    %v5906 = vadd.f32 %v5744, %v5895
    %v5907 = vadd.f32 %v5745, %v5822
    %v5908 = vadd.f32 %v5746, %v5824
    %v5909 = vadd.f32 %v5747, %v5899
    %v5910 = vadd.f32 %v5748, %v5901
    %v5911 = vxor.u32 %v5903, 2147483648
    %v5912 = vxor.u32 %v5907, 2147483648
    %v5913 = vmul.f32 %v5911, 1.442695
    %v5914 = vpow.pop %v5913
    %v5915 = vmul.f32 %v5912, 1.442695
    %v5916 = vpow.pop %v5915
    %v5917 = vadd.f32 %v5914, 1.0
    %v5918 = vadd.f32 %v5916, 1.0
    %v5919 = vrcp.pop %v5917
    %v5920 = vmul.f32 1.0, %v5919
    %v5921 = vrcp.pop %v5918
    %v5922 = vmul.f32 1.0, %v5921
    %v5923 = vxor.u32 %v5904, 2147483648
    %v5924 = vxor.u32 %v5908, 2147483648
    %v5925 = vmul.f32 %v5923, 1.442695
    %v5926 = vpow.pop %v5925
    %v5927 = vmul.f32 %v5924, 1.442695
    %v5928 = vpow.pop %v5927
    %v5929 = vadd.f32 %v5926, 1.0
    %v5930 = vadd.f32 %v5928, 1.0
    %v5931 = vrcp.pop %v5929
    %v5932 = vmul.f32 1.0, %v5931
    %v5933 = vrcp.pop %v5930
    %v5934 = vmul.f32 1.0, %v5933
    %v5935 = vtanh.pop %v5905
    %v5936 = vtanh.pop %v5909
    %v5937 = vxor.u32 %v5906, 2147483648
    %v5938 = vxor.u32 %v5910, 2147483648
    %v5939 = vmul.f32 %v5937, 1.442695
    %v5940 = vpow.pop %v5939
    %v5941 = vmul.f32 %v5938, 1.442695
    %v5942 = vpow.pop %v5941
    %v5943 = vadd.f32 %v5940, 1.0
    %v5944 = vadd.f32 %v5942, 1.0
    %v5945 = vrcp.pop %v5943
    %v5946 = vmul.f32 1.0, %v5945
    %v5947 = vrcp.pop %v5944
    %v5948 = vmul.f32 1.0, %v5947
    %v5949 = vmul.f32 %v5932, %v5644
    %v5950 = vmul.f32 %v5934, %v5645
    %v5951 = vmul.f32 %v5920, %v5935
    %v5952 = vmul.f32 %v5922, %v5936
    %v5953 = vadd.f32 %v5949, %v5951
    %v5954 = vadd.f32 %v5950, %v5952
    %v5955 = vtanh.pop %v5953
    %v5956 = vtanh.pop %v5954
    %v5957 = vmul.f32 %v5946, %v5955
    %v5958 = vmul.f32 %v5948, %v5956
    %s5959 = scalar_lea.vmem [#allocation3], 96
    %5960 = vst [vmem:[%s5959] sm:$0xff] %v5957
    %5961 = vst [vmem:[%s5959 + $0x8] sm:$0xff] %v5958
    %5962 = vmatprep.subr.mxu0 0.0
    %5963 = vmatpush1.msra.mxu0 %v783
    %5964 = vmatprep.subr.mxu0 0.0
    %5965 = vmatpush1.msra.mxu0 %v784
    %5966 = vmatprep.subr.mxu0 0.0
    %5967 = vmatpush1.msra.mxu0 %v785
    %5968 = vmatprep.subr.mxu0 0.0
    %5969 = vmatpush1.msra.mxu0 %v786
    %5970 = vmatprep.subr.mxu0 0.0
    %5971 = vmatpush1.msra.mxu0 %v787
    %5972 = vmatprep.subr.mxu0 0.0
    %5973 = vmatpush1.msra.mxu0 %v788
    %5974 = vmatprep.subr.mxu0 0.0
    %5975 = vmatpush1.msra.mxu0 %v789
    %5976 = vmatprep.subr.mxu0 0.0
    %5977 = vmatpush1.msra.mxu0 %v790
    %5978 = vmatprep.subr.mxu0 0.0
    %5979 = vmatpush1.msra.mxu0 %v791
    %5980 = vmatprep.subr.mxu0 0.0
    %5981 = vmatpush1.msra.mxu0 %v792
    %5982 = vmatprep.subr.mxu0 0.0
    %5983 = vmatpush1.msra.mxu0 %v793
    %5984 = vmatprep.subr.mxu0 0.0
    %5985 = vmatpush1.msra.mxu0 %v794
    %5986 = vmatprep.subr.mxu0 0.0
    %5987 = vmatpush1.msra.mxu0 %v795
    %5988 = vmatprep.subr.mxu0 0.0
    %5989 = vmatpush1.msra.mxu0 %v796
    %5990 = vmatprep.subr.mxu0 0.0
    %5991 = vmatpush1.msra.mxu0 %v797
    %5992 = vmatprep.subr.mxu0 0.0
    %5993 = vmatpush1.msra.mxu0 %v798
    %5994 = vmatprep.subr.mxu0 0.0
    %5995 = vmatpush1.msra.mxu0 0.0
    %5996 = vmatprep.subr.mxu0 0.0
    %5997 = vmatpush1.msra.mxu0 0.0
    %5998 = vmatprep.subr.mxu0 0.0
    %5999 = vmatpush1.msra.mxu0 0.0
    %6000 = vmatprep.subr.mxu0 0.0
    %6001 = vmatpush1.msra.mxu0 0.0
    %6002 = vmatprep.subr.mxu0 0.0
    %6003 = vmatpush1.msra.mxu0 0.0
    %6004 = vmatprep.subr.mxu0 0.0
    %6005 = vmatpush1.msra.mxu0 0.0
    %6006 = vmatprep.subr.mxu0 0.0
    %6007 = vmatpush1.msra.mxu0 0.0
    %6008 = vmatprep.subr.mxu0 0.0
    %6009 = vmatpush1.msra.mxu0 0.0
    %6010 = vmatprep.subr.mxu0 0.0
    %6011 = vmatpush1.msra.mxu0 0.0
    %6012 = vmatprep.subr.mxu0 0.0
    %6013 = vmatpush1.msra.mxu0 0.0
    %6014 = vmatprep.subr.mxu0 0.0
    %6015 = vmatpush1.msra.mxu0 0.0
    %6016 = vmatprep.subr.mxu0 0.0
    %6017 = vmatpush1.msra.mxu0 0.0
    %6018 = vmatprep.subr.mxu0 0.0
    %6019 = vmatpush1.msra.mxu0 0.0
    %6020 = vmatprep.subr.mxu0 0.0
    %6021 = vmatpush1.msra.mxu0 0.0
    %6022 = vmatprep.subr.mxu0 0.0
    %6023 = vmatpush1.msra.mxu0 0.0
    %6024 = vmatprep.subr.mxu0 0.0
    %6025 = vmatpush1.msra.mxu0 0.0
    %6026 = vmatprep.mubr.f32.mxu0 0.0
    %6027 = vmatmul.mubr.f32.gmra.mrb[0].mxu0 %v5957
    %v6028 = vpop.f32.mrb[0].mxu0
    %v6029 = vadd.f32 %v4094, %v6028
    %v6030 = vpop.f32.mrb[0].mxu0
    %6031 = vmatprep.mubr.f32.mxu0 0.0
    %6032 = vmatmul.mubr.f32.gmra.mrb[0].mxu0 %v5958
    %v6033 = vpop.f32.mrb[0].mxu0
    %v6034 = vadd.f32 %v4094, %v6033
    %v6035 = vpop.f32.mrb[0].mxu0
    %6036 = vdwg.mxu0
    %v6037 = vtanh.pop %v6029
    %v6038 = vtanh.pop %v6034
    %v6039 = vmul.f32 %v6037, %v4177
    %v6040 = vmul.f32 %v6038, %v4177
    %6041 = vadd.xlane.f32.xlu0 %v6039
    %v6042 = vpop.xlane.xlu0 %6041
    %6043 = vadd.xlane.f32.xlu0 %v6040
    %v6044 = vpop.xlane.xlu0 %6043
    %v6045 = vadd.f32 %v6042, %v4189
    %v6046 = vadd.f32 %v6044, %v4189
    %s6047 = scalar_lea.vmem [#allocation4], 96
    %6048 = vst.msk [vmem:[%s6047] sm:$0xff] %vm4193, %v6045
    %6049 = vst.msk [vmem:[%s6047 + $0x8] sm:$0xff] %vm4193, %v6046
    %v6050 = vld [vmem:[%s3489] sm:$0xff]
    %v6051 = vld [vmem:[%s3489 + $0x8] sm:$0xff]
    %v6052 = vld [vmem:[%s3489 + $0x10] sm:$0xff]
    %v6053 = vld [vmem:[%s3489 + $0x18] sm:$0xff]
    %v6054 = vld [vmem:[%s3489 + $0x20] sm:$0xff]
    %v6055 = vld [vmem:[%s3489 + $0x28] sm:$0xff]
    %v6056 = vld [vmem:[%s3489 + $0x30] sm:$0xff]
    %v6057 = vld [vmem:[%s3489 + $0x38] sm:$0xff]
    %6058 = vmatprep.subr.mxu0 %v720
    %6059 = vmatpush1.msra.mxu0 %v719
    %6060 = vmatprep.subr.mxu0 %v724
    %6061 = vmatpush1.msra.mxu0 %v723
    %6062 = vmatprep.subr.mxu0 %v728
    %6063 = vmatpush1.msra.mxu0 %v727
    %6064 = vmatprep.subr.mxu0 %v732
    %6065 = vmatpush1.msra.mxu0 %v731
    %6066 = vmatprep.subr.mxu0 %v736
    %6067 = vmatpush1.msra.mxu0 %v735
    %6068 = vmatprep.subr.mxu0 %v740
    %6069 = vmatpush1.msra.mxu0 %v739
    %6070 = vmatprep.subr.mxu0 %v744
    %6071 = vmatpush1.msra.mxu0 %v743
    %6072 = vmatprep.subr.mxu0 %v748
    %6073 = vmatpush1.msra.mxu0 %v747
    %6074 = vmatprep.subr.mxu0 %v752
    %6075 = vmatpush1.msra.mxu0 %v751
    %6076 = vmatprep.subr.mxu0 %v756
    %6077 = vmatpush1.msra.mxu0 %v755
    %6078 = vmatprep.subr.mxu0 %v760
    %6079 = vmatpush1.msra.mxu0 %v759
    %6080 = vmatprep.subr.mxu0 %v764
    %6081 = vmatpush1.msra.mxu0 %v763
    %6082 = vmatprep.subr.mxu0 %v768
    %6083 = vmatpush1.msra.mxu0 %v767
    %6084 = vmatprep.subr.mxu0 %v772
    %6085 = vmatpush1.msra.mxu0 %v771
    %6086 = vmatprep.subr.mxu0 %v776
    %6087 = vmatpush1.msra.mxu0 %v775
    %6088 = vmatprep.subr.mxu0 %v780
    %6089 = vmatpush1.msra.mxu0 %v779
    %6090 = vmatprep.subr.mxu0 0.0
    %6091 = vmatpush1.msra.mxu0 0.0
    %6092 = vmatprep.subr.mxu0 0.0
    %6093 = vmatpush1.msra.mxu0 0.0
    %6094 = vmatprep.subr.mxu0 0.0
    %6095 = vmatpush1.msra.mxu0 0.0
    %6096 = vmatprep.subr.mxu0 0.0
    %6097 = vmatpush1.msra.mxu0 0.0
    %6098 = vmatprep.subr.mxu0 0.0
    %6099 = vmatpush1.msra.mxu0 0.0
    %6100 = vmatprep.subr.mxu0 0.0
    %6101 = vmatpush1.msra.mxu0 0.0
    %6102 = vmatprep.subr.mxu0 0.0
    %6103 = vmatpush1.msra.mxu0 0.0
    %6104 = vmatprep.subr.mxu0 0.0
    %6105 = vmatpush1.msra.mxu0 0.0
    %6106 = vmatprep.subr.mxu0 0.0
    %6107 = vmatpush1.msra.mxu0 0.0
    %6108 = vmatprep.subr.mxu0 0.0
    %6109 = vmatpush1.msra.mxu0 0.0
    %6110 = vmatprep.subr.mxu0 0.0
    %6111 = vmatpush1.msra.mxu0 0.0
    %6112 = vmatprep.subr.mxu0 0.0
    %6113 = vmatpush1.msra.mxu0 0.0
    %6114 = vmatprep.subr.mxu0 0.0
    %6115 = vmatpush1.msra.mxu0 0.0
    %6116 = vmatprep.subr.mxu0 0.0
    %6117 = vmatpush1.msra.mxu0 0.0
    %6118 = vmatprep.subr.mxu0 0.0
    %6119 = vmatpush1.msra.mxu0 0.0
    %6120 = vmatprep.subr.mxu0 0.0
    %6121 = vmatpush1.msra.mxu0 0.0
    %6122 = vmatprep.mubr.f32.mxu0 0.0
    %6123 = vmatmul.mubr.f32.gmra.mrb[0].mxu0 %v5957
    %v6124 = vpop.f32.mrb[0].mxu0
    %v6125 = vadd.f32 0.0, %v6124
    %v6126 = vpop.f32.mrb[0].mxu0
    %v6127 = vadd.f32 0.0, %v6126
    %6128 = vmatprep.mubr.f32.mxu0 0.0
    %6129 = vmatmul.mubr.f32.gmra.mrb[0].mxu0 %v5958
    %v6130 = vpop.f32.mrb[0].mxu0
    %v6131 = vadd.f32 0.0, %v6130
    %v6132 = vpop.f32.mrb[0].mxu0
    %v6133 = vadd.f32 0.0, %v6132
    %6134 = vdwg.mxu0
    %6135 = vmatprep.subr.mxu0 %v722
    %6136 = vmatpush1.msra.mxu0 %v721
    %6137 = vmatprep.subr.mxu0 %v726
    %6138 = vmatpush1.msra.mxu0 %v725
    %6139 = vmatprep.subr.mxu0 %v730
    %6140 = vmatpush1.msra.mxu0 %v729
    %6141 = vmatprep.subr.mxu0 %v734
    %6142 = vmatpush1.msra.mxu0 %v733
    %6143 = vmatprep.subr.mxu0 %v738
    %6144 = vmatpush1.msra.mxu0 %v737
    %6145 = vmatprep.subr.mxu0 %v742
    %6146 = vmatpush1.msra.mxu0 %v741
    %6147 = vmatprep.subr.mxu0 %v746
    %6148 = vmatpush1.msra.mxu0 %v745
    %6149 = vmatprep.subr.mxu0 %v750
    %6150 = vmatpush1.msra.mxu0 %v749
    %6151 = vmatprep.subr.mxu0 %v754
    %6152 = vmatpush1.msra.mxu0 %v753
    %6153 = vmatprep.subr.mxu0 %v758
    %6154 = vmatpush1.msra.mxu0 %v757
    %6155 = vmatprep.subr.mxu0 %v762
    %6156 = vmatpush1.msra.mxu0 %v761
    %6157 = vmatprep.subr.mxu0 %v766
    %6158 = vmatpush1.msra.mxu0 %v765
    %6159 = vmatprep.subr.mxu0 %v770
    %6160 = vmatpush1.msra.mxu0 %v769
    %6161 = vmatprep.subr.mxu0 %v774
    %6162 = vmatpush1.msra.mxu0 %v773
    %6163 = vmatprep.subr.mxu0 %v778
    %6164 = vmatpush1.msra.mxu0 %v777
    %6165 = vmatprep.subr.mxu0 %v782
    %6166 = vmatpush1.msra.mxu0 %v781
    %6167 = vmatprep.subr.mxu0 0.0
    %6168 = vmatpush1.msra.mxu0 0.0
    %6169 = vmatprep.subr.mxu0 0.0
    %6170 = vmatpush1.msra.mxu0 0.0
    %6171 = vmatprep.subr.mxu0 0.0
    %6172 = vmatpush1.msra.mxu0 0.0
    %6173 = vmatprep.subr.mxu0 0.0
    %6174 = vmatpush1.msra.mxu0 0.0
    %6175 = vmatprep.subr.mxu0 0.0
    %6176 = vmatpush1.msra.mxu0 0.0
    %6177 = vmatprep.subr.mxu0 0.0
    %6178 = vmatpush1.msra.mxu0 0.0
    %6179 = vmatprep.subr.mxu0 0.0
    %6180 = vmatpush1.msra.mxu0 0.0
    %6181 = vmatprep.subr.mxu0 0.0
    %6182 = vmatpush1.msra.mxu0 0.0
    %6183 = vmatprep.subr.mxu0 0.0
    %6184 = vmatpush1.msra.mxu0 0.0
    %6185 = vmatprep.subr.mxu0 0.0
    %6186 = vmatpush1.msra.mxu0 0.0
    %6187 = vmatprep.subr.mxu0 0.0
    %6188 = vmatpush1.msra.mxu0 0.0
    %6189 = vmatprep.subr.mxu0 0.0
    %6190 = vmatpush1.msra.mxu0 0.0
    %6191 = vmatprep.subr.mxu0 0.0
    %6192 = vmatpush1.msra.mxu0 0.0
    %6193 = vmatprep.subr.mxu0 0.0
    %6194 = vmatpush1.msra.mxu0 0.0
    %6195 = vmatprep.subr.mxu0 0.0
    %6196 = vmatpush1.msra.mxu0 0.0
    %6197 = vmatprep.subr.mxu0 0.0
    %6198 = vmatpush1.msra.mxu0 0.0
    %6199 = vmatprep.mubr.f32.mxu0 0.0
    %6200 = vmatmul.mubr.f32.gmra.mrb[0].mxu0 %v5957
    %v6201 = vpop.f32.mrb[0].mxu0
    %v6202 = vadd.f32 0.0, %v6201
    %v6203 = vpop.f32.mrb[0].mxu0
    %v6204 = vadd.f32 0.0, %v6203
    %6205 = vmatprep.mubr.f32.mxu0 0.0
    %6206 = vmatmul.mubr.f32.gmra.mrb[0].mxu0 %v5958
    %v6207 = vpop.f32.mrb[0].mxu0
    %v6208 = vadd.f32 0.0, %v6207
    %v6209 = vpop.f32.mrb[0].mxu0
    %v6210 = vadd.f32 0.0, %v6209
    %6211 = vdwg.mxu0
    %v6212 = vadd.f32 %v6050, %v6125
    %v6213 = vadd.f32 %v6051, %v6127
    %v6214 = vadd.f32 %v6052, %v6202
    %v6215 = vadd.f32 %v6053, %v6204
    %v6216 = vadd.f32 %v6054, %v6131
    %v6217 = vadd.f32 %v6055, %v6133
    %v6218 = vadd.f32 %v6056, %v6208
    %v6219 = vadd.f32 %v6057, %v6210
    %v6220 = vxor.u32 %v6212, 2147483648
    %v6221 = vxor.u32 %v6216, 2147483648
    %v6222 = vmul.f32 %v6220, 1.442695
    %v6223 = vpow.pop %v6222
    %v6224 = vmul.f32 %v6221, 1.442695
    %v6225 = vpow.pop %v6224
    %v6226 = vadd.f32 %v6223, 1.0
    %v6227 = vadd.f32 %v6225, 1.0
    %v6228 = vrcp.pop %v6226
    %v6229 = vmul.f32 1.0, %v6228
    %v6230 = vrcp.pop %v6227
    %v6231 = vmul.f32 1.0, %v6230
    %v6232 = vxor.u32 %v6213, 2147483648
    %v6233 = vxor.u32 %v6217, 2147483648
    %v6234 = vmul.f32 %v6232, 1.442695
    %v6235 = vpow.pop %v6234
    %v6236 = vmul.f32 %v6233, 1.442695
    %v6237 = vpow.pop %v6236
    %v6238 = vadd.f32 %v6235, 1.0
    %v6239 = vadd.f32 %v6237, 1.0
    %v6240 = vrcp.pop %v6238
    %v6241 = vmul.f32 1.0, %v6240
    %v6242 = vrcp.pop %v6239
    %v6243 = vmul.f32 1.0, %v6242
    %v6244 = vtanh.pop %v6214
    %v6245 = vtanh.pop %v6218
    %v6246 = vxor.u32 %v6215, 2147483648
    %v6247 = vxor.u32 %v6219, 2147483648
    %v6248 = vmul.f32 %v6246, 1.442695
    %v6249 = vpow.pop %v6248
    %v6250 = vmul.f32 %v6247, 1.442695
    %v6251 = vpow.pop %v6250
    %v6252 = vadd.f32 %v6249, 1.0
    %v6253 = vadd.f32 %v6251, 1.0
    %v6254 = vrcp.pop %v6252
    %v6255 = vmul.f32 1.0, %v6254
    %v6256 = vrcp.pop %v6253
    %v6257 = vmul.f32 1.0, %v6256
    %v6258 = vmul.f32 %v6241, %v5953
    %v6259 = vmul.f32 %v6243, %v5954
    %v6260 = vmul.f32 %v6229, %v6244
    %v6261 = vmul.f32 %v6231, %v6245
    %v6262 = vadd.f32 %v6258, %v6260
    %v6263 = vadd.f32 %v6259, %v6261
    %v6264 = vtanh.pop %v6262
    %v6265 = vtanh.pop %v6263
    %v6266 = vmul.f32 %v6255, %v6264
    %v6267 = vmul.f32 %v6257, %v6265
    %s6268 = scalar_lea.vmem [#allocation3], 112
    %6269 = vst [vmem:[%s6268] sm:$0xff] %v6266
    %6270 = vst [vmem:[%s6268 + $0x8] sm:$0xff] %v6267
    %6271 = vmatprep.subr.mxu0 0.0
    %6272 = vmatpush1.msra.mxu0 %v783
    %6273 = vmatprep.subr.mxu0 0.0
    %6274 = vmatpush1.msra.mxu0 %v784
    %6275 = vmatprep.subr.mxu0 0.0
    %6276 = vmatpush1.msra.mxu0 %v785
    %6277 = vmatprep.subr.mxu0 0.0
    %6278 = vmatpush1.msra.mxu0 %v786
    %6279 = vmatprep.subr.mxu0 0.0
    %6280 = vmatpush1.msra.mxu0 %v787
    %6281 = vmatprep.subr.mxu0 0.0
    %6282 = vmatpush1.msra.mxu0 %v788
    %6283 = vmatprep.subr.mxu0 0.0
    %6284 = vmatpush1.msra.mxu0 %v789
    %6285 = vmatprep.subr.mxu0 0.0
    %6286 = vmatpush1.msra.mxu0 %v790
    %6287 = vmatprep.subr.mxu0 0.0
    %6288 = vmatpush1.msra.mxu0 %v791
    %6289 = vmatprep.subr.mxu0 0.0
    %6290 = vmatpush1.msra.mxu0 %v792
    %6291 = vmatprep.subr.mxu0 0.0
    %6292 = vmatpush1.msra.mxu0 %v793
    %6293 = vmatprep.subr.mxu0 0.0
    %6294 = vmatpush1.msra.mxu0 %v794
    %6295 = vmatprep.subr.mxu0 0.0
    %6296 = vmatpush1.msra.mxu0 %v795
    %6297 = vmatprep.subr.mxu0 0.0
    %6298 = vmatpush1.msra.mxu0 %v796
    %6299 = vmatprep.subr.mxu0 0.0
    %6300 = vmatpush1.msra.mxu0 %v797
    %6301 = vmatprep.subr.mxu0 0.0
    %6302 = vmatpush1.msra.mxu0 %v798
    %6303 = vmatprep.subr.mxu0 0.0
    %6304 = vmatpush1.msra.mxu0 0.0
    %6305 = vmatprep.subr.mxu0 0.0
    %6306 = vmatpush1.msra.mxu0 0.0
    %6307 = vmatprep.subr.mxu0 0.0
    %6308 = vmatpush1.msra.mxu0 0.0
    %6309 = vmatprep.subr.mxu0 0.0
    %6310 = vmatpush1.msra.mxu0 0.0
    %6311 = vmatprep.subr.mxu0 0.0
    %6312 = vmatpush1.msra.mxu0 0.0
    %6313 = vmatprep.subr.mxu0 0.0
    %6314 = vmatpush1.msra.mxu0 0.0
    %6315 = vmatprep.subr.mxu0 0.0
    %6316 = vmatpush1.msra.mxu0 0.0
    %6317 = vmatprep.subr.mxu0 0.0
    %6318 = vmatpush1.msra.mxu0 0.0
    %6319 = vmatprep.subr.mxu0 0.0
    %6320 = vmatpush1.msra.mxu0 0.0
    %6321 = vmatprep.subr.mxu0 0.0
    %6322 = vmatpush1.msra.mxu0 0.0
    %6323 = vmatprep.subr.mxu0 0.0
    %6324 = vmatpush1.msra.mxu0 0.0
    %6325 = vmatprep.subr.mxu0 0.0
    %6326 = vmatpush1.msra.mxu0 0.0
    %6327 = vmatprep.subr.mxu0 0.0
    %6328 = vmatpush1.msra.mxu0 0.0
    %6329 = vmatprep.subr.mxu0 0.0
    %6330 = vmatpush1.msra.mxu0 0.0
    %6331 = vmatprep.subr.mxu0 0.0
    %6332 = vmatpush1.msra.mxu0 0.0
    %6333 = vmatprep.subr.mxu0 0.0
    %6334 = vmatpush1.msra.mxu0 0.0
    %6335 = vmatprep.mubr.f32.mxu0 0.0
    %6336 = vmatmul.mubr.f32.gmra.mrb[0].mxu0 %v6266
    %v6337 = vpop.f32.mrb[0].mxu0
    %v6338 = vadd.f32 %v4094, %v6337
    %v6339 = vpop.f32.mrb[0].mxu0
    %6340 = vmatprep.mubr.f32.mxu0 0.0
    %6341 = vmatmul.mubr.f32.gmra.mrb[0].mxu0 %v6267
    %v6342 = vpop.f32.mrb[0].mxu0
    %v6343 = vadd.f32 %v4094, %v6342
    %v6344 = vpop.f32.mrb[0].mxu0
    %6345 = vdwg.mxu0
    %v6346 = vtanh.pop %v6338
    %v6347 = vtanh.pop %v6343
    %v6348 = vmul.f32 %v6346, %v4177
    %v6349 = vmul.f32 %v6347, %v4177
    %6350 = vadd.xlane.f32.xlu0 %v6348
    %v6351 = vpop.xlane.xlu0 %6350
    %6352 = vadd.xlane.f32.xlu0 %v6349
    %v6353 = vpop.xlane.xlu0 %6352
    %v6354 = vadd.f32 %v6351, %v4189
    %v6355 = vadd.f32 %v6353, %v4189
    %s6356 = scalar_lea.vmem [#allocation4], 112
    %6357 = vst.msk [vmem:[%s6356] sm:$0xff] %vm4193, %v6354
    %6358 = vst.msk [vmem:[%s6356 + $0x8] sm:$0xff] %vm4193, %v6355
    %v6359 = vld [vmem:[#allocation4] sm:$0xff]
    %v6360 = vld [vmem:[#allocation4 + $0x8] sm:$0xff]
    %v6361 = vld [vmem:[#allocation4 + $0x10] sm:$0xff]
    %v6362 = vld [vmem:[#allocation4 + $0x18] sm:$0xff]
    %v6363 = vld [vmem:[#allocation4 + $0x20] sm:$0xff]
    %v6364 = vld [vmem:[#allocation4 + $0x28] sm:$0xff]
    %v6365 = vld [vmem:[#allocation4 + $0x30] sm:$0xff]
    %v6366 = vld [vmem:[#allocation4 + $0x38] sm:$0xff]
    %v6367 = vld [vmem:[#allocation4 + $0x40] sm:$0xff]
    %v6368 = vld [vmem:[#allocation4 + $0x48] sm:$0xff]
    %v6369 = vld [vmem:[#allocation4 + $0x50] sm:$0xff]
    %v6370 = vld [vmem:[#allocation4 + $0x58] sm:$0xff]
    %v6371 = vld [vmem:[#allocation4 + $0x60] sm:$0xff]
    %v6372 = vld [vmem:[#allocation4 + $0x68] sm:$0xff]
    %v6373 = vld [vmem:[#allocation4 + $0x70] sm:$0xff]
    %v6374 = vld [vmem:[#allocation4 + $0x78] sm:$0xff]
    %v6375 = vsel %vm4193, %v6359, -inf
    %v6376 = vsel %vm4193, %v6361, -inf
    %v6377 = vsel %vm4193, %v6363, -inf
    %v6378 = vmax.f32 %v6375, %v6377
    %v6379 = vsel %vm4193, %v6365, -inf
    %v6380 = vmax.f32 %v6376, %v6379
    %v6381 = vsel %vm4193, %v6367, -inf
    %v6382 = vmax.f32 %v6378, %v6381
    %v6383 = vsel %vm4193, %v6369, -inf
    %v6384 = vmax.f32 %v6380, %v6383
    %v6385 = vsel %vm4193, %v6371, -inf
    %v6386 = vmax.f32 %v6382, %v6385
    %v6387 = vsel %vm4193, %v6373, -inf
    %v6388 = vmax.f32 %v6384, %v6387
    %v6389 = vmax.f32 %v6386, %v6388
    %v6390 = vsel %vm4193, %v6360, -inf
    %v6391 = vsel %vm4193, %v6362, -inf
    %v6392 = vsel %vm4193, %v6364, -inf
    %v6393 = vmax.f32 %v6390, %v6392
    %v6394 = vsel %vm4193, %v6366, -inf
    %v6395 = vmax.f32 %v6391, %v6394
    %v6396 = vsel %vm4193, %v6368, -inf
    %v6397 = vmax.f32 %v6393, %v6396
    %v6398 = vsel %vm4193, %v6370, -inf
    %v6399 = vmax.f32 %v6395, %v6398
    %v6400 = vsel %vm4193, %v6372, -inf
    %v6401 = vmax.f32 %v6397, %v6400
    %v6402 = vsel %vm4193, %v6374, -inf
    %v6403 = vmax.f32 %v6399, %v6402
    %v6404 = vmax.f32 %v6401, %v6403
    %v6405 = vsub.f32 %v6359, %v6389
    %v6406 = vsub.f32 %v6360, %v6404
    %v6407 = vsub.f32 %v6361, %v6389
    %v6408 = vsub.f32 %v6362, %v6404
    %v6409 = vsub.f32 %v6363, %v6389
    %v6410 = vsub.f32 %v6364, %v6404
    %v6411 = vsub.f32 %v6365, %v6389
    %v6412 = vsub.f32 %v6366, %v6404
    %v6413 = vsub.f32 %v6367, %v6389
    %v6414 = vsub.f32 %v6368, %v6404
    %v6415 = vsub.f32 %v6369, %v6389
    %v6416 = vsub.f32 %v6370, %v6404
    %v6417 = vsub.f32 %v6371, %v6389
    %v6418 = vsub.f32 %v6372, %v6404
    %v6419 = vsub.f32 %v6373, %v6389
    %v6420 = vsub.f32 %v6374, %v6404
    %v6421 = vmul.f32 %v6405, 1.442695
    %v6422 = vpow.pop %v6421
    %v6423 = vmul.f32 %v6406, 1.442695
    %v6424 = vpow.pop %v6423
    %v6425 = vmul.f32 %v6407, 1.442695
    %v6426 = vpow.pop %v6425
    %v6427 = vmul.f32 %v6408, 1.442695
    %v6428 = vpow.pop %v6427
    %v6429 = vmul.f32 %v6409, 1.442695
    %v6430 = vpow.pop %v6429
    %v6431 = vmul.f32 %v6410, 1.442695
    %v6432 = vpow.pop %v6431
    %v6433 = vmul.f32 %v6411, 1.442695
    %v6434 = vpow.pop %v6433
    %v6435 = vmul.f32 %v6412, 1.442695
    %v6436 = vpow.pop %v6435
    %v6437 = vmul.f32 %v6413, 1.442695
    %v6438 = vpow.pop %v6437
    %v6439 = vmul.f32 %v6414, 1.442695
    %v6440 = vpow.pop %v6439
    %v6441 = vmul.f32 %v6415, 1.442695
    %v6442 = vpow.pop %v6441
    %v6443 = vmul.f32 %v6416, 1.442695
    %v6444 = vpow.pop %v6443
    %v6445 = vmul.f32 %v6417, 1.442695
    %v6446 = vpow.pop %v6445
    %v6447 = vmul.f32 %v6418, 1.442695
    %v6448 = vpow.pop %v6447
    %v6449 = vmul.f32 %v6419, 1.442695
    %v6450 = vpow.pop %v6449
    %v6451 = vmul.f32 %v6420, 1.442695
    %v6452 = vpow.pop %v6451
    %v6453 = vsel %vm4193, %v6422, 0.0
    %v6454 = vsel %vm4193, %v6426, 0.0
    %v6455 = vadd.f32 %v6453, %v6454
    %v6456 = vsel %vm4193, %v6430, 0.0
    %v6457 = vadd.f32 %v6455, %v6456
    %v6458 = vsel %vm4193, %v6434, 0.0
    %v6459 = vadd.f32 %v6457, %v6458
    %v6460 = vsel %vm4193, %v6438, 0.0
    %v6461 = vadd.f32 %v6459, %v6460
    %v6462 = vsel %vm4193, %v6442, 0.0
    %v6463 = vadd.f32 %v6461, %v6462
    %v6464 = vsel %vm4193, %v6446, 0.0
    %v6465 = vadd.f32 %v6463, %v6464
    %v6466 = vsel %vm4193, %v6450, 0.0
    %v6467 = vadd.f32 %v6465, %v6466
    %v6468 = vsel %vm4193, %v6424, 0.0
    %v6469 = vsel %vm4193, %v6428, 0.0
    %v6470 = vadd.f32 %v6468, %v6469
    %v6471 = vsel %vm4193, %v6432, 0.0
    %v6472 = vadd.f32 %v6470, %v6471
    %v6473 = vsel %vm4193, %v6436, 0.0
    %v6474 = vadd.f32 %v6472, %v6473
    %v6475 = vsel %vm4193, %v6440, 0.0
    %v6476 = vadd.f32 %v6474, %v6475
    %v6477 = vsel %vm4193, %v6444, 0.0
    %v6478 = vadd.f32 %v6476, %v6477
    %v6479 = vsel %vm4193, %v6448, 0.0
    %v6480 = vadd.f32 %v6478, %v6479
    %v6481 = vsel %vm4193, %v6452, 0.0
    %v6482 = vadd.f32 %v6480, %v6481
    %v6483 = vrcp.pop %v6467
    %v6484 = vmul.f32 %v6422, %v6483
    %v6485 = vrcp.pop %v6482
    %v6486 = vmul.f32 %v6424, %v6485
    %v6487 = vmul.f32 %v6426, %v6483
    %v6488 = vmul.f32 %v6428, %v6485
    %v6489 = vmul.f32 %v6430, %v6483
    %v6490 = vmul.f32 %v6432, %v6485
    %v6491 = vmul.f32 %v6434, %v6483
    %v6492 = vmul.f32 %v6436, %v6485
    %v6493 = vmul.f32 %v6438, %v6483
    %v6494 = vmul.f32 %v6440, %v6485
    %v6495 = vmul.f32 %v6442, %v6483
    %v6496 = vmul.f32 %v6444, %v6485
    %v6497 = vmul.f32 %v6446, %v6483
    %v6498 = vmul.f32 %v6448, %v6485
    %v6499 = vmul.f32 %v6450, %v6483
    %v6500 = vmul.f32 %v6452, %v6485
    %v6501 = vld [vmem:[#allocation3] sm:$0xff]
    %v6502 = vld [vmem:[#allocation3 + $0x8] sm:$0xff]
    %v6503 = vld [vmem:[#allocation3 + $0x10] sm:$0xff]
    %v6504 = vld [vmem:[#allocation3 + $0x18] sm:$0xff]
    %v6505 = vld [vmem:[#allocation3 + $0x20] sm:$0xff]
    %v6506 = vld [vmem:[#allocation3 + $0x28] sm:$0xff]
    %v6507 = vld [vmem:[#allocation3 + $0x30] sm:$0xff]
    %v6508 = vld [vmem:[#allocation3 + $0x38] sm:$0xff]
    %v6509 = vld [vmem:[#allocation3 + $0x40] sm:$0xff]
    %v6510 = vld [vmem:[#allocation3 + $0x48] sm:$0xff]
    %v6511 = vld [vmem:[#allocation3 + $0x50] sm:$0xff]
    %v6512 = vld [vmem:[#allocation3 + $0x58] sm:$0xff]
    %v6513 = vld [vmem:[#allocation3 + $0x60] sm:$0xff]
    %v6514 = vld [vmem:[#allocation3 + $0x68] sm:$0xff]
    %v6515 = vld [vmem:[#allocation3 + $0x70] sm:$0xff]
    %v6516 = vld [vmem:[#allocation3 + $0x78] sm:$0xff]
    %6518 = vset.pattern.permute.xlu0 0
    %6519 = vperm.xlu0 %6518, %v6484
    %v6520 = vpop.permute.xlu0 %6519
    %6523 = vset.pattern.permute.xlu0 0
    %6524 = vperm.xlu0 %6523, %v6486
    %v6525 = vpop.permute.xlu0 %6524
    %6528 = vset.pattern.permute.xlu0 0
    %6529 = vperm.xlu0 %6528, %v6487
    %v6530 = vpop.permute.xlu0 %6529
    %6533 = vset.pattern.permute.xlu0 0
    %6534 = vperm.xlu0 %6533, %v6488
    %v6535 = vpop.permute.xlu0 %6534
    %6538 = vset.pattern.permute.xlu0 0
    %6539 = vperm.xlu0 %6538, %v6489
    %v6540 = vpop.permute.xlu0 %6539
    %6543 = vset.pattern.permute.xlu0 0
    %6544 = vperm.xlu0 %6543, %v6490
    %v6545 = vpop.permute.xlu0 %6544
    %6548 = vset.pattern.permute.xlu0 0
    %6549 = vperm.xlu0 %6548, %v6491
    %v6550 = vpop.permute.xlu0 %6549
    %6553 = vset.pattern.permute.xlu0 0
    %6554 = vperm.xlu0 %6553, %v6492
    %v6555 = vpop.permute.xlu0 %6554
    %6558 = vset.pattern.permute.xlu0 0
    %6559 = vperm.xlu0 %6558, %v6493
    %v6560 = vpop.permute.xlu0 %6559
    %6563 = vset.pattern.permute.xlu0 0
    %6564 = vperm.xlu0 %6563, %v6494
    %v6565 = vpop.permute.xlu0 %6564
    %6568 = vset.pattern.permute.xlu0 0
    %6569 = vperm.xlu0 %6568, %v6495
    %v6570 = vpop.permute.xlu0 %6569
    %6573 = vset.pattern.permute.xlu0 0
    %6574 = vperm.xlu0 %6573, %v6496
    %v6575 = vpop.permute.xlu0 %6574
    %6578 = vset.pattern.permute.xlu0 0
    %6579 = vperm.xlu0 %6578, %v6497
    %v6580 = vpop.permute.xlu0 %6579
    %6583 = vset.pattern.permute.xlu0 0
    %6584 = vperm.xlu0 %6583, %v6498
    %v6585 = vpop.permute.xlu0 %6584
    %6588 = vset.pattern.permute.xlu0 0
    %6589 = vperm.xlu0 %6588, %v6499
    %v6590 = vpop.permute.xlu0 %6589
    %6593 = vset.pattern.permute.xlu0 0
    %6594 = vperm.xlu0 %6593, %v6500
    %v6595 = vpop.permute.xlu0 %6594
    %v6597 = vmul.f32 %v6520, %v6501
    %v6598 = vmul.f32 %v6525, %v6502
    %v6599 = vmul.f32 %v6530, %v6503
    %v6600 = vmul.f32 %v6535, %v6504
    %v6601 = vmul.f32 %v6540, %v6505
    %v6602 = vmul.f32 %v6545, %v6506
    %v6603 = vmul.f32 %v6550, %v6507
    %v6604 = vmul.f32 %v6555, %v6508
    %v6605 = vmul.f32 %v6560, %v6509
    %v6606 = vmul.f32 %v6565, %v6510
    %v6607 = vmul.f32 %v6570, %v6511
    %v6608 = vmul.f32 %v6575, %v6512
    %v6609 = vmul.f32 %v6580, %v6513
    %v6610 = vmul.f32 %v6585, %v6514
    %v6611 = vmul.f32 %v6590, %v6515
    %v6612 = vmul.f32 %v6595, %v6516
    %v6613 = vadd.f32 %v6597, %v6599
    %v6614 = vadd.f32 %v6613, %v6601
    %v6615 = vadd.f32 %v6614, %v6603
    %v6616 = vadd.f32 %v6615, %v6605
    %v6617 = vadd.f32 %v6616, %v6607
    %v6618 = vadd.f32 %v6617, %v6609
    %v6619 = vadd.f32 %v6618, %v6611
    %v6620 = vadd.f32 %v6598, %v6600
    %v6621 = vadd.f32 %v6620, %v6602
    %v6622 = vadd.f32 %v6621, %v6604
    %v6623 = vadd.f32 %v6622, %v6606
    %v6624 = vadd.f32 %v6623, %v6608
    %v6625 = vadd.f32 %v6624, %v6610
    %v6626 = vadd.f32 %v6625, %v6612
    %v6627 = vld [vmem:[%s11] sm:$0xff]
    %v6628 = vld [vmem:[%s11 + $0x8] sm:$0xff]
    %v6629 = vld [vmem:[%s11 + $0x10] sm:$0xff]
    %v6630 = vld [vmem:[%s11 + $0x18] sm:$0xff]
    %v6631 = vld [vmem:[%s11 + $0x20] sm:$0xff]
    %v6632 = vld [vmem:[%s11 + $0x28] sm:$0xff]
    %v6633 = vld [vmem:[%s11 + $0x30] sm:$0xff]
    %v6634 = vld [vmem:[%s11 + $0x38] sm:$0xff]
    %v6635 = vld [vmem:[%s11 + $0x40] sm:$0xff]
    %v6636 = vld [vmem:[%s11 + $0x48] sm:$0xff]
    %v6637 = vld [vmem:[%s11 + $0x50] sm:$0xff]
    %v6638 = vld [vmem:[%s11 + $0x58] sm:$0xff]
    %v6639 = vld [vmem:[%s11 + $0x60] sm:$0xff]
    %v6640 = vld [vmem:[%s11 + $0x68] sm:$0xff]
    %v6641 = vld [vmem:[%s11 + $0x70] sm:$0xff]
    %v6642 = vld [vmem:[%s11 + $0x78] sm:$0xff]
    %v6643 = vld [vmem:[%s12] sm:$0x1]
    %v6645 = vlaneseq
    %v6646 = vshrl.u32 %v6645, 7
    %v6647 = vsub.s32 0, %v6646
    %v6648 = vrot.slane %v6643, %v6647
    %6650 = vmatprep.subr.mxu0 0.0
    %6651 = vmatpush1.msra.mxu0 %v6627
    %6652 = vmatprep.subr.mxu0 0.0
    %6653 = vmatpush1.msra.mxu0 %v6628
    %6654 = vmatprep.subr.mxu0 0.0
    %6655 = vmatpush1.msra.mxu0 %v6629
    %6656 = vmatprep.subr.mxu0 0.0
    %6657 = vmatpush1.msra.mxu0 %v6630
    %6658 = vmatprep.subr.mxu0 0.0
    %6659 = vmatpush1.msra.mxu0 %v6631
    %6660 = vmatprep.subr.mxu0 0.0
    %6661 = vmatpush1.msra.mxu0 %v6632
    %6662 = vmatprep.subr.mxu0 0.0
    %6663 = vmatpush1.msra.mxu0 %v6633
    %6664 = vmatprep.subr.mxu0 0.0
    %6665 = vmatpush1.msra.mxu0 %v6634
    %6666 = vmatprep.subr.mxu0 0.0
    %6667 = vmatpush1.msra.mxu0 %v6635
    %6668 = vmatprep.subr.mxu0 0.0
    %6669 = vmatpush1.msra.mxu0 %v6636
    %6670 = vmatprep.subr.mxu0 0.0
    %6671 = vmatpush1.msra.mxu0 %v6637
    %6672 = vmatprep.subr.mxu0 0.0
    %6673 = vmatpush1.msra.mxu0 %v6638
    %6674 = vmatprep.subr.mxu0 0.0
    %6675 = vmatpush1.msra.mxu0 %v6639
    %6676 = vmatprep.subr.mxu0 0.0
    %6677 = vmatpush1.msra.mxu0 %v6640
    %6678 = vmatprep.subr.mxu0 0.0
    %6679 = vmatpush1.msra.mxu0 %v6641
    %6680 = vmatprep.subr.mxu0 0.0
    %6681 = vmatpush1.msra.mxu0 %v6642
    %6682 = vmatprep.subr.mxu0 0.0
    %6683 = vmatpush1.msra.mxu0 0.0
    %6684 = vmatprep.subr.mxu0 0.0
    %6685 = vmatpush1.msra.mxu0 0.0
    %6686 = vmatprep.subr.mxu0 0.0
    %6687 = vmatpush1.msra.mxu0 0.0
    %6688 = vmatprep.subr.mxu0 0.0
    %6689 = vmatpush1.msra.mxu0 0.0
    %6690 = vmatprep.subr.mxu0 0.0
    %6691 = vmatpush1.msra.mxu0 0.0
    %6692 = vmatprep.subr.mxu0 0.0
    %6693 = vmatpush1.msra.mxu0 0.0
    %6694 = vmatprep.subr.mxu0 0.0
    %6695 = vmatpush1.msra.mxu0 0.0
    %6696 = vmatprep.subr.mxu0 0.0
    %6697 = vmatpush1.msra.mxu0 0.0
    %6698 = vmatprep.subr.mxu0 0.0
    %6699 = vmatpush1.msra.mxu0 0.0
    %6700 = vmatprep.subr.mxu0 0.0
    %6701 = vmatpush1.msra.mxu0 0.0
    %6702 = vmatprep.subr.mxu0 0.0
    %6703 = vmatpush1.msra.mxu0 0.0
    %6704 = vmatprep.subr.mxu0 0.0
    %6705 = vmatpush1.msra.mxu0 0.0
    %6706 = vmatprep.subr.mxu0 0.0
    %6707 = vmatpush1.msra.mxu0 0.0
    %6708 = vmatprep.subr.mxu0 0.0
    %6709 = vmatpush1.msra.mxu0 0.0
    %6710 = vmatprep.subr.mxu0 0.0
    %6711 = vmatpush1.msra.mxu0 0.0
    %6712 = vmatprep.subr.mxu0 0.0
    %6713 = vmatpush1.msra.mxu0 0.0
    %6714 = vmatprep.mubr.f32.mxu0 0.0
    %6715 = vmatmul.mubr.f32.gmra.mrb[0].mxu0 %v6619
    %v6716 = vpop.f32.mrb[0].mxu0
    %v6717 = vadd.f32 %v6648, %v6716
    %v6718 = vpop.f32.mrb[0].mxu0
    %6719 = vmatprep.mubr.f32.mxu0 0.0
    %6720 = vmatmul.mubr.f32.gmra.mrb[0].mxu0 %v6626
    %v6721 = vpop.f32.mrb[0].mxu0
    %v6722 = vadd.f32 %v6648, %v6721
    %v6723 = vpop.f32.mrb[0].mxu0
    %6724 = vdwg.mxu0
    %v6725 = vmax.f32 %v6717, 0.0
    %v6726 = vmax.f32 %v6722, 0.0
    %v6727 = vld [vmem:[%s13] sm:$0x1]
    %v6729 = vlaneseq
    %v6730 = vshrl.u32 %v6729, 7
    %v6731 = vsub.s32 0, %v6730
    %v6732 = vrot.slane %v6727, %v6731
    %v6734 = vmul.f32 %v6725, %v6732
    %v6735 = vmul.f32 %v6726, %v6732
    %vm6736 = vcmask 523264
    %v6737 = vsel %vm6736, %v6734, 0.0
    %6738 = vadd.xlane.f32.xlu0 %v6737
    %v6739 = vpop.xlane.xlu0 %6738
    %v6740 = vsel %vm6736, %v6735, 0.0
    %6741 = vadd.xlane.f32.xlu0 %v6740
    %v6742 = vpop.xlane.xlu0 %6741
    %v6743 = vld [vmem:[#allocation6] sm:$0x1]
    %v6745 = vlaneseq
    %v6746 = vshrl.u32 %v6745, 7
    %v6747 = vsub.s32 0, %v6746
    %v6748 = vrot.slane %v6743, %v6747
    %v6750 = vadd.f32 %v6739, %v6748
    %v6751 = vadd.f32 %v6742, %v6748
    %v6752 = vxor.u32 %v6750, 2147483648
    %v6753 = vxor.u32 %v6751, 2147483648
    %v6754 = vmul.f32 %v6752, 1.442695
    %v6755 = vpow.pop %v6754
    %v6756 = vmul.f32 %v6753, 1.442695
    %v6757 = vpow.pop %v6756
    %v6758 = vadd.f32 %v6755, 1.0
    %v6759 = vadd.f32 %v6757, 1.0
    %v6760 = vrcp.pop %v6758
    %v6761 = vmul.f32 1.0, %v6760
    %v6762 = vrcp.pop %v6759
    %v6763 = vmul.f32 1.0, %v6762
    %6764 = vst.msk [vmem:[%s15] sm:$0xff] %vm4193, %v6761
    %6765 = vst.msk [vmem:[%s15 + $0x8] sm:$0xff] %vm4193, %v6763
    // Predicated region
    $region78: #{tpu_custom_call.1} parent=1 // pred_check
      _
    $region79: #{tpu_custom_call.1} parent=1 // pred_check_branch
      %6767 = sbr.rel (0) target = $region81
    $region80: #{tpu_custom_call.1} parent=1 // pred_region
      _
    $region81: #{tpu_custom_call.1} parent=1 // pred_fallthru
      _
    // Predicated region
    $region82: #{tpu_custom_call.1} parent=1 // pred_check
      _
    $region83: #{tpu_custom_call.1} parent=1 // pred_check_branch
      %6769 = sbr.rel (0) target = $region85
    $region84: #{tpu_custom_call.1} parent=1 // pred_region
      _
    $region85: #{tpu_custom_call.1} parent=1 // pred_fallthru
      _
    %6770 = vsyncpa [#allocation8], 1
    %6771 = vsyncpa [#allocation10], 1
    %6772 = vsyncpa [#allocation13], 1

</llo_original>
